<compile_context>
chip_gen: v7x
topology: tpu7x:2x2x1
jax: 0.10.0
libtpu: 0.0.40
codegen_flags: <defaults>
</compile_context>

<pallas_src>
import functools

import jax
import jax.numpy as jnp
from jax import lax
from jax.experimental import pallas as pl
from jax.experimental.pallas import tpu as pltpu


_VMEM_LIMIT_BYTES = 32 * 1024 * 1024      # <= physical VMEM on v5e/v6e/v7x
_CONV_VMEM_BUDGET = 20 * 1024 * 1024      # headroom under the scoped limit
_BN_VMEM_BUDGET = 8 * 1024 * 1024


# ----------------------------------------------------------------------------
# Pallas kernel 1: conv-as-matmul (P[M,K] @ W[K,Cout]) with fused activation
# and optional fused per-channel (sum, sum-of-squares) reduction for BN stats.
# ----------------------------------------------------------------------------
def _conv_matmul_kernel(p_ref, w_ref, y_ref, *stats_refs, act, neg_slope,
                        with_stats):
    # Single-pass bf16 MXU matmul, f32 accumulation; Cout on lanes.
    y = jnp.dot(p_ref[...], w_ref[...], preferred_element_type=jnp.float32)

    if with_stats:  # per-channel partial sums of the raw conv output
        s = jnp.sum(y, axis=0, keepdims=True)          # [1, Cout]
        ss = jnp.sum(y * y, axis=0, keepdims=True)     # [1, Cout]
        stats_refs[0][...] = jnp.concatenate([s, ss], axis=0)  # [2, Cout]

    if act == "leaky_relu":
        y = jnp.where(y >= 0, y, neg_slope * y)

    y_ref[...] = y.astype(y_ref.dtype)


def _pick_conv_tile(M, K, Cout, budget=_CONV_VMEM_BUDGET):
    """Largest M-tile whose double-buffered working set fits the VMEM budget."""
    def cost(tm):
        dbuf = 2 * (tm * K * 2 + tm * Cout * 2 + 2 * Cout * 4)  # p, y, stats
        return dbuf + 2 * K * Cout * 2                          # weight (x2)
    for tm in (4096, 2048, 1024, 512, 256, 128, 64, 32, 16, 8):
        if M % tm == 0 and cost(tm) <= budget:
            return tm
    return M  # tiny / oddly-shaped M: single full block


def conv2d_pallas(x_nhwc, w_oihw, stride, pad, act="none", want_stats=False,
                  neg_slope=0.2):
    """Conv2d(bias=False) as patches[N*Ho*Wo, K] @ W[K, Cout] (NHWC)."""
    N, H, W, Cin = x_nhwc.shape
    Cout, Cin2, kh, kw = w_oihw.shape
    assert Cin == Cin2
    K = Cin * kh * kw

    # Fused patch extraction, NHWC in / NHWC out.  The feature dim is ordered
    # input-channel major (k = c*kh*kw + i*kw + j), matching
    # w_oihw.reshape(Cout, K).
    patches = lax.conv_general_dilated_patches(
        x_nhwc, (kh, kw), (stride, stride), [(pad, pad), (pad, pad)],
        dimension_numbers=("NHWC", "HWIO", "NHWC"))
    _, Ho, Wo, Kp = patches.shape
    assert Kp == K
    M = N * Ho * Wo                                    # batch folded into M
    p = patches.reshape(M, K)                          # bf16 (x is bf16)
    w_mat = w_oihw.reshape(Cout, K).T.astype(jnp.bfloat16)   # [K, Cout]

    tm = _pick_conv_tile(M, K, Cout)
    n_mt = M // tm

    out_shape = [jax.ShapeDtypeStruct((M, Cout), jnp.bfloat16)]
    out_specs = [pl.BlockSpec((tm, Cout), lambda mt: (mt, 0))]
    if want_stats:
        out_shape.append(jax.ShapeDtypeStruct((n_mt, 2, Cout), jnp.float32))
        out_specs.append(pl.BlockSpec((None, 2, Cout), lambda mt: (mt, 0, 0)))

    kernel = functools.partial(_conv_matmul_kernel, act=act,
                               neg_slope=neg_slope, with_stats=want_stats)
    outs = pl.pallas_call(
        kernel,
        out_shape=out_shape,
        grid_spec=pltpu.PrefetchScalarGridSpec(
            num_scalar_prefetch=0,
            grid=(n_mt,),
            in_specs=[
                # Patches: full-K block, large sublane (M) tile.
                pl.BlockSpec((tm, K), lambda mt: (mt, 0)),
                # Weights: full block, constant index -> stays VMEM-resident.
                pl.BlockSpec((K, Cout), lambda mt: (0, 0)),
            ],
            out_specs=out_specs,
        ),
        compiler_params=pltpu.CompilerParams(
            dimension_semantics=("parallel",),
            vmem_limit_bytes=_VMEM_LIMIT_BYTES),
    )(p, w_mat)

    y = outs[0].reshape(N, Ho, Wo, Cout)
    if not want_stats:
        return y

    sums = outs[1].sum(axis=0)                         # [2, Cout] f32
    cnt = M
    mean = sums[0] / cnt
    var = jnp.maximum(sums[1] / cnt - mean * mean, 0.0)  # clamp cancellation
    return y, mean, var


# ----------------------------------------------------------------------------
# Pallas kernel 2: folded BatchNorm affine + LeakyReLU (elementwise, C on
# lanes, batch+spatial folded into large sublane tiles).
# ----------------------------------------------------------------------------
def _bn_lrelu_kernel(y_ref, s_ref, b_ref, o_ref, *, neg_slope):
    y = y_ref[...].astype(jnp.float32) * s_ref[...] + b_ref[...]
    o_ref[...] = jnp.where(y >= 0, y, neg_slope * y).astype(o_ref.dtype)


def _pick_bn_tile(M, C, budget=_BN_VMEM_BUDGET):
    for tm in (8192, 4096, 2048, 1024, 512, 256, 128, 64, 32, 16, 8):
        if M % tm == 0 and 2 * 2 * tm * C * 2 <= budget:  # in+out, dbl-buffered
            return tm
    return M


def batchnorm_leaky_relu(y_nhwc, mean, var, gamma, beta, eps=1e-5,
                         neg_slope=0.2):
    N, H, W, C = y_nhwc.shape
    M = N * H * W
    inv_std = 1.0 / jnp.sqrt(var + eps)
    scale = (gamma * inv_std).astype(jnp.float32).reshape(1, C)
    bias = (beta - mean * gamma * inv_std).astype(jnp.float32).reshape(1, C)

    tm = _pick_bn_tile(M, C)
    out = pl.pallas_call(
        functools.partial(_bn_lrelu_kernel, neg_slope=neg_slope),
        out_shape=jax.ShapeDtypeStruct((M, C), jnp.bfloat16),
        grid_spec=pltpu.PrefetchScalarGridSpec(
            num_scalar_prefetch=0,
            grid=(M // tm,),
            in_specs=[
                pl.BlockSpec((tm, C), lambda mt: (mt, 0)),
                pl.BlockSpec((1, C), lambda mt: (0, 0)),
                pl.BlockSpec((1, C), lambda mt: (0, 0)),
            ],
            out_specs=pl.BlockSpec((tm, C), lambda mt: (mt, 0)),
        ),
        compiler_params=pltpu.CompilerParams(
            dimension_semantics=("parallel",),
            vmem_limit_bytes=_VMEM_LIMIT_BYTES),
    )(y_nhwc.reshape(M, C), scale, bias)
    return out.reshape(N, H, W, C)


# ----------------------------------------------------------------------------
# Pallas kernel 3: final 1x1-output conv head (= per-image dot) + sigmoid.
# ----------------------------------------------------------------------------
def _sigmoid_head_kernel(x_ref, w_ref, o_ref):
    prod = x_ref[...].astype(jnp.float32) * w_ref[...].astype(jnp.float32)
    y = jnp.sum(prod, axis=1, keepdims=True)           # [N, 1]
    o_ref[...] = jax.nn.sigmoid(y).astype(o_ref.dtype)


def conv_head_sigmoid(x_nhwc, w_oihw):
    N, H, W, Cin = x_nhwc.shape
    Cout, _, kh, kw = w_oihw.shape
    assert Cout == 1 and (H, W) == (kh, kw)
    K = Cin * kh * kw
    # Full-window valid conv -> flattened NHWC input == (i, j, c) im2col row.
    x2d = x_nhwc.reshape(N, K)
    w_row = jnp.transpose(w_oihw, (0, 2, 3, 1)).reshape(1, K).astype(jnp.bfloat16)
    # TODO(synk): tile over the batch dim if N grows very large; whole-array
    # blocks are fine at DCGAN batch sizes.
    out = pl.pallas_call(                               # whole-array blocks
        _sigmoid_head_kernel,
        out_shape=jax.ShapeDtypeStruct((N, 1), jnp.float32),
    )(x2d, w_row)
    return out.reshape(N, 1, 1, 1)


# ----------------------------------------------------------------------------
# Discriminator forward (feature_map_d = ndf, channel_number = nc)
# ----------------------------------------------------------------------------
def init_params(key, nc, ndf):
    ks = jax.random.split(key, 5)

    def conv_w(k, cout, cin):  # DCGAN-style N(0, 0.02) init
        return 0.02 * jax.random.normal(k, (cout, cin, 4, 4), jnp.float32)

    return {
        "w1": conv_w(ks[0], ndf, nc),
        "w2": conv_w(ks[1], ndf * 2, ndf),
        "g2": jnp.ones((ndf * 2,), jnp.float32),
        "b2": jnp.zeros((ndf * 2,), jnp.float32),
        "w3": conv_w(ks[2], ndf * 4, ndf * 2),
        "g3": jnp.ones((ndf * 4,), jnp.float32),
        "b3": jnp.zeros((ndf * 4,), jnp.float32),
        "w4": conv_w(ks[3], ndf * 8, ndf * 4),
        "g4": jnp.ones((ndf * 8,), jnp.float32),
        "b4": jnp.zeros((ndf * 8,), jnp.float32),
        "w5": conv_w(ks[4], 1, ndf * 8),
    }


def discriminator_forward(params, x_nchw):
    # NHWC + bf16 on the wire; one transpose at the boundary only.
    x = jnp.transpose(x_nchw, (0, 2, 3, 1)).astype(jnp.bfloat16)
    h = conv2d_pallas(x, params["w1"], 2, 1, act="leaky_relu")
    h, m, v = conv2d_pallas(h, params["w2"], 2, 1, want_stats=True)
    h = batchnorm_leaky_relu(h, m, v, params["g2"], params["b2"])
    h, m, v = conv2d_pallas(h, params["w3"], 2, 1, want_stats=True)
    h = batchnorm_leaky_relu(h, m, v, params["g3"], params["b3"])
    h, m, v = conv2d_pallas(h, params["w4"], 2, 1, want_stats=True)
    h = batchnorm_leaky_relu(h, m, v, params["g4"], params["b4"])
    return conv_head_sigmoid(h, params["w5"])          # [N, 1, 1, 1], f32


# ----------------------------------------------------------------------------
# Pure-JAX reference (lax.conv, f32, NCHW) for correctness check
# ----------------------------------------------------------------------------
def ref_forward(params, x_nchw):
    def conv(x, w, stride, pad):
        return lax.conv_general_dilated(
            x, w, (stride, stride), [(pad, pad), (pad, pad)],
            dimension_numbers=("NCHW", "OIHW", "NCHW"),
            precision=lax.Precision.HIGHEST,
        )

    def lrelu(x):
        return jnp.where(x >= 0, x, 0.2 * x)

    def bn(x, g, b, eps=1e-5):
        m = x.mean(axis=(0, 2, 3), keepdims=True)
        v = x.var(axis=(0, 2, 3), keepdims=True)
        return ((x - m) / jnp.sqrt(v + eps) * g.reshape(1, -1, 1, 1)
                + b.reshape(1, -1, 1, 1))

    h = lrelu(conv(x_nchw, params["w1"], 2, 1))
    h = lrelu(bn(conv(h, params["w2"], 2, 1), params["g2"], params["b2"]))
    h = lrelu(bn(conv(h, params["w3"], 2, 1), params["g3"], params["b3"]))
    h = lrelu(bn(conv(h, params["w4"], 2, 1), params["g4"], params["b4"]))
    return jax.nn.sigmoid(conv(h, params["w5"], 1, 0))


if __name__ == "__main__":
    key = jax.random.PRNGKey(0)
    k_param, k_input = jax.random.split(key)

    # 64x64 input as implied by the 5-conv stride-2 stack ending in a 4x4 head.
    batch, nc, ndf, spatial = 2, 3, 8, 64
    params = init_params(k_param, nc, ndf)
    x = jax.random.normal(k_input, (batch, nc, spatial, spatial), jnp.float32)

    out = jax.block_until_ready(jax.jit(discriminator_forward)(params, x))
    assert out.shape == (batch, 1, 1, 1), out.shape
    assert bool(jnp.all(jnp.isfinite(out)))

    ref = jax.block_until_ready(jax.jit(ref_forward)(params, x))
    assert jnp.allclose(out, ref, atol=5e-2, rtol=5e-2), (out, ref)

    print("KERNEL_OK")
</pallas_src>

<mosaic_0001>
module attributes {stable_mosaic.version = 11 : i64} {
  func.func @_conv_matmul_kernel(%arg0: i32, %arg1: memref<2048x48xbf16, #tpu.memory_space<vmem>>, %arg2: memref<48x8xbf16, #tpu.memory_space<vmem>>, %arg3: memref<2048x8xbf16, #tpu.memory_space<vmem>>) attributes {dimension_semantics = [#tpu.dimension_semantics<parallel>], iteration_bounds = array<i64: 1>, scalar_prefetch = 0 : i64, scratch_operands = 0 : i64, tpu.core_type = #tpu.core_type<tc>, window_params = [{transform_indices = @transform_0, window_bounds = array<i64: 2048, 48>}, {pipeline_mode = #tpu.pipeline_mode<synchronous>, transform_indices = @transform_1, window_bounds = array<i64: 48, 8>}, {transform_indices = @transform_2, window_bounds = array<i64: 2048, 8>}]} {
    %c0 = arith.constant 0 : index
    %c0_0 = arith.constant 0 : index
    %0 = vector.load %arg1[%c0, %c0_0] : memref<2048x48xbf16, #tpu.memory_space<vmem>>, vector<2048x48xbf16>
    %c0_1 = arith.constant 0 : index
    %c0_2 = arith.constant 0 : index
    %1 = vector.load %arg2[%c0_1, %c0_2] : memref<48x8xbf16, #tpu.memory_space<vmem>>, vector<48x8xbf16>
    %cst = arith.constant dense<0.000000e+00> : vector<2048x8xf32>
    %2 = tpu.matmul %0, %1, %cst {dimension_numbers = #tpu.dot_dimension_numbers<[1], [0], [0], [1], [0, 0, 1, 1], [], []>} : vector<2048x48xbf16>, vector<48x8xbf16>, vector<2048x8xf32> -> vector<2048x8xf32>
    %cst_3 = arith.constant 0.000000e+00 : f32
    %3 = vector.broadcast %cst_3 : f32 to vector<2048x8xf32>
    %4 = arith.cmpf oge, %2, %3 : vector<2048x8xf32>
    %cst_4 = arith.constant 2.000000e-01 : f32
    %5 = vector.broadcast %cst_4 : f32 to vector<2048x8xf32>
    %6 = arith.mulf %5, %2 : vector<2048x8xf32>
    %7 = arith.select %4, %2, %6 : vector<2048x8xi1>, vector<2048x8xf32>
    %8 = arith.truncf %7 : vector<2048x8xf32> to vector<2048x8xbf16>
    %c0_5 = arith.constant 0 : index
    %c0_6 = arith.constant 0 : index
    %9 = vector.load %arg3[%c0_5, %c0_6] : memref<2048x8xbf16, #tpu.memory_space<vmem>>, vector<2048x8xbf16>
    tpu.vector_store %arg3[%c0_5, %c0_6], %8 {strides = array<i32>} : memref<2048x8xbf16, #tpu.memory_space<vmem>>, vector<2048x8xbf16>,
    return
  }
  func.func @transform_0(%arg0: i32) -> (i32, i32) {
    %c0_i32 = arith.constant 0 : i32
    %c0_i32_0 = arith.constant 0 : i32
    return %arg0, %c0_i32 : i32, i32
  }
  func.func @transform_1(%arg0: i32) -> (i32, i32) {
    %c0_i32 = arith.constant 0 : i32
    %c0_i32_0 = arith.constant 0 : i32
    %c0_i32_1 = arith.constant 0 : i32
    return %c0_i32, %c0_i32_0 : i32, i32
  }
  func.func @transform_2(%arg0: i32) -> (i32, i32) {
    %c0_i32 = arith.constant 0 : i32
    %c0_i32_0 = arith.constant 0 : i32
    return %arg0, %c0_i32 : i32, i32
  }
}

module attributes {stable_mosaic.version = 11 : i64} {
  func.func @_conv_matmul_kernel(%arg0: i32, %arg1: memref<512x128xbf16, #tpu.memory_space<vmem>>, %arg2: memref<128x16xbf16, #tpu.memory_space<vmem>>, %arg3: memref<512x16xbf16, #tpu.memory_space<vmem>>, %arg4: memref<1x2x16xf32, #tpu.memory_space<vmem>>) attributes {dimension_semantics = [#tpu.dimension_semantics<parallel>], iteration_bounds = array<i64: 1>, scalar_prefetch = 0 : i64, scratch_operands = 0 : i64, tpu.core_type = #tpu.core_type<tc>, window_params = [{transform_indices = @transform_0, window_bounds = array<i64: 512, 128>}, {pipeline_mode = #tpu.pipeline_mode<synchronous>, transform_indices = @transform_1, window_bounds = array<i64: 128, 16>}, {transform_indices = @transform_2, window_bounds = array<i64: 512, 16>}, {transform_indices = @transform_3, window_bounds = array<i64: 1, 2, 16>}]} {
    %c0 = arith.constant 0 : index
    %c0_0 = arith.constant 0 : index
    %0 = vector.load %arg1[%c0, %c0_0] : memref<512x128xbf16, #tpu.memory_space<vmem>>, vector<512x128xbf16>
    %c0_1 = arith.constant 0 : index
    %c0_2 = arith.constant 0 : index
    %1 = vector.load %arg2[%c0_1, %c0_2] : memref<128x16xbf16, #tpu.memory_space<vmem>>, vector<128x16xbf16>
    %cst = arith.constant dense<0.000000e+00> : vector<512x16xf32>
    %2 = tpu.matmul %0, %1, %cst {dimension_numbers = #tpu.dot_dimension_numbers<[1], [0], [0], [1], [0, 0, 1, 1], [], []>} : vector<512x128xbf16>, vector<128x16xbf16>, vector<512x16xf32> -> vector<512x16xf32>
    %cst_3 = arith.constant dense<0.000000e+00> : vector<16xf32>
    %3 = vector.multi_reduction <add>, %2, %cst_3 [0] : vector<512x16xf32> to vector<16xf32>
    %4 = vector.shape_cast %3 : vector<16xf32> to vector<1x16xf32>
    %5 = arith.mulf %2, %2 : vector<512x16xf32>
    %cst_4 = arith.constant dense<0.000000e+00> : vector<16xf32>
    %6 = vector.multi_reduction <add>, %5, %cst_4 [0] : vector<512x16xf32> to vector<16xf32>
    %7 = vector.shape_cast %6 : vector<16xf32> to vector<1x16xf32>
    %8 = tpu.concatenate %4, %7 in 0 : vector<1x16xf32>, vector<1x16xf32> -> vector<2x16xf32>
    %c0_5 = arith.constant 0 : index
    %c0_6 = arith.constant 0 : index
    %c0_7 = arith.constant 0 : index
    %9 = vector.load %arg4[%c0_5, %c0_6, %c0_7] : memref<1x2x16xf32, #tpu.memory_space<vmem>>, vector<1x2x16xf32>
    %10 = vector.shape_cast %9 : vector<1x2x16xf32> to vector<2x16xf32>
    %11 = vector.shape_cast %8 : vector<2x16xf32> to vector<1x2x16xf32>
    tpu.vector_store %arg4[%c0_5, %c0_6, %c0_7], %11 {strides = array<i32>} : memref<1x2x16xf32, #tpu.memory_space<vmem>>, vector<1x2x16xf32>,
    %12 = arith.truncf %2 : vector<512x16xf32> to vector<512x16xbf16>
    %c0_8 = arith.constant 0 : index
    %c0_9 = arith.constant 0 : index
    %13 = vector.load %arg3[%c0_8, %c0_9] : memref<512x16xbf16, #tpu.memory_space<vmem>>, vector<512x16xbf16>
    tpu.vector_store %arg3[%c0_8, %c0_9], %12 {strides = array<i32>} : memref<512x16xbf16, #tpu.memory_space<vmem>>, vector<512x16xbf16>,
    return
  }
  func.func @transform_0(%arg0: i32) -> (i32, i32) {
    %c0_i32 = arith.constant 0 : i32
    %c0_i32_0 = arith.constant 0 : i32
    return %arg0, %c0_i32 : i32, i32
  }
  func.func @transform_1(%arg0: i32) -> (i32, i32) {
    %c0_i32 = arith.constant 0 : i32
    %c0_i32_0 = arith.constant 0 : i32
    %c0_i32_1 = arith.constant 0 : i32
    return %c0_i32, %c0_i32_0 : i32, i32
  }
  func.func @transform_2(%arg0: i32) -> (i32, i32) {
    %c0_i32 = arith.constant 0 : i32
    %c0_i32_0 = arith.constant 0 : i32
    return %arg0, %c0_i32 : i32, i32
  }
  func.func @transform_3(%arg0: i32) -> (i32, i32, i32) {
    %c0_i32 = arith.constant 0 : i32
    %c0_i32_0 = arith.constant 0 : i32
    %c0_i32_1 = arith.constant 0 : i32
    return %arg0, %c0_i32, %c0_i32_0 : i32, i32, i32
  }
}

module attributes {stable_mosaic.version = 11 : i64} {
  func.func @_bn_lrelu_kernel(%arg0: i32, %arg1: memref<512x16xbf16, #tpu.memory_space<vmem>>, %arg2: memref<1x16xf32, #tpu.memory_space<vmem>>, %arg3: memref<1x16xf32, #tpu.memory_space<vmem>>, %arg4: memref<512x16xbf16, #tpu.memory_space<vmem>>) attributes {dimension_semantics = [#tpu.dimension_semantics<parallel>], iteration_bounds = array<i64: 1>, scalar_prefetch = 0 : i64, scratch_operands = 0 : i64, tpu.core_type = #tpu.core_type<tc>, window_params = [{transform_indices = @transform_0, window_bounds = array<i64: 512, 16>}, {pipeline_mode = #tpu.pipeline_mode<synchronous>, transform_indices = @transform_1, window_bounds = array<i64: 1, 16>}, {pipeline_mode = #tpu.pipeline_mode<synchronous>, transform_indices = @transform_2, window_bounds = array<i64: 1, 16>}, {transform_indices = @transform_3, window_bounds = array<i64: 512, 16>}]} {
    %c0 = arith.constant 0 : index
    %c0_0 = arith.constant 0 : index
    %0 = vector.load %arg1[%c0, %c0_0] : memref<512x16xbf16, #tpu.memory_space<vmem>>, vector<512x16xbf16>
    %1 = arith.extf %0 : vector<512x16xbf16> to vector<512x16xf32>
    %c0_1 = arith.constant 0 : index
    %c0_2 = arith.constant 0 : index
    %2 = vector.load %arg2[%c0_1, %c0_2] : memref<1x16xf32, #tpu.memory_space<vmem>>, vector<1x16xf32>
    %3 = vector.broadcast %2 : vector<1x16xf32> to vector<512x16xf32>
    %4 = arith.mulf %1, %3 : vector<512x16xf32>
    %c0_3 = arith.constant 0 : index
    %c0_4 = arith.constant 0 : index
    %5 = vector.load %arg3[%c0_3, %c0_4] : memref<1x16xf32, #tpu.memory_space<vmem>>, vector<1x16xf32>
    %6 = vector.broadcast %5 : vector<1x16xf32> to vector<512x16xf32>
    %7 = arith.addf %4, %6 : vector<512x16xf32>
    %cst = arith.constant 0.000000e+00 : f32
    %8 = vector.broadcast %cst : f32 to vector<512x16xf32>
    %9 = arith.cmpf oge, %7, %8 : vector<512x16xf32>
    %cst_5 = arith.constant 2.000000e-01 : f32
    %10 = vector.broadcast %cst_5 : f32 to vector<512x16xf32>
    %11 = arith.mulf %10, %7 : vector<512x16xf32>
    %12 = arith.select %9, %7, %11 : vector<512x16xi1>, vector<512x16xf32>
    %13 = arith.truncf %12 : vector<512x16xf32> to vector<512x16xbf16>
    %c0_6 = arith.constant 0 : index
    %c0_7 = arith.constant 0 : index
    %14 = vector.load %arg4[%c0_6, %c0_7] : memref<512x16xbf16, #tpu.memory_space<vmem>>, vector<512x16xbf16>
    tpu.vector_store %arg4[%c0_6, %c0_7], %13 {strides = array<i32>} : memref<512x16xbf16, #tpu.memory_space<vmem>>, vector<512x16xbf16>,
    return
  }
  func.func @transform_0(%arg0: i32) -> (i32, i32) {
    %c0_i32 = arith.constant 0 : i32
    %c0_i32_0 = arith.constant 0 : i32
    return %arg0, %c0_i32 : i32, i32
  }
  func.func @transform_1(%arg0: i32) -> (i32, i32) {
    %c0_i32 = arith.constant 0 : i32
    %c0_i32_0 = arith.constant 0 : i32
    %c0_i32_1 = arith.constant 0 : i32
    return %c0_i32, %c0_i32_0 : i32, i32
  }
  func.func @transform_2(%arg0: i32) -> (i32, i32) {
    %c0_i32 = arith.constant 0 : i32
    %c0_i32_0 = arith.constant 0 : i32
    %c0_i32_1 = arith.constant 0 : i32
    return %c0_i32, %c0_i32_0 : i32, i32
  }
  func.func @transform_3(%arg0: i32) -> (i32, i32) {
    %c0_i32 = arith.constant 0 : i32
    %c0_i32_0 = arith.constant 0 : i32
    return %arg0, %c0_i32 : i32, i32
  }
}

module attributes {stable_mosaic.version = 11 : i64} {
  func.func @_conv_matmul_kernel(%arg0: i32, %arg1: memref<128x256xbf16, #tpu.memory_space<vmem>>, %arg2: memref<256x32xbf16, #tpu.memory_space<vmem>>, %arg3: memref<128x32xbf16, #tpu.memory_space<vmem>>, %arg4: memref<1x2x32xf32, #tpu.memory_space<vmem>>) attributes {dimension_semantics = [#tpu.dimension_semantics<parallel>], iteration_bounds = array<i64: 1>, scalar_prefetch = 0 : i64, scratch_operands = 0 : i64, tpu.core_type = #tpu.core_type<tc>, window_params = [{transform_indices = @transform_0, window_bounds = array<i64: 128, 256>}, {pipeline_mode = #tpu.pipeline_mode<synchronous>, transform_indices = @transform_1, window_bounds = array<i64: 256, 32>}, {transform_indices = @transform_2, window_bounds = array<i64: 128, 32>}, {transform_indices = @transform_3, window_bounds = array<i64: 1, 2, 32>}]} {
    %c0 = arith.constant 0 : index
    %c0_0 = arith.constant 0 : index
    %0 = vector.load %arg1[%c0, %c0_0] : memref<128x256xbf16, #tpu.memory_space<vmem>>, vector<128x256xbf16>
    %c0_1 = arith.constant 0 : index
    %c0_2 = arith.constant 0 : index
    %1 = vector.load %arg2[%c0_1, %c0_2] : memref<256x32xbf16, #tpu.memory_space<vmem>>, vector<256x32xbf16>
    %cst = arith.constant dense<0.000000e+00> : vector<128x32xf32>
    %2 = tpu.matmul %0, %1, %cst {dimension_numbers = #tpu.dot_dimension_numbers<[1], [0], [0], [1], [0, 0, 1, 1], [], []>} : vector<128x256xbf16>, vector<256x32xbf16>, vector<128x32xf32> -> vector<128x32xf32>
    %cst_3 = arith.constant dense<0.000000e+00> : vector<32xf32>
    %3 = vector.multi_reduction <add>, %2, %cst_3 [0] : vector<128x32xf32> to vector<32xf32>
    %4 = vector.shape_cast %3 : vector<32xf32> to vector<1x32xf32>
    %5 = arith.mulf %2, %2 : vector<128x32xf32>
    %cst_4 = arith.constant dense<0.000000e+00> : vector<32xf32>
    %6 = vector.multi_reduction <add>, %5, %cst_4 [0] : vector<128x32xf32> to vector<32xf32>
    %7 = vector.shape_cast %6 : vector<32xf32> to vector<1x32xf32>
    %8 = tpu.concatenate %4, %7 in 0 : vector<1x32xf32>, vector<1x32xf32> -> vector<2x32xf32>
    %c0_5 = arith.constant 0 : index
    %c0_6 = arith.constant 0 : index
    %c0_7 = arith.constant 0 : index
    %9 = vector.load %arg4[%c0_5, %c0_6, %c0_7] : memref<1x2x32xf32, #tpu.memory_space<vmem>>, vector<1x2x32xf32>
    %10 = vector.shape_cast %9 : vector<1x2x32xf32> to vector<2x32xf32>
    %11 = vector.shape_cast %8 : vector<2x32xf32> to vector<1x2x32xf32>
    tpu.vector_store %arg4[%c0_5, %c0_6, %c0_7], %11 {strides = array<i32>} : memref<1x2x32xf32, #tpu.memory_space<vmem>>, vector<1x2x32xf32>,
    %12 = arith.truncf %2 : vector<128x32xf32> to vector<128x32xbf16>
    %c0_8 = arith.constant 0 : index
    %c0_9 = arith.constant 0 : index
    %13 = vector.load %arg3[%c0_8, %c0_9] : memref<128x32xbf16, #tpu.memory_space<vmem>>, vector<128x32xbf16>
    tpu.vector_store %arg3[%c0_8, %c0_9], %12 {strides = array<i32>} : memref<128x32xbf16, #tpu.memory_space<vmem>>, vector<128x32xbf16>,
    return
  }
  func.func @transform_0(%arg0: i32) -> (i32, i32) {
    %c0_i32 = arith.constant 0 : i32
    %c0_i32_0 = arith.constant 0 : i32
    return %arg0, %c0_i32 : i32, i32
  }
  func.func @transform_1(%arg0: i32) -> (i32, i32) {
    %c0_i32 = arith.constant 0 : i32
    %c0_i32_0 = arith.constant 0 : i32
    %c0_i32_1 = arith.constant 0 : i32
    return %c0_i32, %c0_i32_0 : i32, i32
  }
  func.func @transform_2(%arg0: i32) -> (i32, i32) {
    %c0_i32 = arith.constant 0 : i32
    %c0_i32_0 = arith.constant 0 : i32
    return %arg0, %c0_i32 : i32, i32
  }
  func.func @transform_3(%arg0: i32) -> (i32, i32, i32) {
    %c0_i32 = arith.constant 0 : i32
    %c0_i32_0 = arith.constant 0 : i32
    %c0_i32_1 = arith.constant 0 : i32
    return %arg0, %c0_i32, %c0_i32_0 : i32, i32, i32
  }
}

module attributes {stable_mosaic.version = 11 : i64} {
  func.func @_bn_lrelu_kernel(%arg0: i32, %arg1: memref<128x32xbf16, #tpu.memory_space<vmem>>, %arg2: memref<1x32xf32, #tpu.memory_space<vmem>>, %arg3: memref<1x32xf32, #tpu.memory_space<vmem>>, %arg4: memref<128x32xbf16, #tpu.memory_space<vmem>>) attributes {dimension_semantics = [#tpu.dimension_semantics<parallel>], iteration_bounds = array<i64: 1>, scalar_prefetch = 0 : i64, scratch_operands = 0 : i64, tpu.core_type = #tpu.core_type<tc>, window_params = [{transform_indices = @transform_0, window_bounds = array<i64: 128, 32>}, {pipeline_mode = #tpu.pipeline_mode<synchronous>, transform_indices = @transform_1, window_bounds = array<i64: 1, 32>}, {pipeline_mode = #tpu.pipeline_mode<synchronous>, transform_indices = @transform_2, window_bounds = array<i64: 1, 32>}, {transform_indices = @transform_3, window_bounds = array<i64: 128, 32>}]} {
    %c0 = arith.constant 0 : index
    %c0_0 = arith.constant 0 : index
    %0 = vector.load %arg1[%c0, %c0_0] : memref<128x32xbf16, #tpu.memory_space<vmem>>, vector<128x32xbf16>
    %1 = arith.extf %0 : vector<128x32xbf16> to vector<128x32xf32>
    %c0_1 = arith.constant 0 : index
    %c0_2 = arith.constant 0 : index
    %2 = vector.load %arg2[%c0_1, %c0_2] : memref<1x32xf32, #tpu.memory_space<vmem>>, vector<1x32xf32>
    %3 = vector.broadcast %2 : vector<1x32xf32> to vector<128x32xf32>
    %4 = arith.mulf %1, %3 : vector<128x32xf32>
    %c0_3 = arith.constant 0 : index
    %c0_4 = arith.constant 0 : index
    %5 = vector.load %arg3[%c0_3, %c0_4] : memref<1x32xf32, #tpu.memory_space<vmem>>, vector<1x32xf32>
    %6 = vector.broadcast %5 : vector<1x32xf32> to vector<128x32xf32>
    %7 = arith.addf %4, %6 : vector<128x32xf32>
    %cst = arith.constant 0.000000e+00 : f32
    %8 = vector.broadcast %cst : f32 to vector<128x32xf32>
    %9 = arith.cmpf oge, %7, %8 : vector<128x32xf32>
    %cst_5 = arith.constant 2.000000e-01 : f32
    %10 = vector.broadcast %cst_5 : f32 to vector<128x32xf32>
    %11 = arith.mulf %10, %7 : vector<128x32xf32>
    %12 = arith.select %9, %7, %11 : vector<128x32xi1>, vector<128x32xf32>
    %13 = arith.truncf %12 : vector<128x32xf32> to vector<128x32xbf16>
    %c0_6 = arith.constant 0 : index
    %c0_7 = arith.constant 0 : index
    %14 = vector.load %arg4[%c0_6, %c0_7] : memref<128x32xbf16, #tpu.memory_space<vmem>>, vector<128x32xbf16>
    tpu.vector_store %arg4[%c0_6, %c0_7], %13 {strides = array<i32>} : memref<128x32xbf16, #tpu.memory_space<vmem>>, vector<128x32xbf16>,
    return
  }
  func.func @transform_0(%arg0: i32) -> (i32, i32) {
    %c0_i32 = arith.constant 0 : i32
    %c0_i32_0 = arith.constant 0 : i32
    return %arg0, %c0_i32 : i32, i32
  }
  func.func @transform_1(%arg0: i32) -> (i32, i32) {
    %c0_i32 = arith.constant 0 : i32
    %c0_i32_0 = arith.constant 0 : i32
    %c0_i32_1 = arith.constant 0 : i32
    return %c0_i32, %c0_i32_0 : i32, i32
  }
  func.func @transform_2(%arg0: i32) -> (i32, i32) {
    %c0_i32 = arith.constant 0 : i32
    %c0_i32_0 = arith.constant 0 : i32
    %c0_i32_1 = arith.constant 0 : i32
    return %c0_i32, %c0_i32_0 : i32, i32
  }
  func.func @transform_3(%arg0: i32) -> (i32, i32) {
    %c0_i32 = arith.constant 0 : i32
    %c0_i32_0 = arith.constant 0 : i32
    return %arg0, %c0_i32 : i32, i32
  }
}

module attributes {stable_mosaic.version = 11 : i64} {
  func.func @_conv_matmul_kernel(%arg0: i32, %arg1: memref<32x512xbf16, #tpu.memory_space<vmem>>, %arg2: memref<512x64xbf16, #tpu.memory_space<vmem>>, %arg3: memref<32x64xbf16, #tpu.memory_space<vmem>>, %arg4: memref<1x2x64xf32, #tpu.memory_space<vmem>>) attributes {dimension_semantics = [#tpu.dimension_semantics<parallel>], iteration_bounds = array<i64: 1>, scalar_prefetch = 0 : i64, scratch_operands = 0 : i64, tpu.core_type = #tpu.core_type<tc>, window_params = [{transform_indices = @transform_0, window_bounds = array<i64: 32, 512>}, {pipeline_mode = #tpu.pipeline_mode<synchronous>, transform_indices = @transform_1, window_bounds = array<i64: 512, 64>}, {transform_indices = @transform_2, window_bounds = array<i64: 32, 64>}, {transform_indices = @transform_3, window_bounds = array<i64: 1, 2, 64>}]} {
    %c0 = arith.constant 0 : index
    %c0_0 = arith.constant 0 : index
    %0 = vector.load %arg1[%c0, %c0_0] : memref<32x512xbf16, #tpu.memory_space<vmem>>, vector<32x512xbf16>
    %c0_1 = arith.constant 0 : index
    %c0_2 = arith.constant 0 : index
    %1 = vector.load %arg2[%c0_1, %c0_2] : memref<512x64xbf16, #tpu.memory_space<vmem>>, vector<512x64xbf16>
    %cst = arith.constant dense<0.000000e+00> : vector<32x64xf32>
    %2 = tpu.matmul %0, %1, %cst {dimension_numbers = #tpu.dot_dimension_numbers<[1], [0], [0], [1], [0, 0, 1, 1], [], []>} : vector<32x512xbf16>, vector<512x64xbf16>, vector<32x64xf32> -> vector<32x64xf32>
    %cst_3 = arith.constant dense<0.000000e+00> : vector<64xf32>
    %3 = vector.multi_reduction <add>, %2, %cst_3 [0] : vector<32x64xf32> to vector<64xf32>
    %4 = vector.shape_cast %3 : vector<64xf32> to vector<1x64xf32>
    %5 = arith.mulf %2, %2 : vector<32x64xf32>
    %cst_4 = arith.constant dense<0.000000e+00> : vector<64xf32>
    %6 = vector.multi_reduction <add>, %5, %cst_4 [0] : vector<32x64xf32> to vector<64xf32>
    %7 = vector.shape_cast %6 : vector<64xf32> to vector<1x64xf32>
    %8 = tpu.concatenate %4, %7 in 0 : vector<1x64xf32>, vector<1x64xf32> -> vector<2x64xf32>
    %c0_5 = arith.constant 0 : index
    %c0_6 = arith.constant 0 : index
    %c0_7 = arith.constant 0 : index
    %9 = vector.load %arg4[%c0_5, %c0_6, %c0_7] : memref<1x2x64xf32, #tpu.memory_space<vmem>>, vector<1x2x64xf32>
    %10 = vector.shape_cast %9 : vector<1x2x64xf32> to vector<2x64xf32>
    %11 = vector.shape_cast %8 : vector<2x64xf32> to vector<1x2x64xf32>
    tpu.vector_store %arg4[%c0_5, %c0_6, %c0_7], %11 {strides = array<i32>} : memref<1x2x64xf32, #tpu.memory_space<vmem>>, vector<1x2x64xf32>,
    %12 = arith.truncf %2 : vector<32x64xf32> to vector<32x64xbf16>
    %c0_8 = arith.constant 0 : index
    %c0_9 = arith.constant 0 : index
    %13 = vector.load %arg3[%c0_8, %c0_9] : memref<32x64xbf16, #tpu.memory_space<vmem>>, vector<32x64xbf16>
    tpu.vector_store %arg3[%c0_8, %c0_9], %12 {strides = array<i32>} : memref<32x64xbf16, #tpu.memory_space<vmem>>, vector<32x64xbf16>,
    return
  }
  func.func @transform_0(%arg0: i32) -> (i32, i32) {
    %c0_i32 = arith.constant 0 : i32
    %c0_i32_0 = arith.constant 0 : i32
    return %arg0, %c0_i32 : i32, i32
  }
  func.func @transform_1(%arg0: i32) -> (i32, i32) {
    %c0_i32 = arith.constant 0 : i32
    %c0_i32_0 = arith.constant 0 : i32
    %c0_i32_1 = arith.constant 0 : i32
    return %c0_i32, %c0_i32_0 : i32, i32
  }
  func.func @transform_2(%arg0: i32) -> (i32, i32) {
    %c0_i32 = arith.constant 0 : i32
    %c0_i32_0 = arith.constant 0 : i32
    return %arg0, %c0_i32 : i32, i32
  }
  func.func @transform_3(%arg0: i32) -> (i32, i32, i32) {
    %c0_i32 = arith.constant 0 : i32
    %c0_i32_0 = arith.constant 0 : i32
    %c0_i32_1 = arith.constant 0 : i32
    return %arg0, %c0_i32, %c0_i32_0 : i32, i32, i32
  }
}

module attributes {stable_mosaic.version = 11 : i64} {
  func.func @_bn_lrelu_kernel(%arg0: i32, %arg1: memref<32x64xbf16, #tpu.memory_space<vmem>>, %arg2: memref<1x64xf32, #tpu.memory_space<vmem>>, %arg3: memref<1x64xf32, #tpu.memory_space<vmem>>, %arg4: memref<32x64xbf16, #tpu.memory_space<vmem>>) attributes {dimension_semantics = [#tpu.dimension_semantics<parallel>], iteration_bounds = array<i64: 1>, scalar_prefetch = 0 : i64, scratch_operands = 0 : i64, tpu.core_type = #tpu.core_type<tc>, window_params = [{transform_indices = @transform_0, window_bounds = array<i64: 32, 64>}, {pipeline_mode = #tpu.pipeline_mode<synchronous>, transform_indices = @transform_1, window_bounds = array<i64: 1, 64>}, {pipeline_mode = #tpu.pipeline_mode<synchronous>, transform_indices = @transform_2, window_bounds = array<i64: 1, 64>}, {transform_indices = @transform_3, window_bounds = array<i64: 32, 64>}]} {
    %c0 = arith.constant 0 : index
    %c0_0 = arith.constant 0 : index
    %0 = vector.load %arg1[%c0, %c0_0] : memref<32x64xbf16, #tpu.memory_space<vmem>>, vector<32x64xbf16>
    %1 = arith.extf %0 : vector<32x64xbf16> to vector<32x64xf32>
    %c0_1 = arith.constant 0 : index
    %c0_2 = arith.constant 0 : index
    %2 = vector.load %arg2[%c0_1, %c0_2] : memref<1x64xf32, #tpu.memory_space<vmem>>, vector<1x64xf32>
    %3 = vector.broadcast %2 : vector<1x64xf32> to vector<32x64xf32>
    %4 = arith.mulf %1, %3 : vector<32x64xf32>
    %c0_3 = arith.constant 0 : index
    %c0_4 = arith.constant 0 : index
    %5 = vector.load %arg3[%c0_3, %c0_4] : memref<1x64xf32, #tpu.memory_space<vmem>>, vector<1x64xf32>
    %6 = vector.broadcast %5 : vector<1x64xf32> to vector<32x64xf32>
    %7 = arith.addf %4, %6 : vector<32x64xf32>
    %cst = arith.constant 0.000000e+00 : f32
    %8 = vector.broadcast %cst : f32 to vector<32x64xf32>
    %9 = arith.cmpf oge, %7, %8 : vector<32x64xf32>
    %cst_5 = arith.constant 2.000000e-01 : f32
    %10 = vector.broadcast %cst_5 : f32 to vector<32x64xf32>
    %11 = arith.mulf %10, %7 : vector<32x64xf32>
    %12 = arith.select %9, %7, %11 : vector<32x64xi1>, vector<32x64xf32>
    %13 = arith.truncf %12 : vector<32x64xf32> to vector<32x64xbf16>
    %c0_6 = arith.constant 0 : index
    %c0_7 = arith.constant 0 : index
    %14 = vector.load %arg4[%c0_6, %c0_7] : memref<32x64xbf16, #tpu.memory_space<vmem>>, vector<32x64xbf16>
    tpu.vector_store %arg4[%c0_6, %c0_7], %13 {strides = array<i32>} : memref<32x64xbf16, #tpu.memory_space<vmem>>, vector<32x64xbf16>,
    return
  }
  func.func @transform_0(%arg0: i32) -> (i32, i32) {
    %c0_i32 = arith.constant 0 : i32
    %c0_i32_0 = arith.constant 0 : i32
    return %arg0, %c0_i32 : i32, i32
  }
  func.func @transform_1(%arg0: i32) -> (i32, i32) {
    %c0_i32 = arith.constant 0 : i32
    %c0_i32_0 = arith.constant 0 : i32
    %c0_i32_1 = arith.constant 0 : i32
    return %c0_i32, %c0_i32_0 : i32, i32
  }
  func.func @transform_2(%arg0: i32) -> (i32, i32) {
    %c0_i32 = arith.constant 0 : i32
    %c0_i32_0 = arith.constant 0 : i32
    %c0_i32_1 = arith.constant 0 : i32
    return %c0_i32, %c0_i32_0 : i32, i32
  }
  func.func @transform_3(%arg0: i32) -> (i32, i32) {
    %c0_i32 = arith.constant 0 : i32
    %c0_i32_0 = arith.constant 0 : i32
    return %arg0, %c0_i32 : i32, i32
  }
}

module attributes {stable_mosaic.version = 11 : i64} {
  func.func @_sigmoid_head_kernel(%arg0: memref<2x1024xbf16, #tpu.memory_space<vmem>>, %arg1: memref<1x1024xbf16, #tpu.memory_space<vmem>>, %arg2: memref<2x1xf32, #tpu.memory_space<vmem>>) attributes {dimension_semantics = [], scalar_prefetch = 0 : i64, scratch_operands = 0 : i64, tpu.core_type = #tpu.core_type<tc>} {
    %c0 = arith.constant 0 : index
    %c0_0 = arith.constant 0 : index
    %0 = vector.load %arg0[%c0, %c0_0] : memref<2x1024xbf16, #tpu.memory_space<vmem>>, vector<2x1024xbf16>
    %1 = arith.extf %0 : vector<2x1024xbf16> to vector<2x1024xf32>
    %c0_1 = arith.constant 0 : index
    %c0_2 = arith.constant 0 : index
    %2 = vector.load %arg1[%c0_1, %c0_2] : memref<1x1024xbf16, #tpu.memory_space<vmem>>, vector<1x1024xbf16>
    %3 = arith.extf %2 : vector<1x1024xbf16> to vector<1x1024xf32>
    %4 = vector.broadcast %3 : vector<1x1024xf32> to vector<2x1024xf32>
    %5 = arith.mulf %1, %4 : vector<2x1024xf32>
    %cst = arith.constant dense<0.000000e+00> : vector<2xf32>
    %6 = vector.multi_reduction <add>, %5, %cst [1] : vector<2x1024xf32> to vector<2xf32>
    %7 = vector.shape_cast %6 : vector<2xf32> to vector<2x1xf32>
    %8 = arith.negf %7 : vector<2x1xf32>
    %9 = math.exp %8 : vector<2x1xf32>
    %cst_3 = arith.constant 1.000000e+00 : f32
    %10 = vector.broadcast %cst_3 : f32 to vector<2x1xf32>
    %11 = arith.addf %10, %9 : vector<2x1xf32>
    %12 = arith.divf %10, %11 : vector<2x1xf32>
    %c0_4 = arith.constant 0 : index
    %c0_5 = arith.constant 0 : index
    %13 = vector.load %arg2[%c0_4, %c0_5] : memref<2x1xf32, #tpu.memory_space<vmem>>, vector<2x1xf32>
    tpu.vector_store %arg2[%c0_4, %c0_5], %12 {strides = array<i32>} : memref<2x1xf32, #tpu.memory_space<vmem>>, vector<2x1xf32>,
    return
  }
}

</mosaic_0001>

<llo_original>
// kernel: discriminator_forward.9
$region0: #{discriminator_forward.9}
  #allocation0 [shape = 'u32[]', space=smem, size = 0x4, offset = 0x4, fixed_abs, tag = 'smem constant byte address 0x4 - core index']
  #allocation1 [shape = 'u32[144,128]{1,0:T(1,128)}', space=vmem, size = 0x12000, scoped, tag = 'internal scratch']
  %s0 = inlined_call_operand.vmem [shape: bf16[512,128], index: 0, kind: input, shape index: {}]
  %s1 = inlined_call_operand.vmem [shape: bf16[128,16], index: 1, kind: input, shape index: {}]
  %s2 = inlined_call_operand.vmem [shape: bf16[512,16], index: 2, kind: output, shape index: {0}]
  %s3 = inlined_call_operand.vmem [shape: f32[1,2,16], index: 3, kind: output, shape index: {1}]
  %4 = xla_tuple %s2, %s3
  %s5 = sld [smem:[#allocation0]]
  $region26: #{discriminator_forward.9} parent=0
    _
  %s7 = ssub.s32 1, %s5
  %s8 = scalar_select 0, %s7, %s5
  // Predicated region
  $region2: #{discriminator_forward.9} parent=0 // pred_check
    _
  $region3: #{discriminator_forward.9} parent=0 // pred_check_branch
    %10 = sbr.rel (0) target = $region5
  $region4: #{discriminator_forward.9} parent=0 // pred_region
    _
  $region5: #{discriminator_forward.9} parent=0 // pred_fallthru
    _
  // Predicated region
  $region6: #{discriminator_forward.9} parent=0 // pred_check
    _
  $region7: #{discriminator_forward.9} parent=0 // pred_check_branch
    %12 = sbr.rel (0) target = $region9
  $region8: #{discriminator_forward.9} parent=0 // pred_region
    _
  $region9: #{discriminator_forward.9} parent=0 // pred_fallthru
    _
  %v14 = vld [vmem:[%s0] sm:$0xf]
  %v15 = vld [vmem:[%s0 + $0x4] sm:$0xf]
  %v16 = vld [vmem:[%s0 + $0x8] sm:$0xf]
  %v17 = vld [vmem:[%s0 + $0xc] sm:$0xf]
  %v18 = vld [vmem:[%s0 + $0x10] sm:$0xf]
  %v19 = vld [vmem:[%s0 + $0x14] sm:$0xf]
  %v20 = vld [vmem:[%s0 + $0x18] sm:$0xf]
  %v21 = vld [vmem:[%s0 + $0x1c] sm:$0xf]
  %v22 = vld [vmem:[%s0 + $0x20] sm:$0xf]
  %v23 = vld [vmem:[%s0 + $0x24] sm:$0xf]
  %v24 = vld [vmem:[%s0 + $0x28] sm:$0xf]
  %v25 = vld [vmem:[%s0 + $0x2c] sm:$0xf]
  %v26 = vld [vmem:[%s0 + $0x30] sm:$0xf]
  %v27 = vld [vmem:[%s0 + $0x34] sm:$0xf]
  %v28 = vld [vmem:[%s0 + $0x38] sm:$0xf]
  %v29 = vld [vmem:[%s0 + $0x3c] sm:$0xf]
  %v30 = vld [vmem:[%s0 + $0x40] sm:$0xf]
  %v31 = vld [vmem:[%s0 + $0x44] sm:$0xf]
  %v32 = vld [vmem:[%s0 + $0x48] sm:$0xf]
  %v33 = vld [vmem:[%s0 + $0x4c] sm:$0xf]
  %v34 = vld [vmem:[%s0 + $0x50] sm:$0xf]
  %v35 = vld [vmem:[%s0 + $0x54] sm:$0xf]
  %v36 = vld [vmem:[%s0 + $0x58] sm:$0xf]
  %v37 = vld [vmem:[%s0 + $0x5c] sm:$0xf]
  %v38 = vld [vmem:[%s0 + $0x60] sm:$0xf]
  %v39 = vld [vmem:[%s0 + $0x64] sm:$0xf]
  %v40 = vld [vmem:[%s0 + $0x68] sm:$0xf]
  %v41 = vld [vmem:[%s0 + $0x6c] sm:$0xf]
  %v42 = vld [vmem:[%s0 + $0x70] sm:$0xf]
  %v43 = vld [vmem:[%s0 + $0x74] sm:$0xf]
  %v44 = vld [vmem:[%s0 + $0x78] sm:$0xf]
  %v45 = vld [vmem:[%s0 + $0x7c] sm:$0xf]
  %v46 = vld [vmem:[%s0 + $0x80] sm:$0xf]
  %v47 = vld [vmem:[%s0 + $0x84] sm:$0xf]
  %v48 = vld [vmem:[%s0 + $0x88] sm:$0xf]
  %v49 = vld [vmem:[%s0 + $0x8c] sm:$0xf]
  %v50 = vld [vmem:[%s0 + $0x90] sm:$0xf]
  %v51 = vld [vmem:[%s0 + $0x94] sm:$0xf]
  %v52 = vld [vmem:[%s0 + $0x98] sm:$0xf]
  %v53 = vld [vmem:[%s0 + $0x9c] sm:$0xf]
  %v54 = vld [vmem:[%s0 + $0xa0] sm:$0xf]
  %v55 = vld [vmem:[%s0 + $0xa4] sm:$0xf]
  %v56 = vld [vmem:[%s0 + $0xa8] sm:$0xf]
  %v57 = vld [vmem:[%s0 + $0xac] sm:$0xf]
  %v58 = vld [vmem:[%s0 + $0xb0] sm:$0xf]
  %v59 = vld [vmem:[%s0 + $0xb4] sm:$0xf]
  %v60 = vld [vmem:[%s0 + $0xb8] sm:$0xf]
  %v61 = vld [vmem:[%s0 + $0xbc] sm:$0xf]
  %v62 = vld [vmem:[%s0 + $0xc0] sm:$0xf]
  %v63 = vld [vmem:[%s0 + $0xc4] sm:$0xf]
  %v64 = vld [vmem:[%s0 + $0xc8] sm:$0xf]
  %v65 = vld [vmem:[%s0 + $0xcc] sm:$0xf]
  %v66 = vld [vmem:[%s0 + $0xd0] sm:$0xf]
  %v67 = vld [vmem:[%s0 + $0xd4] sm:$0xf]
  %v68 = vld [vmem:[%s0 + $0xd8] sm:$0xf]
  %v69 = vld [vmem:[%s0 + $0xdc] sm:$0xf]
  %v70 = vld [vmem:[%s0 + $0xe0] sm:$0xf]
  %v71 = vld [vmem:[%s0 + $0xe4] sm:$0xf]
  %v72 = vld [vmem:[%s0 + $0xe8] sm:$0xf]
  %v73 = vld [vmem:[%s0 + $0xec] sm:$0xf]
  %v74 = vld [vmem:[%s0 + $0xf0] sm:$0xf]
  %v75 = vld [vmem:[%s0 + $0xf4] sm:$0xf]
  %v76 = vld [vmem:[%s0 + $0xf8] sm:$0xf]
  %v77 = vld [vmem:[%s0 + $0xfc] sm:$0xf]
  %v78 = vld [vmem:[%s1] sm:$0xf]
  %v79 = vld [vmem:[%s1 + $0x4] sm:$0xf]
  %v80 = vld [vmem:[%s1 + $0x8] sm:$0xf]
  %v81 = vld [vmem:[%s1 + $0xc] sm:$0xf]
  %v82 = vld [vmem:[%s1 + $0x10] sm:$0xf]
  %v83 = vld [vmem:[%s1 + $0x14] sm:$0xf]
  %v84 = vld [vmem:[%s1 + $0x18] sm:$0xf]
  %v85 = vld [vmem:[%s1 + $0x1c] sm:$0xf]
  %v86 = vld [vmem:[%s1 + $0x20] sm:$0xf]
  %v87 = vld [vmem:[%s1 + $0x24] sm:$0xf]
  %v88 = vld [vmem:[%s1 + $0x28] sm:$0xf]
  %v89 = vld [vmem:[%s1 + $0x2c] sm:$0xf]
  %v90 = vld [vmem:[%s1 + $0x30] sm:$0xf]
  %v91 = vld [vmem:[%s1 + $0x34] sm:$0xf]
  %v92 = vld [vmem:[%s1 + $0x38] sm:$0xf]
  %v93 = vld [vmem:[%s1 + $0x3c] sm:$0xf]
  %v158 = vunpack.c.l.b16 %v14
  %v159 = vunpack.c.l.b16 %v15
  %v160 = vunpack.c.l.b16 %v16
  %v161 = vunpack.c.l.b16 %v17
  %v162 = vunpack.c.l.b16 %v18
  %v163 = vunpack.c.l.b16 %v19
  %v164 = vunpack.c.l.b16 %v20
  %v165 = vunpack.c.l.b16 %v21
  %v166 = vunpack.c.l.b16 %v22
  %v167 = vunpack.c.l.b16 %v23
  %v168 = vunpack.c.l.b16 %v24
  %v169 = vunpack.c.l.b16 %v25
  %v170 = vunpack.c.l.b16 %v26
  %v171 = vunpack.c.l.b16 %v27
  %v172 = vunpack.c.l.b16 %v28
  %v173 = vunpack.c.l.b16 %v29
  %v174 = vunpack.c.l.b16 %v30
  %v175 = vunpack.c.l.b16 %v31
  %v176 = vunpack.c.l.b16 %v32
  %v177 = vunpack.c.l.b16 %v33
  %v178 = vunpack.c.l.b16 %v34
  %v179 = vunpack.c.l.b16 %v35
  %v180 = vunpack.c.l.b16 %v36
  %v181 = vunpack.c.l.b16 %v37
  %v182 = vunpack.c.l.b16 %v38
  %v183 = vunpack.c.l.b16 %v39
  %v184 = vunpack.c.l.b16 %v40
  %v185 = vunpack.c.l.b16 %v41
  %v186 = vunpack.c.l.b16 %v42
  %v187 = vunpack.c.l.b16 %v43
  %v188 = vunpack.c.l.b16 %v44
  %v189 = vunpack.c.l.b16 %v45
  %v190 = vunpack.c.l.b16 %v46
  %v191 = vunpack.c.l.b16 %v47
  %v192 = vunpack.c.l.b16 %v48
  %v193 = vunpack.c.l.b16 %v49
  %v194 = vunpack.c.l.b16 %v50
  %v195 = vunpack.c.l.b16 %v51
  %v196 = vunpack.c.l.b16 %v52
  %v197 = vunpack.c.l.b16 %v53
  %v198 = vunpack.c.l.b16 %v54
  %v199 = vunpack.c.l.b16 %v55
  %v200 = vunpack.c.l.b16 %v56
  %v201 = vunpack.c.l.b16 %v57
  %v202 = vunpack.c.l.b16 %v58
  %v203 = vunpack.c.l.b16 %v59
  %v204 = vunpack.c.l.b16 %v60
  %v205 = vunpack.c.l.b16 %v61
  %v206 = vunpack.c.l.b16 %v62
  %v207 = vunpack.c.l.b16 %v63
  %v208 = vunpack.c.l.b16 %v64
  %v209 = vunpack.c.l.b16 %v65
  %v210 = vunpack.c.l.b16 %v66
  %v211 = vunpack.c.l.b16 %v67
  %v212 = vunpack.c.l.b16 %v68
  %v213 = vunpack.c.l.b16 %v69
  %v214 = vunpack.c.l.b16 %v70
  %v215 = vunpack.c.l.b16 %v71
  %v216 = vunpack.c.l.b16 %v72
  %v217 = vunpack.c.l.b16 %v73
  %v218 = vunpack.c.l.b16 %v74
  %v219 = vunpack.c.l.b16 %v75
  %v220 = vunpack.c.l.b16 %v76
  %v221 = vunpack.c.l.b16 %v77
  %v222 = vpack.c.b16 %v159, %v158
  %v223 = vpack.c.b16 %v161, %v160
  %v224 = vpack.c.b16 %v163, %v162
  %v225 = vpack.c.b16 %v165, %v164
  %v226 = vpack.c.b16 %v167, %v166
  %v227 = vpack.c.b16 %v169, %v168
  %v228 = vpack.c.b16 %v171, %v170
  %v229 = vpack.c.b16 %v173, %v172
  %v230 = vpack.c.b16 %v175, %v174
  %v231 = vpack.c.b16 %v177, %v176
  %v232 = vpack.c.b16 %v179, %v178
  %v233 = vpack.c.b16 %v181, %v180
  %v234 = vpack.c.b16 %v183, %v182
  %v235 = vpack.c.b16 %v185, %v184
  %v236 = vpack.c.b16 %v187, %v186
  %v237 = vpack.c.b16 %v189, %v188
  %v238 = vpack.c.b16 %v191, %v190
  %v239 = vpack.c.b16 %v193, %v192
  %v240 = vpack.c.b16 %v195, %v194
  %v241 = vpack.c.b16 %v197, %v196
  %v242 = vpack.c.b16 %v199, %v198
  %v243 = vpack.c.b16 %v201, %v200
  %v244 = vpack.c.b16 %v203, %v202
  %v245 = vpack.c.b16 %v205, %v204
  %v246 = vpack.c.b16 %v207, %v206
  %v247 = vpack.c.b16 %v209, %v208
  %v248 = vpack.c.b16 %v211, %v210
  %v249 = vpack.c.b16 %v213, %v212
  %v250 = vpack.c.b16 %v215, %v214
  %v251 = vpack.c.b16 %v217, %v216
  %v252 = vpack.c.b16 %v219, %v218
  %v253 = vpack.c.b16 %v221, %v220
  %v302 = vunpack.c.l.b16 %v78
  %v303 = vunpack.c.l.b16 %v79
  %v304 = vunpack.c.l.b16 %v80
  %v305 = vunpack.c.l.b16 %v81
  %v306 = vunpack.c.l.b16 %v82
  %v307 = vunpack.c.l.b16 %v83
  %v308 = vunpack.c.l.b16 %v84
  %v309 = vunpack.c.l.b16 %v85
  %v310 = vunpack.c.l.b16 %v86
  %v311 = vunpack.c.l.b16 %v87
  %v312 = vunpack.c.l.b16 %v88
  %v313 = vunpack.c.l.b16 %v89
  %v314 = vunpack.c.l.b16 %v90
  %v315 = vunpack.c.l.b16 %v91
  %v316 = vunpack.c.l.b16 %v92
  %v317 = vunpack.c.l.b16 %v93
  %v318 = vpack.c.b16 %v303, %v302
  %v319 = vpack.c.b16 %v305, %v304
  %v320 = vpack.c.b16 %v307, %v306
  %v321 = vpack.c.b16 %v309, %v308
  %v322 = vpack.c.b16 %v311, %v310
  %v323 = vpack.c.b16 %v313, %v312
  %v324 = vpack.c.b16 %v315, %v314
  %v325 = vpack.c.b16 %v317, %v316
  %334 = vmatprep.subr.bf16.mxu0 0
  %335 = vmatpush1.bf16.msra.mxu0 %v318
  %336 = vmatprep.subr.bf16.mxu0 0
  %337 = vmatpush1.bf16.msra.mxu0 %v319
  %338 = vmatprep.subr.bf16.mxu0 0
  %339 = vmatpush1.bf16.msra.mxu0 %v320
  %340 = vmatprep.subr.bf16.mxu0 0
  %341 = vmatpush1.bf16.msra.mxu0 %v321
  %342 = vmatprep.subr.bf16.mxu0 0
  %343 = vmatpush1.bf16.msra.mxu0 %v322
  %344 = vmatprep.subr.bf16.mxu0 0
  %345 = vmatpush1.bf16.msra.mxu0 %v323
  %346 = vmatprep.subr.bf16.mxu0 0
  %347 = vmatpush1.bf16.msra.mxu0 %v324
  %348 = vmatprep.subr.bf16.mxu0 0
  %349 = vmatpush1.bf16.msra.mxu0 %v325
  %350 = vmatprep.subr.bf16.mxu0 0
  %351 = vmatpush1.bf16.msra.mxu0 0
  %352 = vmatprep.subr.bf16.mxu0 0
  %353 = vmatpush1.bf16.msra.mxu0 0
  %354 = vmatprep.subr.bf16.mxu0 0
  %355 = vmatpush1.bf16.msra.mxu0 0
  %356 = vmatprep.subr.bf16.mxu0 0
  %357 = vmatpush1.bf16.msra.mxu0 0
  %358 = vmatprep.subr.bf16.mxu0 0
  %359 = vmatpush1.bf16.msra.mxu0 0
  %360 = vmatprep.subr.bf16.mxu0 0
  %361 = vmatpush1.bf16.msra.mxu0 0
  %362 = vmatprep.subr.bf16.mxu0 0
  %363 = vmatpush1.bf16.msra.mxu0 0
  %364 = vmatprep.subr.bf16.mxu0 0
  %365 = vmatpush1.bf16.msra.mxu0 0
  %366 = vmatprep.mubr.bf16.mxu0 0
  %367 = vmatmul.mubr.bf16.gmra.mrb[0].mxu0 %v222
  %v368 = vpop.f32.mrb[0].mxu0
  %v369 = vadd.f32 0.0, %v368
  %v370 = vpop.f32.mrb[0].mxu0
  %v371 = vpop.f32.mrb[0].mxu0
  %v372 = vadd.f32 0.0, %v371
  %v373 = vpop.f32.mrb[0].mxu0
  %374 = vmatprep.mubr.bf16.mxu0 0
  %375 = vmatmul.mubr.bf16.gmra.mrb[0].mxu0 %v223
  %v376 = vpop.f32.mrb[0].mxu0
  %v377 = vadd.f32 0.0, %v376
  %v378 = vpop.f32.mrb[0].mxu0
  %v379 = vpop.f32.mrb[0].mxu0
  %v380 = vadd.f32 0.0, %v379
  %v381 = vpop.f32.mrb[0].mxu0
  %382 = vmatprep.mubr.bf16.mxu0 0
  %383 = vmatmul.mubr.bf16.gmra.mrb[0].mxu0 %v224
  %v384 = vpop.f32.mrb[0].mxu0
  %v385 = vadd.f32 0.0, %v384
  %v386 = vpop.f32.mrb[0].mxu0
  %v387 = vpop.f32.mrb[0].mxu0
  %v388 = vadd.f32 0.0, %v387
  %v389 = vpop.f32.mrb[0].mxu0
  %390 = vmatprep.mubr.bf16.mxu0 0
  %391 = vmatmul.mubr.bf16.gmra.mrb[0].mxu0 %v225
  %v392 = vpop.f32.mrb[0].mxu0
  %v393 = vadd.f32 0.0, %v392
  %v394 = vpop.f32.mrb[0].mxu0
  %v395 = vpop.f32.mrb[0].mxu0
  %v396 = vadd.f32 0.0, %v395
  %v397 = vpop.f32.mrb[0].mxu0
  %398 = vmatprep.mubr.bf16.mxu0 0
  %399 = vmatmul.mubr.bf16.gmra.mrb[0].mxu0 %v226
  %v400 = vpop.f32.mrb[0].mxu0
  %v401 = vadd.f32 0.0, %v400
  %v402 = vpop.f32.mrb[0].mxu0
  %v403 = vpop.f32.mrb[0].mxu0
  %v404 = vadd.f32 0.0, %v403
  %v405 = vpop.f32.mrb[0].mxu0
  %406 = vmatprep.mubr.bf16.mxu0 0
  %407 = vmatmul.mubr.bf16.gmra.mrb[0].mxu0 %v227
  %v408 = vpop.f32.mrb[0].mxu0
  %v409 = vadd.f32 0.0, %v408
  %v410 = vpop.f32.mrb[0].mxu0
  %v411 = vpop.f32.mrb[0].mxu0
  %v412 = vadd.f32 0.0, %v411
  %v413 = vpop.f32.mrb[0].mxu0
  %414 = vmatprep.mubr.bf16.mxu0 0
  %415 = vmatmul.mubr.bf16.gmra.mrb[0].mxu0 %v228
  %v416 = vpop.f32.mrb[0].mxu0
  %v417 = vadd.f32 0.0, %v416
  %v418 = vpop.f32.mrb[0].mxu0
  %v419 = vpop.f32.mrb[0].mxu0
  %v420 = vadd.f32 0.0, %v419
  %v421 = vpop.f32.mrb[0].mxu0
  %422 = vmatprep.mubr.bf16.mxu0 0
  %423 = vmatmul.mubr.bf16.gmra.mrb[0].mxu0 %v229
  %v424 = vpop.f32.mrb[0].mxu0
  %v425 = vadd.f32 0.0, %v424
  %v426 = vpop.f32.mrb[0].mxu0
  %v427 = vpop.f32.mrb[0].mxu0
  %v428 = vadd.f32 0.0, %v427
  %v429 = vpop.f32.mrb[0].mxu0
  %430 = vmatprep.mubr.bf16.mxu0 0
  %431 = vmatmul.mubr.bf16.gmra.mrb[0].mxu0 %v230
  %v432 = vpop.f32.mrb[0].mxu0
  %v433 = vadd.f32 0.0, %v432
  %v434 = vpop.f32.mrb[0].mxu0
  %v435 = vpop.f32.mrb[0].mxu0
  %v436 = vadd.f32 0.0, %v435
  %v437 = vpop.f32.mrb[0].mxu0
  %438 = vmatprep.mubr.bf16.mxu0 0
  %439 = vmatmul.mubr.bf16.gmra.mrb[0].mxu0 %v231
  %v440 = vpop.f32.mrb[0].mxu0
  %v441 = vadd.f32 0.0, %v440
  %v442 = vpop.f32.mrb[0].mxu0
  %v443 = vpop.f32.mrb[0].mxu0
  %v444 = vadd.f32 0.0, %v443
  %v445 = vpop.f32.mrb[0].mxu0
  %446 = vmatprep.mubr.bf16.mxu0 0
  %447 = vmatmul.mubr.bf16.gmra.mrb[0].mxu0 %v232
  %v448 = vpop.f32.mrb[0].mxu0
  %v449 = vadd.f32 0.0, %v448
  %v450 = vpop.f32.mrb[0].mxu0
  %v451 = vpop.f32.mrb[0].mxu0
  %v452 = vadd.f32 0.0, %v451
  %v453 = vpop.f32.mrb[0].mxu0
  %454 = vmatprep.mubr.bf16.mxu0 0
  %455 = vmatmul.mubr.bf16.gmra.mrb[0].mxu0 %v233
  %v456 = vpop.f32.mrb[0].mxu0
  %v457 = vadd.f32 0.0, %v456
  %v458 = vpop.f32.mrb[0].mxu0
  %v459 = vpop.f32.mrb[0].mxu0
  %v460 = vadd.f32 0.0, %v459
  %v461 = vpop.f32.mrb[0].mxu0
  %462 = vmatprep.mubr.bf16.mxu0 0
  %463 = vmatmul.mubr.bf16.gmra.mrb[0].mxu0 %v234
  %v464 = vpop.f32.mrb[0].mxu0
  %v465 = vadd.f32 0.0, %v464
  %v466 = vpop.f32.mrb[0].mxu0
  %v467 = vpop.f32.mrb[0].mxu0
  %v468 = vadd.f32 0.0, %v467
  %v469 = vpop.f32.mrb[0].mxu0
  %470 = vmatprep.mubr.bf16.mxu0 0
  %471 = vmatmul.mubr.bf16.gmra.mrb[0].mxu0 %v235
  %v472 = vpop.f32.mrb[0].mxu0
  %v473 = vadd.f32 0.0, %v472
  %v474 = vpop.f32.mrb[0].mxu0
  %v475 = vpop.f32.mrb[0].mxu0
  %v476 = vadd.f32 0.0, %v475
  %v477 = vpop.f32.mrb[0].mxu0
  %478 = vmatprep.mubr.bf16.mxu0 0
  %479 = vmatmul.mubr.bf16.gmra.mrb[0].mxu0 %v236
  %v480 = vpop.f32.mrb[0].mxu0
  %v481 = vadd.f32 0.0, %v480
  %v482 = vpop.f32.mrb[0].mxu0
  %v483 = vpop.f32.mrb[0].mxu0
  %v484 = vadd.f32 0.0, %v483
  %v485 = vpop.f32.mrb[0].mxu0
  %486 = vmatprep.mubr.bf16.mxu0 0
  %487 = vmatmul.mubr.bf16.gmra.mrb[0].mxu0 %v237
  %v488 = vpop.f32.mrb[0].mxu0
  %v489 = vadd.f32 0.0, %v488
  %v490 = vpop.f32.mrb[0].mxu0
  %v491 = vpop.f32.mrb[0].mxu0
  %v492 = vadd.f32 0.0, %v491
  %v493 = vpop.f32.mrb[0].mxu0
  %494 = vmatprep.mubr.bf16.mxu0 0
  %495 = vmatmul.mubr.bf16.gmra.mrb[0].mxu0 %v238
  %v496 = vpop.f32.mrb[0].mxu0
  %v497 = vadd.f32 0.0, %v496
  %v498 = vpop.f32.mrb[0].mxu0
  %v499 = vpop.f32.mrb[0].mxu0
  %v500 = vadd.f32 0.0, %v499
  %v501 = vpop.f32.mrb[0].mxu0
  %502 = vmatprep.mubr.bf16.mxu0 0
  %503 = vmatmul.mubr.bf16.gmra.mrb[0].mxu0 %v239
  %v504 = vpop.f32.mrb[0].mxu0
  %v505 = vadd.f32 0.0, %v504
  %v506 = vpop.f32.mrb[0].mxu0
  %v507 = vpop.f32.mrb[0].mxu0
  %v508 = vadd.f32 0.0, %v507
  %v509 = vpop.f32.mrb[0].mxu0
  %510 = vmatprep.mubr.bf16.mxu0 0
  %511 = vmatmul.mubr.bf16.gmra.mrb[0].mxu0 %v240
  %v512 = vpop.f32.mrb[0].mxu0
  %v513 = vadd.f32 0.0, %v512
  %v514 = vpop.f32.mrb[0].mxu0
  %v515 = vpop.f32.mrb[0].mxu0
  %v516 = vadd.f32 0.0, %v515
  %v517 = vpop.f32.mrb[0].mxu0
  %518 = vmatprep.mubr.bf16.mxu0 0
  %519 = vmatmul.mubr.bf16.gmra.mrb[0].mxu0 %v241
  %v520 = vpop.f32.mrb[0].mxu0
  %v521 = vadd.f32 0.0, %v520
  %v522 = vpop.f32.mrb[0].mxu0
  %v523 = vpop.f32.mrb[0].mxu0
  %v524 = vadd.f32 0.0, %v523
  %v525 = vpop.f32.mrb[0].mxu0
  %526 = vmatprep.mubr.bf16.mxu0 0
  %527 = vmatmul.mubr.bf16.gmra.mrb[0].mxu0 %v242
  %v528 = vpop.f32.mrb[0].mxu0
  %v529 = vadd.f32 0.0, %v528
  %v530 = vpop.f32.mrb[0].mxu0
  %v531 = vpop.f32.mrb[0].mxu0
  %v532 = vadd.f32 0.0, %v531
  %v533 = vpop.f32.mrb[0].mxu0
  %534 = vmatprep.mubr.bf16.mxu0 0
  %535 = vmatmul.mubr.bf16.gmra.mrb[0].mxu0 %v243
  %v536 = vpop.f32.mrb[0].mxu0
  %v537 = vadd.f32 0.0, %v536
  %v538 = vpop.f32.mrb[0].mxu0
  %v539 = vpop.f32.mrb[0].mxu0
  %v540 = vadd.f32 0.0, %v539
  %v541 = vpop.f32.mrb[0].mxu0
  %542 = vmatprep.mubr.bf16.mxu0 0
  %543 = vmatmul.mubr.bf16.gmra.mrb[0].mxu0 %v244
  %v544 = vpop.f32.mrb[0].mxu0
  %v545 = vadd.f32 0.0, %v544
  %v546 = vpop.f32.mrb[0].mxu0
  %v547 = vpop.f32.mrb[0].mxu0
  %v548 = vadd.f32 0.0, %v547
  %v549 = vpop.f32.mrb[0].mxu0
  %550 = vmatprep.mubr.bf16.mxu0 0
  %551 = vmatmul.mubr.bf16.gmra.mrb[0].mxu0 %v245
  %v552 = vpop.f32.mrb[0].mxu0
  %v553 = vadd.f32 0.0, %v552
  %v554 = vpop.f32.mrb[0].mxu0
  %v555 = vpop.f32.mrb[0].mxu0
  %v556 = vadd.f32 0.0, %v555
  %v557 = vpop.f32.mrb[0].mxu0
  %558 = vmatprep.mubr.bf16.mxu0 0
  %559 = vmatmul.mubr.bf16.gmra.mrb[0].mxu0 %v246
  %v560 = vpop.f32.mrb[0].mxu0
  %v561 = vadd.f32 0.0, %v560
  %v562 = vpop.f32.mrb[0].mxu0
  %v563 = vpop.f32.mrb[0].mxu0
  %v564 = vadd.f32 0.0, %v563
  %v565 = vpop.f32.mrb[0].mxu0
  %566 = vmatprep.mubr.bf16.mxu0 0
  %567 = vmatmul.mubr.bf16.gmra.mrb[0].mxu0 %v247
  %v568 = vpop.f32.mrb[0].mxu0
  %v569 = vadd.f32 0.0, %v568
  %v570 = vpop.f32.mrb[0].mxu0
  %v571 = vpop.f32.mrb[0].mxu0
  %v572 = vadd.f32 0.0, %v571
  %v573 = vpop.f32.mrb[0].mxu0
  %574 = vmatprep.mubr.bf16.mxu0 0
  %575 = vmatmul.mubr.bf16.gmra.mrb[0].mxu0 %v248
  %v576 = vpop.f32.mrb[0].mxu0
  %v577 = vadd.f32 0.0, %v576
  %v578 = vpop.f32.mrb[0].mxu0
  %v579 = vpop.f32.mrb[0].mxu0
  %v580 = vadd.f32 0.0, %v579
  %v581 = vpop.f32.mrb[0].mxu0
  %582 = vmatprep.mubr.bf16.mxu0 0
  %583 = vmatmul.mubr.bf16.gmra.mrb[0].mxu0 %v249
  %v584 = vpop.f32.mrb[0].mxu0
  %v585 = vadd.f32 0.0, %v584
  %v586 = vpop.f32.mrb[0].mxu0
  %v587 = vpop.f32.mrb[0].mxu0
  %v588 = vadd.f32 0.0, %v587
  %v589 = vpop.f32.mrb[0].mxu0
  %590 = vmatprep.mubr.bf16.mxu0 0
  %591 = vmatmul.mubr.bf16.gmra.mrb[0].mxu0 %v250
  %v592 = vpop.f32.mrb[0].mxu0
  %v593 = vadd.f32 0.0, %v592
  %v594 = vpop.f32.mrb[0].mxu0
  %v595 = vpop.f32.mrb[0].mxu0
  %v596 = vadd.f32 0.0, %v595
  %v597 = vpop.f32.mrb[0].mxu0
  %598 = vmatprep.mubr.bf16.mxu0 0
  %599 = vmatmul.mubr.bf16.gmra.mrb[0].mxu0 %v251
  %v600 = vpop.f32.mrb[0].mxu0
  %v601 = vadd.f32 0.0, %v600
  %v602 = vpop.f32.mrb[0].mxu0
  %v603 = vpop.f32.mrb[0].mxu0
  %v604 = vadd.f32 0.0, %v603
  %v605 = vpop.f32.mrb[0].mxu0
  %606 = vmatprep.mubr.bf16.mxu0 0
  %607 = vmatmul.mubr.bf16.gmra.mrb[0].mxu0 %v252
  %v608 = vpop.f32.mrb[0].mxu0
  %v609 = vadd.f32 0.0, %v608
  %v610 = vpop.f32.mrb[0].mxu0
  %v611 = vpop.f32.mrb[0].mxu0
  %v612 = vadd.f32 0.0, %v611
  %v613 = vpop.f32.mrb[0].mxu0
  %614 = vmatprep.mubr.bf16.mxu0 0
  %615 = vmatmul.mubr.bf16.gmra.mrb[0].mxu0 %v253
  %v616 = vpop.f32.mrb[0].mxu0
  %v617 = vadd.f32 0.0, %v616
  %v618 = vpop.f32.mrb[0].mxu0
  %v619 = vpop.f32.mrb[0].mxu0
  %v620 = vadd.f32 0.0, %v619
  %v621 = vpop.f32.mrb[0].mxu0
  %622 = vdwg.mxu0
  %vm623 = vcmask 130048
  %v624 = vsel %vm623, %v369, 0.0
  %v625 = vsel %vm623, %v372, 0.0
  %v626 = vadd.f32 %v624, %v625
  %v627 = vsel %vm623, %v377, 0.0
  %v628 = vadd.f32 %v626, %v627
  %v629 = vsel %vm623, %v380, 0.0
  %v630 = vadd.f32 %v628, %v629
  %v631 = vsel %vm623, %v385, 0.0
  %v632 = vadd.f32 %v630, %v631
  %v633 = vsel %vm623, %v388, 0.0
  %v634 = vadd.f32 %v632, %v633
  %v635 = vsel %vm623, %v393, 0.0
  %v636 = vadd.f32 %v634, %v635
  %v637 = vsel %vm623, %v396, 0.0
  %v638 = vadd.f32 %v636, %v637
  %v639 = vsel %vm623, %v401, 0.0
  %v640 = vadd.f32 %v638, %v639
  %v641 = vsel %vm623, %v404, 0.0
  %v642 = vadd.f32 %v640, %v641
  %v643 = vsel %vm623, %v409, 0.0
  %v644 = vadd.f32 %v642, %v643
  %v645 = vsel %vm623, %v412, 0.0
  %v646 = vadd.f32 %v644, %v645
  %v647 = vsel %vm623, %v417, 0.0
  %v648 = vadd.f32 %v646, %v647
  %v649 = vsel %vm623, %v420, 0.0
  %v650 = vadd.f32 %v648, %v649
  %v651 = vsel %vm623, %v425, 0.0
  %v652 = vadd.f32 %v650, %v651
  %v653 = vsel %vm623, %v428, 0.0
  %v654 = vadd.f32 %v652, %v653
  %v655 = vsel %vm623, %v433, 0.0
  %v656 = vadd.f32 %v654, %v655
  %v657 = vsel %vm623, %v436, 0.0
  %v658 = vadd.f32 %v656, %v657
  %v659 = vsel %vm623, %v441, 0.0
  %v660 = vadd.f32 %v658, %v659
  %v661 = vsel %vm623, %v444, 0.0
  %v662 = vadd.f32 %v660, %v661
  %v663 = vsel %vm623, %v449, 0.0
  %v664 = vadd.f32 %v662, %v663
  %v665 = vsel %vm623, %v452, 0.0
  %v666 = vadd.f32 %v664, %v665
  %v667 = vsel %vm623, %v457, 0.0
  %v668 = vadd.f32 %v666, %v667
  %v669 = vsel %vm623, %v460, 0.0
  %v670 = vadd.f32 %v668, %v669
  %v671 = vsel %vm623, %v465, 0.0
  %v672 = vadd.f32 %v670, %v671
  %v673 = vsel %vm623, %v468, 0.0
  %v674 = vadd.f32 %v672, %v673
  %v675 = vsel %vm623, %v473, 0.0
  %v676 = vadd.f32 %v674, %v675
  %v677 = vsel %vm623, %v476, 0.0
  %v678 = vadd.f32 %v676, %v677
  %v679 = vsel %vm623, %v481, 0.0
  %v680 = vadd.f32 %v678, %v679
  %v681 = vsel %vm623, %v484, 0.0
  %v682 = vadd.f32 %v680, %v681
  %v683 = vsel %vm623, %v489, 0.0
  %v684 = vadd.f32 %v682, %v683
  %v685 = vsel %vm623, %v492, 0.0
  %v686 = vadd.f32 %v684, %v685
  %v687 = vsel %vm623, %v497, 0.0
  %v688 = vadd.f32 %v686, %v687
  %v689 = vsel %vm623, %v500, 0.0
  %v690 = vadd.f32 %v688, %v689
  %v691 = vsel %vm623, %v505, 0.0
  %v692 = vadd.f32 %v690, %v691
  %v693 = vsel %vm623, %v508, 0.0
  %v694 = vadd.f32 %v692, %v693
  %v695 = vsel %vm623, %v513, 0.0
  %v696 = vadd.f32 %v694, %v695
  %v697 = vsel %vm623, %v516, 0.0
  %v698 = vadd.f32 %v696, %v697
  %v699 = vsel %vm623, %v521, 0.0
  %v700 = vadd.f32 %v698, %v699
  %v701 = vsel %vm623, %v524, 0.0
  %v702 = vadd.f32 %v700, %v701
  %v703 = vsel %vm623, %v529, 0.0
  %v704 = vadd.f32 %v702, %v703
  %v705 = vsel %vm623, %v532, 0.0
  %v706 = vadd.f32 %v704, %v705
  %v707 = vsel %vm623, %v537, 0.0
  %v708 = vadd.f32 %v706, %v707
  %v709 = vsel %vm623, %v540, 0.0
  %v710 = vadd.f32 %v708, %v709
  %v711 = vsel %vm623, %v545, 0.0
  %v712 = vadd.f32 %v710, %v711
  %v713 = vsel %vm623, %v548, 0.0
  %v714 = vadd.f32 %v712, %v713
  %v715 = vsel %vm623, %v553, 0.0
  %v716 = vadd.f32 %v714, %v715
  %v717 = vsel %vm623, %v556, 0.0
  %v718 = vadd.f32 %v716, %v717
  %v719 = vsel %vm623, %v561, 0.0
  %v720 = vadd.f32 %v718, %v719
  %v721 = vsel %vm623, %v564, 0.0
  %v722 = vadd.f32 %v720, %v721
  %v723 = vsel %vm623, %v569, 0.0
  %v724 = vadd.f32 %v722, %v723
  %v725 = vsel %vm623, %v572, 0.0
  %v726 = vadd.f32 %v724, %v725
  %v727 = vsel %vm623, %v577, 0.0
  %v728 = vadd.f32 %v726, %v727
  %v729 = vsel %vm623, %v580, 0.0
  %v730 = vadd.f32 %v728, %v729
  %v731 = vsel %vm623, %v585, 0.0
  %v732 = vadd.f32 %v730, %v731
  %v733 = vsel %vm623, %v588, 0.0
  %v734 = vadd.f32 %v732, %v733
  %v735 = vsel %vm623, %v593, 0.0
  %v736 = vadd.f32 %v734, %v735
  %v737 = vsel %vm623, %v596, 0.0
  %v738 = vadd.f32 %v736, %v737
  %v739 = vsel %vm623, %v601, 0.0
  %v740 = vadd.f32 %v738, %v739
  %v741 = vsel %vm623, %v604, 0.0
  %v742 = vadd.f32 %v740, %v741
  %v743 = vsel %vm623, %v609, 0.0
  %v744 = vadd.f32 %v742, %v743
  %v745 = vsel %vm623, %v612, 0.0
  %v746 = vadd.f32 %v744, %v745
  %v747 = vsel %vm623, %v617, 0.0
  %v748 = vadd.f32 %v746, %v747
  %v749 = vsel %vm623, %v620, 0.0
  %v750 = vadd.f32 %v748, %v749
  %v751 = vrot.slane %v750, 4
  %v752 = vadd.f32 %v750, %v751
  %v753 = vrot.slane %v752, 2
  %v754 = vadd.f32 %v752, %v753
  %v755 = vrot.slane %v754, 1
  %v756 = vadd.f32 %v754, %v755
  %v757 = vmul.f32 %v369, %v369
  %v758 = vmul.f32 %v372, %v372
  %v759 = vmul.f32 %v377, %v377
  %v760 = vmul.f32 %v380, %v380
  %v761 = vmul.f32 %v385, %v385
  %v762 = vmul.f32 %v388, %v388
  %v763 = vmul.f32 %v393, %v393
  %v764 = vmul.f32 %v396, %v396
  %v765 = vmul.f32 %v401, %v401
  %v766 = vmul.f32 %v404, %v404
  %v767 = vmul.f32 %v409, %v409
  %v768 = vmul.f32 %v412, %v412
  %v769 = vmul.f32 %v417, %v417
  %v770 = vmul.f32 %v420, %v420
  %v771 = vmul.f32 %v425, %v425
  %v772 = vmul.f32 %v428, %v428
  %v773 = vmul.f32 %v433, %v433
  %v774 = vmul.f32 %v436, %v436
  %v775 = vmul.f32 %v441, %v441
  %v776 = vmul.f32 %v444, %v444
  %v777 = vmul.f32 %v449, %v449
  %v778 = vmul.f32 %v452, %v452
  %v779 = vmul.f32 %v457, %v457
  %v780 = vmul.f32 %v460, %v460
  %v781 = vmul.f32 %v465, %v465
  %v782 = vmul.f32 %v468, %v468
  %v783 = vmul.f32 %v473, %v473
  %v784 = vmul.f32 %v476, %v476
  %v785 = vmul.f32 %v481, %v481
  %v786 = vmul.f32 %v484, %v484
  %v787 = vmul.f32 %v489, %v489
  %v788 = vmul.f32 %v492, %v492
  %v789 = vmul.f32 %v497, %v497
  %v790 = vmul.f32 %v500, %v500
  %v791 = vmul.f32 %v505, %v505
  %v792 = vmul.f32 %v508, %v508
  %v793 = vmul.f32 %v513, %v513
  %v794 = vmul.f32 %v516, %v516
  %v795 = vmul.f32 %v521, %v521
  %v796 = vmul.f32 %v524, %v524
  %v797 = vmul.f32 %v529, %v529
  %v798 = vmul.f32 %v532, %v532
  %v799 = vmul.f32 %v537, %v537
  %v800 = vmul.f32 %v540, %v540
  %v801 = vmul.f32 %v545, %v545
  %v802 = vmul.f32 %v548, %v548
  %v803 = vmul.f32 %v553, %v553
  %v804 = vmul.f32 %v556, %v556
  %v805 = vmul.f32 %v561, %v561
  %v806 = vmul.f32 %v564, %v564
  %v807 = vmul.f32 %v569, %v569
  %v808 = vmul.f32 %v572, %v572
  %v809 = vmul.f32 %v577, %v577
  %v810 = vmul.f32 %v580, %v580
  %v811 = vmul.f32 %v585, %v585
  %v812 = vmul.f32 %v588, %v588
  %v813 = vmul.f32 %v593, %v593
  %v814 = vmul.f32 %v596, %v596
  %v815 = vmul.f32 %v601, %v601
  %v816 = vmul.f32 %v604, %v604
  %v817 = vmul.f32 %v609, %v609
  %v818 = vmul.f32 %v612, %v612
  %v819 = vmul.f32 %v617, %v617
  %v820 = vmul.f32 %v620, %v620
  %v821 = vsel %vm623, %v757, 0.0
  %v822 = vsel %vm623, %v758, 0.0
  %v823 = vadd.f32 %v821, %v822
  %v824 = vsel %vm623, %v759, 0.0
  %v825 = vadd.f32 %v823, %v824
  %v826 = vsel %vm623, %v760, 0.0
  %v827 = vadd.f32 %v825, %v826
  %v828 = vsel %vm623, %v761, 0.0
  %v829 = vadd.f32 %v827, %v828
  %v830 = vsel %vm623, %v762, 0.0
  %v831 = vadd.f32 %v829, %v830
  %v832 = vsel %vm623, %v763, 0.0
  %v833 = vadd.f32 %v831, %v832
  %v834 = vsel %vm623, %v764, 0.0
  %v835 = vadd.f32 %v833, %v834
  %v836 = vsel %vm623, %v765, 0.0
  %v837 = vadd.f32 %v835, %v836
  %v838 = vsel %vm623, %v766, 0.0
  %v839 = vadd.f32 %v837, %v838
  %v840 = vsel %vm623, %v767, 0.0
  %v841 = vadd.f32 %v839, %v840
  %v842 = vsel %vm623, %v768, 0.0
  %v843 = vadd.f32 %v841, %v842
  %v844 = vsel %vm623, %v769, 0.0
  %v845 = vadd.f32 %v843, %v844
  %v846 = vsel %vm623, %v770, 0.0
  %v847 = vadd.f32 %v845, %v846
  %v848 = vsel %vm623, %v771, 0.0
  %v849 = vadd.f32 %v847, %v848
  %v850 = vsel %vm623, %v772, 0.0
  %v851 = vadd.f32 %v849, %v850
  %v852 = vsel %vm623, %v773, 0.0
  %v853 = vadd.f32 %v851, %v852
  %v854 = vsel %vm623, %v774, 0.0
  %v855 = vadd.f32 %v853, %v854
  %v856 = vsel %vm623, %v775, 0.0
  %v857 = vadd.f32 %v855, %v856
  %v858 = vsel %vm623, %v776, 0.0
  %v859 = vadd.f32 %v857, %v858
  %v860 = vsel %vm623, %v777, 0.0
  %v861 = vadd.f32 %v859, %v860
  %v862 = vsel %vm623, %v778, 0.0
  %v863 = vadd.f32 %v861, %v862
  %v864 = vsel %vm623, %v779, 0.0
  %v865 = vadd.f32 %v863, %v864
  %v866 = vsel %vm623, %v780, 0.0
  %v867 = vadd.f32 %v865, %v866
  %v868 = vsel %vm623, %v781, 0.0
  %v869 = vadd.f32 %v867, %v868
  %v870 = vsel %vm623, %v782, 0.0
  %v871 = vadd.f32 %v869, %v870
  %v872 = vsel %vm623, %v783, 0.0
  %v873 = vadd.f32 %v871, %v872
  %v874 = vsel %vm623, %v784, 0.0
  %v875 = vadd.f32 %v873, %v874
  %v876 = vsel %vm623, %v785, 0.0
  %v877 = vadd.f32 %v875, %v876
  %v878 = vsel %vm623, %v786, 0.0
  %v879 = vadd.f32 %v877, %v878
  %v880 = vsel %vm623, %v787, 0.0
  %v881 = vadd.f32 %v879, %v880
  %v882 = vsel %vm623, %v788, 0.0
  %v883 = vadd.f32 %v881, %v882
  %v884 = vsel %vm623, %v789, 0.0
  %v885 = vadd.f32 %v883, %v884
  %v886 = vsel %vm623, %v790, 0.0
  %v887 = vadd.f32 %v885, %v886
  %v888 = vsel %vm623, %v791, 0.0
  %v889 = vadd.f32 %v887, %v888
  %v890 = vsel %vm623, %v792, 0.0
  %v891 = vadd.f32 %v889, %v890
  %v892 = vsel %vm623, %v793, 0.0
  %v893 = vadd.f32 %v891, %v892
  %v894 = vsel %vm623, %v794, 0.0
  %v895 = vadd.f32 %v893, %v894
  %v896 = vsel %vm623, %v795, 0.0
  %v897 = vadd.f32 %v895, %v896
  %v898 = vsel %vm623, %v796, 0.0
  %v899 = vadd.f32 %v897, %v898
  %v900 = vsel %vm623, %v797, 0.0
  %v901 = vadd.f32 %v899, %v900
  %v902 = vsel %vm623, %v798, 0.0
  %v903 = vadd.f32 %v901, %v902
  %v904 = vsel %vm623, %v799, 0.0
  %v905 = vadd.f32 %v903, %v904
  %v906 = vsel %vm623, %v800, 0.0
  %v907 = vadd.f32 %v905, %v906
  %v908 = vsel %vm623, %v801, 0.0
  %v909 = vadd.f32 %v907, %v908
  %v910 = vsel %vm623, %v802, 0.0
  %v911 = vadd.f32 %v909, %v910
  %v912 = vsel %vm623, %v803, 0.0
  %v913 = vadd.f32 %v911, %v912
  %v914 = vsel %vm623, %v804, 0.0
  %v915 = vadd.f32 %v913, %v914
  %v916 = vsel %vm623, %v805, 0.0
  %v917 = vadd.f32 %v915, %v916
  %v918 = vsel %vm623, %v806, 0.0
  %v919 = vadd.f32 %v917, %v918
  %v920 = vsel %vm623, %v807, 0.0
  %v921 = vadd.f32 %v919, %v920
  %v922 = vsel %vm623, %v808, 0.0
  %v923 = vadd.f32 %v921, %v922
  %v924 = vsel %vm623, %v809, 0.0
  %v925 = vadd.f32 %v923, %v924
  %v926 = vsel %vm623, %v810, 0.0
  %v927 = vadd.f32 %v925, %v926
  %v928 = vsel %vm623, %v811, 0.0
  %v929 = vadd.f32 %v927, %v928
  %v930 = vsel %vm623, %v812, 0.0
  %v931 = vadd.f32 %v929, %v930
  %v932 = vsel %vm623, %v813, 0.0
  %v933 = vadd.f32 %v931, %v932
  %v934 = vsel %vm623, %v814, 0.0
  %v935 = vadd.f32 %v933, %v934
  %v936 = vsel %vm623, %v815, 0.0
  %v937 = vadd.f32 %v935, %v936
  %v938 = vsel %vm623, %v816, 0.0
  %v939 = vadd.f32 %v937, %v938
  %v940 = vsel %vm623, %v817, 0.0
  %v941 = vadd.f32 %v939, %v940
  %v942 = vsel %vm623, %v818, 0.0
  %v943 = vadd.f32 %v941, %v942
  %v944 = vsel %vm623, %v819, 0.0
  %v945 = vadd.f32 %v943, %v944
  %v946 = vsel %vm623, %v820, 0.0
  %v947 = vadd.f32 %v945, %v946
  %v948 = vrot.slane %v947, 4
  %v949 = vadd.f32 %v947, %v948
  %v950 = vrot.slane %v949, 2
  %v951 = vadd.f32 %v949, %v950
  %v952 = vrot.slane %v951, 1
  %v953 = vadd.f32 %v951, %v952
  %vm954 = vcmask 1040384
  %v955 = vsel %vm954, %v756, %v953
  %vm956 = vcmask 123904
  %957 = vst.msk [vmem:[%s3] sm:$0x3] %vm956, %v955
  %v958 = vpack.c.bf16 %v372, %v369
  %v959 = vpack.c.bf16 %v380, %v377
  %v960 = vpack.c.bf16 %v388, %v385
  %v961 = vpack.c.bf16 %v396, %v393
  %v962 = vpack.c.bf16 %v404, %v401
  %v963 = vpack.c.bf16 %v412, %v409
  %v964 = vpack.c.bf16 %v420, %v417
  %v965 = vpack.c.bf16 %v428, %v425
  %v966 = vpack.c.bf16 %v436, %v433
  %v967 = vpack.c.bf16 %v444, %v441
  %v968 = vpack.c.bf16 %v452, %v449
  %v969 = vpack.c.bf16 %v460, %v457
  %v970 = vpack.c.bf16 %v468, %v465
  %v971 = vpack.c.bf16 %v476, %v473
  %v972 = vpack.c.bf16 %v484, %v481
  %v973 = vpack.c.bf16 %v492, %v489
  %v974 = vpack.c.bf16 %v500, %v497
  %v975 = vpack.c.bf16 %v508, %v505
  %v976 = vpack.c.bf16 %v516, %v513
  %v977 = vpack.c.bf16 %v524, %v521
  %v978 = vpack.c.bf16 %v532, %v529
  %v979 = vpack.c.bf16 %v540, %v537
  %v980 = vpack.c.bf16 %v548, %v545
  %v981 = vpack.c.bf16 %v556, %v553
  %v982 = vpack.c.bf16 %v564, %v561
  %v983 = vpack.c.bf16 %v572, %v569
  %v984 = vpack.c.bf16 %v580, %v577
  %v985 = vpack.c.bf16 %v588, %v585
  %v986 = vpack.c.bf16 %v596, %v593
  %v987 = vpack.c.bf16 %v604, %v601
  %v988 = vpack.c.bf16 %v612, %v609
  %v989 = vpack.c.bf16 %v620, %v617
  %v1022 = vunpack.c.l.b16 %v958
  %v1023 = vunpack.c.h.b16 %v958
  %v1024 = vunpack.c.l.b16 %v959
  %v1025 = vunpack.c.h.b16 %v959
  %v1026 = vunpack.c.l.b16 %v960
  %v1027 = vunpack.c.h.b16 %v960
  %v1028 = vunpack.c.l.b16 %v961
  %v1029 = vunpack.c.h.b16 %v961
  %v1030 = vunpack.c.l.b16 %v962
  %v1031 = vunpack.c.h.b16 %v962
  %v1032 = vunpack.c.l.b16 %v963
  %v1033 = vunpack.c.h.b16 %v963
  %v1034 = vunpack.c.l.b16 %v964
  %v1035 = vunpack.c.h.b16 %v964
  %v1036 = vunpack.c.l.b16 %v965
  %v1037 = vunpack.c.h.b16 %v965
  %v1038 = vunpack.c.l.b16 %v966
  %v1039 = vunpack.c.h.b16 %v966
  %v1040 = vunpack.c.l.b16 %v967
  %v1041 = vunpack.c.h.b16 %v967
  %v1042 = vunpack.c.l.b16 %v968
  %v1043 = vunpack.c.h.b16 %v968
  %v1044 = vunpack.c.l.b16 %v969
  %v1045 = vunpack.c.h.b16 %v969
  %v1046 = vunpack.c.l.b16 %v970
  %v1047 = vunpack.c.h.b16 %v970
  %v1048 = vunpack.c.l.b16 %v971
  %v1049 = vunpack.c.h.b16 %v971
  %v1050 = vunpack.c.l.b16 %v972
  %v1051 = vunpack.c.h.b16 %v972
  %v1052 = vunpack.c.l.b16 %v973
  %v1053 = vunpack.c.h.b16 %v973
  %v1054 = vunpack.c.l.b16 %v974
  %v1055 = vunpack.c.h.b16 %v974
  %v1056 = vunpack.c.l.b16 %v975
  %v1057 = vunpack.c.h.b16 %v975
  %v1058 = vunpack.c.l.b16 %v976
  %v1059 = vunpack.c.h.b16 %v976
  %v1060 = vunpack.c.l.b16 %v977
  %v1061 = vunpack.c.h.b16 %v977
  %v1062 = vunpack.c.l.b16 %v978
  %v1063 = vunpack.c.h.b16 %v978
  %v1064 = vunpack.c.l.b16 %v979
  %v1065 = vunpack.c.h.b16 %v979
  %v1066 = vunpack.c.l.b16 %v980
  %v1067 = vunpack.c.h.b16 %v980
  %v1068 = vunpack.c.l.b16 %v981
  %v1069 = vunpack.c.h.b16 %v981
  %v1070 = vunpack.c.l.b16 %v982
  %v1071 = vunpack.c.h.b16 %v982
  %v1072 = vunpack.c.l.b16 %v983
  %v1073 = vunpack.c.h.b16 %v983
  %v1074 = vunpack.c.l.b16 %v984
  %v1075 = vunpack.c.h.b16 %v984
  %v1076 = vunpack.c.l.b16 %v985
  %v1077 = vunpack.c.h.b16 %v985
  %v1078 = vunpack.c.l.b16 %v986
  %v1079 = vunpack.c.h.b16 %v986
  %v1080 = vunpack.c.l.b16 %v987
  %v1081 = vunpack.c.h.b16 %v987
  %v1082 = vunpack.c.l.b16 %v988
  %v1083 = vunpack.c.h.b16 %v988
  %v1084 = vunpack.c.l.b16 %v989
  %v1085 = vunpack.c.h.b16 %v989
  %v1086 = vpack.c.b16 %v1022, %v1022
  %v1087 = vpack.c.b16 %v1023, %v1023
  %v1088 = vpack.c.b16 %v1024, %v1024
  %v1089 = vpack.c.b16 %v1025, %v1025
  %v1090 = vpack.c.b16 %v1026, %v1026
  %v1091 = vpack.c.b16 %v1027, %v1027
  %v1092 = vpack.c.b16 %v1028, %v1028
  %v1093 = vpack.c.b16 %v1029, %v1029
  %v1094 = vpack.c.b16 %v1030, %v1030
  %v1095 = vpack.c.b16 %v1031, %v1031
  %v1096 = vpack.c.b16 %v1032, %v1032
  %v1097 = vpack.c.b16 %v1033, %v1033
  %v1098 = vpack.c.b16 %v1034, %v1034
  %v1099 = vpack.c.b16 %v1035, %v1035
  %v1100 = vpack.c.b16 %v1036, %v1036
  %v1101 = vpack.c.b16 %v1037, %v1037
  %v1102 = vpack.c.b16 %v1038, %v1038
  %v1103 = vpack.c.b16 %v1039, %v1039
  %v1104 = vpack.c.b16 %v1040, %v1040
  %v1105 = vpack.c.b16 %v1041, %v1041
  %v1106 = vpack.c.b16 %v1042, %v1042
  %v1107 = vpack.c.b16 %v1043, %v1043
  %v1108 = vpack.c.b16 %v1044, %v1044
  %v1109 = vpack.c.b16 %v1045, %v1045
  %v1110 = vpack.c.b16 %v1046, %v1046
  %v1111 = vpack.c.b16 %v1047, %v1047
  %v1112 = vpack.c.b16 %v1048, %v1048
  %v1113 = vpack.c.b16 %v1049, %v1049
  %v1114 = vpack.c.b16 %v1050, %v1050
  %v1115 = vpack.c.b16 %v1051, %v1051
  %v1116 = vpack.c.b16 %v1052, %v1052
  %v1117 = vpack.c.b16 %v1053, %v1053
  %v1118 = vpack.c.b16 %v1054, %v1054
  %v1119 = vpack.c.b16 %v1055, %v1055
  %v1120 = vpack.c.b16 %v1056, %v1056
  %v1121 = vpack.c.b16 %v1057, %v1057
  %v1122 = vpack.c.b16 %v1058, %v1058
  %v1123 = vpack.c.b16 %v1059, %v1059
  %v1124 = vpack.c.b16 %v1060, %v1060
  %v1125 = vpack.c.b16 %v1061, %v1061
  %v1126 = vpack.c.b16 %v1062, %v1062
  %v1127 = vpack.c.b16 %v1063, %v1063
  %v1128 = vpack.c.b16 %v1064, %v1064
  %v1129 = vpack.c.b16 %v1065, %v1065
  %v1130 = vpack.c.b16 %v1066, %v1066
  %v1131 = vpack.c.b16 %v1067, %v1067
  %v1132 = vpack.c.b16 %v1068, %v1068
  %v1133 = vpack.c.b16 %v1069, %v1069
  %v1134 = vpack.c.b16 %v1070, %v1070
  %v1135 = vpack.c.b16 %v1071, %v1071
  %v1136 = vpack.c.b16 %v1072, %v1072
  %v1137 = vpack.c.b16 %v1073, %v1073
  %v1138 = vpack.c.b16 %v1074, %v1074
  %v1139 = vpack.c.b16 %v1075, %v1075
  %v1140 = vpack.c.b16 %v1076, %v1076
  %v1141 = vpack.c.b16 %v1077, %v1077
  %v1142 = vpack.c.b16 %v1078, %v1078
  %v1143 = vpack.c.b16 %v1079, %v1079
  %v1144 = vpack.c.b16 %v1080, %v1080
  %v1145 = vpack.c.b16 %v1081, %v1081
  %v1146 = vpack.c.b16 %v1082, %v1082
  %v1147 = vpack.c.b16 %v1083, %v1083
  %v1148 = vpack.c.b16 %v1084, %v1084
  %v1149 = vpack.c.b16 %v1085, %v1085
  %vm1214 = vcmask 125952
  %1215 = vst.msk [vmem:[%s2] sm:$0xf] %vm1214, %v1086
  %1216 = vst.msk [vmem:[%s2 + $0x4] sm:$0xf] %vm1214, %v1087
  %1217 = vst.msk [vmem:[%s2 + $0x8] sm:$0xf] %vm1214, %v1088
  %1218 = vst.msk [vmem:[%s2 + $0xc] sm:$0xf] %vm1214, %v1089
  %1219 = vst.msk [vmem:[%s2 + $0x10] sm:$0xf] %vm1214, %v1090
  %1220 = vst.msk [vmem:[%s2 + $0x14] sm:$0xf] %vm1214, %v1091
  %1221 = vst.msk [vmem:[%s2 + $0x18] sm:$0xf] %vm1214, %v1092
  %1222 = vst.msk [vmem:[%s2 + $0x1c] sm:$0xf] %vm1214, %v1093
  %1223 = vst.msk [vmem:[%s2 + $0x20] sm:$0xf] %vm1214, %v1094
  %1224 = vst.msk [vmem:[%s2 + $0x24] sm:$0xf] %vm1214, %v1095
  %1225 = vst.msk [vmem:[%s2 + $0x28] sm:$0xf] %vm1214, %v1096
  %1226 = vst.msk [vmem:[%s2 + $0x2c] sm:$0xf] %vm1214, %v1097
  %1227 = vst.msk [vmem:[%s2 + $0x30] sm:$0xf] %vm1214, %v1098
  %1228 = vst.msk [vmem:[%s2 + $0x34] sm:$0xf] %vm1214, %v1099
  %1229 = vst.msk [vmem:[%s2 + $0x38] sm:$0xf] %vm1214, %v1100
  %1230 = vst.msk [vmem:[%s2 + $0x3c] sm:$0xf] %vm1214, %v1101
  %1231 = vst.msk [vmem:[%s2 + $0x40] sm:$0xf] %vm1214, %v1102
  %1232 = vst.msk [vmem:[%s2 + $0x44] sm:$0xf] %vm1214, %v1103
  %1233 = vst.msk [vmem:[%s2 + $0x48] sm:$0xf] %vm1214, %v1104
  %1234 = vst.msk [vmem:[%s2 + $0x4c] sm:$0xf] %vm1214, %v1105
  %1235 = vst.msk [vmem:[%s2 + $0x50] sm:$0xf] %vm1214, %v1106
  %1236 = vst.msk [vmem:[%s2 + $0x54] sm:$0xf] %vm1214, %v1107
  %1237 = vst.msk [vmem:[%s2 + $0x58] sm:$0xf] %vm1214, %v1108
  %1238 = vst.msk [vmem:[%s2 + $0x5c] sm:$0xf] %vm1214, %v1109
  %1239 = vst.msk [vmem:[%s2 + $0x60] sm:$0xf] %vm1214, %v1110
  %1240 = vst.msk [vmem:[%s2 + $0x64] sm:$0xf] %vm1214, %v1111
  %1241 = vst.msk [vmem:[%s2 + $0x68] sm:$0xf] %vm1214, %v1112
  %1242 = vst.msk [vmem:[%s2 + $0x6c] sm:$0xf] %vm1214, %v1113
  %1243 = vst.msk [vmem:[%s2 + $0x70] sm:$0xf] %vm1214, %v1114
  %1244 = vst.msk [vmem:[%s2 + $0x74] sm:$0xf] %vm1214, %v1115
  %1245 = vst.msk [vmem:[%s2 + $0x78] sm:$0xf] %vm1214, %v1116
  %1246 = vst.msk [vmem:[%s2 + $0x7c] sm:$0xf] %vm1214, %v1117
  %1247 = vst.msk [vmem:[%s2 + $0x80] sm:$0xf] %vm1214, %v1118
  %1248 = vst.msk [vmem:[%s2 + $0x84] sm:$0xf] %vm1214, %v1119
  %1249 = vst.msk [vmem:[%s2 + $0x88] sm:$0xf] %vm1214, %v1120
  %1250 = vst.msk [vmem:[%s2 + $0x8c] sm:$0xf] %vm1214, %v1121
  %1251 = vst.msk [vmem:[%s2 + $0x90] sm:$0xf] %vm1214, %v1122
  %1252 = vst.msk [vmem:[%s2 + $0x94] sm:$0xf] %vm1214, %v1123
  %1253 = vst.msk [vmem:[%s2 + $0x98] sm:$0xf] %vm1214, %v1124
  %1254 = vst.msk [vmem:[%s2 + $0x9c] sm:$0xf] %vm1214, %v1125
  %1255 = vst.msk [vmem:[%s2 + $0xa0] sm:$0xf] %vm1214, %v1126
  %1256 = vst.msk [vmem:[%s2 + $0xa4] sm:$0xf] %vm1214, %v1127
  %1257 = vst.msk [vmem:[%s2 + $0xa8] sm:$0xf] %vm1214, %v1128
  %1258 = vst.msk [vmem:[%s2 + $0xac] sm:$0xf] %vm1214, %v1129
  %1259 = vst.msk [vmem:[%s2 + $0xb0] sm:$0xf] %vm1214, %v1130
  %1260 = vst.msk [vmem:[%s2 + $0xb4] sm:$0xf] %vm1214, %v1131
  %1261 = vst.msk [vmem:[%s2 + $0xb8] sm:$0xf] %vm1214, %v1132
  %1262 = vst.msk [vmem:[%s2 + $0xbc] sm:$0xf] %vm1214, %v1133
  %1263 = vst.msk [vmem:[%s2 + $0xc0] sm:$0xf] %vm1214, %v1134
  %1264 = vst.msk [vmem:[%s2 + $0xc4] sm:$0xf] %vm1214, %v1135
  %1265 = vst.msk [vmem:[%s2 + $0xc8] sm:$0xf] %vm1214, %v1136
  %1266 = vst.msk [vmem:[%s2 + $0xcc] sm:$0xf] %vm1214, %v1137
  %1267 = vst.msk [vmem:[%s2 + $0xd0] sm:$0xf] %vm1214, %v1138
  %1268 = vst.msk [vmem:[%s2 + $0xd4] sm:$0xf] %vm1214, %v1139
  %1269 = vst.msk [vmem:[%s2 + $0xd8] sm:$0xf] %vm1214, %v1140
  %1270 = vst.msk [vmem:[%s2 + $0xdc] sm:$0xf] %vm1214, %v1141
  %1271 = vst.msk [vmem:[%s2 + $0xe0] sm:$0xf] %vm1214, %v1142
  %1272 = vst.msk [vmem:[%s2 + $0xe4] sm:$0xf] %vm1214, %v1143
  %1273 = vst.msk [vmem:[%s2 + $0xe8] sm:$0xf] %vm1214, %v1144
  %1274 = vst.msk [vmem:[%s2 + $0xec] sm:$0xf] %vm1214, %v1145
  %1275 = vst.msk [vmem:[%s2 + $0xf0] sm:$0xf] %vm1214, %v1146
  %1276 = vst.msk [vmem:[%s2 + $0xf4] sm:$0xf] %vm1214, %v1147
  %1277 = vst.msk [vmem:[%s2 + $0xf8] sm:$0xf] %vm1214, %v1148
  %1278 = vst.msk [vmem:[%s2 + $0xfc] sm:$0xf] %vm1214, %v1149
  // Predicated region
  $region10: #{discriminator_forward.9} parent=0 // pred_check
    _
  $region11: #{discriminator_forward.9} parent=0 // pred_check_branch
    %1280 = sbr.rel (0) target = $region13
  $region12: #{discriminator_forward.9} parent=0 // pred_region
    _
  $region13: #{discriminator_forward.9} parent=0 // pred_fallthru
    _
  // Predicated region
  $region14: #{discriminator_forward.9} parent=0 // pred_check
    _
  $region15: #{discriminator_forward.9} parent=0 // pred_check_branch
    %1282 = sbr.rel (0) target = $region17
  $region16: #{discriminator_forward.9} parent=0 // pred_region
    _
  $region17: #{discriminator_forward.9} parent=0 // pred_fallthru
    _
  // Predicated region
  $region18: #{discriminator_forward.9} parent=0 // pred_check
    _
  $region19: #{discriminator_forward.9} parent=0 // pred_check_branch
    %1284 = sbr.rel (0) target = $region21
  $region20: #{discriminator_forward.9} parent=0 // pred_region
    _
  $region21: #{discriminator_forward.9} parent=0 // pred_fallthru
    _
  // Predicated region
  $region22: #{discriminator_forward.9} parent=0 // pred_check
    _
  $region23: #{discriminator_forward.9} parent=0 // pred_check_branch
    %1286 = sbr.rel (0) target = $region25
  $region24: #{discriminator_forward.9} parent=0 // pred_region
    _
  $region25: #{discriminator_forward.9} parent=0 // pred_fallthru
    _

// kernel: discriminator_forward.8
$region0: #{discriminator_forward.8}
  #allocation0 [shape = 'u32[]', space=smem, size = 0x4, offset = 0x4, fixed_abs, tag = 'smem constant byte address 0x4 - core index']
  #allocation1 [shape = 'u32[144,128]{1,0:T(1,128)}', space=vmem, size = 0x12000, scoped, tag = 'internal scratch']
  %s0 = inlined_call_operand.vmem [shape: bf16[2048,48], index: 0, kind: input, shape index: {}]
  %s1 = inlined_call_operand.vmem [shape: bf16[48,8], index: 1, kind: input, shape index: {}]
  %s2 = inlined_call_operand.vmem [shape: bf16[2048,8], index: 2, kind: output, shape index: {}]
  %s3 = sld [smem:[#allocation0]]
  $region18: #{discriminator_forward.8} parent=0
    _
  %s5 = ssub.s32 1, %s3
  %s6 = scalar_select 0, %s5, %s3
  // Predicated region
  $region2: #{discriminator_forward.8} parent=0 // pred_check
    _
  $region3: #{discriminator_forward.8} parent=0 // pred_check_branch
    %8 = sbr.rel (0) target = $region5
  $region4: #{discriminator_forward.8} parent=0 // pred_region
    _
  $region5: #{discriminator_forward.8} parent=0 // pred_fallthru
    _
  // Predicated region
  $region6: #{discriminator_forward.8} parent=0 // pred_check
    _
  $region7: #{discriminator_forward.8} parent=0 // pred_check_branch
    %10 = sbr.rel (0) target = $region9
  $region8: #{discriminator_forward.8} parent=0 // pred_region
    _
  $region9: #{discriminator_forward.8} parent=0 // pred_fallthru
    _
  %v12 = vld [vmem:[%s0] sm:$0xf]
  %v13 = vld [vmem:[%s0 + $0x4] sm:$0xf]
  %v14 = vld [vmem:[%s0 + $0x8] sm:$0xf]
  %v15 = vld [vmem:[%s0 + $0xc] sm:$0xf]
  %v16 = vld [vmem:[%s0 + $0x10] sm:$0xf]
  %v17 = vld [vmem:[%s0 + $0x14] sm:$0xf]
  %v18 = vld [vmem:[%s0 + $0x18] sm:$0xf]
  %v19 = vld [vmem:[%s0 + $0x1c] sm:$0xf]
  %v20 = vld [vmem:[%s0 + $0x20] sm:$0xf]
  %v21 = vld [vmem:[%s0 + $0x24] sm:$0xf]
  %v22 = vld [vmem:[%s0 + $0x28] sm:$0xf]
  %v23 = vld [vmem:[%s0 + $0x2c] sm:$0xf]
  %v24 = vld [vmem:[%s0 + $0x30] sm:$0xf]
  %v25 = vld [vmem:[%s0 + $0x34] sm:$0xf]
  %v26 = vld [vmem:[%s0 + $0x38] sm:$0xf]
  %v27 = vld [vmem:[%s0 + $0x3c] sm:$0xf]
  %v28 = vld [vmem:[%s0 + $0x40] sm:$0xf]
  %v29 = vld [vmem:[%s0 + $0x44] sm:$0xf]
  %v30 = vld [vmem:[%s0 + $0x48] sm:$0xf]
  %v31 = vld [vmem:[%s0 + $0x4c] sm:$0xf]
  %v32 = vld [vmem:[%s0 + $0x50] sm:$0xf]
  %v33 = vld [vmem:[%s0 + $0x54] sm:$0xf]
  %v34 = vld [vmem:[%s0 + $0x58] sm:$0xf]
  %v35 = vld [vmem:[%s0 + $0x5c] sm:$0xf]
  %v36 = vld [vmem:[%s0 + $0x60] sm:$0xf]
  %v37 = vld [vmem:[%s0 + $0x64] sm:$0xf]
  %v38 = vld [vmem:[%s0 + $0x68] sm:$0xf]
  %v39 = vld [vmem:[%s0 + $0x6c] sm:$0xf]
  %v40 = vld [vmem:[%s0 + $0x70] sm:$0xf]
  %v41 = vld [vmem:[%s0 + $0x74] sm:$0xf]
  %v42 = vld [vmem:[%s0 + $0x78] sm:$0xf]
  %v43 = vld [vmem:[%s0 + $0x7c] sm:$0xf]
  %v44 = vld [vmem:[%s0 + $0x80] sm:$0xf]
  %v45 = vld [vmem:[%s0 + $0x84] sm:$0xf]
  %v46 = vld [vmem:[%s0 + $0x88] sm:$0xf]
  %v47 = vld [vmem:[%s0 + $0x8c] sm:$0xf]
  %v48 = vld [vmem:[%s0 + $0x90] sm:$0xf]
  %v49 = vld [vmem:[%s0 + $0x94] sm:$0xf]
  %v50 = vld [vmem:[%s0 + $0x98] sm:$0xf]
  %v51 = vld [vmem:[%s0 + $0x9c] sm:$0xf]
  %v52 = vld [vmem:[%s0 + $0xa0] sm:$0xf]
  %v53 = vld [vmem:[%s0 + $0xa4] sm:$0xf]
  %v54 = vld [vmem:[%s0 + $0xa8] sm:$0xf]
  %v55 = vld [vmem:[%s0 + $0xac] sm:$0xf]
  %v56 = vld [vmem:[%s0 + $0xb0] sm:$0xf]
  %v57 = vld [vmem:[%s0 + $0xb4] sm:$0xf]
  %v58 = vld [vmem:[%s0 + $0xb8] sm:$0xf]
  %v59 = vld [vmem:[%s0 + $0xbc] sm:$0xf]
  %v60 = vld [vmem:[%s0 + $0xc0] sm:$0xf]
  %v61 = vld [vmem:[%s0 + $0xc4] sm:$0xf]
  %v62 = vld [vmem:[%s0 + $0xc8] sm:$0xf]
  %v63 = vld [vmem:[%s0 + $0xcc] sm:$0xf]
  %v64 = vld [vmem:[%s0 + $0xd0] sm:$0xf]
  %v65 = vld [vmem:[%s0 + $0xd4] sm:$0xf]
  %v66 = vld [vmem:[%s0 + $0xd8] sm:$0xf]
  %v67 = vld [vmem:[%s0 + $0xdc] sm:$0xf]
  %v68 = vld [vmem:[%s0 + $0xe0] sm:$0xf]
  %v69 = vld [vmem:[%s0 + $0xe4] sm:$0xf]
  %v70 = vld [vmem:[%s0 + $0xe8] sm:$0xf]
  %v71 = vld [vmem:[%s0 + $0xec] sm:$0xf]
  %v72 = vld [vmem:[%s0 + $0xf0] sm:$0xf]
  %v73 = vld [vmem:[%s0 + $0xf4] sm:$0xf]
  %v74 = vld [vmem:[%s0 + $0xf8] sm:$0xf]
  %v75 = vld [vmem:[%s0 + $0xfc] sm:$0xf]
  %v76 = vld [vmem:[%s0 + $0x100] sm:$0xf]
  %v77 = vld [vmem:[%s0 + $0x104] sm:$0xf]
  %v78 = vld [vmem:[%s0 + $0x108] sm:$0xf]
  %v79 = vld [vmem:[%s0 + $0x10c] sm:$0xf]
  %v80 = vld [vmem:[%s0 + $0x110] sm:$0xf]
  %v81 = vld [vmem:[%s0 + $0x114] sm:$0xf]
  %v82 = vld [vmem:[%s0 + $0x118] sm:$0xf]
  %v83 = vld [vmem:[%s0 + $0x11c] sm:$0xf]
  %v84 = vld [vmem:[%s0 + $0x120] sm:$0xf]
  %v85 = vld [vmem:[%s0 + $0x124] sm:$0xf]
  %v86 = vld [vmem:[%s0 + $0x128] sm:$0xf]
  %v87 = vld [vmem:[%s0 + $0x12c] sm:$0xf]
  %v88 = vld [vmem:[%s0 + $0x130] sm:$0xf]
  %v89 = vld [vmem:[%s0 + $0x134] sm:$0xf]
  %v90 = vld [vmem:[%s0 + $0x138] sm:$0xf]
  %v91 = vld [vmem:[%s0 + $0x13c] sm:$0xf]
  %v92 = vld [vmem:[%s0 + $0x140] sm:$0xf]
  %v93 = vld [vmem:[%s0 + $0x144] sm:$0xf]
  %v94 = vld [vmem:[%s0 + $0x148] sm:$0xf]
  %v95 = vld [vmem:[%s0 + $0x14c] sm:$0xf]
  %v96 = vld [vmem:[%s0 + $0x150] sm:$0xf]
  %v97 = vld [vmem:[%s0 + $0x154] sm:$0xf]
  %v98 = vld [vmem:[%s0 + $0x158] sm:$0xf]
  %v99 = vld [vmem:[%s0 + $0x15c] sm:$0xf]
  %v100 = vld [vmem:[%s0 + $0x160] sm:$0xf]
  %v101 = vld [vmem:[%s0 + $0x164] sm:$0xf]
  %v102 = vld [vmem:[%s0 + $0x168] sm:$0xf]
  %v103 = vld [vmem:[%s0 + $0x16c] sm:$0xf]
  %v104 = vld [vmem:[%s0 + $0x170] sm:$0xf]
  %v105 = vld [vmem:[%s0 + $0x174] sm:$0xf]
  %v106 = vld [vmem:[%s0 + $0x178] sm:$0xf]
  %v107 = vld [vmem:[%s0 + $0x17c] sm:$0xf]
  %v108 = vld [vmem:[%s0 + $0x180] sm:$0xf]
  %v109 = vld [vmem:[%s0 + $0x184] sm:$0xf]
  %v110 = vld [vmem:[%s0 + $0x188] sm:$0xf]
  %v111 = vld [vmem:[%s0 + $0x18c] sm:$0xf]
  %v112 = vld [vmem:[%s0 + $0x190] sm:$0xf]
  %v113 = vld [vmem:[%s0 + $0x194] sm:$0xf]
  %v114 = vld [vmem:[%s0 + $0x198] sm:$0xf]
  %v115 = vld [vmem:[%s0 + $0x19c] sm:$0xf]
  %v116 = vld [vmem:[%s0 + $0x1a0] sm:$0xf]
  %v117 = vld [vmem:[%s0 + $0x1a4] sm:$0xf]
  %v118 = vld [vmem:[%s0 + $0x1a8] sm:$0xf]
  %v119 = vld [vmem:[%s0 + $0x1ac] sm:$0xf]
  %v120 = vld [vmem:[%s0 + $0x1b0] sm:$0xf]
  %v121 = vld [vmem:[%s0 + $0x1b4] sm:$0xf]
  %v122 = vld [vmem:[%s0 + $0x1b8] sm:$0xf]
  %v123 = vld [vmem:[%s0 + $0x1bc] sm:$0xf]
  %v124 = vld [vmem:[%s0 + $0x1c0] sm:$0xf]
  %v125 = vld [vmem:[%s0 + $0x1c4] sm:$0xf]
  %v126 = vld [vmem:[%s0 + $0x1c8] sm:$0xf]
  %v127 = vld [vmem:[%s0 + $0x1cc] sm:$0xf]
  %v128 = vld [vmem:[%s0 + $0x1d0] sm:$0xf]
  %v129 = vld [vmem:[%s0 + $0x1d4] sm:$0xf]
  %v130 = vld [vmem:[%s0 + $0x1d8] sm:$0xf]
  %v131 = vld [vmem:[%s0 + $0x1dc] sm:$0xf]
  %v132 = vld [vmem:[%s0 + $0x1e0] sm:$0xf]
  %v133 = vld [vmem:[%s0 + $0x1e4] sm:$0xf]
  %v134 = vld [vmem:[%s0 + $0x1e8] sm:$0xf]
  %v135 = vld [vmem:[%s0 + $0x1ec] sm:$0xf]
  %v136 = vld [vmem:[%s0 + $0x1f0] sm:$0xf]
  %v137 = vld [vmem:[%s0 + $0x1f4] sm:$0xf]
  %v138 = vld [vmem:[%s0 + $0x1f8] sm:$0xf]
  %v139 = vld [vmem:[%s0 + $0x1fc] sm:$0xf]
  %v140 = vld [vmem:[%s0 + $0x200] sm:$0xf]
  %v141 = vld [vmem:[%s0 + $0x204] sm:$0xf]
  %v142 = vld [vmem:[%s0 + $0x208] sm:$0xf]
  %v143 = vld [vmem:[%s0 + $0x20c] sm:$0xf]
  %v144 = vld [vmem:[%s0 + $0x210] sm:$0xf]
  %v145 = vld [vmem:[%s0 + $0x214] sm:$0xf]
  %v146 = vld [vmem:[%s0 + $0x218] sm:$0xf]
  %v147 = vld [vmem:[%s0 + $0x21c] sm:$0xf]
  %v148 = vld [vmem:[%s0 + $0x220] sm:$0xf]
  %v149 = vld [vmem:[%s0 + $0x224] sm:$0xf]
  %v150 = vld [vmem:[%s0 + $0x228] sm:$0xf]
  %v151 = vld [vmem:[%s0 + $0x22c] sm:$0xf]
  %v152 = vld [vmem:[%s0 + $0x230] sm:$0xf]
  %v153 = vld [vmem:[%s0 + $0x234] sm:$0xf]
  %v154 = vld [vmem:[%s0 + $0x238] sm:$0xf]
  %v155 = vld [vmem:[%s0 + $0x23c] sm:$0xf]
  %v156 = vld [vmem:[%s0 + $0x240] sm:$0xf]
  %v157 = vld [vmem:[%s0 + $0x244] sm:$0xf]
  %v158 = vld [vmem:[%s0 + $0x248] sm:$0xf]
  %v159 = vld [vmem:[%s0 + $0x24c] sm:$0xf]
  %v160 = vld [vmem:[%s0 + $0x250] sm:$0xf]
  %v161 = vld [vmem:[%s0 + $0x254] sm:$0xf]
  %v162 = vld [vmem:[%s0 + $0x258] sm:$0xf]
  %v163 = vld [vmem:[%s0 + $0x25c] sm:$0xf]
  %v164 = vld [vmem:[%s0 + $0x260] sm:$0xf]
  %v165 = vld [vmem:[%s0 + $0x264] sm:$0xf]
  %v166 = vld [vmem:[%s0 + $0x268] sm:$0xf]
  %v167 = vld [vmem:[%s0 + $0x26c] sm:$0xf]
  %v168 = vld [vmem:[%s0 + $0x270] sm:$0xf]
  %v169 = vld [vmem:[%s0 + $0x274] sm:$0xf]
  %v170 = vld [vmem:[%s0 + $0x278] sm:$0xf]
  %v171 = vld [vmem:[%s0 + $0x27c] sm:$0xf]
  %v172 = vld [vmem:[%s0 + $0x280] sm:$0xf]
  %v173 = vld [vmem:[%s0 + $0x284] sm:$0xf]
  %v174 = vld [vmem:[%s0 + $0x288] sm:$0xf]
  %v175 = vld [vmem:[%s0 + $0x28c] sm:$0xf]
  %v176 = vld [vmem:[%s0 + $0x290] sm:$0xf]
  %v177 = vld [vmem:[%s0 + $0x294] sm:$0xf]
  %v178 = vld [vmem:[%s0 + $0x298] sm:$0xf]
  %v179 = vld [vmem:[%s0 + $0x29c] sm:$0xf]
  %v180 = vld [vmem:[%s0 + $0x2a0] sm:$0xf]
  %v181 = vld [vmem:[%s0 + $0x2a4] sm:$0xf]
  %v182 = vld [vmem:[%s0 + $0x2a8] sm:$0xf]
  %v183 = vld [vmem:[%s0 + $0x2ac] sm:$0xf]
  %v184 = vld [vmem:[%s0 + $0x2b0] sm:$0xf]
  %v185 = vld [vmem:[%s0 + $0x2b4] sm:$0xf]
  %v186 = vld [vmem:[%s0 + $0x2b8] sm:$0xf]
  %v187 = vld [vmem:[%s0 + $0x2bc] sm:$0xf]
  %v188 = vld [vmem:[%s0 + $0x2c0] sm:$0xf]
  %v189 = vld [vmem:[%s0 + $0x2c4] sm:$0xf]
  %v190 = vld [vmem:[%s0 + $0x2c8] sm:$0xf]
  %v191 = vld [vmem:[%s0 + $0x2cc] sm:$0xf]
  %v192 = vld [vmem:[%s0 + $0x2d0] sm:$0xf]
  %v193 = vld [vmem:[%s0 + $0x2d4] sm:$0xf]
  %v194 = vld [vmem:[%s0 + $0x2d8] sm:$0xf]
  %v195 = vld [vmem:[%s0 + $0x2dc] sm:$0xf]
  %v196 = vld [vmem:[%s0 + $0x2e0] sm:$0xf]
  %v197 = vld [vmem:[%s0 + $0x2e4] sm:$0xf]
  %v198 = vld [vmem:[%s0 + $0x2e8] sm:$0xf]
  %v199 = vld [vmem:[%s0 + $0x2ec] sm:$0xf]
  %v200 = vld [vmem:[%s0 + $0x2f0] sm:$0xf]
  %v201 = vld [vmem:[%s0 + $0x2f4] sm:$0xf]
  %v202 = vld [vmem:[%s0 + $0x2f8] sm:$0xf]
  %v203 = vld [vmem:[%s0 + $0x2fc] sm:$0xf]
  %v204 = vld [vmem:[%s0 + $0x300] sm:$0xf]
  %v205 = vld [vmem:[%s0 + $0x304] sm:$0xf]
  %v206 = vld [vmem:[%s0 + $0x308] sm:$0xf]
  %v207 = vld [vmem:[%s0 + $0x30c] sm:$0xf]
  %v208 = vld [vmem:[%s0 + $0x310] sm:$0xf]
  %v209 = vld [vmem:[%s0 + $0x314] sm:$0xf]
  %v210 = vld [vmem:[%s0 + $0x318] sm:$0xf]
  %v211 = vld [vmem:[%s0 + $0x31c] sm:$0xf]
  %v212 = vld [vmem:[%s0 + $0x320] sm:$0xf]
  %v213 = vld [vmem:[%s0 + $0x324] sm:$0xf]
  %v214 = vld [vmem:[%s0 + $0x328] sm:$0xf]
  %v215 = vld [vmem:[%s0 + $0x32c] sm:$0xf]
  %v216 = vld [vmem:[%s0 + $0x330] sm:$0xf]
  %v217 = vld [vmem:[%s0 + $0x334] sm:$0xf]
  %v218 = vld [vmem:[%s0 + $0x338] sm:$0xf]
  %v219 = vld [vmem:[%s0 + $0x33c] sm:$0xf]
  %v220 = vld [vmem:[%s0 + $0x340] sm:$0xf]
  %v221 = vld [vmem:[%s0 + $0x344] sm:$0xf]
  %v222 = vld [vmem:[%s0 + $0x348] sm:$0xf]
  %v223 = vld [vmem:[%s0 + $0x34c] sm:$0xf]
  %v224 = vld [vmem:[%s0 + $0x350] sm:$0xf]
  %v225 = vld [vmem:[%s0 + $0x354] sm:$0xf]
  %v226 = vld [vmem:[%s0 + $0x358] sm:$0xf]
  %v227 = vld [vmem:[%s0 + $0x35c] sm:$0xf]
  %v228 = vld [vmem:[%s0 + $0x360] sm:$0xf]
  %v229 = vld [vmem:[%s0 + $0x364] sm:$0xf]
  %v230 = vld [vmem:[%s0 + $0x368] sm:$0xf]
  %v231 = vld [vmem:[%s0 + $0x36c] sm:$0xf]
  %v232 = vld [vmem:[%s0 + $0x370] sm:$0xf]
  %v233 = vld [vmem:[%s0 + $0x374] sm:$0xf]
  %v234 = vld [vmem:[%s0 + $0x378] sm:$0xf]
  %v235 = vld [vmem:[%s0 + $0x37c] sm:$0xf]
  %v236 = vld [vmem:[%s0 + $0x380] sm:$0xf]
  %v237 = vld [vmem:[%s0 + $0x384] sm:$0xf]
  %v238 = vld [vmem:[%s0 + $0x388] sm:$0xf]
  %v239 = vld [vmem:[%s0 + $0x38c] sm:$0xf]
  %v240 = vld [vmem:[%s0 + $0x390] sm:$0xf]
  %v241 = vld [vmem:[%s0 + $0x394] sm:$0xf]
  %v242 = vld [vmem:[%s0 + $0x398] sm:$0xf]
  %v243 = vld [vmem:[%s0 + $0x39c] sm:$0xf]
  %v244 = vld [vmem:[%s0 + $0x3a0] sm:$0xf]
  %v245 = vld [vmem:[%s0 + $0x3a4] sm:$0xf]
  %v246 = vld [vmem:[%s0 + $0x3a8] sm:$0xf]
  %v247 = vld [vmem:[%s0 + $0x3ac] sm:$0xf]
  %v248 = vld [vmem:[%s0 + $0x3b0] sm:$0xf]
  %v249 = vld [vmem:[%s0 + $0x3b4] sm:$0xf]
  %v250 = vld [vmem:[%s0 + $0x3b8] sm:$0xf]
  %v251 = vld [vmem:[%s0 + $0x3bc] sm:$0xf]
  %v252 = vld [vmem:[%s0 + $0x3c0] sm:$0xf]
  %v253 = vld [vmem:[%s0 + $0x3c4] sm:$0xf]
  %v254 = vld [vmem:[%s0 + $0x3c8] sm:$0xf]
  %v255 = vld [vmem:[%s0 + $0x3cc] sm:$0xf]
  %v256 = vld [vmem:[%s0 + $0x3d0] sm:$0xf]
  %v257 = vld [vmem:[%s0 + $0x3d4] sm:$0xf]
  %v258 = vld [vmem:[%s0 + $0x3d8] sm:$0xf]
  %v259 = vld [vmem:[%s0 + $0x3dc] sm:$0xf]
  %v260 = vld [vmem:[%s0 + $0x3e0] sm:$0xf]
  %v261 = vld [vmem:[%s0 + $0x3e4] sm:$0xf]
  %v262 = vld [vmem:[%s0 + $0x3e8] sm:$0xf]
  %v263 = vld [vmem:[%s0 + $0x3ec] sm:$0xf]
  %v264 = vld [vmem:[%s0 + $0x3f0] sm:$0xf]
  %v265 = vld [vmem:[%s0 + $0x3f4] sm:$0xf]
  %v266 = vld [vmem:[%s0 + $0x3f8] sm:$0xf]
  %v267 = vld [vmem:[%s0 + $0x3fc] sm:$0xf]
  %v268 = vld [vmem:[%s1] sm:$0xf]
  %v269 = vld [vmem:[%s1 + $0x4] sm:$0xf]
  %v270 = vld [vmem:[%s1 + $0x8] sm:$0xf]
  %v271 = vld [vmem:[%s1 + $0xc] sm:$0xf]
  %v272 = vld [vmem:[%s1 + $0x10] sm:$0xf]
  %v273 = vld [vmem:[%s1 + $0x14] sm:$0xf]
  %v530 = vunpack.c.l.b16 %v12
  %v531 = vunpack.c.l.b16 %v13
  %v532 = vunpack.c.l.b16 %v14
  %v533 = vunpack.c.l.b16 %v15
  %v534 = vunpack.c.l.b16 %v16
  %v535 = vunpack.c.l.b16 %v17
  %v536 = vunpack.c.l.b16 %v18
  %v537 = vunpack.c.l.b16 %v19
  %v538 = vunpack.c.l.b16 %v20
  %v539 = vunpack.c.l.b16 %v21
  %v540 = vunpack.c.l.b16 %v22
  %v541 = vunpack.c.l.b16 %v23
  %v542 = vunpack.c.l.b16 %v24
  %v543 = vunpack.c.l.b16 %v25
  %v544 = vunpack.c.l.b16 %v26
  %v545 = vunpack.c.l.b16 %v27
  %v546 = vunpack.c.l.b16 %v28
  %v547 = vunpack.c.l.b16 %v29
  %v548 = vunpack.c.l.b16 %v30
  %v549 = vunpack.c.l.b16 %v31
  %v550 = vunpack.c.l.b16 %v32
  %v551 = vunpack.c.l.b16 %v33
  %v552 = vunpack.c.l.b16 %v34
  %v553 = vunpack.c.l.b16 %v35
  %v554 = vunpack.c.l.b16 %v36
  %v555 = vunpack.c.l.b16 %v37
  %v556 = vunpack.c.l.b16 %v38
  %v557 = vunpack.c.l.b16 %v39
  %v558 = vunpack.c.l.b16 %v40
  %v559 = vunpack.c.l.b16 %v41
  %v560 = vunpack.c.l.b16 %v42
  %v561 = vunpack.c.l.b16 %v43
  %v562 = vunpack.c.l.b16 %v44
  %v563 = vunpack.c.l.b16 %v45
  %v564 = vunpack.c.l.b16 %v46
  %v565 = vunpack.c.l.b16 %v47
  %v566 = vunpack.c.l.b16 %v48
  %v567 = vunpack.c.l.b16 %v49
  %v568 = vunpack.c.l.b16 %v50
  %v569 = vunpack.c.l.b16 %v51
  %v570 = vunpack.c.l.b16 %v52
  %v571 = vunpack.c.l.b16 %v53
  %v572 = vunpack.c.l.b16 %v54
  %v573 = vunpack.c.l.b16 %v55
  %v574 = vunpack.c.l.b16 %v56
  %v575 = vunpack.c.l.b16 %v57
  %v576 = vunpack.c.l.b16 %v58
  %v577 = vunpack.c.l.b16 %v59
  %v578 = vunpack.c.l.b16 %v60
  %v579 = vunpack.c.l.b16 %v61
  %v580 = vunpack.c.l.b16 %v62
  %v581 = vunpack.c.l.b16 %v63
  %v582 = vunpack.c.l.b16 %v64
  %v583 = vunpack.c.l.b16 %v65
  %v584 = vunpack.c.l.b16 %v66
  %v585 = vunpack.c.l.b16 %v67
  %v586 = vunpack.c.l.b16 %v68
  %v587 = vunpack.c.l.b16 %v69
  %v588 = vunpack.c.l.b16 %v70
  %v589 = vunpack.c.l.b16 %v71
  %v590 = vunpack.c.l.b16 %v72
  %v591 = vunpack.c.l.b16 %v73
  %v592 = vunpack.c.l.b16 %v74
  %v593 = vunpack.c.l.b16 %v75
  %v594 = vunpack.c.l.b16 %v76
  %v595 = vunpack.c.l.b16 %v77
  %v596 = vunpack.c.l.b16 %v78
  %v597 = vunpack.c.l.b16 %v79
  %v598 = vunpack.c.l.b16 %v80
  %v599 = vunpack.c.l.b16 %v81
  %v600 = vunpack.c.l.b16 %v82
  %v601 = vunpack.c.l.b16 %v83
  %v602 = vunpack.c.l.b16 %v84
  %v603 = vunpack.c.l.b16 %v85
  %v604 = vunpack.c.l.b16 %v86
  %v605 = vunpack.c.l.b16 %v87
  %v606 = vunpack.c.l.b16 %v88
  %v607 = vunpack.c.l.b16 %v89
  %v608 = vunpack.c.l.b16 %v90
  %v609 = vunpack.c.l.b16 %v91
  %v610 = vunpack.c.l.b16 %v92
  %v611 = vunpack.c.l.b16 %v93
  %v612 = vunpack.c.l.b16 %v94
  %v613 = vunpack.c.l.b16 %v95
  %v614 = vunpack.c.l.b16 %v96
  %v615 = vunpack.c.l.b16 %v97
  %v616 = vunpack.c.l.b16 %v98
  %v617 = vunpack.c.l.b16 %v99
  %v618 = vunpack.c.l.b16 %v100
  %v619 = vunpack.c.l.b16 %v101
  %v620 = vunpack.c.l.b16 %v102
  %v621 = vunpack.c.l.b16 %v103
  %v622 = vunpack.c.l.b16 %v104
  %v623 = vunpack.c.l.b16 %v105
  %v624 = vunpack.c.l.b16 %v106
  %v625 = vunpack.c.l.b16 %v107
  %v626 = vunpack.c.l.b16 %v108
  %v627 = vunpack.c.l.b16 %v109
  %v628 = vunpack.c.l.b16 %v110
  %v629 = vunpack.c.l.b16 %v111
  %v630 = vunpack.c.l.b16 %v112
  %v631 = vunpack.c.l.b16 %v113
  %v632 = vunpack.c.l.b16 %v114
  %v633 = vunpack.c.l.b16 %v115
  %v634 = vunpack.c.l.b16 %v116
  %v635 = vunpack.c.l.b16 %v117
  %v636 = vunpack.c.l.b16 %v118
  %v637 = vunpack.c.l.b16 %v119
  %v638 = vunpack.c.l.b16 %v120
  %v639 = vunpack.c.l.b16 %v121
  %v640 = vunpack.c.l.b16 %v122
  %v641 = vunpack.c.l.b16 %v123
  %v642 = vunpack.c.l.b16 %v124
  %v643 = vunpack.c.l.b16 %v125
  %v644 = vunpack.c.l.b16 %v126
  %v645 = vunpack.c.l.b16 %v127
  %v646 = vunpack.c.l.b16 %v128
  %v647 = vunpack.c.l.b16 %v129
  %v648 = vunpack.c.l.b16 %v130
  %v649 = vunpack.c.l.b16 %v131
  %v650 = vunpack.c.l.b16 %v132
  %v651 = vunpack.c.l.b16 %v133
  %v652 = vunpack.c.l.b16 %v134
  %v653 = vunpack.c.l.b16 %v135
  %v654 = vunpack.c.l.b16 %v136
  %v655 = vunpack.c.l.b16 %v137
  %v656 = vunpack.c.l.b16 %v138
  %v657 = vunpack.c.l.b16 %v139
  %v658 = vunpack.c.l.b16 %v140
  %v659 = vunpack.c.l.b16 %v141
  %v660 = vunpack.c.l.b16 %v142
  %v661 = vunpack.c.l.b16 %v143
  %v662 = vunpack.c.l.b16 %v144
  %v663 = vunpack.c.l.b16 %v145
  %v664 = vunpack.c.l.b16 %v146
  %v665 = vunpack.c.l.b16 %v147
  %v666 = vunpack.c.l.b16 %v148
  %v667 = vunpack.c.l.b16 %v149
  %v668 = vunpack.c.l.b16 %v150
  %v669 = vunpack.c.l.b16 %v151
  %v670 = vunpack.c.l.b16 %v152
  %v671 = vunpack.c.l.b16 %v153
  %v672 = vunpack.c.l.b16 %v154
  %v673 = vunpack.c.l.b16 %v155
  %v674 = vunpack.c.l.b16 %v156
  %v675 = vunpack.c.l.b16 %v157
  %v676 = vunpack.c.l.b16 %v158
  %v677 = vunpack.c.l.b16 %v159
  %v678 = vunpack.c.l.b16 %v160
  %v679 = vunpack.c.l.b16 %v161
  %v680 = vunpack.c.l.b16 %v162
  %v681 = vunpack.c.l.b16 %v163
  %v682 = vunpack.c.l.b16 %v164
  %v683 = vunpack.c.l.b16 %v165
  %v684 = vunpack.c.l.b16 %v166
  %v685 = vunpack.c.l.b16 %v167
  %v686 = vunpack.c.l.b16 %v168
  %v687 = vunpack.c.l.b16 %v169
  %v688 = vunpack.c.l.b16 %v170
  %v689 = vunpack.c.l.b16 %v171
  %v690 = vunpack.c.l.b16 %v172
  %v691 = vunpack.c.l.b16 %v173
  %v692 = vunpack.c.l.b16 %v174
  %v693 = vunpack.c.l.b16 %v175
  %v694 = vunpack.c.l.b16 %v176
  %v695 = vunpack.c.l.b16 %v177
  %v696 = vunpack.c.l.b16 %v178
  %v697 = vunpack.c.l.b16 %v179
  %v698 = vunpack.c.l.b16 %v180
  %v699 = vunpack.c.l.b16 %v181
  %v700 = vunpack.c.l.b16 %v182
  %v701 = vunpack.c.l.b16 %v183
  %v702 = vunpack.c.l.b16 %v184
  %v703 = vunpack.c.l.b16 %v185
  %v704 = vunpack.c.l.b16 %v186
  %v705 = vunpack.c.l.b16 %v187
  %v706 = vunpack.c.l.b16 %v188
  %v707 = vunpack.c.l.b16 %v189
  %v708 = vunpack.c.l.b16 %v190
  %v709 = vunpack.c.l.b16 %v191
  %v710 = vunpack.c.l.b16 %v192
  %v711 = vunpack.c.l.b16 %v193
  %v712 = vunpack.c.l.b16 %v194
  %v713 = vunpack.c.l.b16 %v195
  %v714 = vunpack.c.l.b16 %v196
  %v715 = vunpack.c.l.b16 %v197
  %v716 = vunpack.c.l.b16 %v198
  %v717 = vunpack.c.l.b16 %v199
  %v718 = vunpack.c.l.b16 %v200
  %v719 = vunpack.c.l.b16 %v201
  %v720 = vunpack.c.l.b16 %v202
  %v721 = vunpack.c.l.b16 %v203
  %v722 = vunpack.c.l.b16 %v204
  %v723 = vunpack.c.l.b16 %v205
  %v724 = vunpack.c.l.b16 %v206
  %v725 = vunpack.c.l.b16 %v207
  %v726 = vunpack.c.l.b16 %v208
  %v727 = vunpack.c.l.b16 %v209
  %v728 = vunpack.c.l.b16 %v210
  %v729 = vunpack.c.l.b16 %v211
  %v730 = vunpack.c.l.b16 %v212
  %v731 = vunpack.c.l.b16 %v213
  %v732 = vunpack.c.l.b16 %v214
  %v733 = vunpack.c.l.b16 %v215
  %v734 = vunpack.c.l.b16 %v216
  %v735 = vunpack.c.l.b16 %v217
  %v736 = vunpack.c.l.b16 %v218
  %v737 = vunpack.c.l.b16 %v219
  %v738 = vunpack.c.l.b16 %v220
  %v739 = vunpack.c.l.b16 %v221
  %v740 = vunpack.c.l.b16 %v222
  %v741 = vunpack.c.l.b16 %v223
  %v742 = vunpack.c.l.b16 %v224
  %v743 = vunpack.c.l.b16 %v225
  %v744 = vunpack.c.l.b16 %v226
  %v745 = vunpack.c.l.b16 %v227
  %v746 = vunpack.c.l.b16 %v228
  %v747 = vunpack.c.l.b16 %v229
  %v748 = vunpack.c.l.b16 %v230
  %v749 = vunpack.c.l.b16 %v231
  %v750 = vunpack.c.l.b16 %v232
  %v751 = vunpack.c.l.b16 %v233
  %v752 = vunpack.c.l.b16 %v234
  %v753 = vunpack.c.l.b16 %v235
  %v754 = vunpack.c.l.b16 %v236
  %v755 = vunpack.c.l.b16 %v237
  %v756 = vunpack.c.l.b16 %v238
  %v757 = vunpack.c.l.b16 %v239
  %v758 = vunpack.c.l.b16 %v240
  %v759 = vunpack.c.l.b16 %v241
  %v760 = vunpack.c.l.b16 %v242
  %v761 = vunpack.c.l.b16 %v243
  %v762 = vunpack.c.l.b16 %v244
  %v763 = vunpack.c.l.b16 %v245
  %v764 = vunpack.c.l.b16 %v246
  %v765 = vunpack.c.l.b16 %v247
  %v766 = vunpack.c.l.b16 %v248
  %v767 = vunpack.c.l.b16 %v249
  %v768 = vunpack.c.l.b16 %v250
  %v769 = vunpack.c.l.b16 %v251
  %v770 = vunpack.c.l.b16 %v252
  %v771 = vunpack.c.l.b16 %v253
  %v772 = vunpack.c.l.b16 %v254
  %v773 = vunpack.c.l.b16 %v255
  %v774 = vunpack.c.l.b16 %v256
  %v775 = vunpack.c.l.b16 %v257
  %v776 = vunpack.c.l.b16 %v258
  %v777 = vunpack.c.l.b16 %v259
  %v778 = vunpack.c.l.b16 %v260
  %v779 = vunpack.c.l.b16 %v261
  %v780 = vunpack.c.l.b16 %v262
  %v781 = vunpack.c.l.b16 %v263
  %v782 = vunpack.c.l.b16 %v264
  %v783 = vunpack.c.l.b16 %v265
  %v784 = vunpack.c.l.b16 %v266
  %v785 = vunpack.c.l.b16 %v267
  %v786 = vpack.c.b16 %v531, %v530
  %v787 = vpack.c.b16 %v533, %v532
  %v788 = vpack.c.b16 %v535, %v534
  %v789 = vpack.c.b16 %v537, %v536
  %v790 = vpack.c.b16 %v539, %v538
  %v791 = vpack.c.b16 %v541, %v540
  %v792 = vpack.c.b16 %v543, %v542
  %v793 = vpack.c.b16 %v545, %v544
  %v794 = vpack.c.b16 %v547, %v546
  %v795 = vpack.c.b16 %v549, %v548
  %v796 = vpack.c.b16 %v551, %v550
  %v797 = vpack.c.b16 %v553, %v552
  %v798 = vpack.c.b16 %v555, %v554
  %v799 = vpack.c.b16 %v557, %v556
  %v800 = vpack.c.b16 %v559, %v558
  %v801 = vpack.c.b16 %v561, %v560
  %v802 = vpack.c.b16 %v563, %v562
  %v803 = vpack.c.b16 %v565, %v564
  %v804 = vpack.c.b16 %v567, %v566
  %v805 = vpack.c.b16 %v569, %v568
  %v806 = vpack.c.b16 %v571, %v570
  %v807 = vpack.c.b16 %v573, %v572
  %v808 = vpack.c.b16 %v575, %v574
  %v809 = vpack.c.b16 %v577, %v576
  %v810 = vpack.c.b16 %v579, %v578
  %v811 = vpack.c.b16 %v581, %v580
  %v812 = vpack.c.b16 %v583, %v582
  %v813 = vpack.c.b16 %v585, %v584
  %v814 = vpack.c.b16 %v587, %v586
  %v815 = vpack.c.b16 %v589, %v588
  %v816 = vpack.c.b16 %v591, %v590
  %v817 = vpack.c.b16 %v593, %v592
  %v818 = vpack.c.b16 %v595, %v594
  %v819 = vpack.c.b16 %v597, %v596
  %v820 = vpack.c.b16 %v599, %v598
  %v821 = vpack.c.b16 %v601, %v600
  %v822 = vpack.c.b16 %v603, %v602
  %v823 = vpack.c.b16 %v605, %v604
  %v824 = vpack.c.b16 %v607, %v606
  %v825 = vpack.c.b16 %v609, %v608
  %v826 = vpack.c.b16 %v611, %v610
  %v827 = vpack.c.b16 %v613, %v612
  %v828 = vpack.c.b16 %v615, %v614
  %v829 = vpack.c.b16 %v617, %v616
  %v830 = vpack.c.b16 %v619, %v618
  %v831 = vpack.c.b16 %v621, %v620
  %v832 = vpack.c.b16 %v623, %v622
  %v833 = vpack.c.b16 %v625, %v624
  %v834 = vpack.c.b16 %v627, %v626
  %v835 = vpack.c.b16 %v629, %v628
  %v836 = vpack.c.b16 %v631, %v630
  %v837 = vpack.c.b16 %v633, %v632
  %v838 = vpack.c.b16 %v635, %v634
  %v839 = vpack.c.b16 %v637, %v636
  %v840 = vpack.c.b16 %v639, %v638
  %v841 = vpack.c.b16 %v641, %v640
  %v842 = vpack.c.b16 %v643, %v642
  %v843 = vpack.c.b16 %v645, %v644
  %v844 = vpack.c.b16 %v647, %v646
  %v845 = vpack.c.b16 %v649, %v648
  %v846 = vpack.c.b16 %v651, %v650
  %v847 = vpack.c.b16 %v653, %v652
  %v848 = vpack.c.b16 %v655, %v654
  %v849 = vpack.c.b16 %v657, %v656
  %v850 = vpack.c.b16 %v659, %v658
  %v851 = vpack.c.b16 %v661, %v660
  %v852 = vpack.c.b16 %v663, %v662
  %v853 = vpack.c.b16 %v665, %v664
  %v854 = vpack.c.b16 %v667, %v666
  %v855 = vpack.c.b16 %v669, %v668
  %v856 = vpack.c.b16 %v671, %v670
  %v857 = vpack.c.b16 %v673, %v672
  %v858 = vpack.c.b16 %v675, %v674
  %v859 = vpack.c.b16 %v677, %v676
  %v860 = vpack.c.b16 %v679, %v678
  %v861 = vpack.c.b16 %v681, %v680
  %v862 = vpack.c.b16 %v683, %v682
  %v863 = vpack.c.b16 %v685, %v684
  %v864 = vpack.c.b16 %v687, %v686
  %v865 = vpack.c.b16 %v689, %v688
  %v866 = vpack.c.b16 %v691, %v690
  %v867 = vpack.c.b16 %v693, %v692
  %v868 = vpack.c.b16 %v695, %v694
  %v869 = vpack.c.b16 %v697, %v696
  %v870 = vpack.c.b16 %v699, %v698
  %v871 = vpack.c.b16 %v701, %v700
  %v872 = vpack.c.b16 %v703, %v702
  %v873 = vpack.c.b16 %v705, %v704
  %v874 = vpack.c.b16 %v707, %v706
  %v875 = vpack.c.b16 %v709, %v708
  %v876 = vpack.c.b16 %v711, %v710
  %v877 = vpack.c.b16 %v713, %v712
  %v878 = vpack.c.b16 %v715, %v714
  %v879 = vpack.c.b16 %v717, %v716
  %v880 = vpack.c.b16 %v719, %v718
  %v881 = vpack.c.b16 %v721, %v720
  %v882 = vpack.c.b16 %v723, %v722
  %v883 = vpack.c.b16 %v725, %v724
  %v884 = vpack.c.b16 %v727, %v726
  %v885 = vpack.c.b16 %v729, %v728
  %v886 = vpack.c.b16 %v731, %v730
  %v887 = vpack.c.b16 %v733, %v732
  %v888 = vpack.c.b16 %v735, %v734
  %v889 = vpack.c.b16 %v737, %v736
  %v890 = vpack.c.b16 %v739, %v738
  %v891 = vpack.c.b16 %v741, %v740
  %v892 = vpack.c.b16 %v743, %v742
  %v893 = vpack.c.b16 %v745, %v744
  %v894 = vpack.c.b16 %v747, %v746
  %v895 = vpack.c.b16 %v749, %v748
  %v896 = vpack.c.b16 %v751, %v750
  %v897 = vpack.c.b16 %v753, %v752
  %v898 = vpack.c.b16 %v755, %v754
  %v899 = vpack.c.b16 %v757, %v756
  %v900 = vpack.c.b16 %v759, %v758
  %v901 = vpack.c.b16 %v761, %v760
  %v902 = vpack.c.b16 %v763, %v762
  %v903 = vpack.c.b16 %v765, %v764
  %v904 = vpack.c.b16 %v767, %v766
  %v905 = vpack.c.b16 %v769, %v768
  %v906 = vpack.c.b16 %v771, %v770
  %v907 = vpack.c.b16 %v773, %v772
  %v908 = vpack.c.b16 %v775, %v774
  %v909 = vpack.c.b16 %v777, %v776
  %v910 = vpack.c.b16 %v779, %v778
  %v911 = vpack.c.b16 %v781, %v780
  %v912 = vpack.c.b16 %v783, %v782
  %v913 = vpack.c.b16 %v785, %v784
  %v920 = vunpack.c.l.b16 %v268
  %v921 = vunpack.c.l.b16 %v269
  %v922 = vunpack.c.l.b16 %v270
  %v923 = vunpack.c.l.b16 %v271
  %v924 = vunpack.c.l.b16 %v272
  %v925 = vunpack.c.l.b16 %v273
  %v926 = vpack.c.b16 %v921, %v920
  %v927 = vpack.c.b16 %v923, %v922
  %v928 = vpack.c.b16 %v925, %v924
  %vm932 = vcmask 392192
  %v934 = vsel %vm932, %v786, 0
  %v937 = vsel %vm932, %v787, 0
  %v940 = vsel %vm932, %v788, 0
  %v943 = vsel %vm932, %v789, 0
  %v946 = vsel %vm932, %v790, 0
  %v949 = vsel %vm932, %v791, 0
  %v952 = vsel %vm932, %v792, 0
  %v955 = vsel %vm932, %v793, 0
  %v958 = vsel %vm932, %v794, 0
  %v961 = vsel %vm932, %v795, 0
  %v964 = vsel %vm932, %v796, 0
  %v967 = vsel %vm932, %v797, 0
  %v970 = vsel %vm932, %v798, 0
  %v973 = vsel %vm932, %v799, 0
  %v976 = vsel %vm932, %v800, 0
  %v979 = vsel %vm932, %v801, 0
  %v982 = vsel %vm932, %v802, 0
  %v985 = vsel %vm932, %v803, 0
  %v988 = vsel %vm932, %v804, 0
  %v991 = vsel %vm932, %v805, 0
  %v994 = vsel %vm932, %v806, 0
  %v997 = vsel %vm932, %v807, 0
  %v1000 = vsel %vm932, %v808, 0
  %v1003 = vsel %vm932, %v809, 0
  %v1006 = vsel %vm932, %v810, 0
  %v1009 = vsel %vm932, %v811, 0
  %v1012 = vsel %vm932, %v812, 0
  %v1015 = vsel %vm932, %v813, 0
  %v1018 = vsel %vm932, %v814, 0
  %v1021 = vsel %vm932, %v815, 0
  %v1024 = vsel %vm932, %v816, 0
  %v1027 = vsel %vm932, %v817, 0
  %v1030 = vsel %vm932, %v818, 0
  %v1033 = vsel %vm932, %v819, 0
  %v1036 = vsel %vm932, %v820, 0
  %v1039 = vsel %vm932, %v821, 0
  %v1042 = vsel %vm932, %v822, 0
  %v1045 = vsel %vm932, %v823, 0
  %v1048 = vsel %vm932, %v824, 0
  %v1051 = vsel %vm932, %v825, 0
  %v1054 = vsel %vm932, %v826, 0
  %v1057 = vsel %vm932, %v827, 0
  %v1060 = vsel %vm932, %v828, 0
  %v1063 = vsel %vm932, %v829, 0
  %v1066 = vsel %vm932, %v830, 0
  %v1069 = vsel %vm932, %v831, 0
  %v1072 = vsel %vm932, %v832, 0
  %v1075 = vsel %vm932, %v833, 0
  %v1078 = vsel %vm932, %v834, 0
  %v1081 = vsel %vm932, %v835, 0
  %v1084 = vsel %vm932, %v836, 0
  %v1087 = vsel %vm932, %v837, 0
  %v1090 = vsel %vm932, %v838, 0
  %v1093 = vsel %vm932, %v839, 0
  %v1096 = vsel %vm932, %v840, 0
  %v1099 = vsel %vm932, %v841, 0
  %v1102 = vsel %vm932, %v842, 0
  %v1105 = vsel %vm932, %v843, 0
  %v1108 = vsel %vm932, %v844, 0
  %v1111 = vsel %vm932, %v845, 0
  %v1114 = vsel %vm932, %v846, 0
  %v1117 = vsel %vm932, %v847, 0
  %v1120 = vsel %vm932, %v848, 0
  %v1123 = vsel %vm932, %v849, 0
  %v1126 = vsel %vm932, %v850, 0
  %v1129 = vsel %vm932, %v851, 0
  %v1132 = vsel %vm932, %v852, 0
  %v1135 = vsel %vm932, %v853, 0
  %v1138 = vsel %vm932, %v854, 0
  %v1141 = vsel %vm932, %v855, 0
  %v1144 = vsel %vm932, %v856, 0
  %v1147 = vsel %vm932, %v857, 0
  %v1150 = vsel %vm932, %v858, 0
  %v1153 = vsel %vm932, %v859, 0
  %v1156 = vsel %vm932, %v860, 0
  %v1159 = vsel %vm932, %v861, 0
  %v1162 = vsel %vm932, %v862, 0
  %v1165 = vsel %vm932, %v863, 0
  %v1168 = vsel %vm932, %v864, 0
  %v1171 = vsel %vm932, %v865, 0
  %v1174 = vsel %vm932, %v866, 0
  %v1177 = vsel %vm932, %v867, 0
  %v1180 = vsel %vm932, %v868, 0
  %v1183 = vsel %vm932, %v869, 0
  %v1186 = vsel %vm932, %v870, 0
  %v1189 = vsel %vm932, %v871, 0
  %v1192 = vsel %vm932, %v872, 0
  %v1195 = vsel %vm932, %v873, 0
  %v1198 = vsel %vm932, %v874, 0
  %v1201 = vsel %vm932, %v875, 0
  %v1204 = vsel %vm932, %v876, 0
  %v1207 = vsel %vm932, %v877, 0
  %v1210 = vsel %vm932, %v878, 0
  %v1213 = vsel %vm932, %v879, 0
  %v1216 = vsel %vm932, %v880, 0
  %v1219 = vsel %vm932, %v881, 0
  %v1222 = vsel %vm932, %v882, 0
  %v1225 = vsel %vm932, %v883, 0
  %v1228 = vsel %vm932, %v884, 0
  %v1231 = vsel %vm932, %v885, 0
  %v1234 = vsel %vm932, %v886, 0
  %v1237 = vsel %vm932, %v887, 0
  %v1240 = vsel %vm932, %v888, 0
  %v1243 = vsel %vm932, %v889, 0
  %v1246 = vsel %vm932, %v890, 0
  %v1249 = vsel %vm932, %v891, 0
  %v1252 = vsel %vm932, %v892, 0
  %v1255 = vsel %vm932, %v893, 0
  %v1258 = vsel %vm932, %v894, 0
  %v1261 = vsel %vm932, %v895, 0
  %v1264 = vsel %vm932, %v896, 0
  %v1267 = vsel %vm932, %v897, 0
  %v1270 = vsel %vm932, %v898, 0
  %v1273 = vsel %vm932, %v899, 0
  %v1276 = vsel %vm932, %v900, 0
  %v1279 = vsel %vm932, %v901, 0
  %v1282 = vsel %vm932, %v902, 0
  %v1285 = vsel %vm932, %v903, 0
  %v1288 = vsel %vm932, %v904, 0
  %v1291 = vsel %vm932, %v905, 0
  %v1294 = vsel %vm932, %v906, 0
  %v1297 = vsel %vm932, %v907, 0
  %v1300 = vsel %vm932, %v908, 0
  %v1303 = vsel %vm932, %v909, 0
  %v1306 = vsel %vm932, %v910, 0
  %v1309 = vsel %vm932, %v911, 0
  %v1312 = vsel %vm932, %v912, 0
  %v1315 = vsel %vm932, %v913, 0
  %1317 = vmatprep.subr.bf16.mxu0 0
  %1318 = vmatpush1.bf16.msra.mxu0 %v926
  %1319 = vmatprep.subr.bf16.mxu0 0
  %1320 = vmatpush1.bf16.msra.mxu0 %v927
  %1321 = vmatprep.subr.bf16.mxu0 0
  %1322 = vmatpush1.bf16.msra.mxu0 %v928
  %1323 = vmatprep.subr.bf16.mxu0 0
  %1324 = vmatpush1.bf16.msra.mxu0 0
  %1325 = vmatprep.subr.bf16.mxu0 0
  %1326 = vmatpush1.bf16.msra.mxu0 0
  %1327 = vmatprep.subr.bf16.mxu0 0
  %1328 = vmatpush1.bf16.msra.mxu0 0
  %1329 = vmatprep.subr.bf16.mxu0 0
  %1330 = vmatpush1.bf16.msra.mxu0 0
  %1331 = vmatprep.subr.bf16.mxu0 0
  %1332 = vmatpush1.bf16.msra.mxu0 0
  %1333 = vmatprep.subr.bf16.mxu0 0
  %1334 = vmatpush1.bf16.msra.mxu0 0
  %1335 = vmatprep.subr.bf16.mxu0 0
  %1336 = vmatpush1.bf16.msra.mxu0 0
  %1337 = vmatprep.subr.bf16.mxu0 0
  %1338 = vmatpush1.bf16.msra.mxu0 0
  %1339 = vmatprep.subr.bf16.mxu0 0
  %1340 = vmatpush1.bf16.msra.mxu0 0
  %1341 = vmatprep.subr.bf16.mxu0 0
  %1342 = vmatpush1.bf16.msra.mxu0 0
  %1343 = vmatprep.subr.bf16.mxu0 0
  %1344 = vmatpush1.bf16.msra.mxu0 0
  %1345 = vmatprep.subr.bf16.mxu0 0
  %1346 = vmatpush1.bf16.msra.mxu0 0
  %1347 = vmatprep.subr.bf16.mxu0 0
  %1348 = vmatpush1.bf16.msra.mxu0 0
  %1349 = vmatprep.mubr.bf16.mxu0 0
  %1350 = vmatmul.mubr.bf16.gmra.mrb[0].mxu0 %v934
  %v1351 = vpop.f32.mrb[0].mxu0
  %v1352 = vadd.f32 0.0, %v1351
  %v1353 = vpop.f32.mrb[0].mxu0
  %v1354 = vpop.f32.mrb[0].mxu0
  %v1355 = vadd.f32 0.0, %v1354
  %v1356 = vpop.f32.mrb[0].mxu0
  %1357 = vmatprep.mubr.bf16.mxu0 0
  %1358 = vmatmul.mubr.bf16.gmra.mrb[0].mxu0 %v937
  %v1359 = vpop.f32.mrb[0].mxu0
  %v1360 = vadd.f32 0.0, %v1359
  %v1361 = vpop.f32.mrb[0].mxu0
  %v1362 = vpop.f32.mrb[0].mxu0
  %v1363 = vadd.f32 0.0, %v1362
  %v1364 = vpop.f32.mrb[0].mxu0
  %1365 = vmatprep.mubr.bf16.mxu0 0
  %1366 = vmatmul.mubr.bf16.gmra.mrb[0].mxu0 %v940
  %v1367 = vpop.f32.mrb[0].mxu0
  %v1368 = vadd.f32 0.0, %v1367
  %v1369 = vpop.f32.mrb[0].mxu0
  %v1370 = vpop.f32.mrb[0].mxu0
  %v1371 = vadd.f32 0.0, %v1370
  %v1372 = vpop.f32.mrb[0].mxu0
  %1373 = vmatprep.mubr.bf16.mxu0 0
  %1374 = vmatmul.mubr.bf16.gmra.mrb[0].mxu0 %v943
  %v1375 = vpop.f32.mrb[0].mxu0
  %v1376 = vadd.f32 0.0, %v1375
  %v1377 = vpop.f32.mrb[0].mxu0
  %v1378 = vpop.f32.mrb[0].mxu0
  %v1379 = vadd.f32 0.0, %v1378
  %v1380 = vpop.f32.mrb[0].mxu0
  %1381 = vmatprep.mubr.bf16.mxu0 0
  %1382 = vmatmul.mubr.bf16.gmra.mrb[0].mxu0 %v946
  %v1383 = vpop.f32.mrb[0].mxu0
  %v1384 = vadd.f32 0.0, %v1383
  %v1385 = vpop.f32.mrb[0].mxu0
  %v1386 = vpop.f32.mrb[0].mxu0
  %v1387 = vadd.f32 0.0, %v1386
  %v1388 = vpop.f32.mrb[0].mxu0
  %1389 = vmatprep.mubr.bf16.mxu0 0
  %1390 = vmatmul.mubr.bf16.gmra.mrb[0].mxu0 %v949
  %v1391 = vpop.f32.mrb[0].mxu0
  %v1392 = vadd.f32 0.0, %v1391
  %v1393 = vpop.f32.mrb[0].mxu0
  %v1394 = vpop.f32.mrb[0].mxu0
  %v1395 = vadd.f32 0.0, %v1394
  %v1396 = vpop.f32.mrb[0].mxu0
  %1397 = vmatprep.mubr.bf16.mxu0 0
  %1398 = vmatmul.mubr.bf16.gmra.mrb[0].mxu0 %v952
  %v1399 = vpop.f32.mrb[0].mxu0
  %v1400 = vadd.f32 0.0, %v1399
  %v1401 = vpop.f32.mrb[0].mxu0
  %v1402 = vpop.f32.mrb[0].mxu0
  %v1403 = vadd.f32 0.0, %v1402
  %v1404 = vpop.f32.mrb[0].mxu0
  %1405 = vmatprep.mubr.bf16.mxu0 0
  %1406 = vmatmul.mubr.bf16.gmra.mrb[0].mxu0 %v955
  %v1407 = vpop.f32.mrb[0].mxu0
  %v1408 = vadd.f32 0.0, %v1407
  %v1409 = vpop.f32.mrb[0].mxu0
  %v1410 = vpop.f32.mrb[0].mxu0
  %v1411 = vadd.f32 0.0, %v1410
  %v1412 = vpop.f32.mrb[0].mxu0
  %1413 = vmatprep.mubr.bf16.mxu0 0
  %1414 = vmatmul.mubr.bf16.gmra.mrb[0].mxu0 %v958
  %v1415 = vpop.f32.mrb[0].mxu0
  %v1416 = vadd.f32 0.0, %v1415
  %v1417 = vpop.f32.mrb[0].mxu0
  %v1418 = vpop.f32.mrb[0].mxu0
  %v1419 = vadd.f32 0.0, %v1418
  %v1420 = vpop.f32.mrb[0].mxu0
  %1421 = vmatprep.mubr.bf16.mxu0 0
  %1422 = vmatmul.mubr.bf16.gmra.mrb[0].mxu0 %v961
  %v1423 = vpop.f32.mrb[0].mxu0
  %v1424 = vadd.f32 0.0, %v1423
  %v1425 = vpop.f32.mrb[0].mxu0
  %v1426 = vpop.f32.mrb[0].mxu0
  %v1427 = vadd.f32 0.0, %v1426
  %v1428 = vpop.f32.mrb[0].mxu0
  %1429 = vmatprep.mubr.bf16.mxu0 0
  %1430 = vmatmul.mubr.bf16.gmra.mrb[0].mxu0 %v964
  %v1431 = vpop.f32.mrb[0].mxu0
  %v1432 = vadd.f32 0.0, %v1431
  %v1433 = vpop.f32.mrb[0].mxu0
  %v1434 = vpop.f32.mrb[0].mxu0
  %v1435 = vadd.f32 0.0, %v1434
  %v1436 = vpop.f32.mrb[0].mxu0
  %1437 = vmatprep.mubr.bf16.mxu0 0
  %1438 = vmatmul.mubr.bf16.gmra.mrb[0].mxu0 %v967
  %v1439 = vpop.f32.mrb[0].mxu0
  %v1440 = vadd.f32 0.0, %v1439
  %v1441 = vpop.f32.mrb[0].mxu0
  %v1442 = vpop.f32.mrb[0].mxu0
  %v1443 = vadd.f32 0.0, %v1442
  %v1444 = vpop.f32.mrb[0].mxu0
  %1445 = vmatprep.mubr.bf16.mxu0 0
  %1446 = vmatmul.mubr.bf16.gmra.mrb[0].mxu0 %v970
  %v1447 = vpop.f32.mrb[0].mxu0
  %v1448 = vadd.f32 0.0, %v1447
  %v1449 = vpop.f32.mrb[0].mxu0
  %v1450 = vpop.f32.mrb[0].mxu0
  %v1451 = vadd.f32 0.0, %v1450
  %v1452 = vpop.f32.mrb[0].mxu0
  %1453 = vmatprep.mubr.bf16.mxu0 0
  %1454 = vmatmul.mubr.bf16.gmra.mrb[0].mxu0 %v973
  %v1455 = vpop.f32.mrb[0].mxu0
  %v1456 = vadd.f32 0.0, %v1455
  %v1457 = vpop.f32.mrb[0].mxu0
  %v1458 = vpop.f32.mrb[0].mxu0
  %v1459 = vadd.f32 0.0, %v1458
  %v1460 = vpop.f32.mrb[0].mxu0
  %1461 = vmatprep.mubr.bf16.mxu0 0
  %1462 = vmatmul.mubr.bf16.gmra.mrb[0].mxu0 %v976
  %v1463 = vpop.f32.mrb[0].mxu0
  %v1464 = vadd.f32 0.0, %v1463
  %v1465 = vpop.f32.mrb[0].mxu0
  %v1466 = vpop.f32.mrb[0].mxu0
  %v1467 = vadd.f32 0.0, %v1466
  %v1468 = vpop.f32.mrb[0].mxu0
  %1469 = vmatprep.mubr.bf16.mxu0 0
  %1470 = vmatmul.mubr.bf16.gmra.mrb[0].mxu0 %v979
  %v1471 = vpop.f32.mrb[0].mxu0
  %v1472 = vadd.f32 0.0, %v1471
  %v1473 = vpop.f32.mrb[0].mxu0
  %v1474 = vpop.f32.mrb[0].mxu0
  %v1475 = vadd.f32 0.0, %v1474
  %v1476 = vpop.f32.mrb[0].mxu0
  %1477 = vmatprep.mubr.bf16.mxu0 0
  %1478 = vmatmul.mubr.bf16.gmra.mrb[0].mxu0 %v982
  %v1479 = vpop.f32.mrb[0].mxu0
  %v1480 = vadd.f32 0.0, %v1479
  %v1481 = vpop.f32.mrb[0].mxu0
  %v1482 = vpop.f32.mrb[0].mxu0
  %v1483 = vadd.f32 0.0, %v1482
  %v1484 = vpop.f32.mrb[0].mxu0
  %1485 = vmatprep.mubr.bf16.mxu0 0
  %1486 = vmatmul.mubr.bf16.gmra.mrb[0].mxu0 %v985
  %v1487 = vpop.f32.mrb[0].mxu0
  %v1488 = vadd.f32 0.0, %v1487
  %v1489 = vpop.f32.mrb[0].mxu0
  %v1490 = vpop.f32.mrb[0].mxu0
  %v1491 = vadd.f32 0.0, %v1490
  %v1492 = vpop.f32.mrb[0].mxu0
  %1493 = vmatprep.mubr.bf16.mxu0 0
  %1494 = vmatmul.mubr.bf16.gmra.mrb[0].mxu0 %v988
  %v1495 = vpop.f32.mrb[0].mxu0
  %v1496 = vadd.f32 0.0, %v1495
  %v1497 = vpop.f32.mrb[0].mxu0
  %v1498 = vpop.f32.mrb[0].mxu0
  %v1499 = vadd.f32 0.0, %v1498
  %v1500 = vpop.f32.mrb[0].mxu0
  %1501 = vmatprep.mubr.bf16.mxu0 0
  %1502 = vmatmul.mubr.bf16.gmra.mrb[0].mxu0 %v991
  %v1503 = vpop.f32.mrb[0].mxu0
  %v1504 = vadd.f32 0.0, %v1503
  %v1505 = vpop.f32.mrb[0].mxu0
  %v1506 = vpop.f32.mrb[0].mxu0
  %v1507 = vadd.f32 0.0, %v1506
  %v1508 = vpop.f32.mrb[0].mxu0
  %1509 = vmatprep.mubr.bf16.mxu0 0
  %1510 = vmatmul.mubr.bf16.gmra.mrb[0].mxu0 %v994
  %v1511 = vpop.f32.mrb[0].mxu0
  %v1512 = vadd.f32 0.0, %v1511
  %v1513 = vpop.f32.mrb[0].mxu0
  %v1514 = vpop.f32.mrb[0].mxu0
  %v1515 = vadd.f32 0.0, %v1514
  %v1516 = vpop.f32.mrb[0].mxu0
  %1517 = vmatprep.mubr.bf16.mxu0 0
  %1518 = vmatmul.mubr.bf16.gmra.mrb[0].mxu0 %v997
  %v1519 = vpop.f32.mrb[0].mxu0
  %v1520 = vadd.f32 0.0, %v1519
  %v1521 = vpop.f32.mrb[0].mxu0
  %v1522 = vpop.f32.mrb[0].mxu0
  %v1523 = vadd.f32 0.0, %v1522
  %v1524 = vpop.f32.mrb[0].mxu0
  %1525 = vmatprep.mubr.bf16.mxu0 0
  %1526 = vmatmul.mubr.bf16.gmra.mrb[0].mxu0 %v1000
  %v1527 = vpop.f32.mrb[0].mxu0
  %v1528 = vadd.f32 0.0, %v1527
  %v1529 = vpop.f32.mrb[0].mxu0
  %v1530 = vpop.f32.mrb[0].mxu0
  %v1531 = vadd.f32 0.0, %v1530
  %v1532 = vpop.f32.mrb[0].mxu0
  %1533 = vmatprep.mubr.bf16.mxu0 0
  %1534 = vmatmul.mubr.bf16.gmra.mrb[0].mxu0 %v1003
  %v1535 = vpop.f32.mrb[0].mxu0
  %v1536 = vadd.f32 0.0, %v1535
  %v1537 = vpop.f32.mrb[0].mxu0
  %v1538 = vpop.f32.mrb[0].mxu0
  %v1539 = vadd.f32 0.0, %v1538
  %v1540 = vpop.f32.mrb[0].mxu0
  %1541 = vmatprep.mubr.bf16.mxu0 0
  %1542 = vmatmul.mubr.bf16.gmra.mrb[0].mxu0 %v1006
  %v1543 = vpop.f32.mrb[0].mxu0
  %v1544 = vadd.f32 0.0, %v1543
  %v1545 = vpop.f32.mrb[0].mxu0
  %v1546 = vpop.f32.mrb[0].mxu0
  %v1547 = vadd.f32 0.0, %v1546
  %v1548 = vpop.f32.mrb[0].mxu0
  %1549 = vmatprep.mubr.bf16.mxu0 0
  %1550 = vmatmul.mubr.bf16.gmra.mrb[0].mxu0 %v1009
  %v1551 = vpop.f32.mrb[0].mxu0
  %v1552 = vadd.f32 0.0, %v1551
  %v1553 = vpop.f32.mrb[0].mxu0
  %v1554 = vpop.f32.mrb[0].mxu0
  %v1555 = vadd.f32 0.0, %v1554
  %v1556 = vpop.f32.mrb[0].mxu0
  %1557 = vmatprep.mubr.bf16.mxu0 0
  %1558 = vmatmul.mubr.bf16.gmra.mrb[0].mxu0 %v1012
  %v1559 = vpop.f32.mrb[0].mxu0
  %v1560 = vadd.f32 0.0, %v1559
  %v1561 = vpop.f32.mrb[0].mxu0
  %v1562 = vpop.f32.mrb[0].mxu0
  %v1563 = vadd.f32 0.0, %v1562
  %v1564 = vpop.f32.mrb[0].mxu0
  %1565 = vmatprep.mubr.bf16.mxu0 0
  %1566 = vmatmul.mubr.bf16.gmra.mrb[0].mxu0 %v1015
  %v1567 = vpop.f32.mrb[0].mxu0
  %v1568 = vadd.f32 0.0, %v1567
  %v1569 = vpop.f32.mrb[0].mxu0
  %v1570 = vpop.f32.mrb[0].mxu0
  %v1571 = vadd.f32 0.0, %v1570
  %v1572 = vpop.f32.mrb[0].mxu0
  %1573 = vmatprep.mubr.bf16.mxu0 0
  %1574 = vmatmul.mubr.bf16.gmra.mrb[0].mxu0 %v1018
  %v1575 = vpop.f32.mrb[0].mxu0
  %v1576 = vadd.f32 0.0, %v1575
  %v1577 = vpop.f32.mrb[0].mxu0
  %v1578 = vpop.f32.mrb[0].mxu0
  %v1579 = vadd.f32 0.0, %v1578
  %v1580 = vpop.f32.mrb[0].mxu0
  %1581 = vmatprep.mubr.bf16.mxu0 0
  %1582 = vmatmul.mubr.bf16.gmra.mrb[0].mxu0 %v1021
  %v1583 = vpop.f32.mrb[0].mxu0
  %v1584 = vadd.f32 0.0, %v1583
  %v1585 = vpop.f32.mrb[0].mxu0
  %v1586 = vpop.f32.mrb[0].mxu0
  %v1587 = vadd.f32 0.0, %v1586
  %v1588 = vpop.f32.mrb[0].mxu0
  %1589 = vmatprep.mubr.bf16.mxu0 0
  %1590 = vmatmul.mubr.bf16.gmra.mrb[0].mxu0 %v1024
  %v1591 = vpop.f32.mrb[0].mxu0
  %v1592 = vadd.f32 0.0, %v1591
  %v1593 = vpop.f32.mrb[0].mxu0
  %v1594 = vpop.f32.mrb[0].mxu0
  %v1595 = vadd.f32 0.0, %v1594
  %v1596 = vpop.f32.mrb[0].mxu0
  %1597 = vmatprep.mubr.bf16.mxu0 0
  %1598 = vmatmul.mubr.bf16.gmra.mrb[0].mxu0 %v1027
  %v1599 = vpop.f32.mrb[0].mxu0
  %v1600 = vadd.f32 0.0, %v1599
  %v1601 = vpop.f32.mrb[0].mxu0
  %v1602 = vpop.f32.mrb[0].mxu0
  %v1603 = vadd.f32 0.0, %v1602
  %v1604 = vpop.f32.mrb[0].mxu0
  %1605 = vmatprep.mubr.bf16.mxu0 0
  %1606 = vmatmul.mubr.bf16.gmra.mrb[0].mxu0 %v1030
  %v1607 = vpop.f32.mrb[0].mxu0
  %v1608 = vadd.f32 0.0, %v1607
  %v1609 = vpop.f32.mrb[0].mxu0
  %v1610 = vpop.f32.mrb[0].mxu0
  %v1611 = vadd.f32 0.0, %v1610
  %v1612 = vpop.f32.mrb[0].mxu0
  %1613 = vmatprep.mubr.bf16.mxu0 0
  %1614 = vmatmul.mubr.bf16.gmra.mrb[0].mxu0 %v1033
  %v1615 = vpop.f32.mrb[0].mxu0
  %v1616 = vadd.f32 0.0, %v1615
  %v1617 = vpop.f32.mrb[0].mxu0
  %v1618 = vpop.f32.mrb[0].mxu0
  %v1619 = vadd.f32 0.0, %v1618
  %v1620 = vpop.f32.mrb[0].mxu0
  %1621 = vmatprep.mubr.bf16.mxu0 0
  %1622 = vmatmul.mubr.bf16.gmra.mrb[0].mxu0 %v1036
  %v1623 = vpop.f32.mrb[0].mxu0
  %v1624 = vadd.f32 0.0, %v1623
  %v1625 = vpop.f32.mrb[0].mxu0
  %v1626 = vpop.f32.mrb[0].mxu0
  %v1627 = vadd.f32 0.0, %v1626
  %v1628 = vpop.f32.mrb[0].mxu0
  %1629 = vmatprep.mubr.bf16.mxu0 0
  %1630 = vmatmul.mubr.bf16.gmra.mrb[0].mxu0 %v1039
  %v1631 = vpop.f32.mrb[0].mxu0
  %v1632 = vadd.f32 0.0, %v1631
  %v1633 = vpop.f32.mrb[0].mxu0
  %v1634 = vpop.f32.mrb[0].mxu0
  %v1635 = vadd.f32 0.0, %v1634
  %v1636 = vpop.f32.mrb[0].mxu0
  %1637 = vmatprep.mubr.bf16.mxu0 0
  %1638 = vmatmul.mubr.bf16.gmra.mrb[0].mxu0 %v1042
  %v1639 = vpop.f32.mrb[0].mxu0
  %v1640 = vadd.f32 0.0, %v1639
  %v1641 = vpop.f32.mrb[0].mxu0
  %v1642 = vpop.f32.mrb[0].mxu0
  %v1643 = vadd.f32 0.0, %v1642
  %v1644 = vpop.f32.mrb[0].mxu0
  %1645 = vmatprep.mubr.bf16.mxu0 0
  %1646 = vmatmul.mubr.bf16.gmra.mrb[0].mxu0 %v1045
  %v1647 = vpop.f32.mrb[0].mxu0
  %v1648 = vadd.f32 0.0, %v1647
  %v1649 = vpop.f32.mrb[0].mxu0
  %v1650 = vpop.f32.mrb[0].mxu0
  %v1651 = vadd.f32 0.0, %v1650
  %v1652 = vpop.f32.mrb[0].mxu0
  %1653 = vmatprep.mubr.bf16.mxu0 0
  %1654 = vmatmul.mubr.bf16.gmra.mrb[0].mxu0 %v1048
  %v1655 = vpop.f32.mrb[0].mxu0
  %v1656 = vadd.f32 0.0, %v1655
  %v1657 = vpop.f32.mrb[0].mxu0
  %v1658 = vpop.f32.mrb[0].mxu0
  %v1659 = vadd.f32 0.0, %v1658
  %v1660 = vpop.f32.mrb[0].mxu0
  %1661 = vmatprep.mubr.bf16.mxu0 0
  %1662 = vmatmul.mubr.bf16.gmra.mrb[0].mxu0 %v1051
  %v1663 = vpop.f32.mrb[0].mxu0
  %v1664 = vadd.f32 0.0, %v1663
  %v1665 = vpop.f32.mrb[0].mxu0
  %v1666 = vpop.f32.mrb[0].mxu0
  %v1667 = vadd.f32 0.0, %v1666
  %v1668 = vpop.f32.mrb[0].mxu0
  %1669 = vmatprep.mubr.bf16.mxu0 0
  %1670 = vmatmul.mubr.bf16.gmra.mrb[0].mxu0 %v1054
  %v1671 = vpop.f32.mrb[0].mxu0
  %v1672 = vadd.f32 0.0, %v1671
  %v1673 = vpop.f32.mrb[0].mxu0
  %v1674 = vpop.f32.mrb[0].mxu0
  %v1675 = vadd.f32 0.0, %v1674
  %v1676 = vpop.f32.mrb[0].mxu0
  %1677 = vmatprep.mubr.bf16.mxu0 0
  %1678 = vmatmul.mubr.bf16.gmra.mrb[0].mxu0 %v1057
  %v1679 = vpop.f32.mrb[0].mxu0
  %v1680 = vadd.f32 0.0, %v1679
  %v1681 = vpop.f32.mrb[0].mxu0
  %v1682 = vpop.f32.mrb[0].mxu0
  %v1683 = vadd.f32 0.0, %v1682
  %v1684 = vpop.f32.mrb[0].mxu0
  %1685 = vmatprep.mubr.bf16.mxu0 0
  %1686 = vmatmul.mubr.bf16.gmra.mrb[0].mxu0 %v1060
  %v1687 = vpop.f32.mrb[0].mxu0
  %v1688 = vadd.f32 0.0, %v1687
  %v1689 = vpop.f32.mrb[0].mxu0
  %v1690 = vpop.f32.mrb[0].mxu0
  %v1691 = vadd.f32 0.0, %v1690
  %v1692 = vpop.f32.mrb[0].mxu0
  %1693 = vmatprep.mubr.bf16.mxu0 0
  %1694 = vmatmul.mubr.bf16.gmra.mrb[0].mxu0 %v1063
  %v1695 = vpop.f32.mrb[0].mxu0
  %v1696 = vadd.f32 0.0, %v1695
  %v1697 = vpop.f32.mrb[0].mxu0
  %v1698 = vpop.f32.mrb[0].mxu0
  %v1699 = vadd.f32 0.0, %v1698
  %v1700 = vpop.f32.mrb[0].mxu0
  %1701 = vmatprep.mubr.bf16.mxu0 0
  %1702 = vmatmul.mubr.bf16.gmra.mrb[0].mxu0 %v1066
  %v1703 = vpop.f32.mrb[0].mxu0
  %v1704 = vadd.f32 0.0, %v1703
  %v1705 = vpop.f32.mrb[0].mxu0
  %v1706 = vpop.f32.mrb[0].mxu0
  %v1707 = vadd.f32 0.0, %v1706
  %v1708 = vpop.f32.mrb[0].mxu0
  %1709 = vmatprep.mubr.bf16.mxu0 0
  %1710 = vmatmul.mubr.bf16.gmra.mrb[0].mxu0 %v1069
  %v1711 = vpop.f32.mrb[0].mxu0
  %v1712 = vadd.f32 0.0, %v1711
  %v1713 = vpop.f32.mrb[0].mxu0
  %v1714 = vpop.f32.mrb[0].mxu0
  %v1715 = vadd.f32 0.0, %v1714
  %v1716 = vpop.f32.mrb[0].mxu0
  %1717 = vmatprep.mubr.bf16.mxu0 0
  %1718 = vmatmul.mubr.bf16.gmra.mrb[0].mxu0 %v1072
  %v1719 = vpop.f32.mrb[0].mxu0
  %v1720 = vadd.f32 0.0, %v1719
  %v1721 = vpop.f32.mrb[0].mxu0
  %v1722 = vpop.f32.mrb[0].mxu0
  %v1723 = vadd.f32 0.0, %v1722
  %v1724 = vpop.f32.mrb[0].mxu0
  %1725 = vmatprep.mubr.bf16.mxu0 0
  %1726 = vmatmul.mubr.bf16.gmra.mrb[0].mxu0 %v1075
  %v1727 = vpop.f32.mrb[0].mxu0
  %v1728 = vadd.f32 0.0, %v1727
  %v1729 = vpop.f32.mrb[0].mxu0
  %v1730 = vpop.f32.mrb[0].mxu0
  %v1731 = vadd.f32 0.0, %v1730
  %v1732 = vpop.f32.mrb[0].mxu0
  %1733 = vmatprep.mubr.bf16.mxu0 0
  %1734 = vmatmul.mubr.bf16.gmra.mrb[0].mxu0 %v1078
  %v1735 = vpop.f32.mrb[0].mxu0
  %v1736 = vadd.f32 0.0, %v1735
  %v1737 = vpop.f32.mrb[0].mxu0
  %v1738 = vpop.f32.mrb[0].mxu0
  %v1739 = vadd.f32 0.0, %v1738
  %v1740 = vpop.f32.mrb[0].mxu0
  %1741 = vmatprep.mubr.bf16.mxu0 0
  %1742 = vmatmul.mubr.bf16.gmra.mrb[0].mxu0 %v1081
  %v1743 = vpop.f32.mrb[0].mxu0
  %v1744 = vadd.f32 0.0, %v1743
  %v1745 = vpop.f32.mrb[0].mxu0
  %v1746 = vpop.f32.mrb[0].mxu0
  %v1747 = vadd.f32 0.0, %v1746
  %v1748 = vpop.f32.mrb[0].mxu0
  %1749 = vmatprep.mubr.bf16.mxu0 0
  %1750 = vmatmul.mubr.bf16.gmra.mrb[0].mxu0 %v1084
  %v1751 = vpop.f32.mrb[0].mxu0
  %v1752 = vadd.f32 0.0, %v1751
  %v1753 = vpop.f32.mrb[0].mxu0
  %v1754 = vpop.f32.mrb[0].mxu0
  %v1755 = vadd.f32 0.0, %v1754
  %v1756 = vpop.f32.mrb[0].mxu0
  %1757 = vmatprep.mubr.bf16.mxu0 0
  %1758 = vmatmul.mubr.bf16.gmra.mrb[0].mxu0 %v1087
  %v1759 = vpop.f32.mrb[0].mxu0
  %v1760 = vadd.f32 0.0, %v1759
  %v1761 = vpop.f32.mrb[0].mxu0
  %v1762 = vpop.f32.mrb[0].mxu0
  %v1763 = vadd.f32 0.0, %v1762
  %v1764 = vpop.f32.mrb[0].mxu0
  %1765 = vmatprep.mubr.bf16.mxu0 0
  %1766 = vmatmul.mubr.bf16.gmra.mrb[0].mxu0 %v1090
  %v1767 = vpop.f32.mrb[0].mxu0
  %v1768 = vadd.f32 0.0, %v1767
  %v1769 = vpop.f32.mrb[0].mxu0
  %v1770 = vpop.f32.mrb[0].mxu0
  %v1771 = vadd.f32 0.0, %v1770
  %v1772 = vpop.f32.mrb[0].mxu0
  %1773 = vmatprep.mubr.bf16.mxu0 0
  %1774 = vmatmul.mubr.bf16.gmra.mrb[0].mxu0 %v1093
  %v1775 = vpop.f32.mrb[0].mxu0
  %v1776 = vadd.f32 0.0, %v1775
  %v1777 = vpop.f32.mrb[0].mxu0
  %v1778 = vpop.f32.mrb[0].mxu0
  %v1779 = vadd.f32 0.0, %v1778
  %v1780 = vpop.f32.mrb[0].mxu0
  %1781 = vmatprep.mubr.bf16.mxu0 0
  %1782 = vmatmul.mubr.bf16.gmra.mrb[0].mxu0 %v1096
  %v1783 = vpop.f32.mrb[0].mxu0
  %v1784 = vadd.f32 0.0, %v1783
  %v1785 = vpop.f32.mrb[0].mxu0
  %v1786 = vpop.f32.mrb[0].mxu0
  %v1787 = vadd.f32 0.0, %v1786
  %v1788 = vpop.f32.mrb[0].mxu0
  %1789 = vmatprep.mubr.bf16.mxu0 0
  %1790 = vmatmul.mubr.bf16.gmra.mrb[0].mxu0 %v1099
  %v1791 = vpop.f32.mrb[0].mxu0
  %v1792 = vadd.f32 0.0, %v1791
  %v1793 = vpop.f32.mrb[0].mxu0
  %v1794 = vpop.f32.mrb[0].mxu0
  %v1795 = vadd.f32 0.0, %v1794
  %v1796 = vpop.f32.mrb[0].mxu0
  %1797 = vmatprep.mubr.bf16.mxu0 0
  %1798 = vmatmul.mubr.bf16.gmra.mrb[0].mxu0 %v1102
  %v1799 = vpop.f32.mrb[0].mxu0
  %v1800 = vadd.f32 0.0, %v1799
  %v1801 = vpop.f32.mrb[0].mxu0
  %v1802 = vpop.f32.mrb[0].mxu0
  %v1803 = vadd.f32 0.0, %v1802
  %v1804 = vpop.f32.mrb[0].mxu0
  %1805 = vmatprep.mubr.bf16.mxu0 0
  %1806 = vmatmul.mubr.bf16.gmra.mrb[0].mxu0 %v1105
  %v1807 = vpop.f32.mrb[0].mxu0
  %v1808 = vadd.f32 0.0, %v1807
  %v1809 = vpop.f32.mrb[0].mxu0
  %v1810 = vpop.f32.mrb[0].mxu0
  %v1811 = vadd.f32 0.0, %v1810
  %v1812 = vpop.f32.mrb[0].mxu0
  %1813 = vmatprep.mubr.bf16.mxu0 0
  %1814 = vmatmul.mubr.bf16.gmra.mrb[0].mxu0 %v1108
  %v1815 = vpop.f32.mrb[0].mxu0
  %v1816 = vadd.f32 0.0, %v1815
  %v1817 = vpop.f32.mrb[0].mxu0
  %v1818 = vpop.f32.mrb[0].mxu0
  %v1819 = vadd.f32 0.0, %v1818
  %v1820 = vpop.f32.mrb[0].mxu0
  %1821 = vmatprep.mubr.bf16.mxu0 0
  %1822 = vmatmul.mubr.bf16.gmra.mrb[0].mxu0 %v1111
  %v1823 = vpop.f32.mrb[0].mxu0
  %v1824 = vadd.f32 0.0, %v1823
  %v1825 = vpop.f32.mrb[0].mxu0
  %v1826 = vpop.f32.mrb[0].mxu0
  %v1827 = vadd.f32 0.0, %v1826
  %v1828 = vpop.f32.mrb[0].mxu0
  %1829 = vmatprep.mubr.bf16.mxu0 0
  %1830 = vmatmul.mubr.bf16.gmra.mrb[0].mxu0 %v1114
  %v1831 = vpop.f32.mrb[0].mxu0
  %v1832 = vadd.f32 0.0, %v1831
  %v1833 = vpop.f32.mrb[0].mxu0
  %v1834 = vpop.f32.mrb[0].mxu0
  %v1835 = vadd.f32 0.0, %v1834
  %v1836 = vpop.f32.mrb[0].mxu0
  %1837 = vmatprep.mubr.bf16.mxu0 0
  %1838 = vmatmul.mubr.bf16.gmra.mrb[0].mxu0 %v1117
  %v1839 = vpop.f32.mrb[0].mxu0
  %v1840 = vadd.f32 0.0, %v1839
  %v1841 = vpop.f32.mrb[0].mxu0
  %v1842 = vpop.f32.mrb[0].mxu0
  %v1843 = vadd.f32 0.0, %v1842
  %v1844 = vpop.f32.mrb[0].mxu0
  %1845 = vmatprep.mubr.bf16.mxu0 0
  %1846 = vmatmul.mubr.bf16.gmra.mrb[0].mxu0 %v1120
  %v1847 = vpop.f32.mrb[0].mxu0
  %v1848 = vadd.f32 0.0, %v1847
  %v1849 = vpop.f32.mrb[0].mxu0
  %v1850 = vpop.f32.mrb[0].mxu0
  %v1851 = vadd.f32 0.0, %v1850
  %v1852 = vpop.f32.mrb[0].mxu0
  %1853 = vmatprep.mubr.bf16.mxu0 0
  %1854 = vmatmul.mubr.bf16.gmra.mrb[0].mxu0 %v1123
  %v1855 = vpop.f32.mrb[0].mxu0
  %v1856 = vadd.f32 0.0, %v1855
  %v1857 = vpop.f32.mrb[0].mxu0
  %v1858 = vpop.f32.mrb[0].mxu0
  %v1859 = vadd.f32 0.0, %v1858
  %v1860 = vpop.f32.mrb[0].mxu0
  %1861 = vmatprep.mubr.bf16.mxu0 0
  %1862 = vmatmul.mubr.bf16.gmra.mrb[0].mxu0 %v1126
  %v1863 = vpop.f32.mrb[0].mxu0
  %v1864 = vadd.f32 0.0, %v1863
  %v1865 = vpop.f32.mrb[0].mxu0
  %v1866 = vpop.f32.mrb[0].mxu0
  %v1867 = vadd.f32 0.0, %v1866
  %v1868 = vpop.f32.mrb[0].mxu0
  %1869 = vmatprep.mubr.bf16.mxu0 0
  %1870 = vmatmul.mubr.bf16.gmra.mrb[0].mxu0 %v1129
  %v1871 = vpop.f32.mrb[0].mxu0
  %v1872 = vadd.f32 0.0, %v1871
  %v1873 = vpop.f32.mrb[0].mxu0
  %v1874 = vpop.f32.mrb[0].mxu0
  %v1875 = vadd.f32 0.0, %v1874
  %v1876 = vpop.f32.mrb[0].mxu0
  %1877 = vmatprep.mubr.bf16.mxu0 0
  %1878 = vmatmul.mubr.bf16.gmra.mrb[0].mxu0 %v1132
  %v1879 = vpop.f32.mrb[0].mxu0
  %v1880 = vadd.f32 0.0, %v1879
  %v1881 = vpop.f32.mrb[0].mxu0
  %v1882 = vpop.f32.mrb[0].mxu0
  %v1883 = vadd.f32 0.0, %v1882
  %v1884 = vpop.f32.mrb[0].mxu0
  %1885 = vmatprep.mubr.bf16.mxu0 0
  %1886 = vmatmul.mubr.bf16.gmra.mrb[0].mxu0 %v1135
  %v1887 = vpop.f32.mrb[0].mxu0
  %v1888 = vadd.f32 0.0, %v1887
  %v1889 = vpop.f32.mrb[0].mxu0
  %v1890 = vpop.f32.mrb[0].mxu0
  %v1891 = vadd.f32 0.0, %v1890
  %v1892 = vpop.f32.mrb[0].mxu0
  %1893 = vmatprep.mubr.bf16.mxu0 0
  %1894 = vmatmul.mubr.bf16.gmra.mrb[0].mxu0 %v1138
  %v1895 = vpop.f32.mrb[0].mxu0
  %v1896 = vadd.f32 0.0, %v1895
  %v1897 = vpop.f32.mrb[0].mxu0
  %v1898 = vpop.f32.mrb[0].mxu0
  %v1899 = vadd.f32 0.0, %v1898
  %v1900 = vpop.f32.mrb[0].mxu0
  %1901 = vmatprep.mubr.bf16.mxu0 0
  %1902 = vmatmul.mubr.bf16.gmra.mrb[0].mxu0 %v1141
  %v1903 = vpop.f32.mrb[0].mxu0
  %v1904 = vadd.f32 0.0, %v1903
  %v1905 = vpop.f32.mrb[0].mxu0
  %v1906 = vpop.f32.mrb[0].mxu0
  %v1907 = vadd.f32 0.0, %v1906
  %v1908 = vpop.f32.mrb[0].mxu0
  %1909 = vmatprep.mubr.bf16.mxu0 0
  %1910 = vmatmul.mubr.bf16.gmra.mrb[0].mxu0 %v1144
  %v1911 = vpop.f32.mrb[0].mxu0
  %v1912 = vadd.f32 0.0, %v1911
  %v1913 = vpop.f32.mrb[0].mxu0
  %v1914 = vpop.f32.mrb[0].mxu0
  %v1915 = vadd.f32 0.0, %v1914
  %v1916 = vpop.f32.mrb[0].mxu0
  %1917 = vmatprep.mubr.bf16.mxu0 0
  %1918 = vmatmul.mubr.bf16.gmra.mrb[0].mxu0 %v1147
  %v1919 = vpop.f32.mrb[0].mxu0
  %v1920 = vadd.f32 0.0, %v1919
  %v1921 = vpop.f32.mrb[0].mxu0
  %v1922 = vpop.f32.mrb[0].mxu0
  %v1923 = vadd.f32 0.0, %v1922
  %v1924 = vpop.f32.mrb[0].mxu0
  %1925 = vmatprep.mubr.bf16.mxu0 0
  %1926 = vmatmul.mubr.bf16.gmra.mrb[0].mxu0 %v1150
  %v1927 = vpop.f32.mrb[0].mxu0
  %v1928 = vadd.f32 0.0, %v1927
  %v1929 = vpop.f32.mrb[0].mxu0
  %v1930 = vpop.f32.mrb[0].mxu0
  %v1931 = vadd.f32 0.0, %v1930
  %v1932 = vpop.f32.mrb[0].mxu0
  %1933 = vmatprep.mubr.bf16.mxu0 0
  %1934 = vmatmul.mubr.bf16.gmra.mrb[0].mxu0 %v1153
  %v1935 = vpop.f32.mrb[0].mxu0
  %v1936 = vadd.f32 0.0, %v1935
  %v1937 = vpop.f32.mrb[0].mxu0
  %v1938 = vpop.f32.mrb[0].mxu0
  %v1939 = vadd.f32 0.0, %v1938
  %v1940 = vpop.f32.mrb[0].mxu0
  %1941 = vmatprep.mubr.bf16.mxu0 0
  %1942 = vmatmul.mubr.bf16.gmra.mrb[0].mxu0 %v1156
  %v1943 = vpop.f32.mrb[0].mxu0
  %v1944 = vadd.f32 0.0, %v1943
  %v1945 = vpop.f32.mrb[0].mxu0
  %v1946 = vpop.f32.mrb[0].mxu0
  %v1947 = vadd.f32 0.0, %v1946
  %v1948 = vpop.f32.mrb[0].mxu0
  %1949 = vmatprep.mubr.bf16.mxu0 0
  %1950 = vmatmul.mubr.bf16.gmra.mrb[0].mxu0 %v1159
  %v1951 = vpop.f32.mrb[0].mxu0
  %v1952 = vadd.f32 0.0, %v1951
  %v1953 = vpop.f32.mrb[0].mxu0
  %v1954 = vpop.f32.mrb[0].mxu0
  %v1955 = vadd.f32 0.0, %v1954
  %v1956 = vpop.f32.mrb[0].mxu0
  %1957 = vmatprep.mubr.bf16.mxu0 0
  %1958 = vmatmul.mubr.bf16.gmra.mrb[0].mxu0 %v1162
  %v1959 = vpop.f32.mrb[0].mxu0
  %v1960 = vadd.f32 0.0, %v1959
  %v1961 = vpop.f32.mrb[0].mxu0
  %v1962 = vpop.f32.mrb[0].mxu0
  %v1963 = vadd.f32 0.0, %v1962
  %v1964 = vpop.f32.mrb[0].mxu0
  %1965 = vmatprep.mubr.bf16.mxu0 0
  %1966 = vmatmul.mubr.bf16.gmra.mrb[0].mxu0 %v1165
  %v1967 = vpop.f32.mrb[0].mxu0
  %v1968 = vadd.f32 0.0, %v1967
  %v1969 = vpop.f32.mrb[0].mxu0
  %v1970 = vpop.f32.mrb[0].mxu0
  %v1971 = vadd.f32 0.0, %v1970
  %v1972 = vpop.f32.mrb[0].mxu0
  %1973 = vmatprep.mubr.bf16.mxu0 0
  %1974 = vmatmul.mubr.bf16.gmra.mrb[0].mxu0 %v1168
  %v1975 = vpop.f32.mrb[0].mxu0
  %v1976 = vadd.f32 0.0, %v1975
  %v1977 = vpop.f32.mrb[0].mxu0
  %v1978 = vpop.f32.mrb[0].mxu0
  %v1979 = vadd.f32 0.0, %v1978
  %v1980 = vpop.f32.mrb[0].mxu0
  %1981 = vmatprep.mubr.bf16.mxu0 0
  %1982 = vmatmul.mubr.bf16.gmra.mrb[0].mxu0 %v1171
  %v1983 = vpop.f32.mrb[0].mxu0
  %v1984 = vadd.f32 0.0, %v1983
  %v1985 = vpop.f32.mrb[0].mxu0
  %v1986 = vpop.f32.mrb[0].mxu0
  %v1987 = vadd.f32 0.0, %v1986
  %v1988 = vpop.f32.mrb[0].mxu0
  %1989 = vmatprep.mubr.bf16.mxu0 0
  %1990 = vmatmul.mubr.bf16.gmra.mrb[0].mxu0 %v1174
  %v1991 = vpop.f32.mrb[0].mxu0
  %v1992 = vadd.f32 0.0, %v1991
  %v1993 = vpop.f32.mrb[0].mxu0
  %v1994 = vpop.f32.mrb[0].mxu0
  %v1995 = vadd.f32 0.0, %v1994
  %v1996 = vpop.f32.mrb[0].mxu0
  %1997 = vmatprep.mubr.bf16.mxu0 0
  %1998 = vmatmul.mubr.bf16.gmra.mrb[0].mxu0 %v1177
  %v1999 = vpop.f32.mrb[0].mxu0
  %v2000 = vadd.f32 0.0, %v1999
  %v2001 = vpop.f32.mrb[0].mxu0
  %v2002 = vpop.f32.mrb[0].mxu0
  %v2003 = vadd.f32 0.0, %v2002
  %v2004 = vpop.f32.mrb[0].mxu0
  %2005 = vmatprep.mubr.bf16.mxu0 0
  %2006 = vmatmul.mubr.bf16.gmra.mrb[0].mxu0 %v1180
  %v2007 = vpop.f32.mrb[0].mxu0
  %v2008 = vadd.f32 0.0, %v2007
  %v2009 = vpop.f32.mrb[0].mxu0
  %v2010 = vpop.f32.mrb[0].mxu0
  %v2011 = vadd.f32 0.0, %v2010
  %v2012 = vpop.f32.mrb[0].mxu0
  %2013 = vmatprep.mubr.bf16.mxu0 0
  %2014 = vmatmul.mubr.bf16.gmra.mrb[0].mxu0 %v1183
  %v2015 = vpop.f32.mrb[0].mxu0
  %v2016 = vadd.f32 0.0, %v2015
  %v2017 = vpop.f32.mrb[0].mxu0
  %v2018 = vpop.f32.mrb[0].mxu0
  %v2019 = vadd.f32 0.0, %v2018
  %v2020 = vpop.f32.mrb[0].mxu0
  %2021 = vmatprep.mubr.bf16.mxu0 0
  %2022 = vmatmul.mubr.bf16.gmra.mrb[0].mxu0 %v1186
  %v2023 = vpop.f32.mrb[0].mxu0
  %v2024 = vadd.f32 0.0, %v2023
  %v2025 = vpop.f32.mrb[0].mxu0
  %v2026 = vpop.f32.mrb[0].mxu0
  %v2027 = vadd.f32 0.0, %v2026
  %v2028 = vpop.f32.mrb[0].mxu0
  %2029 = vmatprep.mubr.bf16.mxu0 0
  %2030 = vmatmul.mubr.bf16.gmra.mrb[0].mxu0 %v1189
  %v2031 = vpop.f32.mrb[0].mxu0
  %v2032 = vadd.f32 0.0, %v2031
  %v2033 = vpop.f32.mrb[0].mxu0
  %v2034 = vpop.f32.mrb[0].mxu0
  %v2035 = vadd.f32 0.0, %v2034
  %v2036 = vpop.f32.mrb[0].mxu0
  %2037 = vmatprep.mubr.bf16.mxu0 0
  %2038 = vmatmul.mubr.bf16.gmra.mrb[0].mxu0 %v1192
  %v2039 = vpop.f32.mrb[0].mxu0
  %v2040 = vadd.f32 0.0, %v2039
  %v2041 = vpop.f32.mrb[0].mxu0
  %v2042 = vpop.f32.mrb[0].mxu0
  %v2043 = vadd.f32 0.0, %v2042
  %v2044 = vpop.f32.mrb[0].mxu0
  %2045 = vmatprep.mubr.bf16.mxu0 0
  %2046 = vmatmul.mubr.bf16.gmra.mrb[0].mxu0 %v1195
  %v2047 = vpop.f32.mrb[0].mxu0
  %v2048 = vadd.f32 0.0, %v2047
  %v2049 = vpop.f32.mrb[0].mxu0
  %v2050 = vpop.f32.mrb[0].mxu0
  %v2051 = vadd.f32 0.0, %v2050
  %v2052 = vpop.f32.mrb[0].mxu0
  %2053 = vmatprep.mubr.bf16.mxu0 0
  %2054 = vmatmul.mubr.bf16.gmra.mrb[0].mxu0 %v1198
  %v2055 = vpop.f32.mrb[0].mxu0
  %v2056 = vadd.f32 0.0, %v2055
  %v2057 = vpop.f32.mrb[0].mxu0
  %v2058 = vpop.f32.mrb[0].mxu0
  %v2059 = vadd.f32 0.0, %v2058
  %v2060 = vpop.f32.mrb[0].mxu0
  %2061 = vmatprep.mubr.bf16.mxu0 0
  %2062 = vmatmul.mubr.bf16.gmra.mrb[0].mxu0 %v1201
  %v2063 = vpop.f32.mrb[0].mxu0
  %v2064 = vadd.f32 0.0, %v2063
  %v2065 = vpop.f32.mrb[0].mxu0
  %v2066 = vpop.f32.mrb[0].mxu0
  %v2067 = vadd.f32 0.0, %v2066
  %v2068 = vpop.f32.mrb[0].mxu0
  %2069 = vmatprep.mubr.bf16.mxu0 0
  %2070 = vmatmul.mubr.bf16.gmra.mrb[0].mxu0 %v1204
  %v2071 = vpop.f32.mrb[0].mxu0
  %v2072 = vadd.f32 0.0, %v2071
  %v2073 = vpop.f32.mrb[0].mxu0
  %v2074 = vpop.f32.mrb[0].mxu0
  %v2075 = vadd.f32 0.0, %v2074
  %v2076 = vpop.f32.mrb[0].mxu0
  %2077 = vmatprep.mubr.bf16.mxu0 0
  %2078 = vmatmul.mubr.bf16.gmra.mrb[0].mxu0 %v1207
  %v2079 = vpop.f32.mrb[0].mxu0
  %v2080 = vadd.f32 0.0, %v2079
  %v2081 = vpop.f32.mrb[0].mxu0
  %v2082 = vpop.f32.mrb[0].mxu0
  %v2083 = vadd.f32 0.0, %v2082
  %v2084 = vpop.f32.mrb[0].mxu0
  %2085 = vmatprep.mubr.bf16.mxu0 0
  %2086 = vmatmul.mubr.bf16.gmra.mrb[0].mxu0 %v1210
  %v2087 = vpop.f32.mrb[0].mxu0
  %v2088 = vadd.f32 0.0, %v2087
  %v2089 = vpop.f32.mrb[0].mxu0
  %v2090 = vpop.f32.mrb[0].mxu0
  %v2091 = vadd.f32 0.0, %v2090
  %v2092 = vpop.f32.mrb[0].mxu0
  %2093 = vmatprep.mubr.bf16.mxu0 0
  %2094 = vmatmul.mubr.bf16.gmra.mrb[0].mxu0 %v1213
  %v2095 = vpop.f32.mrb[0].mxu0
  %v2096 = vadd.f32 0.0, %v2095
  %v2097 = vpop.f32.mrb[0].mxu0
  %v2098 = vpop.f32.mrb[0].mxu0
  %v2099 = vadd.f32 0.0, %v2098
  %v2100 = vpop.f32.mrb[0].mxu0
  %2101 = vmatprep.mubr.bf16.mxu0 0
  %2102 = vmatmul.mubr.bf16.gmra.mrb[0].mxu0 %v1216
  %v2103 = vpop.f32.mrb[0].mxu0
  %v2104 = vadd.f32 0.0, %v2103
  %v2105 = vpop.f32.mrb[0].mxu0
  %v2106 = vpop.f32.mrb[0].mxu0
  %v2107 = vadd.f32 0.0, %v2106
  %v2108 = vpop.f32.mrb[0].mxu0
  %2109 = vmatprep.mubr.bf16.mxu0 0
  %2110 = vmatmul.mubr.bf16.gmra.mrb[0].mxu0 %v1219
  %v2111 = vpop.f32.mrb[0].mxu0
  %v2112 = vadd.f32 0.0, %v2111
  %v2113 = vpop.f32.mrb[0].mxu0
  %v2114 = vpop.f32.mrb[0].mxu0
  %v2115 = vadd.f32 0.0, %v2114
  %v2116 = vpop.f32.mrb[0].mxu0
  %2117 = vmatprep.mubr.bf16.mxu0 0
  %2118 = vmatmul.mubr.bf16.gmra.mrb[0].mxu0 %v1222
  %v2119 = vpop.f32.mrb[0].mxu0
  %v2120 = vadd.f32 0.0, %v2119
  %v2121 = vpop.f32.mrb[0].mxu0
  %v2122 = vpop.f32.mrb[0].mxu0
  %v2123 = vadd.f32 0.0, %v2122
  %v2124 = vpop.f32.mrb[0].mxu0
  %2125 = vmatprep.mubr.bf16.mxu0 0
  %2126 = vmatmul.mubr.bf16.gmra.mrb[0].mxu0 %v1225
  %v2127 = vpop.f32.mrb[0].mxu0
  %v2128 = vadd.f32 0.0, %v2127
  %v2129 = vpop.f32.mrb[0].mxu0
  %v2130 = vpop.f32.mrb[0].mxu0
  %v2131 = vadd.f32 0.0, %v2130
  %v2132 = vpop.f32.mrb[0].mxu0
  %2133 = vmatprep.mubr.bf16.mxu0 0
  %2134 = vmatmul.mubr.bf16.gmra.mrb[0].mxu0 %v1228
  %v2135 = vpop.f32.mrb[0].mxu0
  %v2136 = vadd.f32 0.0, %v2135
  %v2137 = vpop.f32.mrb[0].mxu0
  %v2138 = vpop.f32.mrb[0].mxu0
  %v2139 = vadd.f32 0.0, %v2138
  %v2140 = vpop.f32.mrb[0].mxu0
  %2141 = vmatprep.mubr.bf16.mxu0 0
  %2142 = vmatmul.mubr.bf16.gmra.mrb[0].mxu0 %v1231
  %v2143 = vpop.f32.mrb[0].mxu0
  %v2144 = vadd.f32 0.0, %v2143
  %v2145 = vpop.f32.mrb[0].mxu0
  %v2146 = vpop.f32.mrb[0].mxu0
  %v2147 = vadd.f32 0.0, %v2146
  %v2148 = vpop.f32.mrb[0].mxu0
  %2149 = vmatprep.mubr.bf16.mxu0 0
  %2150 = vmatmul.mubr.bf16.gmra.mrb[0].mxu0 %v1234
  %v2151 = vpop.f32.mrb[0].mxu0
  %v2152 = vadd.f32 0.0, %v2151
  %v2153 = vpop.f32.mrb[0].mxu0
  %v2154 = vpop.f32.mrb[0].mxu0
  %v2155 = vadd.f32 0.0, %v2154
  %v2156 = vpop.f32.mrb[0].mxu0
  %2157 = vmatprep.mubr.bf16.mxu0 0
  %2158 = vmatmul.mubr.bf16.gmra.mrb[0].mxu0 %v1237
  %v2159 = vpop.f32.mrb[0].mxu0
  %v2160 = vadd.f32 0.0, %v2159
  %v2161 = vpop.f32.mrb[0].mxu0
  %v2162 = vpop.f32.mrb[0].mxu0
  %v2163 = vadd.f32 0.0, %v2162
  %v2164 = vpop.f32.mrb[0].mxu0
  %2165 = vmatprep.mubr.bf16.mxu0 0
  %2166 = vmatmul.mubr.bf16.gmra.mrb[0].mxu0 %v1240
  %v2167 = vpop.f32.mrb[0].mxu0
  %v2168 = vadd.f32 0.0, %v2167
  %v2169 = vpop.f32.mrb[0].mxu0
  %v2170 = vpop.f32.mrb[0].mxu0
  %v2171 = vadd.f32 0.0, %v2170
  %v2172 = vpop.f32.mrb[0].mxu0
  %2173 = vmatprep.mubr.bf16.mxu0 0
  %2174 = vmatmul.mubr.bf16.gmra.mrb[0].mxu0 %v1243
  %v2175 = vpop.f32.mrb[0].mxu0
  %v2176 = vadd.f32 0.0, %v2175
  %v2177 = vpop.f32.mrb[0].mxu0
  %v2178 = vpop.f32.mrb[0].mxu0
  %v2179 = vadd.f32 0.0, %v2178
  %v2180 = vpop.f32.mrb[0].mxu0
  %2181 = vmatprep.mubr.bf16.mxu0 0
  %2182 = vmatmul.mubr.bf16.gmra.mrb[0].mxu0 %v1246
  %v2183 = vpop.f32.mrb[0].mxu0
  %v2184 = vadd.f32 0.0, %v2183
  %v2185 = vpop.f32.mrb[0].mxu0
  %v2186 = vpop.f32.mrb[0].mxu0
  %v2187 = vadd.f32 0.0, %v2186
  %v2188 = vpop.f32.mrb[0].mxu0
  %2189 = vmatprep.mubr.bf16.mxu0 0
  %2190 = vmatmul.mubr.bf16.gmra.mrb[0].mxu0 %v1249
  %v2191 = vpop.f32.mrb[0].mxu0
  %v2192 = vadd.f32 0.0, %v2191
  %v2193 = vpop.f32.mrb[0].mxu0
  %v2194 = vpop.f32.mrb[0].mxu0
  %v2195 = vadd.f32 0.0, %v2194
  %v2196 = vpop.f32.mrb[0].mxu0
  %2197 = vmatprep.mubr.bf16.mxu0 0
  %2198 = vmatmul.mubr.bf16.gmra.mrb[0].mxu0 %v1252
  %v2199 = vpop.f32.mrb[0].mxu0
  %v2200 = vadd.f32 0.0, %v2199
  %v2201 = vpop.f32.mrb[0].mxu0
  %v2202 = vpop.f32.mrb[0].mxu0
  %v2203 = vadd.f32 0.0, %v2202
  %v2204 = vpop.f32.mrb[0].mxu0
  %2205 = vmatprep.mubr.bf16.mxu0 0
  %2206 = vmatmul.mubr.bf16.gmra.mrb[0].mxu0 %v1255
  %v2207 = vpop.f32.mrb[0].mxu0
  %v2208 = vadd.f32 0.0, %v2207
  %v2209 = vpop.f32.mrb[0].mxu0
  %v2210 = vpop.f32.mrb[0].mxu0
  %v2211 = vadd.f32 0.0, %v2210
  %v2212 = vpop.f32.mrb[0].mxu0
  %2213 = vmatprep.mubr.bf16.mxu0 0
  %2214 = vmatmul.mubr.bf16.gmra.mrb[0].mxu0 %v1258
  %v2215 = vpop.f32.mrb[0].mxu0
  %v2216 = vadd.f32 0.0, %v2215
  %v2217 = vpop.f32.mrb[0].mxu0
  %v2218 = vpop.f32.mrb[0].mxu0
  %v2219 = vadd.f32 0.0, %v2218
  %v2220 = vpop.f32.mrb[0].mxu0
  %2221 = vmatprep.mubr.bf16.mxu0 0
  %2222 = vmatmul.mubr.bf16.gmra.mrb[0].mxu0 %v1261
  %v2223 = vpop.f32.mrb[0].mxu0
  %v2224 = vadd.f32 0.0, %v2223
  %v2225 = vpop.f32.mrb[0].mxu0
  %v2226 = vpop.f32.mrb[0].mxu0
  %v2227 = vadd.f32 0.0, %v2226
  %v2228 = vpop.f32.mrb[0].mxu0
  %2229 = vmatprep.mubr.bf16.mxu0 0
  %2230 = vmatmul.mubr.bf16.gmra.mrb[0].mxu0 %v1264
  %v2231 = vpop.f32.mrb[0].mxu0
  %v2232 = vadd.f32 0.0, %v2231
  %v2233 = vpop.f32.mrb[0].mxu0
  %v2234 = vpop.f32.mrb[0].mxu0
  %v2235 = vadd.f32 0.0, %v2234
  %v2236 = vpop.f32.mrb[0].mxu0
  %2237 = vmatprep.mubr.bf16.mxu0 0
  %2238 = vmatmul.mubr.bf16.gmra.mrb[0].mxu0 %v1267
  %v2239 = vpop.f32.mrb[0].mxu0
  %v2240 = vadd.f32 0.0, %v2239
  %v2241 = vpop.f32.mrb[0].mxu0
  %v2242 = vpop.f32.mrb[0].mxu0
  %v2243 = vadd.f32 0.0, %v2242
  %v2244 = vpop.f32.mrb[0].mxu0
  %2245 = vmatprep.mubr.bf16.mxu0 0
  %2246 = vmatmul.mubr.bf16.gmra.mrb[0].mxu0 %v1270
  %v2247 = vpop.f32.mrb[0].mxu0
  %v2248 = vadd.f32 0.0, %v2247
  %v2249 = vpop.f32.mrb[0].mxu0
  %v2250 = vpop.f32.mrb[0].mxu0
  %v2251 = vadd.f32 0.0, %v2250
  %v2252 = vpop.f32.mrb[0].mxu0
  %2253 = vmatprep.mubr.bf16.mxu0 0
  %2254 = vmatmul.mubr.bf16.gmra.mrb[0].mxu0 %v1273
  %v2255 = vpop.f32.mrb[0].mxu0
  %v2256 = vadd.f32 0.0, %v2255
  %v2257 = vpop.f32.mrb[0].mxu0
  %v2258 = vpop.f32.mrb[0].mxu0
  %v2259 = vadd.f32 0.0, %v2258
  %v2260 = vpop.f32.mrb[0].mxu0
  %2261 = vmatprep.mubr.bf16.mxu0 0
  %2262 = vmatmul.mubr.bf16.gmra.mrb[0].mxu0 %v1276
  %v2263 = vpop.f32.mrb[0].mxu0
  %v2264 = vadd.f32 0.0, %v2263
  %v2265 = vpop.f32.mrb[0].mxu0
  %v2266 = vpop.f32.mrb[0].mxu0
  %v2267 = vadd.f32 0.0, %v2266
  %v2268 = vpop.f32.mrb[0].mxu0
  %2269 = vmatprep.mubr.bf16.mxu0 0
  %2270 = vmatmul.mubr.bf16.gmra.mrb[0].mxu0 %v1279
  %v2271 = vpop.f32.mrb[0].mxu0
  %v2272 = vadd.f32 0.0, %v2271
  %v2273 = vpop.f32.mrb[0].mxu0
  %v2274 = vpop.f32.mrb[0].mxu0
  %v2275 = vadd.f32 0.0, %v2274
  %v2276 = vpop.f32.mrb[0].mxu0
  %2277 = vmatprep.mubr.bf16.mxu0 0
  %2278 = vmatmul.mubr.bf16.gmra.mrb[0].mxu0 %v1282
  %v2279 = vpop.f32.mrb[0].mxu0
  %v2280 = vadd.f32 0.0, %v2279
  %v2281 = vpop.f32.mrb[0].mxu0
  %v2282 = vpop.f32.mrb[0].mxu0
  %v2283 = vadd.f32 0.0, %v2282
  %v2284 = vpop.f32.mrb[0].mxu0
  %2285 = vmatprep.mubr.bf16.mxu0 0
  %2286 = vmatmul.mubr.bf16.gmra.mrb[0].mxu0 %v1285
  %v2287 = vpop.f32.mrb[0].mxu0
  %v2288 = vadd.f32 0.0, %v2287
  %v2289 = vpop.f32.mrb[0].mxu0
  %v2290 = vpop.f32.mrb[0].mxu0
  %v2291 = vadd.f32 0.0, %v2290
  %v2292 = vpop.f32.mrb[0].mxu0
  %2293 = vmatprep.mubr.bf16.mxu0 0
  %2294 = vmatmul.mubr.bf16.gmra.mrb[0].mxu0 %v1288
  %v2295 = vpop.f32.mrb[0].mxu0
  %v2296 = vadd.f32 0.0, %v2295
  %v2297 = vpop.f32.mrb[0].mxu0
  %v2298 = vpop.f32.mrb[0].mxu0
  %v2299 = vadd.f32 0.0, %v2298
  %v2300 = vpop.f32.mrb[0].mxu0
  %2301 = vmatprep.mubr.bf16.mxu0 0
  %2302 = vmatmul.mubr.bf16.gmra.mrb[0].mxu0 %v1291
  %v2303 = vpop.f32.mrb[0].mxu0
  %v2304 = vadd.f32 0.0, %v2303
  %v2305 = vpop.f32.mrb[0].mxu0
  %v2306 = vpop.f32.mrb[0].mxu0
  %v2307 = vadd.f32 0.0, %v2306
  %v2308 = vpop.f32.mrb[0].mxu0
  %2309 = vmatprep.mubr.bf16.mxu0 0
  %2310 = vmatmul.mubr.bf16.gmra.mrb[0].mxu0 %v1294
  %v2311 = vpop.f32.mrb[0].mxu0
  %v2312 = vadd.f32 0.0, %v2311
  %v2313 = vpop.f32.mrb[0].mxu0
  %v2314 = vpop.f32.mrb[0].mxu0
  %v2315 = vadd.f32 0.0, %v2314
  %v2316 = vpop.f32.mrb[0].mxu0
  %2317 = vmatprep.mubr.bf16.mxu0 0
  %2318 = vmatmul.mubr.bf16.gmra.mrb[0].mxu0 %v1297
  %v2319 = vpop.f32.mrb[0].mxu0
  %v2320 = vadd.f32 0.0, %v2319
  %v2321 = vpop.f32.mrb[0].mxu0
  %v2322 = vpop.f32.mrb[0].mxu0
  %v2323 = vadd.f32 0.0, %v2322
  %v2324 = vpop.f32.mrb[0].mxu0
  %2325 = vmatprep.mubr.bf16.mxu0 0
  %2326 = vmatmul.mubr.bf16.gmra.mrb[0].mxu0 %v1300
  %v2327 = vpop.f32.mrb[0].mxu0
  %v2328 = vadd.f32 0.0, %v2327
  %v2329 = vpop.f32.mrb[0].mxu0
  %v2330 = vpop.f32.mrb[0].mxu0
  %v2331 = vadd.f32 0.0, %v2330
  %v2332 = vpop.f32.mrb[0].mxu0
  %2333 = vmatprep.mubr.bf16.mxu0 0
  %2334 = vmatmul.mubr.bf16.gmra.mrb[0].mxu0 %v1303
  %v2335 = vpop.f32.mrb[0].mxu0
  %v2336 = vadd.f32 0.0, %v2335
  %v2337 = vpop.f32.mrb[0].mxu0
  %v2338 = vpop.f32.mrb[0].mxu0
  %v2339 = vadd.f32 0.0, %v2338
  %v2340 = vpop.f32.mrb[0].mxu0
  %2341 = vmatprep.mubr.bf16.mxu0 0
  %2342 = vmatmul.mubr.bf16.gmra.mrb[0].mxu0 %v1306
  %v2343 = vpop.f32.mrb[0].mxu0
  %v2344 = vadd.f32 0.0, %v2343
  %v2345 = vpop.f32.mrb[0].mxu0
  %v2346 = vpop.f32.mrb[0].mxu0
  %v2347 = vadd.f32 0.0, %v2346
  %v2348 = vpop.f32.mrb[0].mxu0
  %2349 = vmatprep.mubr.bf16.mxu0 0
  %2350 = vmatmul.mubr.bf16.gmra.mrb[0].mxu0 %v1309
  %v2351 = vpop.f32.mrb[0].mxu0
  %v2352 = vadd.f32 0.0, %v2351
  %v2353 = vpop.f32.mrb[0].mxu0
  %v2354 = vpop.f32.mrb[0].mxu0
  %v2355 = vadd.f32 0.0, %v2354
  %v2356 = vpop.f32.mrb[0].mxu0
  %2357 = vmatprep.mubr.bf16.mxu0 0
  %2358 = vmatmul.mubr.bf16.gmra.mrb[0].mxu0 %v1312
  %v2359 = vpop.f32.mrb[0].mxu0
  %v2360 = vadd.f32 0.0, %v2359
  %v2361 = vpop.f32.mrb[0].mxu0
  %v2362 = vpop.f32.mrb[0].mxu0
  %v2363 = vadd.f32 0.0, %v2362
  %v2364 = vpop.f32.mrb[0].mxu0
  %2365 = vmatprep.mubr.bf16.mxu0 0
  %2366 = vmatmul.mubr.bf16.gmra.mrb[0].mxu0 %v1315
  %v2367 = vpop.f32.mrb[0].mxu0
  %v2368 = vadd.f32 0.0, %v2367
  %v2369 = vpop.f32.mrb[0].mxu0
  %v2370 = vpop.f32.mrb[0].mxu0
  %v2371 = vadd.f32 0.0, %v2370
  %v2372 = vpop.f32.mrb[0].mxu0
  %2373 = vdwg.mxu0
  %vm2374 = vcmp.ge.f32.partialorder %v1352, 0.0
  %vm2375 = vcmp.ge.f32.partialorder %v1355, 0.0
  %vm2376 = vcmp.ge.f32.partialorder %v1360, 0.0
  %vm2377 = vcmp.ge.f32.partialorder %v1363, 0.0
  %vm2378 = vcmp.ge.f32.partialorder %v1368, 0.0
  %vm2379 = vcmp.ge.f32.partialorder %v1371, 0.0
  %vm2380 = vcmp.ge.f32.partialorder %v1376, 0.0
  %vm2381 = vcmp.ge.f32.partialorder %v1379, 0.0
  %vm2382 = vcmp.ge.f32.partialorder %v1384, 0.0
  %vm2383 = vcmp.ge.f32.partialorder %v1387, 0.0
  %vm2384 = vcmp.ge.f32.partialorder %v1392, 0.0
  %vm2385 = vcmp.ge.f32.partialorder %v1395, 0.0
  %vm2386 = vcmp.ge.f32.partialorder %v1400, 0.0
  %vm2387 = vcmp.ge.f32.partialorder %v1403, 0.0
  %vm2388 = vcmp.ge.f32.partialorder %v1408, 0.0
  %vm2389 = vcmp.ge.f32.partialorder %v1411, 0.0
  %vm2390 = vcmp.ge.f32.partialorder %v1416, 0.0
  %vm2391 = vcmp.ge.f32.partialorder %v1419, 0.0
  %vm2392 = vcmp.ge.f32.partialorder %v1424, 0.0
  %vm2393 = vcmp.ge.f32.partialorder %v1427, 0.0
  %vm2394 = vcmp.ge.f32.partialorder %v1432, 0.0
  %vm2395 = vcmp.ge.f32.partialorder %v1435, 0.0
  %vm2396 = vcmp.ge.f32.partialorder %v1440, 0.0
  %vm2397 = vcmp.ge.f32.partialorder %v1443, 0.0
  %vm2398 = vcmp.ge.f32.partialorder %v1448, 0.0
  %vm2399 = vcmp.ge.f32.partialorder %v1451, 0.0
  %vm2400 = vcmp.ge.f32.partialorder %v1456, 0.0
  %vm2401 = vcmp.ge.f32.partialorder %v1459, 0.0
  %vm2402 = vcmp.ge.f32.partialorder %v1464, 0.0
  %vm2403 = vcmp.ge.f32.partialorder %v1467, 0.0
  %vm2404 = vcmp.ge.f32.partialorder %v1472, 0.0
  %vm2405 = vcmp.ge.f32.partialorder %v1475, 0.0
  %vm2406 = vcmp.ge.f32.partialorder %v1480, 0.0
  %vm2407 = vcmp.ge.f32.partialorder %v1483, 0.0
  %vm2408 = vcmp.ge.f32.partialorder %v1488, 0.0
  %vm2409 = vcmp.ge.f32.partialorder %v1491, 0.0
  %vm2410 = vcmp.ge.f32.partialorder %v1496, 0.0
  %vm2411 = vcmp.ge.f32.partialorder %v1499, 0.0
  %vm2412 = vcmp.ge.f32.partialorder %v1504, 0.0
  %vm2413 = vcmp.ge.f32.partialorder %v1507, 0.0
  %vm2414 = vcmp.ge.f32.partialorder %v1512, 0.0
  %vm2415 = vcmp.ge.f32.partialorder %v1515, 0.0
  %vm2416 = vcmp.ge.f32.partialorder %v1520, 0.0
  %vm2417 = vcmp.ge.f32.partialorder %v1523, 0.0
  %vm2418 = vcmp.ge.f32.partialorder %v1528, 0.0
  %vm2419 = vcmp.ge.f32.partialorder %v1531, 0.0
  %vm2420 = vcmp.ge.f32.partialorder %v1536, 0.0
  %vm2421 = vcmp.ge.f32.partialorder %v1539, 0.0
  %vm2422 = vcmp.ge.f32.partialorder %v1544, 0.0
  %vm2423 = vcmp.ge.f32.partialorder %v1547, 0.0
  %vm2424 = vcmp.ge.f32.partialorder %v1552, 0.0
  %vm2425 = vcmp.ge.f32.partialorder %v1555, 0.0
  %vm2426 = vcmp.ge.f32.partialorder %v1560, 0.0
  %vm2427 = vcmp.ge.f32.partialorder %v1563, 0.0
  %vm2428 = vcmp.ge.f32.partialorder %v1568, 0.0
  %vm2429 = vcmp.ge.f32.partialorder %v1571, 0.0
  %vm2430 = vcmp.ge.f32.partialorder %v1576, 0.0
  %vm2431 = vcmp.ge.f32.partialorder %v1579, 0.0
  %vm2432 = vcmp.ge.f32.partialorder %v1584, 0.0
  %vm2433 = vcmp.ge.f32.partialorder %v1587, 0.0
  %vm2434 = vcmp.ge.f32.partialorder %v1592, 0.0
  %vm2435 = vcmp.ge.f32.partialorder %v1595, 0.0
  %vm2436 = vcmp.ge.f32.partialorder %v1600, 0.0
  %vm2437 = vcmp.ge.f32.partialorder %v1603, 0.0
  %vm2438 = vcmp.ge.f32.partialorder %v1608, 0.0
  %vm2439 = vcmp.ge.f32.partialorder %v1611, 0.0
  %vm2440 = vcmp.ge.f32.partialorder %v1616, 0.0
  %vm2441 = vcmp.ge.f32.partialorder %v1619, 0.0
  %vm2442 = vcmp.ge.f32.partialorder %v1624, 0.0
  %vm2443 = vcmp.ge.f32.partialorder %v1627, 0.0
  %vm2444 = vcmp.ge.f32.partialorder %v1632, 0.0
  %vm2445 = vcmp.ge.f32.partialorder %v1635, 0.0
  %vm2446 = vcmp.ge.f32.partialorder %v1640, 0.0
  %vm2447 = vcmp.ge.f32.partialorder %v1643, 0.0
  %vm2448 = vcmp.ge.f32.partialorder %v1648, 0.0
  %vm2449 = vcmp.ge.f32.partialorder %v1651, 0.0
  %vm2450 = vcmp.ge.f32.partialorder %v1656, 0.0
  %vm2451 = vcmp.ge.f32.partialorder %v1659, 0.0
  %vm2452 = vcmp.ge.f32.partialorder %v1664, 0.0
  %vm2453 = vcmp.ge.f32.partialorder %v1667, 0.0
  %vm2454 = vcmp.ge.f32.partialorder %v1672, 0.0
  %vm2455 = vcmp.ge.f32.partialorder %v1675, 0.0
  %vm2456 = vcmp.ge.f32.partialorder %v1680, 0.0
  %vm2457 = vcmp.ge.f32.partialorder %v1683, 0.0
  %vm2458 = vcmp.ge.f32.partialorder %v1688, 0.0
  %vm2459 = vcmp.ge.f32.partialorder %v1691, 0.0
  %vm2460 = vcmp.ge.f32.partialorder %v1696, 0.0
  %vm2461 = vcmp.ge.f32.partialorder %v1699, 0.0
  %vm2462 = vcmp.ge.f32.partialorder %v1704, 0.0
  %vm2463 = vcmp.ge.f32.partialorder %v1707, 0.0
  %vm2464 = vcmp.ge.f32.partialorder %v1712, 0.0
  %vm2465 = vcmp.ge.f32.partialorder %v1715, 0.0
  %vm2466 = vcmp.ge.f32.partialorder %v1720, 0.0
  %vm2467 = vcmp.ge.f32.partialorder %v1723, 0.0
  %vm2468 = vcmp.ge.f32.partialorder %v1728, 0.0
  %vm2469 = vcmp.ge.f32.partialorder %v1731, 0.0
  %vm2470 = vcmp.ge.f32.partialorder %v1736, 0.0
  %vm2471 = vcmp.ge.f32.partialorder %v1739, 0.0
  %vm2472 = vcmp.ge.f32.partialorder %v1744, 0.0
  %vm2473 = vcmp.ge.f32.partialorder %v1747, 0.0
  %vm2474 = vcmp.ge.f32.partialorder %v1752, 0.0
  %vm2475 = vcmp.ge.f32.partialorder %v1755, 0.0
  %vm2476 = vcmp.ge.f32.partialorder %v1760, 0.0
  %vm2477 = vcmp.ge.f32.partialorder %v1763, 0.0
  %vm2478 = vcmp.ge.f32.partialorder %v1768, 0.0
  %vm2479 = vcmp.ge.f32.partialorder %v1771, 0.0
  %vm2480 = vcmp.ge.f32.partialorder %v1776, 0.0
  %vm2481 = vcmp.ge.f32.partialorder %v1779, 0.0
  %vm2482 = vcmp.ge.f32.partialorder %v1784, 0.0
  %vm2483 = vcmp.ge.f32.partialorder %v1787, 0.0
  %vm2484 = vcmp.ge.f32.partialorder %v1792, 0.0
  %vm2485 = vcmp.ge.f32.partialorder %v1795, 0.0
  %vm2486 = vcmp.ge.f32.partialorder %v1800, 0.0
  %vm2487 = vcmp.ge.f32.partialorder %v1803, 0.0
  %vm2488 = vcmp.ge.f32.partialorder %v1808, 0.0
  %vm2489 = vcmp.ge.f32.partialorder %v1811, 0.0
  %vm2490 = vcmp.ge.f32.partialorder %v1816, 0.0
  %vm2491 = vcmp.ge.f32.partialorder %v1819, 0.0
  %vm2492 = vcmp.ge.f32.partialorder %v1824, 0.0
  %vm2493 = vcmp.ge.f32.partialorder %v1827, 0.0
  %vm2494 = vcmp.ge.f32.partialorder %v1832, 0.0
  %vm2495 = vcmp.ge.f32.partialorder %v1835, 0.0
  %vm2496 = vcmp.ge.f32.partialorder %v1840, 0.0
  %vm2497 = vcmp.ge.f32.partialorder %v1843, 0.0
  %vm2498 = vcmp.ge.f32.partialorder %v1848, 0.0
  %vm2499 = vcmp.ge.f32.partialorder %v1851, 0.0
  %vm2500 = vcmp.ge.f32.partialorder %v1856, 0.0
  %vm2501 = vcmp.ge.f32.partialorder %v1859, 0.0
  %vm2502 = vcmp.ge.f32.partialorder %v1864, 0.0
  %vm2503 = vcmp.ge.f32.partialorder %v1867, 0.0
  %vm2504 = vcmp.ge.f32.partialorder %v1872, 0.0
  %vm2505 = vcmp.ge.f32.partialorder %v1875, 0.0
  %vm2506 = vcmp.ge.f32.partialorder %v1880, 0.0
  %vm2507 = vcmp.ge.f32.partialorder %v1883, 0.0
  %vm2508 = vcmp.ge.f32.partialorder %v1888, 0.0
  %vm2509 = vcmp.ge.f32.partialorder %v1891, 0.0
  %vm2510 = vcmp.ge.f32.partialorder %v1896, 0.0
  %vm2511 = vcmp.ge.f32.partialorder %v1899, 0.0
  %vm2512 = vcmp.ge.f32.partialorder %v1904, 0.0
  %vm2513 = vcmp.ge.f32.partialorder %v1907, 0.0
  %vm2514 = vcmp.ge.f32.partialorder %v1912, 0.0
  %vm2515 = vcmp.ge.f32.partialorder %v1915, 0.0
  %vm2516 = vcmp.ge.f32.partialorder %v1920, 0.0
  %vm2517 = vcmp.ge.f32.partialorder %v1923, 0.0
  %vm2518 = vcmp.ge.f32.partialorder %v1928, 0.0
  %vm2519 = vcmp.ge.f32.partialorder %v1931, 0.0
  %vm2520 = vcmp.ge.f32.partialorder %v1936, 0.0
  %vm2521 = vcmp.ge.f32.partialorder %v1939, 0.0
  %vm2522 = vcmp.ge.f32.partialorder %v1944, 0.0
  %vm2523 = vcmp.ge.f32.partialorder %v1947, 0.0
  %vm2524 = vcmp.ge.f32.partialorder %v1952, 0.0
  %vm2525 = vcmp.ge.f32.partialorder %v1955, 0.0
  %vm2526 = vcmp.ge.f32.partialorder %v1960, 0.0
  %vm2527 = vcmp.ge.f32.partialorder %v1963, 0.0
  %vm2528 = vcmp.ge.f32.partialorder %v1968, 0.0
  %vm2529 = vcmp.ge.f32.partialorder %v1971, 0.0
  %vm2530 = vcmp.ge.f32.partialorder %v1976, 0.0
  %vm2531 = vcmp.ge.f32.partialorder %v1979, 0.0
  %vm2532 = vcmp.ge.f32.partialorder %v1984, 0.0
  %vm2533 = vcmp.ge.f32.partialorder %v1987, 0.0
  %vm2534 = vcmp.ge.f32.partialorder %v1992, 0.0
  %vm2535 = vcmp.ge.f32.partialorder %v1995, 0.0
  %vm2536 = vcmp.ge.f32.partialorder %v2000, 0.0
  %vm2537 = vcmp.ge.f32.partialorder %v2003, 0.0
  %vm2538 = vcmp.ge.f32.partialorder %v2008, 0.0
  %vm2539 = vcmp.ge.f32.partialorder %v2011, 0.0
  %vm2540 = vcmp.ge.f32.partialorder %v2016, 0.0
  %vm2541 = vcmp.ge.f32.partialorder %v2019, 0.0
  %vm2542 = vcmp.ge.f32.partialorder %v2024, 0.0
  %vm2543 = vcmp.ge.f32.partialorder %v2027, 0.0
  %vm2544 = vcmp.ge.f32.partialorder %v2032, 0.0
  %vm2545 = vcmp.ge.f32.partialorder %v2035, 0.0
  %vm2546 = vcmp.ge.f32.partialorder %v2040, 0.0
  %vm2547 = vcmp.ge.f32.partialorder %v2043, 0.0
  %vm2548 = vcmp.ge.f32.partialorder %v2048, 0.0
  %vm2549 = vcmp.ge.f32.partialorder %v2051, 0.0
  %vm2550 = vcmp.ge.f32.partialorder %v2056, 0.0
  %vm2551 = vcmp.ge.f32.partialorder %v2059, 0.0
  %vm2552 = vcmp.ge.f32.partialorder %v2064, 0.0
  %vm2553 = vcmp.ge.f32.partialorder %v2067, 0.0
  %vm2554 = vcmp.ge.f32.partialorder %v2072, 0.0
  %vm2555 = vcmp.ge.f32.partialorder %v2075, 0.0
  %vm2556 = vcmp.ge.f32.partialorder %v2080, 0.0
  %vm2557 = vcmp.ge.f32.partialorder %v2083, 0.0
  %vm2558 = vcmp.ge.f32.partialorder %v2088, 0.0
  %vm2559 = vcmp.ge.f32.partialorder %v2091, 0.0
  %vm2560 = vcmp.ge.f32.partialorder %v2096, 0.0
  %vm2561 = vcmp.ge.f32.partialorder %v2099, 0.0
  %vm2562 = vcmp.ge.f32.partialorder %v2104, 0.0
  %vm2563 = vcmp.ge.f32.partialorder %v2107, 0.0
  %vm2564 = vcmp.ge.f32.partialorder %v2112, 0.0
  %vm2565 = vcmp.ge.f32.partialorder %v2115, 0.0
  %vm2566 = vcmp.ge.f32.partialorder %v2120, 0.0
  %vm2567 = vcmp.ge.f32.partialorder %v2123, 0.0
  %vm2568 = vcmp.ge.f32.partialorder %v2128, 0.0
  %vm2569 = vcmp.ge.f32.partialorder %v2131, 0.0
  %vm2570 = vcmp.ge.f32.partialorder %v2136, 0.0
  %vm2571 = vcmp.ge.f32.partialorder %v2139, 0.0
  %vm2572 = vcmp.ge.f32.partialorder %v2144, 0.0
  %vm2573 = vcmp.ge.f32.partialorder %v2147, 0.0
  %vm2574 = vcmp.ge.f32.partialorder %v2152, 0.0
  %vm2575 = vcmp.ge.f32.partialorder %v2155, 0.0
  %vm2576 = vcmp.ge.f32.partialorder %v2160, 0.0
  %vm2577 = vcmp.ge.f32.partialorder %v2163, 0.0
  %vm2578 = vcmp.ge.f32.partialorder %v2168, 0.0
  %vm2579 = vcmp.ge.f32.partialorder %v2171, 0.0
  %vm2580 = vcmp.ge.f32.partialorder %v2176, 0.0
  %vm2581 = vcmp.ge.f32.partialorder %v2179, 0.0
  %vm2582 = vcmp.ge.f32.partialorder %v2184, 0.0
  %vm2583 = vcmp.ge.f32.partialorder %v2187, 0.0
  %vm2584 = vcmp.ge.f32.partialorder %v2192, 0.0
  %vm2585 = vcmp.ge.f32.partialorder %v2195, 0.0
  %vm2586 = vcmp.ge.f32.partialorder %v2200, 0.0
  %vm2587 = vcmp.ge.f32.partialorder %v2203, 0.0
  %vm2588 = vcmp.ge.f32.partialorder %v2208, 0.0
  %vm2589 = vcmp.ge.f32.partialorder %v2211, 0.0
  %vm2590 = vcmp.ge.f32.partialorder %v2216, 0.0
  %vm2591 = vcmp.ge.f32.partialorder %v2219, 0.0
  %vm2592 = vcmp.ge.f32.partialorder %v2224, 0.0
  %vm2593 = vcmp.ge.f32.partialorder %v2227, 0.0
  %vm2594 = vcmp.ge.f32.partialorder %v2232, 0.0
  %vm2595 = vcmp.ge.f32.partialorder %v2235, 0.0
  %vm2596 = vcmp.ge.f32.partialorder %v2240, 0.0
  %vm2597 = vcmp.ge.f32.partialorder %v2243, 0.0
  %vm2598 = vcmp.ge.f32.partialorder %v2248, 0.0
  %vm2599 = vcmp.ge.f32.partialorder %v2251, 0.0
  %vm2600 = vcmp.ge.f32.partialorder %v2256, 0.0
  %vm2601 = vcmp.ge.f32.partialorder %v2259, 0.0
  %vm2602 = vcmp.ge.f32.partialorder %v2264, 0.0
  %vm2603 = vcmp.ge.f32.partialorder %v2267, 0.0
  %vm2604 = vcmp.ge.f32.partialorder %v2272, 0.0
  %vm2605 = vcmp.ge.f32.partialorder %v2275, 0.0
  %vm2606 = vcmp.ge.f32.partialorder %v2280, 0.0
  %vm2607 = vcmp.ge.f32.partialorder %v2283, 0.0
  %vm2608 = vcmp.ge.f32.partialorder %v2288, 0.0
  %vm2609 = vcmp.ge.f32.partialorder %v2291, 0.0
  %vm2610 = vcmp.ge.f32.partialorder %v2296, 0.0
  %vm2611 = vcmp.ge.f32.partialorder %v2299, 0.0
  %vm2612 = vcmp.ge.f32.partialorder %v2304, 0.0
  %vm2613 = vcmp.ge.f32.partialorder %v2307, 0.0
  %vm2614 = vcmp.ge.f32.partialorder %v2312, 0.0
  %vm2615 = vcmp.ge.f32.partialorder %v2315, 0.0
  %vm2616 = vcmp.ge.f32.partialorder %v2320, 0.0
  %vm2617 = vcmp.ge.f32.partialorder %v2323, 0.0
  %vm2618 = vcmp.ge.f32.partialorder %v2328, 0.0
  %vm2619 = vcmp.ge.f32.partialorder %v2331, 0.0
  %vm2620 = vcmp.ge.f32.partialorder %v2336, 0.0
  %vm2621 = vcmp.ge.f32.partialorder %v2339, 0.0
  %vm2622 = vcmp.ge.f32.partialorder %v2344, 0.0
  %vm2623 = vcmp.ge.f32.partialorder %v2347, 0.0
  %vm2624 = vcmp.ge.f32.partialorder %v2352, 0.0
  %vm2625 = vcmp.ge.f32.partialorder %v2355, 0.0
  %vm2626 = vcmp.ge.f32.partialorder %v2360, 0.0
  %vm2627 = vcmp.ge.f32.partialorder %v2363, 0.0
  %vm2628 = vcmp.ge.f32.partialorder %v2368, 0.0
  %vm2629 = vcmp.ge.f32.partialorder %v2371, 0.0
  %v2630 = vmul.f32 %v1352, 0.2
  %v2631 = vmul.f32 %v1355, 0.2
  %v2632 = vmul.f32 %v1360, 0.2
  %v2633 = vmul.f32 %v1363, 0.2
  %v2634 = vmul.f32 %v1368, 0.2
  %v2635 = vmul.f32 %v1371, 0.2
  %v2636 = vmul.f32 %v1376, 0.2
  %v2637 = vmul.f32 %v1379, 0.2
  %v2638 = vmul.f32 %v1384, 0.2
  %v2639 = vmul.f32 %v1387, 0.2
  %v2640 = vmul.f32 %v1392, 0.2
  %v2641 = vmul.f32 %v1395, 0.2
  %v2642 = vmul.f32 %v1400, 0.2
  %v2643 = vmul.f32 %v1403, 0.2
  %v2644 = vmul.f32 %v1408, 0.2
  %v2645 = vmul.f32 %v1411, 0.2
  %v2646 = vmul.f32 %v1416, 0.2
  %v2647 = vmul.f32 %v1419, 0.2
  %v2648 = vmul.f32 %v1424, 0.2
  %v2649 = vmul.f32 %v1427, 0.2
  %v2650 = vmul.f32 %v1432, 0.2
  %v2651 = vmul.f32 %v1435, 0.2
  %v2652 = vmul.f32 %v1440, 0.2
  %v2653 = vmul.f32 %v1443, 0.2
  %v2654 = vmul.f32 %v1448, 0.2
  %v2655 = vmul.f32 %v1451, 0.2
  %v2656 = vmul.f32 %v1456, 0.2
  %v2657 = vmul.f32 %v1459, 0.2
  %v2658 = vmul.f32 %v1464, 0.2
  %v2659 = vmul.f32 %v1467, 0.2
  %v2660 = vmul.f32 %v1472, 0.2
  %v2661 = vmul.f32 %v1475, 0.2
  %v2662 = vmul.f32 %v1480, 0.2
  %v2663 = vmul.f32 %v1483, 0.2
  %v2664 = vmul.f32 %v1488, 0.2
  %v2665 = vmul.f32 %v1491, 0.2
  %v2666 = vmul.f32 %v1496, 0.2
  %v2667 = vmul.f32 %v1499, 0.2
  %v2668 = vmul.f32 %v1504, 0.2
  %v2669 = vmul.f32 %v1507, 0.2
  %v2670 = vmul.f32 %v1512, 0.2
  %v2671 = vmul.f32 %v1515, 0.2
  %v2672 = vmul.f32 %v1520, 0.2
  %v2673 = vmul.f32 %v1523, 0.2
  %v2674 = vmul.f32 %v1528, 0.2
  %v2675 = vmul.f32 %v1531, 0.2
  %v2676 = vmul.f32 %v1536, 0.2
  %v2677 = vmul.f32 %v1539, 0.2
  %v2678 = vmul.f32 %v1544, 0.2
  %v2679 = vmul.f32 %v1547, 0.2
  %v2680 = vmul.f32 %v1552, 0.2
  %v2681 = vmul.f32 %v1555, 0.2
  %v2682 = vmul.f32 %v1560, 0.2
  %v2683 = vmul.f32 %v1563, 0.2
  %v2684 = vmul.f32 %v1568, 0.2
  %v2685 = vmul.f32 %v1571, 0.2
  %v2686 = vmul.f32 %v1576, 0.2
  %v2687 = vmul.f32 %v1579, 0.2
  %v2688 = vmul.f32 %v1584, 0.2
  %v2689 = vmul.f32 %v1587, 0.2
  %v2690 = vmul.f32 %v1592, 0.2
  %v2691 = vmul.f32 %v1595, 0.2
  %v2692 = vmul.f32 %v1600, 0.2
  %v2693 = vmul.f32 %v1603, 0.2
  %v2694 = vmul.f32 %v1608, 0.2
  %v2695 = vmul.f32 %v1611, 0.2
  %v2696 = vmul.f32 %v1616, 0.2
  %v2697 = vmul.f32 %v1619, 0.2
  %v2698 = vmul.f32 %v1624, 0.2
  %v2699 = vmul.f32 %v1627, 0.2
  %v2700 = vmul.f32 %v1632, 0.2
  %v2701 = vmul.f32 %v1635, 0.2
  %v2702 = vmul.f32 %v1640, 0.2
  %v2703 = vmul.f32 %v1643, 0.2
  %v2704 = vmul.f32 %v1648, 0.2
  %v2705 = vmul.f32 %v1651, 0.2
  %v2706 = vmul.f32 %v1656, 0.2
  %v2707 = vmul.f32 %v1659, 0.2
  %v2708 = vmul.f32 %v1664, 0.2
  %v2709 = vmul.f32 %v1667, 0.2
  %v2710 = vmul.f32 %v1672, 0.2
  %v2711 = vmul.f32 %v1675, 0.2
  %v2712 = vmul.f32 %v1680, 0.2
  %v2713 = vmul.f32 %v1683, 0.2
  %v2714 = vmul.f32 %v1688, 0.2
  %v2715 = vmul.f32 %v1691, 0.2
  %v2716 = vmul.f32 %v1696, 0.2
  %v2717 = vmul.f32 %v1699, 0.2
  %v2718 = vmul.f32 %v1704, 0.2
  %v2719 = vmul.f32 %v1707, 0.2
  %v2720 = vmul.f32 %v1712, 0.2
  %v2721 = vmul.f32 %v1715, 0.2
  %v2722 = vmul.f32 %v1720, 0.2
  %v2723 = vmul.f32 %v1723, 0.2
  %v2724 = vmul.f32 %v1728, 0.2
  %v2725 = vmul.f32 %v1731, 0.2
  %v2726 = vmul.f32 %v1736, 0.2
  %v2727 = vmul.f32 %v1739, 0.2
  %v2728 = vmul.f32 %v1744, 0.2
  %v2729 = vmul.f32 %v1747, 0.2
  %v2730 = vmul.f32 %v1752, 0.2
  %v2731 = vmul.f32 %v1755, 0.2
  %v2732 = vmul.f32 %v1760, 0.2
  %v2733 = vmul.f32 %v1763, 0.2
  %v2734 = vmul.f32 %v1768, 0.2
  %v2735 = vmul.f32 %v1771, 0.2
  %v2736 = vmul.f32 %v1776, 0.2
  %v2737 = vmul.f32 %v1779, 0.2
  %v2738 = vmul.f32 %v1784, 0.2
  %v2739 = vmul.f32 %v1787, 0.2
  %v2740 = vmul.f32 %v1792, 0.2
  %v2741 = vmul.f32 %v1795, 0.2
  %v2742 = vmul.f32 %v1800, 0.2
  %v2743 = vmul.f32 %v1803, 0.2
  %v2744 = vmul.f32 %v1808, 0.2
  %v2745 = vmul.f32 %v1811, 0.2
  %v2746 = vmul.f32 %v1816, 0.2
  %v2747 = vmul.f32 %v1819, 0.2
  %v2748 = vmul.f32 %v1824, 0.2
  %v2749 = vmul.f32 %v1827, 0.2
  %v2750 = vmul.f32 %v1832, 0.2
  %v2751 = vmul.f32 %v1835, 0.2
  %v2752 = vmul.f32 %v1840, 0.2
  %v2753 = vmul.f32 %v1843, 0.2
  %v2754 = vmul.f32 %v1848, 0.2
  %v2755 = vmul.f32 %v1851, 0.2
  %v2756 = vmul.f32 %v1856, 0.2
  %v2757 = vmul.f32 %v1859, 0.2
  %v2758 = vmul.f32 %v1864, 0.2
  %v2759 = vmul.f32 %v1867, 0.2
  %v2760 = vmul.f32 %v1872, 0.2
  %v2761 = vmul.f32 %v1875, 0.2
  %v2762 = vmul.f32 %v1880, 0.2
  %v2763 = vmul.f32 %v1883, 0.2
  %v2764 = vmul.f32 %v1888, 0.2
  %v2765 = vmul.f32 %v1891, 0.2
  %v2766 = vmul.f32 %v1896, 0.2
  %v2767 = vmul.f32 %v1899, 0.2
  %v2768 = vmul.f32 %v1904, 0.2
  %v2769 = vmul.f32 %v1907, 0.2
  %v2770 = vmul.f32 %v1912, 0.2
  %v2771 = vmul.f32 %v1915, 0.2
  %v2772 = vmul.f32 %v1920, 0.2
  %v2773 = vmul.f32 %v1923, 0.2
  %v2774 = vmul.f32 %v1928, 0.2
  %v2775 = vmul.f32 %v1931, 0.2
  %v2776 = vmul.f32 %v1936, 0.2
  %v2777 = vmul.f32 %v1939, 0.2
  %v2778 = vmul.f32 %v1944, 0.2
  %v2779 = vmul.f32 %v1947, 0.2
  %v2780 = vmul.f32 %v1952, 0.2
  %v2781 = vmul.f32 %v1955, 0.2
  %v2782 = vmul.f32 %v1960, 0.2
  %v2783 = vmul.f32 %v1963, 0.2
  %v2784 = vmul.f32 %v1968, 0.2
  %v2785 = vmul.f32 %v1971, 0.2
  %v2786 = vmul.f32 %v1976, 0.2
  %v2787 = vmul.f32 %v1979, 0.2
  %v2788 = vmul.f32 %v1984, 0.2
  %v2789 = vmul.f32 %v1987, 0.2
  %v2790 = vmul.f32 %v1992, 0.2
  %v2791 = vmul.f32 %v1995, 0.2
  %v2792 = vmul.f32 %v2000, 0.2
  %v2793 = vmul.f32 %v2003, 0.2
  %v2794 = vmul.f32 %v2008, 0.2
  %v2795 = vmul.f32 %v2011, 0.2
  %v2796 = vmul.f32 %v2016, 0.2
  %v2797 = vmul.f32 %v2019, 0.2
  %v2798 = vmul.f32 %v2024, 0.2
  %v2799 = vmul.f32 %v2027, 0.2
  %v2800 = vmul.f32 %v2032, 0.2
  %v2801 = vmul.f32 %v2035, 0.2
  %v2802 = vmul.f32 %v2040, 0.2
  %v2803 = vmul.f32 %v2043, 0.2
  %v2804 = vmul.f32 %v2048, 0.2
  %v2805 = vmul.f32 %v2051, 0.2
  %v2806 = vmul.f32 %v2056, 0.2
  %v2807 = vmul.f32 %v2059, 0.2
  %v2808 = vmul.f32 %v2064, 0.2
  %v2809 = vmul.f32 %v2067, 0.2
  %v2810 = vmul.f32 %v2072, 0.2
  %v2811 = vmul.f32 %v2075, 0.2
  %v2812 = vmul.f32 %v2080, 0.2
  %v2813 = vmul.f32 %v2083, 0.2
  %v2814 = vmul.f32 %v2088, 0.2
  %v2815 = vmul.f32 %v2091, 0.2
  %v2816 = vmul.f32 %v2096, 0.2
  %v2817 = vmul.f32 %v2099, 0.2
  %v2818 = vmul.f32 %v2104, 0.2
  %v2819 = vmul.f32 %v2107, 0.2
  %v2820 = vmul.f32 %v2112, 0.2
  %v2821 = vmul.f32 %v2115, 0.2
  %v2822 = vmul.f32 %v2120, 0.2
  %v2823 = vmul.f32 %v2123, 0.2
  %v2824 = vmul.f32 %v2128, 0.2
  %v2825 = vmul.f32 %v2131, 0.2
  %v2826 = vmul.f32 %v2136, 0.2
  %v2827 = vmul.f32 %v2139, 0.2
  %v2828 = vmul.f32 %v2144, 0.2
  %v2829 = vmul.f32 %v2147, 0.2
  %v2830 = vmul.f32 %v2152, 0.2
  %v2831 = vmul.f32 %v2155, 0.2
  %v2832 = vmul.f32 %v2160, 0.2
  %v2833 = vmul.f32 %v2163, 0.2
  %v2834 = vmul.f32 %v2168, 0.2
  %v2835 = vmul.f32 %v2171, 0.2
  %v2836 = vmul.f32 %v2176, 0.2
  %v2837 = vmul.f32 %v2179, 0.2
  %v2838 = vmul.f32 %v2184, 0.2
  %v2839 = vmul.f32 %v2187, 0.2
  %v2840 = vmul.f32 %v2192, 0.2
  %v2841 = vmul.f32 %v2195, 0.2
  %v2842 = vmul.f32 %v2200, 0.2
  %v2843 = vmul.f32 %v2203, 0.2
  %v2844 = vmul.f32 %v2208, 0.2
  %v2845 = vmul.f32 %v2211, 0.2
  %v2846 = vmul.f32 %v2216, 0.2
  %v2847 = vmul.f32 %v2219, 0.2
  %v2848 = vmul.f32 %v2224, 0.2
  %v2849 = vmul.f32 %v2227, 0.2
  %v2850 = vmul.f32 %v2232, 0.2
  %v2851 = vmul.f32 %v2235, 0.2
  %v2852 = vmul.f32 %v2240, 0.2
  %v2853 = vmul.f32 %v2243, 0.2
  %v2854 = vmul.f32 %v2248, 0.2
  %v2855 = vmul.f32 %v2251, 0.2
  %v2856 = vmul.f32 %v2256, 0.2
  %v2857 = vmul.f32 %v2259, 0.2
  %v2858 = vmul.f32 %v2264, 0.2
  %v2859 = vmul.f32 %v2267, 0.2
  %v2860 = vmul.f32 %v2272, 0.2
  %v2861 = vmul.f32 %v2275, 0.2
  %v2862 = vmul.f32 %v2280, 0.2
  %v2863 = vmul.f32 %v2283, 0.2
  %v2864 = vmul.f32 %v2288, 0.2
  %v2865 = vmul.f32 %v2291, 0.2
  %v2866 = vmul.f32 %v2296, 0.2
  %v2867 = vmul.f32 %v2299, 0.2
  %v2868 = vmul.f32 %v2304, 0.2
  %v2869 = vmul.f32 %v2307, 0.2
  %v2870 = vmul.f32 %v2312, 0.2
  %v2871 = vmul.f32 %v2315, 0.2
  %v2872 = vmul.f32 %v2320, 0.2
  %v2873 = vmul.f32 %v2323, 0.2
  %v2874 = vmul.f32 %v2328, 0.2
  %v2875 = vmul.f32 %v2331, 0.2
  %v2876 = vmul.f32 %v2336, 0.2
  %v2877 = vmul.f32 %v2339, 0.2
  %v2878 = vmul.f32 %v2344, 0.2
  %v2879 = vmul.f32 %v2347, 0.2
  %v2880 = vmul.f32 %v2352, 0.2
  %v2881 = vmul.f32 %v2355, 0.2
  %v2882 = vmul.f32 %v2360, 0.2
  %v2883 = vmul.f32 %v2363, 0.2
  %v2884 = vmul.f32 %v2368, 0.2
  %v2885 = vmul.f32 %v2371, 0.2
  %v2886 = vsel %vm2374, %v1352, %v2630
  %v2887 = vsel %vm2375, %v1355, %v2631
  %v2888 = vsel %vm2376, %v1360, %v2632
  %v2889 = vsel %vm2377, %v1363, %v2633
  %v2890 = vsel %vm2378, %v1368, %v2634
  %v2891 = vsel %vm2379, %v1371, %v2635
  %v2892 = vsel %vm2380, %v1376, %v2636
  %v2893 = vsel %vm2381, %v1379, %v2637
  %v2894 = vsel %vm2382, %v1384, %v2638
  %v2895 = vsel %vm2383, %v1387, %v2639
  %v2896 = vsel %vm2384, %v1392, %v2640
  %v2897 = vsel %vm2385, %v1395, %v2641
  %v2898 = vsel %vm2386, %v1400, %v2642
  %v2899 = vsel %vm2387, %v1403, %v2643
  %v2900 = vsel %vm2388, %v1408, %v2644
  %v2901 = vsel %vm2389, %v1411, %v2645
  %v2902 = vsel %vm2390, %v1416, %v2646
  %v2903 = vsel %vm2391, %v1419, %v2647
  %v2904 = vsel %vm2392, %v1424, %v2648
  %v2905 = vsel %vm2393, %v1427, %v2649
  %v2906 = vsel %vm2394, %v1432, %v2650
  %v2907 = vsel %vm2395, %v1435, %v2651
  %v2908 = vsel %vm2396, %v1440, %v2652
  %v2909 = vsel %vm2397, %v1443, %v2653
  %v2910 = vsel %vm2398, %v1448, %v2654
  %v2911 = vsel %vm2399, %v1451, %v2655
  %v2912 = vsel %vm2400, %v1456, %v2656
  %v2913 = vsel %vm2401, %v1459, %v2657
  %v2914 = vsel %vm2402, %v1464, %v2658
  %v2915 = vsel %vm2403, %v1467, %v2659
  %v2916 = vsel %vm2404, %v1472, %v2660
  %v2917 = vsel %vm2405, %v1475, %v2661
  %v2918 = vsel %vm2406, %v1480, %v2662
  %v2919 = vsel %vm2407, %v1483, %v2663
  %v2920 = vsel %vm2408, %v1488, %v2664
  %v2921 = vsel %vm2409, %v1491, %v2665
  %v2922 = vsel %vm2410, %v1496, %v2666
  %v2923 = vsel %vm2411, %v1499, %v2667
  %v2924 = vsel %vm2412, %v1504, %v2668
  %v2925 = vsel %vm2413, %v1507, %v2669
  %v2926 = vsel %vm2414, %v1512, %v2670
  %v2927 = vsel %vm2415, %v1515, %v2671
  %v2928 = vsel %vm2416, %v1520, %v2672
  %v2929 = vsel %vm2417, %v1523, %v2673
  %v2930 = vsel %vm2418, %v1528, %v2674
  %v2931 = vsel %vm2419, %v1531, %v2675
  %v2932 = vsel %vm2420, %v1536, %v2676
  %v2933 = vsel %vm2421, %v1539, %v2677
  %v2934 = vsel %vm2422, %v1544, %v2678
  %v2935 = vsel %vm2423, %v1547, %v2679
  %v2936 = vsel %vm2424, %v1552, %v2680
  %v2937 = vsel %vm2425, %v1555, %v2681
  %v2938 = vsel %vm2426, %v1560, %v2682
  %v2939 = vsel %vm2427, %v1563, %v2683
  %v2940 = vsel %vm2428, %v1568, %v2684
  %v2941 = vsel %vm2429, %v1571, %v2685
  %v2942 = vsel %vm2430, %v1576, %v2686
  %v2943 = vsel %vm2431, %v1579, %v2687
  %v2944 = vsel %vm2432, %v1584, %v2688
  %v2945 = vsel %vm2433, %v1587, %v2689
  %v2946 = vsel %vm2434, %v1592, %v2690
  %v2947 = vsel %vm2435, %v1595, %v2691
  %v2948 = vsel %vm2436, %v1600, %v2692
  %v2949 = vsel %vm2437, %v1603, %v2693
  %v2950 = vsel %vm2438, %v1608, %v2694
  %v2951 = vsel %vm2439, %v1611, %v2695
  %v2952 = vsel %vm2440, %v1616, %v2696
  %v2953 = vsel %vm2441, %v1619, %v2697
  %v2954 = vsel %vm2442, %v1624, %v2698
  %v2955 = vsel %vm2443, %v1627, %v2699
  %v2956 = vsel %vm2444, %v1632, %v2700
  %v2957 = vsel %vm2445, %v1635, %v2701
  %v2958 = vsel %vm2446, %v1640, %v2702
  %v2959 = vsel %vm2447, %v1643, %v2703
  %v2960 = vsel %vm2448, %v1648, %v2704
  %v2961 = vsel %vm2449, %v1651, %v2705
  %v2962 = vsel %vm2450, %v1656, %v2706
  %v2963 = vsel %vm2451, %v1659, %v2707
  %v2964 = vsel %vm2452, %v1664, %v2708
  %v2965 = vsel %vm2453, %v1667, %v2709
  %v2966 = vsel %vm2454, %v1672, %v2710
  %v2967 = vsel %vm2455, %v1675, %v2711
  %v2968 = vsel %vm2456, %v1680, %v2712
  %v2969 = vsel %vm2457, %v1683, %v2713
  %v2970 = vsel %vm2458, %v1688, %v2714
  %v2971 = vsel %vm2459, %v1691, %v2715
  %v2972 = vsel %vm2460, %v1696, %v2716
  %v2973 = vsel %vm2461, %v1699, %v2717
  %v2974 = vsel %vm2462, %v1704, %v2718
  %v2975 = vsel %vm2463, %v1707, %v2719
  %v2976 = vsel %vm2464, %v1712, %v2720
  %v2977 = vsel %vm2465, %v1715, %v2721
  %v2978 = vsel %vm2466, %v1720, %v2722
  %v2979 = vsel %vm2467, %v1723, %v2723
  %v2980 = vsel %vm2468, %v1728, %v2724
  %v2981 = vsel %vm2469, %v1731, %v2725
  %v2982 = vsel %vm2470, %v1736, %v2726
  %v2983 = vsel %vm2471, %v1739, %v2727
  %v2984 = vsel %vm2472, %v1744, %v2728
  %v2985 = vsel %vm2473, %v1747, %v2729
  %v2986 = vsel %vm2474, %v1752, %v2730
  %v2987 = vsel %vm2475, %v1755, %v2731
  %v2988 = vsel %vm2476, %v1760, %v2732
  %v2989 = vsel %vm2477, %v1763, %v2733
  %v2990 = vsel %vm2478, %v1768, %v2734
  %v2991 = vsel %vm2479, %v1771, %v2735
  %v2992 = vsel %vm2480, %v1776, %v2736
  %v2993 = vsel %vm2481, %v1779, %v2737
  %v2994 = vsel %vm2482, %v1784, %v2738
  %v2995 = vsel %vm2483, %v1787, %v2739
  %v2996 = vsel %vm2484, %v1792, %v2740
  %v2997 = vsel %vm2485, %v1795, %v2741
  %v2998 = vsel %vm2486, %v1800, %v2742
  %v2999 = vsel %vm2487, %v1803, %v2743
  %v3000 = vsel %vm2488, %v1808, %v2744
  %v3001 = vsel %vm2489, %v1811, %v2745
  %v3002 = vsel %vm2490, %v1816, %v2746
  %v3003 = vsel %vm2491, %v1819, %v2747
  %v3004 = vsel %vm2492, %v1824, %v2748
  %v3005 = vsel %vm2493, %v1827, %v2749
  %v3006 = vsel %vm2494, %v1832, %v2750
  %v3007 = vsel %vm2495, %v1835, %v2751
  %v3008 = vsel %vm2496, %v1840, %v2752
  %v3009 = vsel %vm2497, %v1843, %v2753
  %v3010 = vsel %vm2498, %v1848, %v2754
  %v3011 = vsel %vm2499, %v1851, %v2755
  %v3012 = vsel %vm2500, %v1856, %v2756
  %v3013 = vsel %vm2501, %v1859, %v2757
  %v3014 = vsel %vm2502, %v1864, %v2758
  %v3015 = vsel %vm2503, %v1867, %v2759
  %v3016 = vsel %vm2504, %v1872, %v2760
  %v3017 = vsel %vm2505, %v1875, %v2761
  %v3018 = vsel %vm2506, %v1880, %v2762
  %v3019 = vsel %vm2507, %v1883, %v2763
  %v3020 = vsel %vm2508, %v1888, %v2764
  %v3021 = vsel %vm2509, %v1891, %v2765
  %v3022 = vsel %vm2510, %v1896, %v2766
  %v3023 = vsel %vm2511, %v1899, %v2767
  %v3024 = vsel %vm2512, %v1904, %v2768
  %v3025 = vsel %vm2513, %v1907, %v2769
  %v3026 = vsel %vm2514, %v1912, %v2770
  %v3027 = vsel %vm2515, %v1915, %v2771
  %v3028 = vsel %vm2516, %v1920, %v2772
  %v3029 = vsel %vm2517, %v1923, %v2773
  %v3030 = vsel %vm2518, %v1928, %v2774
  %v3031 = vsel %vm2519, %v1931, %v2775
  %v3032 = vsel %vm2520, %v1936, %v2776
  %v3033 = vsel %vm2521, %v1939, %v2777
  %v3034 = vsel %vm2522, %v1944, %v2778
  %v3035 = vsel %vm2523, %v1947, %v2779
  %v3036 = vsel %vm2524, %v1952, %v2780
  %v3037 = vsel %vm2525, %v1955, %v2781
  %v3038 = vsel %vm2526, %v1960, %v2782
  %v3039 = vsel %vm2527, %v1963, %v2783
  %v3040 = vsel %vm2528, %v1968, %v2784
  %v3041 = vsel %vm2529, %v1971, %v2785
  %v3042 = vsel %vm2530, %v1976, %v2786
  %v3043 = vsel %vm2531, %v1979, %v2787
  %v3044 = vsel %vm2532, %v1984, %v2788
  %v3045 = vsel %vm2533, %v1987, %v2789
  %v3046 = vsel %vm2534, %v1992, %v2790
  %v3047 = vsel %vm2535, %v1995, %v2791
  %v3048 = vsel %vm2536, %v2000, %v2792
  %v3049 = vsel %vm2537, %v2003, %v2793
  %v3050 = vsel %vm2538, %v2008, %v2794
  %v3051 = vsel %vm2539, %v2011, %v2795
  %v3052 = vsel %vm2540, %v2016, %v2796
  %v3053 = vsel %vm2541, %v2019, %v2797
  %v3054 = vsel %vm2542, %v2024, %v2798
  %v3055 = vsel %vm2543, %v2027, %v2799
  %v3056 = vsel %vm2544, %v2032, %v2800
  %v3057 = vsel %vm2545, %v2035, %v2801
  %v3058 = vsel %vm2546, %v2040, %v2802
  %v3059 = vsel %vm2547, %v2043, %v2803
  %v3060 = vsel %vm2548, %v2048, %v2804
  %v3061 = vsel %vm2549, %v2051, %v2805
  %v3062 = vsel %vm2550, %v2056, %v2806
  %v3063 = vsel %vm2551, %v2059, %v2807
  %v3064 = vsel %vm2552, %v2064, %v2808
  %v3065 = vsel %vm2553, %v2067, %v2809
  %v3066 = vsel %vm2554, %v2072, %v2810
  %v3067 = vsel %vm2555, %v2075, %v2811
  %v3068 = vsel %vm2556, %v2080, %v2812
  %v3069 = vsel %vm2557, %v2083, %v2813
  %v3070 = vsel %vm2558, %v2088, %v2814
  %v3071 = vsel %vm2559, %v2091, %v2815
  %v3072 = vsel %vm2560, %v2096, %v2816
  %v3073 = vsel %vm2561, %v2099, %v2817
  %v3074 = vsel %vm2562, %v2104, %v2818
  %v3075 = vsel %vm2563, %v2107, %v2819
  %v3076 = vsel %vm2564, %v2112, %v2820
  %v3077 = vsel %vm2565, %v2115, %v2821
  %v3078 = vsel %vm2566, %v2120, %v2822
  %v3079 = vsel %vm2567, %v2123, %v2823
  %v3080 = vsel %vm2568, %v2128, %v2824
  %v3081 = vsel %vm2569, %v2131, %v2825
  %v3082 = vsel %vm2570, %v2136, %v2826
  %v3083 = vsel %vm2571, %v2139, %v2827
  %v3084 = vsel %vm2572, %v2144, %v2828
  %v3085 = vsel %vm2573, %v2147, %v2829
  %v3086 = vsel %vm2574, %v2152, %v2830
  %v3087 = vsel %vm2575, %v2155, %v2831
  %v3088 = vsel %vm2576, %v2160, %v2832
  %v3089 = vsel %vm2577, %v2163, %v2833
  %v3090 = vsel %vm2578, %v2168, %v2834
  %v3091 = vsel %vm2579, %v2171, %v2835
  %v3092 = vsel %vm2580, %v2176, %v2836
  %v3093 = vsel %vm2581, %v2179, %v2837
  %v3094 = vsel %vm2582, %v2184, %v2838
  %v3095 = vsel %vm2583, %v2187, %v2839
  %v3096 = vsel %vm2584, %v2192, %v2840
  %v3097 = vsel %vm2585, %v2195, %v2841
  %v3098 = vsel %vm2586, %v2200, %v2842
  %v3099 = vsel %vm2587, %v2203, %v2843
  %v3100 = vsel %vm2588, %v2208, %v2844
  %v3101 = vsel %vm2589, %v2211, %v2845
  %v3102 = vsel %vm2590, %v2216, %v2846
  %v3103 = vsel %vm2591, %v2219, %v2847
  %v3104 = vsel %vm2592, %v2224, %v2848
  %v3105 = vsel %vm2593, %v2227, %v2849
  %v3106 = vsel %vm2594, %v2232, %v2850
  %v3107 = vsel %vm2595, %v2235, %v2851
  %v3108 = vsel %vm2596, %v2240, %v2852
  %v3109 = vsel %vm2597, %v2243, %v2853
  %v3110 = vsel %vm2598, %v2248, %v2854
  %v3111 = vsel %vm2599, %v2251, %v2855
  %v3112 = vsel %vm2600, %v2256, %v2856
  %v3113 = vsel %vm2601, %v2259, %v2857
  %v3114 = vsel %vm2602, %v2264, %v2858
  %v3115 = vsel %vm2603, %v2267, %v2859
  %v3116 = vsel %vm2604, %v2272, %v2860
  %v3117 = vsel %vm2605, %v2275, %v2861
  %v3118 = vsel %vm2606, %v2280, %v2862
  %v3119 = vsel %vm2607, %v2283, %v2863
  %v3120 = vsel %vm2608, %v2288, %v2864
  %v3121 = vsel %vm2609, %v2291, %v2865
  %v3122 = vsel %vm2610, %v2296, %v2866
  %v3123 = vsel %vm2611, %v2299, %v2867
  %v3124 = vsel %vm2612, %v2304, %v2868
  %v3125 = vsel %vm2613, %v2307, %v2869
  %v3126 = vsel %vm2614, %v2312, %v2870
  %v3127 = vsel %vm2615, %v2315, %v2871
  %v3128 = vsel %vm2616, %v2320, %v2872
  %v3129 = vsel %vm2617, %v2323, %v2873
  %v3130 = vsel %vm2618, %v2328, %v2874
  %v3131 = vsel %vm2619, %v2331, %v2875
  %v3132 = vsel %vm2620, %v2336, %v2876
  %v3133 = vsel %vm2621, %v2339, %v2877
  %v3134 = vsel %vm2622, %v2344, %v2878
  %v3135 = vsel %vm2623, %v2347, %v2879
  %v3136 = vsel %vm2624, %v2352, %v2880
  %v3137 = vsel %vm2625, %v2355, %v2881
  %v3138 = vsel %vm2626, %v2360, %v2882
  %v3139 = vsel %vm2627, %v2363, %v2883
  %v3140 = vsel %vm2628, %v2368, %v2884
  %v3141 = vsel %vm2629, %v2371, %v2885
  %v3142 = vpack.c.bf16 %v2887, %v2886
  %v3143 = vpack.c.bf16 %v2889, %v2888
  %v3144 = vpack.c.bf16 %v2891, %v2890
  %v3145 = vpack.c.bf16 %v2893, %v2892
  %v3146 = vpack.c.bf16 %v2895, %v2894
  %v3147 = vpack.c.bf16 %v2897, %v2896
  %v3148 = vpack.c.bf16 %v2899, %v2898
  %v3149 = vpack.c.bf16 %v2901, %v2900
  %v3150 = vpack.c.bf16 %v2903, %v2902
  %v3151 = vpack.c.bf16 %v2905, %v2904
  %v3152 = vpack.c.bf16 %v2907, %v2906
  %v3153 = vpack.c.bf16 %v2909, %v2908
  %v3154 = vpack.c.bf16 %v2911, %v2910
  %v3155 = vpack.c.bf16 %v2913, %v2912
  %v3156 = vpack.c.bf16 %v2915, %v2914
  %v3157 = vpack.c.bf16 %v2917, %v2916
  %v3158 = vpack.c.bf16 %v2919, %v2918
  %v3159 = vpack.c.bf16 %v2921, %v2920
  %v3160 = vpack.c.bf16 %v2923, %v2922
  %v3161 = vpack.c.bf16 %v2925, %v2924
  %v3162 = vpack.c.bf16 %v2927, %v2926
  %v3163 = vpack.c.bf16 %v2929, %v2928
  %v3164 = vpack.c.bf16 %v2931, %v2930
  %v3165 = vpack.c.bf16 %v2933, %v2932
  %v3166 = vpack.c.bf16 %v2935, %v2934
  %v3167 = vpack.c.bf16 %v2937, %v2936
  %v3168 = vpack.c.bf16 %v2939, %v2938
  %v3169 = vpack.c.bf16 %v2941, %v2940
  %v3170 = vpack.c.bf16 %v2943, %v2942
  %v3171 = vpack.c.bf16 %v2945, %v2944
  %v3172 = vpack.c.bf16 %v2947, %v2946
  %v3173 = vpack.c.bf16 %v2949, %v2948
  %v3174 = vpack.c.bf16 %v2951, %v2950
  %v3175 = vpack.c.bf16 %v2953, %v2952
  %v3176 = vpack.c.bf16 %v2955, %v2954
  %v3177 = vpack.c.bf16 %v2957, %v2956
  %v3178 = vpack.c.bf16 %v2959, %v2958
  %v3179 = vpack.c.bf16 %v2961, %v2960
  %v3180 = vpack.c.bf16 %v2963, %v2962
  %v3181 = vpack.c.bf16 %v2965, %v2964
  %v3182 = vpack.c.bf16 %v2967, %v2966
  %v3183 = vpack.c.bf16 %v2969, %v2968
  %v3184 = vpack.c.bf16 %v2971, %v2970
  %v3185 = vpack.c.bf16 %v2973, %v2972
  %v3186 = vpack.c.bf16 %v2975, %v2974
  %v3187 = vpack.c.bf16 %v2977, %v2976
  %v3188 = vpack.c.bf16 %v2979, %v2978
  %v3189 = vpack.c.bf16 %v2981, %v2980
  %v3190 = vpack.c.bf16 %v2983, %v2982
  %v3191 = vpack.c.bf16 %v2985, %v2984
  %v3192 = vpack.c.bf16 %v2987, %v2986
  %v3193 = vpack.c.bf16 %v2989, %v2988
  %v3194 = vpack.c.bf16 %v2991, %v2990
  %v3195 = vpack.c.bf16 %v2993, %v2992
  %v3196 = vpack.c.bf16 %v2995, %v2994
  %v3197 = vpack.c.bf16 %v2997, %v2996
  %v3198 = vpack.c.bf16 %v2999, %v2998
  %v3199 = vpack.c.bf16 %v3001, %v3000
  %v3200 = vpack.c.bf16 %v3003, %v3002
  %v3201 = vpack.c.bf16 %v3005, %v3004
  %v3202 = vpack.c.bf16 %v3007, %v3006
  %v3203 = vpack.c.bf16 %v3009, %v3008
  %v3204 = vpack.c.bf16 %v3011, %v3010
  %v3205 = vpack.c.bf16 %v3013, %v3012
  %v3206 = vpack.c.bf16 %v3015, %v3014
  %v3207 = vpack.c.bf16 %v3017, %v3016
  %v3208 = vpack.c.bf16 %v3019, %v3018
  %v3209 = vpack.c.bf16 %v3021, %v3020
  %v3210 = vpack.c.bf16 %v3023, %v3022
  %v3211 = vpack.c.bf16 %v3025, %v3024
  %v3212 = vpack.c.bf16 %v3027, %v3026
  %v3213 = vpack.c.bf16 %v3029, %v3028
  %v3214 = vpack.c.bf16 %v3031, %v3030
  %v3215 = vpack.c.bf16 %v3033, %v3032
  %v3216 = vpack.c.bf16 %v3035, %v3034
  %v3217 = vpack.c.bf16 %v3037, %v3036
  %v3218 = vpack.c.bf16 %v3039, %v3038
  %v3219 = vpack.c.bf16 %v3041, %v3040
  %v3220 = vpack.c.bf16 %v3043, %v3042
  %v3221 = vpack.c.bf16 %v3045, %v3044
  %v3222 = vpack.c.bf16 %v3047, %v3046
  %v3223 = vpack.c.bf16 %v3049, %v3048
  %v3224 = vpack.c.bf16 %v3051, %v3050
  %v3225 = vpack.c.bf16 %v3053, %v3052
  %v3226 = vpack.c.bf16 %v3055, %v3054
  %v3227 = vpack.c.bf16 %v3057, %v3056
  %v3228 = vpack.c.bf16 %v3059, %v3058
  %v3229 = vpack.c.bf16 %v3061, %v3060
  %v3230 = vpack.c.bf16 %v3063, %v3062
  %v3231 = vpack.c.bf16 %v3065, %v3064
  %v3232 = vpack.c.bf16 %v3067, %v3066
  %v3233 = vpack.c.bf16 %v3069, %v3068
  %v3234 = vpack.c.bf16 %v3071, %v3070
  %v3235 = vpack.c.bf16 %v3073, %v3072
  %v3236 = vpack.c.bf16 %v3075, %v3074
  %v3237 = vpack.c.bf16 %v3077, %v3076
  %v3238 = vpack.c.bf16 %v3079, %v3078
  %v3239 = vpack.c.bf16 %v3081, %v3080
  %v3240 = vpack.c.bf16 %v3083, %v3082
  %v3241 = vpack.c.bf16 %v3085, %v3084
  %v3242 = vpack.c.bf16 %v3087, %v3086
  %v3243 = vpack.c.bf16 %v3089, %v3088
  %v3244 = vpack.c.bf16 %v3091, %v3090
  %v3245 = vpack.c.bf16 %v3093, %v3092
  %v3246 = vpack.c.bf16 %v3095, %v3094
  %v3247 = vpack.c.bf16 %v3097, %v3096
  %v3248 = vpack.c.bf16 %v3099, %v3098
  %v3249 = vpack.c.bf16 %v3101, %v3100
  %v3250 = vpack.c.bf16 %v3103, %v3102
  %v3251 = vpack.c.bf16 %v3105, %v3104
  %v3252 = vpack.c.bf16 %v3107, %v3106
  %v3253 = vpack.c.bf16 %v3109, %v3108
  %v3254 = vpack.c.bf16 %v3111, %v3110
  %v3255 = vpack.c.bf16 %v3113, %v3112
  %v3256 = vpack.c.bf16 %v3115, %v3114
  %v3257 = vpack.c.bf16 %v3117, %v3116
  %v3258 = vpack.c.bf16 %v3119, %v3118
  %v3259 = vpack.c.bf16 %v3121, %v3120
  %v3260 = vpack.c.bf16 %v3123, %v3122
  %v3261 = vpack.c.bf16 %v3125, %v3124
  %v3262 = vpack.c.bf16 %v3127, %v3126
  %v3263 = vpack.c.bf16 %v3129, %v3128
  %v3264 = vpack.c.bf16 %v3131, %v3130
  %v3265 = vpack.c.bf16 %v3133, %v3132
  %v3266 = vpack.c.bf16 %v3135, %v3134
  %v3267 = vpack.c.bf16 %v3137, %v3136
  %v3268 = vpack.c.bf16 %v3139, %v3138
  %v3269 = vpack.c.bf16 %v3141, %v3140
  %v3398 = vunpack.c.l.b16 %v3142
  %v3399 = vunpack.c.h.b16 %v3142
  %v3400 = vunpack.c.l.b16 %v3143
  %v3401 = vunpack.c.h.b16 %v3143
  %v3402 = vunpack.c.l.b16 %v3144
  %v3403 = vunpack.c.h.b16 %v3144
  %v3404 = vunpack.c.l.b16 %v3145
  %v3405 = vunpack.c.h.b16 %v3145
  %v3406 = vunpack.c.l.b16 %v3146
  %v3407 = vunpack.c.h.b16 %v3146
  %v3408 = vunpack.c.l.b16 %v3147
  %v3409 = vunpack.c.h.b16 %v3147
  %v3410 = vunpack.c.l.b16 %v3148
  %v3411 = vunpack.c.h.b16 %v3148
  %v3412 = vunpack.c.l.b16 %v3149
  %v3413 = vunpack.c.h.b16 %v3149
  %v3414 = vunpack.c.l.b16 %v3150
  %v3415 = vunpack.c.h.b16 %v3150
  %v3416 = vunpack.c.l.b16 %v3151
  %v3417 = vunpack.c.h.b16 %v3151
  %v3418 = vunpack.c.l.b16 %v3152
  %v3419 = vunpack.c.h.b16 %v3152
  %v3420 = vunpack.c.l.b16 %v3153
  %v3421 = vunpack.c.h.b16 %v3153
  %v3422 = vunpack.c.l.b16 %v3154
  %v3423 = vunpack.c.h.b16 %v3154
  %v3424 = vunpack.c.l.b16 %v3155
  %v3425 = vunpack.c.h.b16 %v3155
  %v3426 = vunpack.c.l.b16 %v3156
  %v3427 = vunpack.c.h.b16 %v3156
  %v3428 = vunpack.c.l.b16 %v3157
  %v3429 = vunpack.c.h.b16 %v3157
  %v3430 = vunpack.c.l.b16 %v3158
  %v3431 = vunpack.c.h.b16 %v3158
  %v3432 = vunpack.c.l.b16 %v3159
  %v3433 = vunpack.c.h.b16 %v3159
  %v3434 = vunpack.c.l.b16 %v3160
  %v3435 = vunpack.c.h.b16 %v3160
  %v3436 = vunpack.c.l.b16 %v3161
  %v3437 = vunpack.c.h.b16 %v3161
  %v3438 = vunpack.c.l.b16 %v3162
  %v3439 = vunpack.c.h.b16 %v3162
  %v3440 = vunpack.c.l.b16 %v3163
  %v3441 = vunpack.c.h.b16 %v3163
  %v3442 = vunpack.c.l.b16 %v3164
  %v3443 = vunpack.c.h.b16 %v3164
  %v3444 = vunpack.c.l.b16 %v3165
  %v3445 = vunpack.c.h.b16 %v3165
  %v3446 = vunpack.c.l.b16 %v3166
  %v3447 = vunpack.c.h.b16 %v3166
  %v3448 = vunpack.c.l.b16 %v3167
  %v3449 = vunpack.c.h.b16 %v3167
  %v3450 = vunpack.c.l.b16 %v3168
  %v3451 = vunpack.c.h.b16 %v3168
  %v3452 = vunpack.c.l.b16 %v3169
  %v3453 = vunpack.c.h.b16 %v3169
  %v3454 = vunpack.c.l.b16 %v3170
  %v3455 = vunpack.c.h.b16 %v3170
  %v3456 = vunpack.c.l.b16 %v3171
  %v3457 = vunpack.c.h.b16 %v3171
  %v3458 = vunpack.c.l.b16 %v3172
  %v3459 = vunpack.c.h.b16 %v3172
  %v3460 = vunpack.c.l.b16 %v3173
  %v3461 = vunpack.c.h.b16 %v3173
  %v3462 = vunpack.c.l.b16 %v3174
  %v3463 = vunpack.c.h.b16 %v3174
  %v3464 = vunpack.c.l.b16 %v3175
  %v3465 = vunpack.c.h.b16 %v3175
  %v3466 = vunpack.c.l.b16 %v3176
  %v3467 = vunpack.c.h.b16 %v3176
  %v3468 = vunpack.c.l.b16 %v3177
  %v3469 = vunpack.c.h.b16 %v3177
  %v3470 = vunpack.c.l.b16 %v3178
  %v3471 = vunpack.c.h.b16 %v3178
  %v3472 = vunpack.c.l.b16 %v3179
  %v3473 = vunpack.c.h.b16 %v3179
  %v3474 = vunpack.c.l.b16 %v3180
  %v3475 = vunpack.c.h.b16 %v3180
  %v3476 = vunpack.c.l.b16 %v3181
  %v3477 = vunpack.c.h.b16 %v3181
  %v3478 = vunpack.c.l.b16 %v3182
  %v3479 = vunpack.c.h.b16 %v3182
  %v3480 = vunpack.c.l.b16 %v3183
  %v3481 = vunpack.c.h.b16 %v3183
  %v3482 = vunpack.c.l.b16 %v3184
  %v3483 = vunpack.c.h.b16 %v3184
  %v3484 = vunpack.c.l.b16 %v3185
  %v3485 = vunpack.c.h.b16 %v3185
  %v3486 = vunpack.c.l.b16 %v3186
  %v3487 = vunpack.c.h.b16 %v3186
  %v3488 = vunpack.c.l.b16 %v3187
  %v3489 = vunpack.c.h.b16 %v3187
  %v3490 = vunpack.c.l.b16 %v3188
  %v3491 = vunpack.c.h.b16 %v3188
  %v3492 = vunpack.c.l.b16 %v3189
  %v3493 = vunpack.c.h.b16 %v3189
  %v3494 = vunpack.c.l.b16 %v3190
  %v3495 = vunpack.c.h.b16 %v3190
  %v3496 = vunpack.c.l.b16 %v3191
  %v3497 = vunpack.c.h.b16 %v3191
  %v3498 = vunpack.c.l.b16 %v3192
  %v3499 = vunpack.c.h.b16 %v3192
  %v3500 = vunpack.c.l.b16 %v3193
  %v3501 = vunpack.c.h.b16 %v3193
  %v3502 = vunpack.c.l.b16 %v3194
  %v3503 = vunpack.c.h.b16 %v3194
  %v3504 = vunpack.c.l.b16 %v3195
  %v3505 = vunpack.c.h.b16 %v3195
  %v3506 = vunpack.c.l.b16 %v3196
  %v3507 = vunpack.c.h.b16 %v3196
  %v3508 = vunpack.c.l.b16 %v3197
  %v3509 = vunpack.c.h.b16 %v3197
  %v3510 = vunpack.c.l.b16 %v3198
  %v3511 = vunpack.c.h.b16 %v3198
  %v3512 = vunpack.c.l.b16 %v3199
  %v3513 = vunpack.c.h.b16 %v3199
  %v3514 = vunpack.c.l.b16 %v3200
  %v3515 = vunpack.c.h.b16 %v3200
  %v3516 = vunpack.c.l.b16 %v3201
  %v3517 = vunpack.c.h.b16 %v3201
  %v3518 = vunpack.c.l.b16 %v3202
  %v3519 = vunpack.c.h.b16 %v3202
  %v3520 = vunpack.c.l.b16 %v3203
  %v3521 = vunpack.c.h.b16 %v3203
  %v3522 = vunpack.c.l.b16 %v3204
  %v3523 = vunpack.c.h.b16 %v3204
  %v3524 = vunpack.c.l.b16 %v3205
  %v3525 = vunpack.c.h.b16 %v3205
  %v3526 = vunpack.c.l.b16 %v3206
  %v3527 = vunpack.c.h.b16 %v3206
  %v3528 = vunpack.c.l.b16 %v3207
  %v3529 = vunpack.c.h.b16 %v3207
  %v3530 = vunpack.c.l.b16 %v3208
  %v3531 = vunpack.c.h.b16 %v3208
  %v3532 = vunpack.c.l.b16 %v3209
  %v3533 = vunpack.c.h.b16 %v3209
  %v3534 = vunpack.c.l.b16 %v3210
  %v3535 = vunpack.c.h.b16 %v3210
  %v3536 = vunpack.c.l.b16 %v3211
  %v3537 = vunpack.c.h.b16 %v3211
  %v3538 = vunpack.c.l.b16 %v3212
  %v3539 = vunpack.c.h.b16 %v3212
  %v3540 = vunpack.c.l.b16 %v3213
  %v3541 = vunpack.c.h.b16 %v3213
  %v3542 = vunpack.c.l.b16 %v3214
  %v3543 = vunpack.c.h.b16 %v3214
  %v3544 = vunpack.c.l.b16 %v3215
  %v3545 = vunpack.c.h.b16 %v3215
  %v3546 = vunpack.c.l.b16 %v3216
  %v3547 = vunpack.c.h.b16 %v3216
  %v3548 = vunpack.c.l.b16 %v3217
  %v3549 = vunpack.c.h.b16 %v3217
  %v3550 = vunpack.c.l.b16 %v3218
  %v3551 = vunpack.c.h.b16 %v3218
  %v3552 = vunpack.c.l.b16 %v3219
  %v3553 = vunpack.c.h.b16 %v3219
  %v3554 = vunpack.c.l.b16 %v3220
  %v3555 = vunpack.c.h.b16 %v3220
  %v3556 = vunpack.c.l.b16 %v3221
  %v3557 = vunpack.c.h.b16 %v3221
  %v3558 = vunpack.c.l.b16 %v3222
  %v3559 = vunpack.c.h.b16 %v3222
  %v3560 = vunpack.c.l.b16 %v3223
  %v3561 = vunpack.c.h.b16 %v3223
  %v3562 = vunpack.c.l.b16 %v3224
  %v3563 = vunpack.c.h.b16 %v3224
  %v3564 = vunpack.c.l.b16 %v3225
  %v3565 = vunpack.c.h.b16 %v3225
  %v3566 = vunpack.c.l.b16 %v3226
  %v3567 = vunpack.c.h.b16 %v3226
  %v3568 = vunpack.c.l.b16 %v3227
  %v3569 = vunpack.c.h.b16 %v3227
  %v3570 = vunpack.c.l.b16 %v3228
  %v3571 = vunpack.c.h.b16 %v3228
  %v3572 = vunpack.c.l.b16 %v3229
  %v3573 = vunpack.c.h.b16 %v3229
  %v3574 = vunpack.c.l.b16 %v3230
  %v3575 = vunpack.c.h.b16 %v3230
  %v3576 = vunpack.c.l.b16 %v3231
  %v3577 = vunpack.c.h.b16 %v3231
  %v3578 = vunpack.c.l.b16 %v3232
  %v3579 = vunpack.c.h.b16 %v3232
  %v3580 = vunpack.c.l.b16 %v3233
  %v3581 = vunpack.c.h.b16 %v3233
  %v3582 = vunpack.c.l.b16 %v3234
  %v3583 = vunpack.c.h.b16 %v3234
  %v3584 = vunpack.c.l.b16 %v3235
  %v3585 = vunpack.c.h.b16 %v3235
  %v3586 = vunpack.c.l.b16 %v3236
  %v3587 = vunpack.c.h.b16 %v3236
  %v3588 = vunpack.c.l.b16 %v3237
  %v3589 = vunpack.c.h.b16 %v3237
  %v3590 = vunpack.c.l.b16 %v3238
  %v3591 = vunpack.c.h.b16 %v3238
  %v3592 = vunpack.c.l.b16 %v3239
  %v3593 = vunpack.c.h.b16 %v3239
  %v3594 = vunpack.c.l.b16 %v3240
  %v3595 = vunpack.c.h.b16 %v3240
  %v3596 = vunpack.c.l.b16 %v3241
  %v3597 = vunpack.c.h.b16 %v3241
  %v3598 = vunpack.c.l.b16 %v3242
  %v3599 = vunpack.c.h.b16 %v3242
  %v3600 = vunpack.c.l.b16 %v3243
  %v3601 = vunpack.c.h.b16 %v3243
  %v3602 = vunpack.c.l.b16 %v3244
  %v3603 = vunpack.c.h.b16 %v3244
  %v3604 = vunpack.c.l.b16 %v3245
  %v3605 = vunpack.c.h.b16 %v3245
  %v3606 = vunpack.c.l.b16 %v3246
  %v3607 = vunpack.c.h.b16 %v3246
  %v3608 = vunpack.c.l.b16 %v3247
  %v3609 = vunpack.c.h.b16 %v3247
  %v3610 = vunpack.c.l.b16 %v3248
  %v3611 = vunpack.c.h.b16 %v3248
  %v3612 = vunpack.c.l.b16 %v3249
  %v3613 = vunpack.c.h.b16 %v3249
  %v3614 = vunpack.c.l.b16 %v3250
  %v3615 = vunpack.c.h.b16 %v3250
  %v3616 = vunpack.c.l.b16 %v3251
  %v3617 = vunpack.c.h.b16 %v3251
  %v3618 = vunpack.c.l.b16 %v3252
  %v3619 = vunpack.c.h.b16 %v3252
  %v3620 = vunpack.c.l.b16 %v3253
  %v3621 = vunpack.c.h.b16 %v3253
  %v3622 = vunpack.c.l.b16 %v3254
  %v3623 = vunpack.c.h.b16 %v3254
  %v3624 = vunpack.c.l.b16 %v3255
  %v3625 = vunpack.c.h.b16 %v3255
  %v3626 = vunpack.c.l.b16 %v3256
  %v3627 = vunpack.c.h.b16 %v3256
  %v3628 = vunpack.c.l.b16 %v3257
  %v3629 = vunpack.c.h.b16 %v3257
  %v3630 = vunpack.c.l.b16 %v3258
  %v3631 = vunpack.c.h.b16 %v3258
  %v3632 = vunpack.c.l.b16 %v3259
  %v3633 = vunpack.c.h.b16 %v3259
  %v3634 = vunpack.c.l.b16 %v3260
  %v3635 = vunpack.c.h.b16 %v3260
  %v3636 = vunpack.c.l.b16 %v3261
  %v3637 = vunpack.c.h.b16 %v3261
  %v3638 = vunpack.c.l.b16 %v3262
  %v3639 = vunpack.c.h.b16 %v3262
  %v3640 = vunpack.c.l.b16 %v3263
  %v3641 = vunpack.c.h.b16 %v3263
  %v3642 = vunpack.c.l.b16 %v3264
  %v3643 = vunpack.c.h.b16 %v3264
  %v3644 = vunpack.c.l.b16 %v3265
  %v3645 = vunpack.c.h.b16 %v3265
  %v3646 = vunpack.c.l.b16 %v3266
  %v3647 = vunpack.c.h.b16 %v3266
  %v3648 = vunpack.c.l.b16 %v3267
  %v3649 = vunpack.c.h.b16 %v3267
  %v3650 = vunpack.c.l.b16 %v3268
  %v3651 = vunpack.c.h.b16 %v3268
  %v3652 = vunpack.c.l.b16 %v3269
  %v3653 = vunpack.c.h.b16 %v3269
  %v3654 = vpack.c.b16 %v3398, %v3398
  %v3655 = vpack.c.b16 %v3399, %v3399
  %v3656 = vpack.c.b16 %v3400, %v3400
  %v3657 = vpack.c.b16 %v3401, %v3401
  %v3658 = vpack.c.b16 %v3402, %v3402
  %v3659 = vpack.c.b16 %v3403, %v3403
  %v3660 = vpack.c.b16 %v3404, %v3404
  %v3661 = vpack.c.b16 %v3405, %v3405
  %v3662 = vpack.c.b16 %v3406, %v3406
  %v3663 = vpack.c.b16 %v3407, %v3407
  %v3664 = vpack.c.b16 %v3408, %v3408
  %v3665 = vpack.c.b16 %v3409, %v3409
  %v3666 = vpack.c.b16 %v3410, %v3410
  %v3667 = vpack.c.b16 %v3411, %v3411
  %v3668 = vpack.c.b16 %v3412, %v3412
  %v3669 = vpack.c.b16 %v3413, %v3413
  %v3670 = vpack.c.b16 %v3414, %v3414
  %v3671 = vpack.c.b16 %v3415, %v3415
  %v3672 = vpack.c.b16 %v3416, %v3416
  %v3673 = vpack.c.b16 %v3417, %v3417
  %v3674 = vpack.c.b16 %v3418, %v3418
  %v3675 = vpack.c.b16 %v3419, %v3419
  %v3676 = vpack.c.b16 %v3420, %v3420
  %v3677 = vpack.c.b16 %v3421, %v3421
  %v3678 = vpack.c.b16 %v3422, %v3422
  %v3679 = vpack.c.b16 %v3423, %v3423
  %v3680 = vpack.c.b16 %v3424, %v3424
  %v3681 = vpack.c.b16 %v3425, %v3425
  %v3682 = vpack.c.b16 %v3426, %v3426
  %v3683 = vpack.c.b16 %v3427, %v3427
  %v3684 = vpack.c.b16 %v3428, %v3428
  %v3685 = vpack.c.b16 %v3429, %v3429
  %v3686 = vpack.c.b16 %v3430, %v3430
  %v3687 = vpack.c.b16 %v3431, %v3431
  %v3688 = vpack.c.b16 %v3432, %v3432
  %v3689 = vpack.c.b16 %v3433, %v3433
  %v3690 = vpack.c.b16 %v3434, %v3434
  %v3691 = vpack.c.b16 %v3435, %v3435
  %v3692 = vpack.c.b16 %v3436, %v3436
  %v3693 = vpack.c.b16 %v3437, %v3437
  %v3694 = vpack.c.b16 %v3438, %v3438
  %v3695 = vpack.c.b16 %v3439, %v3439
  %v3696 = vpack.c.b16 %v3440, %v3440
  %v3697 = vpack.c.b16 %v3441, %v3441
  %v3698 = vpack.c.b16 %v3442, %v3442
  %v3699 = vpack.c.b16 %v3443, %v3443
  %v3700 = vpack.c.b16 %v3444, %v3444
  %v3701 = vpack.c.b16 %v3445, %v3445
  %v3702 = vpack.c.b16 %v3446, %v3446
  %v3703 = vpack.c.b16 %v3447, %v3447
  %v3704 = vpack.c.b16 %v3448, %v3448
  %v3705 = vpack.c.b16 %v3449, %v3449
  %v3706 = vpack.c.b16 %v3450, %v3450
  %v3707 = vpack.c.b16 %v3451, %v3451
  %v3708 = vpack.c.b16 %v3452, %v3452
  %v3709 = vpack.c.b16 %v3453, %v3453
  %v3710 = vpack.c.b16 %v3454, %v3454
  %v3711 = vpack.c.b16 %v3455, %v3455
  %v3712 = vpack.c.b16 %v3456, %v3456
  %v3713 = vpack.c.b16 %v3457, %v3457
  %v3714 = vpack.c.b16 %v3458, %v3458
  %v3715 = vpack.c.b16 %v3459, %v3459
  %v3716 = vpack.c.b16 %v3460, %v3460
  %v3717 = vpack.c.b16 %v3461, %v3461
  %v3718 = vpack.c.b16 %v3462, %v3462
  %v3719 = vpack.c.b16 %v3463, %v3463
  %v3720 = vpack.c.b16 %v3464, %v3464
  %v3721 = vpack.c.b16 %v3465, %v3465
  %v3722 = vpack.c.b16 %v3466, %v3466
  %v3723 = vpack.c.b16 %v3467, %v3467
  %v3724 = vpack.c.b16 %v3468, %v3468
  %v3725 = vpack.c.b16 %v3469, %v3469
  %v3726 = vpack.c.b16 %v3470, %v3470
  %v3727 = vpack.c.b16 %v3471, %v3471
  %v3728 = vpack.c.b16 %v3472, %v3472
  %v3729 = vpack.c.b16 %v3473, %v3473
  %v3730 = vpack.c.b16 %v3474, %v3474
  %v3731 = vpack.c.b16 %v3475, %v3475
  %v3732 = vpack.c.b16 %v3476, %v3476
  %v3733 = vpack.c.b16 %v3477, %v3477
  %v3734 = vpack.c.b16 %v3478, %v3478
  %v3735 = vpack.c.b16 %v3479, %v3479
  %v3736 = vpack.c.b16 %v3480, %v3480
  %v3737 = vpack.c.b16 %v3481, %v3481
  %v3738 = vpack.c.b16 %v3482, %v3482
  %v3739 = vpack.c.b16 %v3483, %v3483
  %v3740 = vpack.c.b16 %v3484, %v3484
  %v3741 = vpack.c.b16 %v3485, %v3485
  %v3742 = vpack.c.b16 %v3486, %v3486
  %v3743 = vpack.c.b16 %v3487, %v3487
  %v3744 = vpack.c.b16 %v3488, %v3488
  %v3745 = vpack.c.b16 %v3489, %v3489
  %v3746 = vpack.c.b16 %v3490, %v3490
  %v3747 = vpack.c.b16 %v3491, %v3491
  %v3748 = vpack.c.b16 %v3492, %v3492
  %v3749 = vpack.c.b16 %v3493, %v3493
  %v3750 = vpack.c.b16 %v3494, %v3494
  %v3751 = vpack.c.b16 %v3495, %v3495
  %v3752 = vpack.c.b16 %v3496, %v3496
  %v3753 = vpack.c.b16 %v3497, %v3497
  %v3754 = vpack.c.b16 %v3498, %v3498
  %v3755 = vpack.c.b16 %v3499, %v3499
  %v3756 = vpack.c.b16 %v3500, %v3500
  %v3757 = vpack.c.b16 %v3501, %v3501
  %v3758 = vpack.c.b16 %v3502, %v3502
  %v3759 = vpack.c.b16 %v3503, %v3503
  %v3760 = vpack.c.b16 %v3504, %v3504
  %v3761 = vpack.c.b16 %v3505, %v3505
  %v3762 = vpack.c.b16 %v3506, %v3506
  %v3763 = vpack.c.b16 %v3507, %v3507
  %v3764 = vpack.c.b16 %v3508, %v3508
  %v3765 = vpack.c.b16 %v3509, %v3509
  %v3766 = vpack.c.b16 %v3510, %v3510
  %v3767 = vpack.c.b16 %v3511, %v3511
  %v3768 = vpack.c.b16 %v3512, %v3512
  %v3769 = vpack.c.b16 %v3513, %v3513
  %v3770 = vpack.c.b16 %v3514, %v3514
  %v3771 = vpack.c.b16 %v3515, %v3515
  %v3772 = vpack.c.b16 %v3516, %v3516
  %v3773 = vpack.c.b16 %v3517, %v3517
  %v3774 = vpack.c.b16 %v3518, %v3518
  %v3775 = vpack.c.b16 %v3519, %v3519
  %v3776 = vpack.c.b16 %v3520, %v3520
  %v3777 = vpack.c.b16 %v3521, %v3521
  %v3778 = vpack.c.b16 %v3522, %v3522
  %v3779 = vpack.c.b16 %v3523, %v3523
  %v3780 = vpack.c.b16 %v3524, %v3524
  %v3781 = vpack.c.b16 %v3525, %v3525
  %v3782 = vpack.c.b16 %v3526, %v3526
  %v3783 = vpack.c.b16 %v3527, %v3527
  %v3784 = vpack.c.b16 %v3528, %v3528
  %v3785 = vpack.c.b16 %v3529, %v3529
  %v3786 = vpack.c.b16 %v3530, %v3530
  %v3787 = vpack.c.b16 %v3531, %v3531
  %v3788 = vpack.c.b16 %v3532, %v3532
  %v3789 = vpack.c.b16 %v3533, %v3533
  %v3790 = vpack.c.b16 %v3534, %v3534
  %v3791 = vpack.c.b16 %v3535, %v3535
  %v3792 = vpack.c.b16 %v3536, %v3536
  %v3793 = vpack.c.b16 %v3537, %v3537
  %v3794 = vpack.c.b16 %v3538, %v3538
  %v3795 = vpack.c.b16 %v3539, %v3539
  %v3796 = vpack.c.b16 %v3540, %v3540
  %v3797 = vpack.c.b16 %v3541, %v3541
  %v3798 = vpack.c.b16 %v3542, %v3542
  %v3799 = vpack.c.b16 %v3543, %v3543
  %v3800 = vpack.c.b16 %v3544, %v3544
  %v3801 = vpack.c.b16 %v3545, %v3545
  %v3802 = vpack.c.b16 %v3546, %v3546
  %v3803 = vpack.c.b16 %v3547, %v3547
  %v3804 = vpack.c.b16 %v3548, %v3548
  %v3805 = vpack.c.b16 %v3549, %v3549
  %v3806 = vpack.c.b16 %v3550, %v3550
  %v3807 = vpack.c.b16 %v3551, %v3551
  %v3808 = vpack.c.b16 %v3552, %v3552
  %v3809 = vpack.c.b16 %v3553, %v3553
  %v3810 = vpack.c.b16 %v3554, %v3554
  %v3811 = vpack.c.b16 %v3555, %v3555
  %v3812 = vpack.c.b16 %v3556, %v3556
  %v3813 = vpack.c.b16 %v3557, %v3557
  %v3814 = vpack.c.b16 %v3558, %v3558
  %v3815 = vpack.c.b16 %v3559, %v3559
  %v3816 = vpack.c.b16 %v3560, %v3560
  %v3817 = vpack.c.b16 %v3561, %v3561
  %v3818 = vpack.c.b16 %v3562, %v3562
  %v3819 = vpack.c.b16 %v3563, %v3563
  %v3820 = vpack.c.b16 %v3564, %v3564
  %v3821 = vpack.c.b16 %v3565, %v3565
  %v3822 = vpack.c.b16 %v3566, %v3566
  %v3823 = vpack.c.b16 %v3567, %v3567
  %v3824 = vpack.c.b16 %v3568, %v3568
  %v3825 = vpack.c.b16 %v3569, %v3569
  %v3826 = vpack.c.b16 %v3570, %v3570
  %v3827 = vpack.c.b16 %v3571, %v3571
  %v3828 = vpack.c.b16 %v3572, %v3572
  %v3829 = vpack.c.b16 %v3573, %v3573
  %v3830 = vpack.c.b16 %v3574, %v3574
  %v3831 = vpack.c.b16 %v3575, %v3575
  %v3832 = vpack.c.b16 %v3576, %v3576
  %v3833 = vpack.c.b16 %v3577, %v3577
  %v3834 = vpack.c.b16 %v3578, %v3578
  %v3835 = vpack.c.b16 %v3579, %v3579
  %v3836 = vpack.c.b16 %v3580, %v3580
  %v3837 = vpack.c.b16 %v3581, %v3581
  %v3838 = vpack.c.b16 %v3582, %v3582
  %v3839 = vpack.c.b16 %v3583, %v3583
  %v3840 = vpack.c.b16 %v3584, %v3584
  %v3841 = vpack.c.b16 %v3585, %v3585
  %v3842 = vpack.c.b16 %v3586, %v3586
  %v3843 = vpack.c.b16 %v3587, %v3587
  %v3844 = vpack.c.b16 %v3588, %v3588
  %v3845 = vpack.c.b16 %v3589, %v3589
  %v3846 = vpack.c.b16 %v3590, %v3590
  %v3847 = vpack.c.b16 %v3591, %v3591
  %v3848 = vpack.c.b16 %v3592, %v3592
  %v3849 = vpack.c.b16 %v3593, %v3593
  %v3850 = vpack.c.b16 %v3594, %v3594
  %v3851 = vpack.c.b16 %v3595, %v3595
  %v3852 = vpack.c.b16 %v3596, %v3596
  %v3853 = vpack.c.b16 %v3597, %v3597
  %v3854 = vpack.c.b16 %v3598, %v3598
  %v3855 = vpack.c.b16 %v3599, %v3599
  %v3856 = vpack.c.b16 %v3600, %v3600
  %v3857 = vpack.c.b16 %v3601, %v3601
  %v3858 = vpack.c.b16 %v3602, %v3602
  %v3859 = vpack.c.b16 %v3603, %v3603
  %v3860 = vpack.c.b16 %v3604, %v3604
  %v3861 = vpack.c.b16 %v3605, %v3605
  %v3862 = vpack.c.b16 %v3606, %v3606
  %v3863 = vpack.c.b16 %v3607, %v3607
  %v3864 = vpack.c.b16 %v3608, %v3608
  %v3865 = vpack.c.b16 %v3609, %v3609
  %v3866 = vpack.c.b16 %v3610, %v3610
  %v3867 = vpack.c.b16 %v3611, %v3611
  %v3868 = vpack.c.b16 %v3612, %v3612
  %v3869 = vpack.c.b16 %v3613, %v3613
  %v3870 = vpack.c.b16 %v3614, %v3614
  %v3871 = vpack.c.b16 %v3615, %v3615
  %v3872 = vpack.c.b16 %v3616, %v3616
  %v3873 = vpack.c.b16 %v3617, %v3617
  %v3874 = vpack.c.b16 %v3618, %v3618
  %v3875 = vpack.c.b16 %v3619, %v3619
  %v3876 = vpack.c.b16 %v3620, %v3620
  %v3877 = vpack.c.b16 %v3621, %v3621
  %v3878 = vpack.c.b16 %v3622, %v3622
  %v3879 = vpack.c.b16 %v3623, %v3623
  %v3880 = vpack.c.b16 %v3624, %v3624
  %v3881 = vpack.c.b16 %v3625, %v3625
  %v3882 = vpack.c.b16 %v3626, %v3626
  %v3883 = vpack.c.b16 %v3627, %v3627
  %v3884 = vpack.c.b16 %v3628, %v3628
  %v3885 = vpack.c.b16 %v3629, %v3629
  %v3886 = vpack.c.b16 %v3630, %v3630
  %v3887 = vpack.c.b16 %v3631, %v3631
  %v3888 = vpack.c.b16 %v3632, %v3632
  %v3889 = vpack.c.b16 %v3633, %v3633
  %v3890 = vpack.c.b16 %v3634, %v3634
  %v3891 = vpack.c.b16 %v3635, %v3635
  %v3892 = vpack.c.b16 %v3636, %v3636
  %v3893 = vpack.c.b16 %v3637, %v3637
  %v3894 = vpack.c.b16 %v3638, %v3638
  %v3895 = vpack.c.b16 %v3639, %v3639
  %v3896 = vpack.c.b16 %v3640, %v3640
  %v3897 = vpack.c.b16 %v3641, %v3641
  %v3898 = vpack.c.b16 %v3642, %v3642
  %v3899 = vpack.c.b16 %v3643, %v3643
  %v3900 = vpack.c.b16 %v3644, %v3644
  %v3901 = vpack.c.b16 %v3645, %v3645
  %v3902 = vpack.c.b16 %v3646, %v3646
  %v3903 = vpack.c.b16 %v3647, %v3647
  %v3904 = vpack.c.b16 %v3648, %v3648
  %v3905 = vpack.c.b16 %v3649, %v3649
  %v3906 = vpack.c.b16 %v3650, %v3650
  %v3907 = vpack.c.b16 %v3651, %v3651
  %v3908 = vpack.c.b16 %v3652, %v3652
  %v3909 = vpack.c.b16 %v3653, %v3653
  %vm4166 = vcmask 60416
  %4167 = vst.msk [vmem:[%s2] sm:$0xf] %vm4166, %v3654
  %4168 = vst.msk [vmem:[%s2 + $0x4] sm:$0xf] %vm4166, %v3655
  %4169 = vst.msk [vmem:[%s2 + $0x8] sm:$0xf] %vm4166, %v3656
  %4170 = vst.msk [vmem:[%s2 + $0xc] sm:$0xf] %vm4166, %v3657
  %4171 = vst.msk [vmem:[%s2 + $0x10] sm:$0xf] %vm4166, %v3658
  %4172 = vst.msk [vmem:[%s2 + $0x14] sm:$0xf] %vm4166, %v3659
  %4173 = vst.msk [vmem:[%s2 + $0x18] sm:$0xf] %vm4166, %v3660
  %4174 = vst.msk [vmem:[%s2 + $0x1c] sm:$0xf] %vm4166, %v3661
  %4175 = vst.msk [vmem:[%s2 + $0x20] sm:$0xf] %vm4166, %v3662
  %4176 = vst.msk [vmem:[%s2 + $0x24] sm:$0xf] %vm4166, %v3663
  %4177 = vst.msk [vmem:[%s2 + $0x28] sm:$0xf] %vm4166, %v3664
  %4178 = vst.msk [vmem:[%s2 + $0x2c] sm:$0xf] %vm4166, %v3665
  %4179 = vst.msk [vmem:[%s2 + $0x30] sm:$0xf] %vm4166, %v3666
  %4180 = vst.msk [vmem:[%s2 + $0x34] sm:$0xf] %vm4166, %v3667
  %4181 = vst.msk [vmem:[%s2 + $0x38] sm:$0xf] %vm4166, %v3668
  %4182 = vst.msk [vmem:[%s2 + $0x3c] sm:$0xf] %vm4166, %v3669
  %4183 = vst.msk [vmem:[%s2 + $0x40] sm:$0xf] %vm4166, %v3670
  %4184 = vst.msk [vmem:[%s2 + $0x44] sm:$0xf] %vm4166, %v3671
  %4185 = vst.msk [vmem:[%s2 + $0x48] sm:$0xf] %vm4166, %v3672
  %4186 = vst.msk [vmem:[%s2 + $0x4c] sm:$0xf] %vm4166, %v3673
  %4187 = vst.msk [vmem:[%s2 + $0x50] sm:$0xf] %vm4166, %v3674
  %4188 = vst.msk [vmem:[%s2 + $0x54] sm:$0xf] %vm4166, %v3675
  %4189 = vst.msk [vmem:[%s2 + $0x58] sm:$0xf] %vm4166, %v3676
  %4190 = vst.msk [vmem:[%s2 + $0x5c] sm:$0xf] %vm4166, %v3677
  %4191 = vst.msk [vmem:[%s2 + $0x60] sm:$0xf] %vm4166, %v3678
  %4192 = vst.msk [vmem:[%s2 + $0x64] sm:$0xf] %vm4166, %v3679
  %4193 = vst.msk [vmem:[%s2 + $0x68] sm:$0xf] %vm4166, %v3680
  %4194 = vst.msk [vmem:[%s2 + $0x6c] sm:$0xf] %vm4166, %v3681
  %4195 = vst.msk [vmem:[%s2 + $0x70] sm:$0xf] %vm4166, %v3682
  %4196 = vst.msk [vmem:[%s2 + $0x74] sm:$0xf] %vm4166, %v3683
  %4197 = vst.msk [vmem:[%s2 + $0x78] sm:$0xf] %vm4166, %v3684
  %4198 = vst.msk [vmem:[%s2 + $0x7c] sm:$0xf] %vm4166, %v3685
  %4199 = vst.msk [vmem:[%s2 + $0x80] sm:$0xf] %vm4166, %v3686
  %4200 = vst.msk [vmem:[%s2 + $0x84] sm:$0xf] %vm4166, %v3687
  %4201 = vst.msk [vmem:[%s2 + $0x88] sm:$0xf] %vm4166, %v3688
  %4202 = vst.msk [vmem:[%s2 + $0x8c] sm:$0xf] %vm4166, %v3689
  %4203 = vst.msk [vmem:[%s2 + $0x90] sm:$0xf] %vm4166, %v3690
  %4204 = vst.msk [vmem:[%s2 + $0x94] sm:$0xf] %vm4166, %v3691
  %4205 = vst.msk [vmem:[%s2 + $0x98] sm:$0xf] %vm4166, %v3692
  %4206 = vst.msk [vmem:[%s2 + $0x9c] sm:$0xf] %vm4166, %v3693
  %4207 = vst.msk [vmem:[%s2 + $0xa0] sm:$0xf] %vm4166, %v3694
  %4208 = vst.msk [vmem:[%s2 + $0xa4] sm:$0xf] %vm4166, %v3695
  %4209 = vst.msk [vmem:[%s2 + $0xa8] sm:$0xf] %vm4166, %v3696
  %4210 = vst.msk [vmem:[%s2 + $0xac] sm:$0xf] %vm4166, %v3697
  %4211 = vst.msk [vmem:[%s2 + $0xb0] sm:$0xf] %vm4166, %v3698
  %4212 = vst.msk [vmem:[%s2 + $0xb4] sm:$0xf] %vm4166, %v3699
  %4213 = vst.msk [vmem:[%s2 + $0xb8] sm:$0xf] %vm4166, %v3700
  %4214 = vst.msk [vmem:[%s2 + $0xbc] sm:$0xf] %vm4166, %v3701
  %4215 = vst.msk [vmem:[%s2 + $0xc0] sm:$0xf] %vm4166, %v3702
  %4216 = vst.msk [vmem:[%s2 + $0xc4] sm:$0xf] %vm4166, %v3703
  %4217 = vst.msk [vmem:[%s2 + $0xc8] sm:$0xf] %vm4166, %v3704
  %4218 = vst.msk [vmem:[%s2 + $0xcc] sm:$0xf] %vm4166, %v3705
  %4219 = vst.msk [vmem:[%s2 + $0xd0] sm:$0xf] %vm4166, %v3706
  %4220 = vst.msk [vmem:[%s2 + $0xd4] sm:$0xf] %vm4166, %v3707
  %4221 = vst.msk [vmem:[%s2 + $0xd8] sm:$0xf] %vm4166, %v3708
  %4222 = vst.msk [vmem:[%s2 + $0xdc] sm:$0xf] %vm4166, %v3709
  %4223 = vst.msk [vmem:[%s2 + $0xe0] sm:$0xf] %vm4166, %v3710
  %4224 = vst.msk [vmem:[%s2 + $0xe4] sm:$0xf] %vm4166, %v3711
  %4225 = vst.msk [vmem:[%s2 + $0xe8] sm:$0xf] %vm4166, %v3712
  %4226 = vst.msk [vmem:[%s2 + $0xec] sm:$0xf] %vm4166, %v3713
  %4227 = vst.msk [vmem:[%s2 + $0xf0] sm:$0xf] %vm4166, %v3714
  %4228 = vst.msk [vmem:[%s2 + $0xf4] sm:$0xf] %vm4166, %v3715
  %4229 = vst.msk [vmem:[%s2 + $0xf8] sm:$0xf] %vm4166, %v3716
  %4230 = vst.msk [vmem:[%s2 + $0xfc] sm:$0xf] %vm4166, %v3717
  %4231 = vst.msk [vmem:[%s2 + $0x100] sm:$0xf] %vm4166, %v3718
  %4232 = vst.msk [vmem:[%s2 + $0x104] sm:$0xf] %vm4166, %v3719
  %4233 = vst.msk [vmem:[%s2 + $0x108] sm:$0xf] %vm4166, %v3720
  %4234 = vst.msk [vmem:[%s2 + $0x10c] sm:$0xf] %vm4166, %v3721
  %4235 = vst.msk [vmem:[%s2 + $0x110] sm:$0xf] %vm4166, %v3722
  %4236 = vst.msk [vmem:[%s2 + $0x114] sm:$0xf] %vm4166, %v3723
  %4237 = vst.msk [vmem:[%s2 + $0x118] sm:$0xf] %vm4166, %v3724
  %4238 = vst.msk [vmem:[%s2 + $0x11c] sm:$0xf] %vm4166, %v3725
  %4239 = vst.msk [vmem:[%s2 + $0x120] sm:$0xf] %vm4166, %v3726
  %4240 = vst.msk [vmem:[%s2 + $0x124] sm:$0xf] %vm4166, %v3727
  %4241 = vst.msk [vmem:[%s2 + $0x128] sm:$0xf] %vm4166, %v3728
  %4242 = vst.msk [vmem:[%s2 + $0x12c] sm:$0xf] %vm4166, %v3729
  %4243 = vst.msk [vmem:[%s2 + $0x130] sm:$0xf] %vm4166, %v3730
  %4244 = vst.msk [vmem:[%s2 + $0x134] sm:$0xf] %vm4166, %v3731
  %4245 = vst.msk [vmem:[%s2 + $0x138] sm:$0xf] %vm4166, %v3732
  %4246 = vst.msk [vmem:[%s2 + $0x13c] sm:$0xf] %vm4166, %v3733
  %4247 = vst.msk [vmem:[%s2 + $0x140] sm:$0xf] %vm4166, %v3734
  %4248 = vst.msk [vmem:[%s2 + $0x144] sm:$0xf] %vm4166, %v3735
  %4249 = vst.msk [vmem:[%s2 + $0x148] sm:$0xf] %vm4166, %v3736
  %4250 = vst.msk [vmem:[%s2 + $0x14c] sm:$0xf] %vm4166, %v3737
  %4251 = vst.msk [vmem:[%s2 + $0x150] sm:$0xf] %vm4166, %v3738
  %4252 = vst.msk [vmem:[%s2 + $0x154] sm:$0xf] %vm4166, %v3739
  %4253 = vst.msk [vmem:[%s2 + $0x158] sm:$0xf] %vm4166, %v3740
  %4254 = vst.msk [vmem:[%s2 + $0x15c] sm:$0xf] %vm4166, %v3741
  %4255 = vst.msk [vmem:[%s2 + $0x160] sm:$0xf] %vm4166, %v3742
  %4256 = vst.msk [vmem:[%s2 + $0x164] sm:$0xf] %vm4166, %v3743
  %4257 = vst.msk [vmem:[%s2 + $0x168] sm:$0xf] %vm4166, %v3744
  %4258 = vst.msk [vmem:[%s2 + $0x16c] sm:$0xf] %vm4166, %v3745
  %4259 = vst.msk [vmem:[%s2 + $0x170] sm:$0xf] %vm4166, %v3746
  %4260 = vst.msk [vmem:[%s2 + $0x174] sm:$0xf] %vm4166, %v3747
  %4261 = vst.msk [vmem:[%s2 + $0x178] sm:$0xf] %vm4166, %v3748
  %4262 = vst.msk [vmem:[%s2 + $0x17c] sm:$0xf] %vm4166, %v3749
  %4263 = vst.msk [vmem:[%s2 + $0x180] sm:$0xf] %vm4166, %v3750
  %4264 = vst.msk [vmem:[%s2 + $0x184] sm:$0xf] %vm4166, %v3751
  %4265 = vst.msk [vmem:[%s2 + $0x188] sm:$0xf] %vm4166, %v3752
  %4266 = vst.msk [vmem:[%s2 + $0x18c] sm:$0xf] %vm4166, %v3753
  %4267 = vst.msk [vmem:[%s2 + $0x190] sm:$0xf] %vm4166, %v3754
  %4268 = vst.msk [vmem:[%s2 + $0x194] sm:$0xf] %vm4166, %v3755
  %4269 = vst.msk [vmem:[%s2 + $0x198] sm:$0xf] %vm4166, %v3756
  %4270 = vst.msk [vmem:[%s2 + $0x19c] sm:$0xf] %vm4166, %v3757
  %4271 = vst.msk [vmem:[%s2 + $0x1a0] sm:$0xf] %vm4166, %v3758
  %4272 = vst.msk [vmem:[%s2 + $0x1a4] sm:$0xf] %vm4166, %v3759
  %4273 = vst.msk [vmem:[%s2 + $0x1a8] sm:$0xf] %vm4166, %v3760
  %4274 = vst.msk [vmem:[%s2 + $0x1ac] sm:$0xf] %vm4166, %v3761
  %4275 = vst.msk [vmem:[%s2 + $0x1b0] sm:$0xf] %vm4166, %v3762
  %4276 = vst.msk [vmem:[%s2 + $0x1b4] sm:$0xf] %vm4166, %v3763
  %4277 = vst.msk [vmem:[%s2 + $0x1b8] sm:$0xf] %vm4166, %v3764
  %4278 = vst.msk [vmem:[%s2 + $0x1bc] sm:$0xf] %vm4166, %v3765
  %4279 = vst.msk [vmem:[%s2 + $0x1c0] sm:$0xf] %vm4166, %v3766
  %4280 = vst.msk [vmem:[%s2 + $0x1c4] sm:$0xf] %vm4166, %v3767
  %4281 = vst.msk [vmem:[%s2 + $0x1c8] sm:$0xf] %vm4166, %v3768
  %4282 = vst.msk [vmem:[%s2 + $0x1cc] sm:$0xf] %vm4166, %v3769
  %4283 = vst.msk [vmem:[%s2 + $0x1d0] sm:$0xf] %vm4166, %v3770
  %4284 = vst.msk [vmem:[%s2 + $0x1d4] sm:$0xf] %vm4166, %v3771
  %4285 = vst.msk [vmem:[%s2 + $0x1d8] sm:$0xf] %vm4166, %v3772
  %4286 = vst.msk [vmem:[%s2 + $0x1dc] sm:$0xf] %vm4166, %v3773
  %4287 = vst.msk [vmem:[%s2 + $0x1e0] sm:$0xf] %vm4166, %v3774
  %4288 = vst.msk [vmem:[%s2 + $0x1e4] sm:$0xf] %vm4166, %v3775
  %4289 = vst.msk [vmem:[%s2 + $0x1e8] sm:$0xf] %vm4166, %v3776
  %4290 = vst.msk [vmem:[%s2 + $0x1ec] sm:$0xf] %vm4166, %v3777
  %4291 = vst.msk [vmem:[%s2 + $0x1f0] sm:$0xf] %vm4166, %v3778
  %4292 = vst.msk [vmem:[%s2 + $0x1f4] sm:$0xf] %vm4166, %v3779
  %4293 = vst.msk [vmem:[%s2 + $0x1f8] sm:$0xf] %vm4166, %v3780
  %4294 = vst.msk [vmem:[%s2 + $0x1fc] sm:$0xf] %vm4166, %v3781
  %4295 = vst.msk [vmem:[%s2 + $0x200] sm:$0xf] %vm4166, %v3782
  %4296 = vst.msk [vmem:[%s2 + $0x204] sm:$0xf] %vm4166, %v3783
  %4297 = vst.msk [vmem:[%s2 + $0x208] sm:$0xf] %vm4166, %v3784
  %4298 = vst.msk [vmem:[%s2 + $0x20c] sm:$0xf] %vm4166, %v3785
  %4299 = vst.msk [vmem:[%s2 + $0x210] sm:$0xf] %vm4166, %v3786
  %4300 = vst.msk [vmem:[%s2 + $0x214] sm:$0xf] %vm4166, %v3787
  %4301 = vst.msk [vmem:[%s2 + $0x218] sm:$0xf] %vm4166, %v3788
  %4302 = vst.msk [vmem:[%s2 + $0x21c] sm:$0xf] %vm4166, %v3789
  %4303 = vst.msk [vmem:[%s2 + $0x220] sm:$0xf] %vm4166, %v3790
  %4304 = vst.msk [vmem:[%s2 + $0x224] sm:$0xf] %vm4166, %v3791
  %4305 = vst.msk [vmem:[%s2 + $0x228] sm:$0xf] %vm4166, %v3792
  %4306 = vst.msk [vmem:[%s2 + $0x22c] sm:$0xf] %vm4166, %v3793
  %4307 = vst.msk [vmem:[%s2 + $0x230] sm:$0xf] %vm4166, %v3794
  %4308 = vst.msk [vmem:[%s2 + $0x234] sm:$0xf] %vm4166, %v3795
  %4309 = vst.msk [vmem:[%s2 + $0x238] sm:$0xf] %vm4166, %v3796
  %4310 = vst.msk [vmem:[%s2 + $0x23c] sm:$0xf] %vm4166, %v3797
  %4311 = vst.msk [vmem:[%s2 + $0x240] sm:$0xf] %vm4166, %v3798
  %4312 = vst.msk [vmem:[%s2 + $0x244] sm:$0xf] %vm4166, %v3799
  %4313 = vst.msk [vmem:[%s2 + $0x248] sm:$0xf] %vm4166, %v3800
  %4314 = vst.msk [vmem:[%s2 + $0x24c] sm:$0xf] %vm4166, %v3801
  %4315 = vst.msk [vmem:[%s2 + $0x250] sm:$0xf] %vm4166, %v3802
  %4316 = vst.msk [vmem:[%s2 + $0x254] sm:$0xf] %vm4166, %v3803
  %4317 = vst.msk [vmem:[%s2 + $0x258] sm:$0xf] %vm4166, %v3804
  %4318 = vst.msk [vmem:[%s2 + $0x25c] sm:$0xf] %vm4166, %v3805
  %4319 = vst.msk [vmem:[%s2 + $0x260] sm:$0xf] %vm4166, %v3806
  %4320 = vst.msk [vmem:[%s2 + $0x264] sm:$0xf] %vm4166, %v3807
  %4321 = vst.msk [vmem:[%s2 + $0x268] sm:$0xf] %vm4166, %v3808
  %4322 = vst.msk [vmem:[%s2 + $0x26c] sm:$0xf] %vm4166, %v3809
  %4323 = vst.msk [vmem:[%s2 + $0x270] sm:$0xf] %vm4166, %v3810
  %4324 = vst.msk [vmem:[%s2 + $0x274] sm:$0xf] %vm4166, %v3811
  %4325 = vst.msk [vmem:[%s2 + $0x278] sm:$0xf] %vm4166, %v3812
  %4326 = vst.msk [vmem:[%s2 + $0x27c] sm:$0xf] %vm4166, %v3813
  %4327 = vst.msk [vmem:[%s2 + $0x280] sm:$0xf] %vm4166, %v3814
  %4328 = vst.msk [vmem:[%s2 + $0x284] sm:$0xf] %vm4166, %v3815
  %4329 = vst.msk [vmem:[%s2 + $0x288] sm:$0xf] %vm4166, %v3816
  %4330 = vst.msk [vmem:[%s2 + $0x28c] sm:$0xf] %vm4166, %v3817
  %4331 = vst.msk [vmem:[%s2 + $0x290] sm:$0xf] %vm4166, %v3818
  %4332 = vst.msk [vmem:[%s2 + $0x294] sm:$0xf] %vm4166, %v3819
  %4333 = vst.msk [vmem:[%s2 + $0x298] sm:$0xf] %vm4166, %v3820
  %4334 = vst.msk [vmem:[%s2 + $0x29c] sm:$0xf] %vm4166, %v3821
  %4335 = vst.msk [vmem:[%s2 + $0x2a0] sm:$0xf] %vm4166, %v3822
  %4336 = vst.msk [vmem:[%s2 + $0x2a4] sm:$0xf] %vm4166, %v3823
  %4337 = vst.msk [vmem:[%s2 + $0x2a8] sm:$0xf] %vm4166, %v3824
  %4338 = vst.msk [vmem:[%s2 + $0x2ac] sm:$0xf] %vm4166, %v3825
  %4339 = vst.msk [vmem:[%s2 + $0x2b0] sm:$0xf] %vm4166, %v3826
  %4340 = vst.msk [vmem:[%s2 + $0x2b4] sm:$0xf] %vm4166, %v3827
  %4341 = vst.msk [vmem:[%s2 + $0x2b8] sm:$0xf] %vm4166, %v3828
  %4342 = vst.msk [vmem:[%s2 + $0x2bc] sm:$0xf] %vm4166, %v3829
  %4343 = vst.msk [vmem:[%s2 + $0x2c0] sm:$0xf] %vm4166, %v3830
  %4344 = vst.msk [vmem:[%s2 + $0x2c4] sm:$0xf] %vm4166, %v3831
  %4345 = vst.msk [vmem:[%s2 + $0x2c8] sm:$0xf] %vm4166, %v3832
  %4346 = vst.msk [vmem:[%s2 + $0x2cc] sm:$0xf] %vm4166, %v3833
  %4347 = vst.msk [vmem:[%s2 + $0x2d0] sm:$0xf] %vm4166, %v3834
  %4348 = vst.msk [vmem:[%s2 + $0x2d4] sm:$0xf] %vm4166, %v3835
  %4349 = vst.msk [vmem:[%s2 + $0x2d8] sm:$0xf] %vm4166, %v3836
  %4350 = vst.msk [vmem:[%s2 + $0x2dc] sm:$0xf] %vm4166, %v3837
  %4351 = vst.msk [vmem:[%s2 + $0x2e0] sm:$0xf] %vm4166, %v3838
  %4352 = vst.msk [vmem:[%s2 + $0x2e4] sm:$0xf] %vm4166, %v3839
  %4353 = vst.msk [vmem:[%s2 + $0x2e8] sm:$0xf] %vm4166, %v3840
  %4354 = vst.msk [vmem:[%s2 + $0x2ec] sm:$0xf] %vm4166, %v3841
  %4355 = vst.msk [vmem:[%s2 + $0x2f0] sm:$0xf] %vm4166, %v3842
  %4356 = vst.msk [vmem:[%s2 + $0x2f4] sm:$0xf] %vm4166, %v3843
  %4357 = vst.msk [vmem:[%s2 + $0x2f8] sm:$0xf] %vm4166, %v3844
  %4358 = vst.msk [vmem:[%s2 + $0x2fc] sm:$0xf] %vm4166, %v3845
  %4359 = vst.msk [vmem:[%s2 + $0x300] sm:$0xf] %vm4166, %v3846
  %4360 = vst.msk [vmem:[%s2 + $0x304] sm:$0xf] %vm4166, %v3847
  %4361 = vst.msk [vmem:[%s2 + $0x308] sm:$0xf] %vm4166, %v3848
  %4362 = vst.msk [vmem:[%s2 + $0x30c] sm:$0xf] %vm4166, %v3849
  %4363 = vst.msk [vmem:[%s2 + $0x310] sm:$0xf] %vm4166, %v3850
  %4364 = vst.msk [vmem:[%s2 + $0x314] sm:$0xf] %vm4166, %v3851
  %4365 = vst.msk [vmem:[%s2 + $0x318] sm:$0xf] %vm4166, %v3852
  %4366 = vst.msk [vmem:[%s2 + $0x31c] sm:$0xf] %vm4166, %v3853
  %4367 = vst.msk [vmem:[%s2 + $0x320] sm:$0xf] %vm4166, %v3854
  %4368 = vst.msk [vmem:[%s2 + $0x324] sm:$0xf] %vm4166, %v3855
  %4369 = vst.msk [vmem:[%s2 + $0x328] sm:$0xf] %vm4166, %v3856
  %4370 = vst.msk [vmem:[%s2 + $0x32c] sm:$0xf] %vm4166, %v3857
  %4371 = vst.msk [vmem:[%s2 + $0x330] sm:$0xf] %vm4166, %v3858
  %4372 = vst.msk [vmem:[%s2 + $0x334] sm:$0xf] %vm4166, %v3859
  %4373 = vst.msk [vmem:[%s2 + $0x338] sm:$0xf] %vm4166, %v3860
  %4374 = vst.msk [vmem:[%s2 + $0x33c] sm:$0xf] %vm4166, %v3861
  %4375 = vst.msk [vmem:[%s2 + $0x340] sm:$0xf] %vm4166, %v3862
  %4376 = vst.msk [vmem:[%s2 + $0x344] sm:$0xf] %vm4166, %v3863
  %4377 = vst.msk [vmem:[%s2 + $0x348] sm:$0xf] %vm4166, %v3864
  %4378 = vst.msk [vmem:[%s2 + $0x34c] sm:$0xf] %vm4166, %v3865
  %4379 = vst.msk [vmem:[%s2 + $0x350] sm:$0xf] %vm4166, %v3866
  %4380 = vst.msk [vmem:[%s2 + $0x354] sm:$0xf] %vm4166, %v3867
  %4381 = vst.msk [vmem:[%s2 + $0x358] sm:$0xf] %vm4166, %v3868
  %4382 = vst.msk [vmem:[%s2 + $0x35c] sm:$0xf] %vm4166, %v3869
  %4383 = vst.msk [vmem:[%s2 + $0x360] sm:$0xf] %vm4166, %v3870
  %4384 = vst.msk [vmem:[%s2 + $0x364] sm:$0xf] %vm4166, %v3871
  %4385 = vst.msk [vmem:[%s2 + $0x368] sm:$0xf] %vm4166, %v3872
  %4386 = vst.msk [vmem:[%s2 + $0x36c] sm:$0xf] %vm4166, %v3873
  %4387 = vst.msk [vmem:[%s2 + $0x370] sm:$0xf] %vm4166, %v3874
  %4388 = vst.msk [vmem:[%s2 + $0x374] sm:$0xf] %vm4166, %v3875
  %4389 = vst.msk [vmem:[%s2 + $0x378] sm:$0xf] %vm4166, %v3876
  %4390 = vst.msk [vmem:[%s2 + $0x37c] sm:$0xf] %vm4166, %v3877
  %4391 = vst.msk [vmem:[%s2 + $0x380] sm:$0xf] %vm4166, %v3878
  %4392 = vst.msk [vmem:[%s2 + $0x384] sm:$0xf] %vm4166, %v3879
  %4393 = vst.msk [vmem:[%s2 + $0x388] sm:$0xf] %vm4166, %v3880
  %4394 = vst.msk [vmem:[%s2 + $0x38c] sm:$0xf] %vm4166, %v3881
  %4395 = vst.msk [vmem:[%s2 + $0x390] sm:$0xf] %vm4166, %v3882
  %4396 = vst.msk [vmem:[%s2 + $0x394] sm:$0xf] %vm4166, %v3883
  %4397 = vst.msk [vmem:[%s2 + $0x398] sm:$0xf] %vm4166, %v3884
  %4398 = vst.msk [vmem:[%s2 + $0x39c] sm:$0xf] %vm4166, %v3885
  %4399 = vst.msk [vmem:[%s2 + $0x3a0] sm:$0xf] %vm4166, %v3886
  %4400 = vst.msk [vmem:[%s2 + $0x3a4] sm:$0xf] %vm4166, %v3887
  %4401 = vst.msk [vmem:[%s2 + $0x3a8] sm:$0xf] %vm4166, %v3888
  %4402 = vst.msk [vmem:[%s2 + $0x3ac] sm:$0xf] %vm4166, %v3889
  %4403 = vst.msk [vmem:[%s2 + $0x3b0] sm:$0xf] %vm4166, %v3890
  %4404 = vst.msk [vmem:[%s2 + $0x3b4] sm:$0xf] %vm4166, %v3891
  %4405 = vst.msk [vmem:[%s2 + $0x3b8] sm:$0xf] %vm4166, %v3892
  %4406 = vst.msk [vmem:[%s2 + $0x3bc] sm:$0xf] %vm4166, %v3893
  %4407 = vst.msk [vmem:[%s2 + $0x3c0] sm:$0xf] %vm4166, %v3894
  %4408 = vst.msk [vmem:[%s2 + $0x3c4] sm:$0xf] %vm4166, %v3895
  %4409 = vst.msk [vmem:[%s2 + $0x3c8] sm:$0xf] %vm4166, %v3896
  %4410 = vst.msk [vmem:[%s2 + $0x3cc] sm:$0xf] %vm4166, %v3897
  %4411 = vst.msk [vmem:[%s2 + $0x3d0] sm:$0xf] %vm4166, %v3898
  %4412 = vst.msk [vmem:[%s2 + $0x3d4] sm:$0xf] %vm4166, %v3899
  %4413 = vst.msk [vmem:[%s2 + $0x3d8] sm:$0xf] %vm4166, %v3900
  %4414 = vst.msk [vmem:[%s2 + $0x3dc] sm:$0xf] %vm4166, %v3901
  %4415 = vst.msk [vmem:[%s2 + $0x3e0] sm:$0xf] %vm4166, %v3902
  %4416 = vst.msk [vmem:[%s2 + $0x3e4] sm:$0xf] %vm4166, %v3903
  %4417 = vst.msk [vmem:[%s2 + $0x3e8] sm:$0xf] %vm4166, %v3904
  %4418 = vst.msk [vmem:[%s2 + $0x3ec] sm:$0xf] %vm4166, %v3905
  %4419 = vst.msk [vmem:[%s2 + $0x3f0] sm:$0xf] %vm4166, %v3906
  %4420 = vst.msk [vmem:[%s2 + $0x3f4] sm:$0xf] %vm4166, %v3907
  %4421 = vst.msk [vmem:[%s2 + $0x3f8] sm:$0xf] %vm4166, %v3908
  %4422 = vst.msk [vmem:[%s2 + $0x3fc] sm:$0xf] %vm4166, %v3909
  // Predicated region
  $region10: #{discriminator_forward.8} parent=0 // pred_check
    _
  $region11: #{discriminator_forward.8} parent=0 // pred_check_branch
    %4424 = sbr.rel (0) target = $region13
  $region12: #{discriminator_forward.8} parent=0 // pred_region
    _
  $region13: #{discriminator_forward.8} parent=0 // pred_fallthru
    _
  // Predicated region
  $region14: #{discriminator_forward.8} parent=0 // pred_check
    _
  $region15: #{discriminator_forward.8} parent=0 // pred_check_branch
    %4426 = sbr.rel (0) target = $region17
  $region16: #{discriminator_forward.8} parent=0 // pred_region
    _
  $region17: #{discriminator_forward.8} parent=0 // pred_fallthru
    _

// kernel: discriminator_forward.10
$region0: #{discriminator_forward.10}
  #allocation0 [shape = 'u32[]', space=smem, size = 0x4, offset = 0x4, fixed_abs, tag = 'smem constant byte address 0x4 - core index']
  #allocation1 [shape = 'u32[144,128]{1,0:T(1,128)}', space=vmem, size = 0x12000, scoped, tag = 'internal scratch']
  %s0 = inlined_call_operand.vmem [shape: bf16[512,16], index: 0, kind: input, shape index: {}]
  %s1 = inlined_call_operand.vmem [shape: f32[1,16], index: 1, kind: input, shape index: {}]
  %s2 = inlined_call_operand.vmem [shape: f32[1,16], index: 2, kind: input, shape index: {}]
  %s3 = inlined_call_operand.vmem [shape: bf16[512,16], index: 3, kind: output, shape index: {}]
  %s4 = sld [smem:[#allocation0]]
  $region22: #{discriminator_forward.10} parent=0
    _
  %s6 = ssub.s32 1, %s4
  %s7 = scalar_select 0, %s6, %s4
  // Predicated region
  $region2: #{discriminator_forward.10} parent=0 // pred_check
    _
  $region3: #{discriminator_forward.10} parent=0 // pred_check_branch
    %9 = sbr.rel (0) target = $region5
  $region4: #{discriminator_forward.10} parent=0 // pred_region
    _
  $region5: #{discriminator_forward.10} parent=0 // pred_fallthru
    _
  // Predicated region
  $region6: #{discriminator_forward.10} parent=0 // pred_check
    _
  $region7: #{discriminator_forward.10} parent=0 // pred_check_branch
    %11 = sbr.rel (0) target = $region9
  $region8: #{discriminator_forward.10} parent=0 // pred_region
    _
  $region9: #{discriminator_forward.10} parent=0 // pred_fallthru
    _
  // Predicated region
  $region10: #{discriminator_forward.10} parent=0 // pred_check
    _
  $region11: #{discriminator_forward.10} parent=0 // pred_check_branch
    %13 = sbr.rel (0) target = $region13
  $region12: #{discriminator_forward.10} parent=0 // pred_region
    _
  $region13: #{discriminator_forward.10} parent=0 // pred_fallthru
    _
  %v14 = vld [vmem:[%s0] sm:$0xf]
  %v15 = vld [vmem:[%s0 + $0x4] sm:$0xf]
  %v16 = vld [vmem:[%s0 + $0x8] sm:$0xf]
  %v17 = vld [vmem:[%s0 + $0xc] sm:$0xf]
  %v18 = vld [vmem:[%s0 + $0x10] sm:$0xf]
  %v19 = vld [vmem:[%s0 + $0x14] sm:$0xf]
  %v20 = vld [vmem:[%s0 + $0x18] sm:$0xf]
  %v21 = vld [vmem:[%s0 + $0x1c] sm:$0xf]
  %v22 = vld [vmem:[%s0 + $0x20] sm:$0xf]
  %v23 = vld [vmem:[%s0 + $0x24] sm:$0xf]
  %v24 = vld [vmem:[%s0 + $0x28] sm:$0xf]
  %v25 = vld [vmem:[%s0 + $0x2c] sm:$0xf]
  %v26 = vld [vmem:[%s0 + $0x30] sm:$0xf]
  %v27 = vld [vmem:[%s0 + $0x34] sm:$0xf]
  %v28 = vld [vmem:[%s0 + $0x38] sm:$0xf]
  %v29 = vld [vmem:[%s0 + $0x3c] sm:$0xf]
  %v30 = vld [vmem:[%s0 + $0x40] sm:$0xf]
  %v31 = vld [vmem:[%s0 + $0x44] sm:$0xf]
  %v32 = vld [vmem:[%s0 + $0x48] sm:$0xf]
  %v33 = vld [vmem:[%s0 + $0x4c] sm:$0xf]
  %v34 = vld [vmem:[%s0 + $0x50] sm:$0xf]
  %v35 = vld [vmem:[%s0 + $0x54] sm:$0xf]
  %v36 = vld [vmem:[%s0 + $0x58] sm:$0xf]
  %v37 = vld [vmem:[%s0 + $0x5c] sm:$0xf]
  %v38 = vld [vmem:[%s0 + $0x60] sm:$0xf]
  %v39 = vld [vmem:[%s0 + $0x64] sm:$0xf]
  %v40 = vld [vmem:[%s0 + $0x68] sm:$0xf]
  %v41 = vld [vmem:[%s0 + $0x6c] sm:$0xf]
  %v42 = vld [vmem:[%s0 + $0x70] sm:$0xf]
  %v43 = vld [vmem:[%s0 + $0x74] sm:$0xf]
  %v44 = vld [vmem:[%s0 + $0x78] sm:$0xf]
  %v45 = vld [vmem:[%s0 + $0x7c] sm:$0xf]
  %v46 = vld [vmem:[%s0 + $0x80] sm:$0xf]
  %v47 = vld [vmem:[%s0 + $0x84] sm:$0xf]
  %v48 = vld [vmem:[%s0 + $0x88] sm:$0xf]
  %v49 = vld [vmem:[%s0 + $0x8c] sm:$0xf]
  %v50 = vld [vmem:[%s0 + $0x90] sm:$0xf]
  %v51 = vld [vmem:[%s0 + $0x94] sm:$0xf]
  %v52 = vld [vmem:[%s0 + $0x98] sm:$0xf]
  %v53 = vld [vmem:[%s0 + $0x9c] sm:$0xf]
  %v54 = vld [vmem:[%s0 + $0xa0] sm:$0xf]
  %v55 = vld [vmem:[%s0 + $0xa4] sm:$0xf]
  %v56 = vld [vmem:[%s0 + $0xa8] sm:$0xf]
  %v57 = vld [vmem:[%s0 + $0xac] sm:$0xf]
  %v58 = vld [vmem:[%s0 + $0xb0] sm:$0xf]
  %v59 = vld [vmem:[%s0 + $0xb4] sm:$0xf]
  %v60 = vld [vmem:[%s0 + $0xb8] sm:$0xf]
  %v61 = vld [vmem:[%s0 + $0xbc] sm:$0xf]
  %v62 = vld [vmem:[%s0 + $0xc0] sm:$0xf]
  %v63 = vld [vmem:[%s0 + $0xc4] sm:$0xf]
  %v64 = vld [vmem:[%s0 + $0xc8] sm:$0xf]
  %v65 = vld [vmem:[%s0 + $0xcc] sm:$0xf]
  %v66 = vld [vmem:[%s0 + $0xd0] sm:$0xf]
  %v67 = vld [vmem:[%s0 + $0xd4] sm:$0xf]
  %v68 = vld [vmem:[%s0 + $0xd8] sm:$0xf]
  %v69 = vld [vmem:[%s0 + $0xdc] sm:$0xf]
  %v70 = vld [vmem:[%s0 + $0xe0] sm:$0xf]
  %v71 = vld [vmem:[%s0 + $0xe4] sm:$0xf]
  %v72 = vld [vmem:[%s0 + $0xe8] sm:$0xf]
  %v73 = vld [vmem:[%s0 + $0xec] sm:$0xf]
  %v74 = vld [vmem:[%s0 + $0xf0] sm:$0xf]
  %v75 = vld [vmem:[%s0 + $0xf4] sm:$0xf]
  %v76 = vld [vmem:[%s0 + $0xf8] sm:$0xf]
  %v77 = vld [vmem:[%s0 + $0xfc] sm:$0xf]
  %v78 = vunpack.c.l.bf16 %v14
  %v79 = vunpack.c.l.bf16 %v15
  %v80 = vunpack.c.l.bf16 %v16
  %v81 = vunpack.c.l.bf16 %v17
  %v82 = vunpack.c.l.bf16 %v18
  %v83 = vunpack.c.l.bf16 %v19
  %v84 = vunpack.c.l.bf16 %v20
  %v85 = vunpack.c.l.bf16 %v21
  %v86 = vunpack.c.l.bf16 %v22
  %v87 = vunpack.c.l.bf16 %v23
  %v88 = vunpack.c.l.bf16 %v24
  %v89 = vunpack.c.l.bf16 %v25
  %v90 = vunpack.c.l.bf16 %v26
  %v91 = vunpack.c.l.bf16 %v27
  %v92 = vunpack.c.l.bf16 %v28
  %v93 = vunpack.c.l.bf16 %v29
  %v94 = vunpack.c.l.bf16 %v30
  %v95 = vunpack.c.l.bf16 %v31
  %v96 = vunpack.c.l.bf16 %v32
  %v97 = vunpack.c.l.bf16 %v33
  %v98 = vunpack.c.l.bf16 %v34
  %v99 = vunpack.c.l.bf16 %v35
  %v100 = vunpack.c.l.bf16 %v36
  %v101 = vunpack.c.l.bf16 %v37
  %v102 = vunpack.c.l.bf16 %v38
  %v103 = vunpack.c.l.bf16 %v39
  %v104 = vunpack.c.l.bf16 %v40
  %v105 = vunpack.c.l.bf16 %v41
  %v106 = vunpack.c.l.bf16 %v42
  %v107 = vunpack.c.l.bf16 %v43
  %v108 = vunpack.c.l.bf16 %v44
  %v109 = vunpack.c.l.bf16 %v45
  %v110 = vunpack.c.l.bf16 %v46
  %v111 = vunpack.c.l.bf16 %v47
  %v112 = vunpack.c.l.bf16 %v48
  %v113 = vunpack.c.l.bf16 %v49
  %v114 = vunpack.c.l.bf16 %v50
  %v115 = vunpack.c.l.bf16 %v51
  %v116 = vunpack.c.l.bf16 %v52
  %v117 = vunpack.c.l.bf16 %v53
  %v118 = vunpack.c.l.bf16 %v54
  %v119 = vunpack.c.l.bf16 %v55
  %v120 = vunpack.c.l.bf16 %v56
  %v121 = vunpack.c.l.bf16 %v57
  %v122 = vunpack.c.l.bf16 %v58
  %v123 = vunpack.c.l.bf16 %v59
  %v124 = vunpack.c.l.bf16 %v60
  %v125 = vunpack.c.l.bf16 %v61
  %v126 = vunpack.c.l.bf16 %v62
  %v127 = vunpack.c.l.bf16 %v63
  %v128 = vunpack.c.l.bf16 %v64
  %v129 = vunpack.c.l.bf16 %v65
  %v130 = vunpack.c.l.bf16 %v66
  %v131 = vunpack.c.l.bf16 %v67
  %v132 = vunpack.c.l.bf16 %v68
  %v133 = vunpack.c.l.bf16 %v69
  %v134 = vunpack.c.l.bf16 %v70
  %v135 = vunpack.c.l.bf16 %v71
  %v136 = vunpack.c.l.bf16 %v72
  %v137 = vunpack.c.l.bf16 %v73
  %v138 = vunpack.c.l.bf16 %v74
  %v139 = vunpack.c.l.bf16 %v75
  %v140 = vunpack.c.l.bf16 %v76
  %v141 = vunpack.c.l.bf16 %v77
  %v142 = vld [vmem:[%s1] sm:$0x1]
  %v144 = vlaneseq
  %v145 = vshrl.u32 %v144, 7
  %v146 = vsub.s32 0, %v145
  %v147 = vrot.slane %v142, %v146
  %v149 = vmul.f32 %v78, %v147
  %v150 = vmul.f32 %v79, %v147
  %v151 = vmul.f32 %v80, %v147
  %v152 = vmul.f32 %v81, %v147
  %v153 = vmul.f32 %v82, %v147
  %v154 = vmul.f32 %v83, %v147
  %v155 = vmul.f32 %v84, %v147
  %v156 = vmul.f32 %v85, %v147
  %v157 = vmul.f32 %v86, %v147
  %v158 = vmul.f32 %v87, %v147
  %v159 = vmul.f32 %v88, %v147
  %v160 = vmul.f32 %v89, %v147
  %v161 = vmul.f32 %v90, %v147
  %v162 = vmul.f32 %v91, %v147
  %v163 = vmul.f32 %v92, %v147
  %v164 = vmul.f32 %v93, %v147
  %v165 = vmul.f32 %v94, %v147
  %v166 = vmul.f32 %v95, %v147
  %v167 = vmul.f32 %v96, %v147
  %v168 = vmul.f32 %v97, %v147
  %v169 = vmul.f32 %v98, %v147
  %v170 = vmul.f32 %v99, %v147
  %v171 = vmul.f32 %v100, %v147
  %v172 = vmul.f32 %v101, %v147
  %v173 = vmul.f32 %v102, %v147
  %v174 = vmul.f32 %v103, %v147
  %v175 = vmul.f32 %v104, %v147
  %v176 = vmul.f32 %v105, %v147
  %v177 = vmul.f32 %v106, %v147
  %v178 = vmul.f32 %v107, %v147
  %v179 = vmul.f32 %v108, %v147
  %v180 = vmul.f32 %v109, %v147
  %v181 = vmul.f32 %v110, %v147
  %v182 = vmul.f32 %v111, %v147
  %v183 = vmul.f32 %v112, %v147
  %v184 = vmul.f32 %v113, %v147
  %v185 = vmul.f32 %v114, %v147
  %v186 = vmul.f32 %v115, %v147
  %v187 = vmul.f32 %v116, %v147
  %v188 = vmul.f32 %v117, %v147
  %v189 = vmul.f32 %v118, %v147
  %v190 = vmul.f32 %v119, %v147
  %v191 = vmul.f32 %v120, %v147
  %v192 = vmul.f32 %v121, %v147
  %v193 = vmul.f32 %v122, %v147
  %v194 = vmul.f32 %v123, %v147
  %v195 = vmul.f32 %v124, %v147
  %v196 = vmul.f32 %v125, %v147
  %v197 = vmul.f32 %v126, %v147
  %v198 = vmul.f32 %v127, %v147
  %v199 = vmul.f32 %v128, %v147
  %v200 = vmul.f32 %v129, %v147
  %v201 = vmul.f32 %v130, %v147
  %v202 = vmul.f32 %v131, %v147
  %v203 = vmul.f32 %v132, %v147
  %v204 = vmul.f32 %v133, %v147
  %v205 = vmul.f32 %v134, %v147
  %v206 = vmul.f32 %v135, %v147
  %v207 = vmul.f32 %v136, %v147
  %v208 = vmul.f32 %v137, %v147
  %v209 = vmul.f32 %v138, %v147
  %v210 = vmul.f32 %v139, %v147
  %v211 = vmul.f32 %v140, %v147
  %v212 = vmul.f32 %v141, %v147
  %v213 = vld [vmem:[%s2] sm:$0x1]
  %v215 = vlaneseq
  %v216 = vshrl.u32 %v215, 7
  %v217 = vsub.s32 0, %v216
  %v218 = vrot.slane %v213, %v217
  %v220 = vadd.f32 %v149, %v218
  %v221 = vadd.f32 %v150, %v218
  %v222 = vadd.f32 %v151, %v218
  %v223 = vadd.f32 %v152, %v218
  %v224 = vadd.f32 %v153, %v218
  %v225 = vadd.f32 %v154, %v218
  %v226 = vadd.f32 %v155, %v218
  %v227 = vadd.f32 %v156, %v218
  %v228 = vadd.f32 %v157, %v218
  %v229 = vadd.f32 %v158, %v218
  %v230 = vadd.f32 %v159, %v218
  %v231 = vadd.f32 %v160, %v218
  %v232 = vadd.f32 %v161, %v218
  %v233 = vadd.f32 %v162, %v218
  %v234 = vadd.f32 %v163, %v218
  %v235 = vadd.f32 %v164, %v218
  %v236 = vadd.f32 %v165, %v218
  %v237 = vadd.f32 %v166, %v218
  %v238 = vadd.f32 %v167, %v218
  %v239 = vadd.f32 %v168, %v218
  %v240 = vadd.f32 %v169, %v218
  %v241 = vadd.f32 %v170, %v218
  %v242 = vadd.f32 %v171, %v218
  %v243 = vadd.f32 %v172, %v218
  %v244 = vadd.f32 %v173, %v218
  %v245 = vadd.f32 %v174, %v218
  %v246 = vadd.f32 %v175, %v218
  %v247 = vadd.f32 %v176, %v218
  %v248 = vadd.f32 %v177, %v218
  %v249 = vadd.f32 %v178, %v218
  %v250 = vadd.f32 %v179, %v218
  %v251 = vadd.f32 %v180, %v218
  %v252 = vadd.f32 %v181, %v218
  %v253 = vadd.f32 %v182, %v218
  %v254 = vadd.f32 %v183, %v218
  %v255 = vadd.f32 %v184, %v218
  %v256 = vadd.f32 %v185, %v218
  %v257 = vadd.f32 %v186, %v218
  %v258 = vadd.f32 %v187, %v218
  %v259 = vadd.f32 %v188, %v218
  %v260 = vadd.f32 %v189, %v218
  %v261 = vadd.f32 %v190, %v218
  %v262 = vadd.f32 %v191, %v218
  %v263 = vadd.f32 %v192, %v218
  %v264 = vadd.f32 %v193, %v218
  %v265 = vadd.f32 %v194, %v218
  %v266 = vadd.f32 %v195, %v218
  %v267 = vadd.f32 %v196, %v218
  %v268 = vadd.f32 %v197, %v218
  %v269 = vadd.f32 %v198, %v218
  %v270 = vadd.f32 %v199, %v218
  %v271 = vadd.f32 %v200, %v218
  %v272 = vadd.f32 %v201, %v218
  %v273 = vadd.f32 %v202, %v218
  %v274 = vadd.f32 %v203, %v218
  %v275 = vadd.f32 %v204, %v218
  %v276 = vadd.f32 %v205, %v218
  %v277 = vadd.f32 %v206, %v218
  %v278 = vadd.f32 %v207, %v218
  %v279 = vadd.f32 %v208, %v218
  %v280 = vadd.f32 %v209, %v218
  %v281 = vadd.f32 %v210, %v218
  %v282 = vadd.f32 %v211, %v218
  %v283 = vadd.f32 %v212, %v218
  %vm284 = vcmp.ge.f32.partialorder %v220, 0.0
  %vm285 = vcmp.ge.f32.partialorder %v221, 0.0
  %vm286 = vcmp.ge.f32.partialorder %v222, 0.0
  %vm287 = vcmp.ge.f32.partialorder %v223, 0.0
  %vm288 = vcmp.ge.f32.partialorder %v224, 0.0
  %vm289 = vcmp.ge.f32.partialorder %v225, 0.0
  %vm290 = vcmp.ge.f32.partialorder %v226, 0.0
  %vm291 = vcmp.ge.f32.partialorder %v227, 0.0
  %vm292 = vcmp.ge.f32.partialorder %v228, 0.0
  %vm293 = vcmp.ge.f32.partialorder %v229, 0.0
  %vm294 = vcmp.ge.f32.partialorder %v230, 0.0
  %vm295 = vcmp.ge.f32.partialorder %v231, 0.0
  %vm296 = vcmp.ge.f32.partialorder %v232, 0.0
  %vm297 = vcmp.ge.f32.partialorder %v233, 0.0
  %vm298 = vcmp.ge.f32.partialorder %v234, 0.0
  %vm299 = vcmp.ge.f32.partialorder %v235, 0.0
  %vm300 = vcmp.ge.f32.partialorder %v236, 0.0
  %vm301 = vcmp.ge.f32.partialorder %v237, 0.0
  %vm302 = vcmp.ge.f32.partialorder %v238, 0.0
  %vm303 = vcmp.ge.f32.partialorder %v239, 0.0
  %vm304 = vcmp.ge.f32.partialorder %v240, 0.0
  %vm305 = vcmp.ge.f32.partialorder %v241, 0.0
  %vm306 = vcmp.ge.f32.partialorder %v242, 0.0
  %vm307 = vcmp.ge.f32.partialorder %v243, 0.0
  %vm308 = vcmp.ge.f32.partialorder %v244, 0.0
  %vm309 = vcmp.ge.f32.partialorder %v245, 0.0
  %vm310 = vcmp.ge.f32.partialorder %v246, 0.0
  %vm311 = vcmp.ge.f32.partialorder %v247, 0.0
  %vm312 = vcmp.ge.f32.partialorder %v248, 0.0
  %vm313 = vcmp.ge.f32.partialorder %v249, 0.0
  %vm314 = vcmp.ge.f32.partialorder %v250, 0.0
  %vm315 = vcmp.ge.f32.partialorder %v251, 0.0
  %vm316 = vcmp.ge.f32.partialorder %v252, 0.0
  %vm317 = vcmp.ge.f32.partialorder %v253, 0.0
  %vm318 = vcmp.ge.f32.partialorder %v254, 0.0
  %vm319 = vcmp.ge.f32.partialorder %v255, 0.0
  %vm320 = vcmp.ge.f32.partialorder %v256, 0.0
  %vm321 = vcmp.ge.f32.partialorder %v257, 0.0
  %vm322 = vcmp.ge.f32.partialorder %v258, 0.0
  %vm323 = vcmp.ge.f32.partialorder %v259, 0.0
  %vm324 = vcmp.ge.f32.partialorder %v260, 0.0
  %vm325 = vcmp.ge.f32.partialorder %v261, 0.0
  %vm326 = vcmp.ge.f32.partialorder %v262, 0.0
  %vm327 = vcmp.ge.f32.partialorder %v263, 0.0
  %vm328 = vcmp.ge.f32.partialorder %v264, 0.0
  %vm329 = vcmp.ge.f32.partialorder %v265, 0.0
  %vm330 = vcmp.ge.f32.partialorder %v266, 0.0
  %vm331 = vcmp.ge.f32.partialorder %v267, 0.0
  %vm332 = vcmp.ge.f32.partialorder %v268, 0.0
  %vm333 = vcmp.ge.f32.partialorder %v269, 0.0
  %vm334 = vcmp.ge.f32.partialorder %v270, 0.0
  %vm335 = vcmp.ge.f32.partialorder %v271, 0.0
  %vm336 = vcmp.ge.f32.partialorder %v272, 0.0
  %vm337 = vcmp.ge.f32.partialorder %v273, 0.0
  %vm338 = vcmp.ge.f32.partialorder %v274, 0.0
  %vm339 = vcmp.ge.f32.partialorder %v275, 0.0
  %vm340 = vcmp.ge.f32.partialorder %v276, 0.0
  %vm341 = vcmp.ge.f32.partialorder %v277, 0.0
  %vm342 = vcmp.ge.f32.partialorder %v278, 0.0
  %vm343 = vcmp.ge.f32.partialorder %v279, 0.0
  %vm344 = vcmp.ge.f32.partialorder %v280, 0.0
  %vm345 = vcmp.ge.f32.partialorder %v281, 0.0
  %vm346 = vcmp.ge.f32.partialorder %v282, 0.0
  %vm347 = vcmp.ge.f32.partialorder %v283, 0.0
  %v348 = vmul.f32 %v220, 0.2
  %v349 = vmul.f32 %v221, 0.2
  %v350 = vmul.f32 %v222, 0.2
  %v351 = vmul.f32 %v223, 0.2
  %v352 = vmul.f32 %v224, 0.2
  %v353 = vmul.f32 %v225, 0.2
  %v354 = vmul.f32 %v226, 0.2
  %v355 = vmul.f32 %v227, 0.2
  %v356 = vmul.f32 %v228, 0.2
  %v357 = vmul.f32 %v229, 0.2
  %v358 = vmul.f32 %v230, 0.2
  %v359 = vmul.f32 %v231, 0.2
  %v360 = vmul.f32 %v232, 0.2
  %v361 = vmul.f32 %v233, 0.2
  %v362 = vmul.f32 %v234, 0.2
  %v363 = vmul.f32 %v235, 0.2
  %v364 = vmul.f32 %v236, 0.2
  %v365 = vmul.f32 %v237, 0.2
  %v366 = vmul.f32 %v238, 0.2
  %v367 = vmul.f32 %v239, 0.2
  %v368 = vmul.f32 %v240, 0.2
  %v369 = vmul.f32 %v241, 0.2
  %v370 = vmul.f32 %v242, 0.2
  %v371 = vmul.f32 %v243, 0.2
  %v372 = vmul.f32 %v244, 0.2
  %v373 = vmul.f32 %v245, 0.2
  %v374 = vmul.f32 %v246, 0.2
  %v375 = vmul.f32 %v247, 0.2
  %v376 = vmul.f32 %v248, 0.2
  %v377 = vmul.f32 %v249, 0.2
  %v378 = vmul.f32 %v250, 0.2
  %v379 = vmul.f32 %v251, 0.2
  %v380 = vmul.f32 %v252, 0.2
  %v381 = vmul.f32 %v253, 0.2
  %v382 = vmul.f32 %v254, 0.2
  %v383 = vmul.f32 %v255, 0.2
  %v384 = vmul.f32 %v256, 0.2
  %v385 = vmul.f32 %v257, 0.2
  %v386 = vmul.f32 %v258, 0.2
  %v387 = vmul.f32 %v259, 0.2
  %v388 = vmul.f32 %v260, 0.2
  %v389 = vmul.f32 %v261, 0.2
  %v390 = vmul.f32 %v262, 0.2
  %v391 = vmul.f32 %v263, 0.2
  %v392 = vmul.f32 %v264, 0.2
  %v393 = vmul.f32 %v265, 0.2
  %v394 = vmul.f32 %v266, 0.2
  %v395 = vmul.f32 %v267, 0.2
  %v396 = vmul.f32 %v268, 0.2
  %v397 = vmul.f32 %v269, 0.2
  %v398 = vmul.f32 %v270, 0.2
  %v399 = vmul.f32 %v271, 0.2
  %v400 = vmul.f32 %v272, 0.2
  %v401 = vmul.f32 %v273, 0.2
  %v402 = vmul.f32 %v274, 0.2
  %v403 = vmul.f32 %v275, 0.2
  %v404 = vmul.f32 %v276, 0.2
  %v405 = vmul.f32 %v277, 0.2
  %v406 = vmul.f32 %v278, 0.2
  %v407 = vmul.f32 %v279, 0.2
  %v408 = vmul.f32 %v280, 0.2
  %v409 = vmul.f32 %v281, 0.2
  %v410 = vmul.f32 %v282, 0.2
  %v411 = vmul.f32 %v283, 0.2
  %v412 = vsel %vm284, %v220, %v348
  %v413 = vsel %vm285, %v221, %v349
  %v414 = vsel %vm286, %v222, %v350
  %v415 = vsel %vm287, %v223, %v351
  %v416 = vsel %vm288, %v224, %v352
  %v417 = vsel %vm289, %v225, %v353
  %v418 = vsel %vm290, %v226, %v354
  %v419 = vsel %vm291, %v227, %v355
  %v420 = vsel %vm292, %v228, %v356
  %v421 = vsel %vm293, %v229, %v357
  %v422 = vsel %vm294, %v230, %v358
  %v423 = vsel %vm295, %v231, %v359
  %v424 = vsel %vm296, %v232, %v360
  %v425 = vsel %vm297, %v233, %v361
  %v426 = vsel %vm298, %v234, %v362
  %v427 = vsel %vm299, %v235, %v363
  %v428 = vsel %vm300, %v236, %v364
  %v429 = vsel %vm301, %v237, %v365
  %v430 = vsel %vm302, %v238, %v366
  %v431 = vsel %vm303, %v239, %v367
  %v432 = vsel %vm304, %v240, %v368
  %v433 = vsel %vm305, %v241, %v369
  %v434 = vsel %vm306, %v242, %v370
  %v435 = vsel %vm307, %v243, %v371
  %v436 = vsel %vm308, %v244, %v372
  %v437 = vsel %vm309, %v245, %v373
  %v438 = vsel %vm310, %v246, %v374
  %v439 = vsel %vm311, %v247, %v375
  %v440 = vsel %vm312, %v248, %v376
  %v441 = vsel %vm313, %v249, %v377
  %v442 = vsel %vm314, %v250, %v378
  %v443 = vsel %vm315, %v251, %v379
  %v444 = vsel %vm316, %v252, %v380
  %v445 = vsel %vm317, %v253, %v381
  %v446 = vsel %vm318, %v254, %v382
  %v447 = vsel %vm319, %v255, %v383
  %v448 = vsel %vm320, %v256, %v384
  %v449 = vsel %vm321, %v257, %v385
  %v450 = vsel %vm322, %v258, %v386
  %v451 = vsel %vm323, %v259, %v387
  %v452 = vsel %vm324, %v260, %v388
  %v453 = vsel %vm325, %v261, %v389
  %v454 = vsel %vm326, %v262, %v390
  %v455 = vsel %vm327, %v263, %v391
  %v456 = vsel %vm328, %v264, %v392
  %v457 = vsel %vm329, %v265, %v393
  %v458 = vsel %vm330, %v266, %v394
  %v459 = vsel %vm331, %v267, %v395
  %v460 = vsel %vm332, %v268, %v396
  %v461 = vsel %vm333, %v269, %v397
  %v462 = vsel %vm334, %v270, %v398
  %v463 = vsel %vm335, %v271, %v399
  %v464 = vsel %vm336, %v272, %v400
  %v465 = vsel %vm337, %v273, %v401
  %v466 = vsel %vm338, %v274, %v402
  %v467 = vsel %vm339, %v275, %v403
  %v468 = vsel %vm340, %v276, %v404
  %v469 = vsel %vm341, %v277, %v405
  %v470 = vsel %vm342, %v278, %v406
  %v471 = vsel %vm343, %v279, %v407
  %v472 = vsel %vm344, %v280, %v408
  %v473 = vsel %vm345, %v281, %v409
  %v474 = vsel %vm346, %v282, %v410
  %v475 = vsel %vm347, %v283, %v411
  %v476 = vpack.c.bf16 %v413, %v412
  %v477 = vpack.c.bf16 %v415, %v414
  %v478 = vpack.c.bf16 %v417, %v416
  %v479 = vpack.c.bf16 %v419, %v418
  %v480 = vpack.c.bf16 %v421, %v420
  %v481 = vpack.c.bf16 %v423, %v422
  %v482 = vpack.c.bf16 %v425, %v424
  %v483 = vpack.c.bf16 %v427, %v426
  %v484 = vpack.c.bf16 %v429, %v428
  %v485 = vpack.c.bf16 %v431, %v430
  %v486 = vpack.c.bf16 %v433, %v432
  %v487 = vpack.c.bf16 %v435, %v434
  %v488 = vpack.c.bf16 %v437, %v436
  %v489 = vpack.c.bf16 %v439, %v438
  %v490 = vpack.c.bf16 %v441, %v440
  %v491 = vpack.c.bf16 %v443, %v442
  %v492 = vpack.c.bf16 %v445, %v444
  %v493 = vpack.c.bf16 %v447, %v446
  %v494 = vpack.c.bf16 %v449, %v448
  %v495 = vpack.c.bf16 %v451, %v450
  %v496 = vpack.c.bf16 %v453, %v452
  %v497 = vpack.c.bf16 %v455, %v454
  %v498 = vpack.c.bf16 %v457, %v456
  %v499 = vpack.c.bf16 %v459, %v458
  %v500 = vpack.c.bf16 %v461, %v460
  %v501 = vpack.c.bf16 %v463, %v462
  %v502 = vpack.c.bf16 %v465, %v464
  %v503 = vpack.c.bf16 %v467, %v466
  %v504 = vpack.c.bf16 %v469, %v468
  %v505 = vpack.c.bf16 %v471, %v470
  %v506 = vpack.c.bf16 %v473, %v472
  %v507 = vpack.c.bf16 %v475, %v474
  %v540 = vunpack.c.l.b16 %v476
  %v541 = vunpack.c.h.b16 %v476
  %v542 = vunpack.c.l.b16 %v477
  %v543 = vunpack.c.h.b16 %v477
  %v544 = vunpack.c.l.b16 %v478
  %v545 = vunpack.c.h.b16 %v478
  %v546 = vunpack.c.l.b16 %v479
  %v547 = vunpack.c.h.b16 %v479
  %v548 = vunpack.c.l.b16 %v480
  %v549 = vunpack.c.h.b16 %v480
  %v550 = vunpack.c.l.b16 %v481
  %v551 = vunpack.c.h.b16 %v481
  %v552 = vunpack.c.l.b16 %v482
  %v553 = vunpack.c.h.b16 %v482
  %v554 = vunpack.c.l.b16 %v483
  %v555 = vunpack.c.h.b16 %v483
  %v556 = vunpack.c.l.b16 %v484
  %v557 = vunpack.c.h.b16 %v484
  %v558 = vunpack.c.l.b16 %v485
  %v559 = vunpack.c.h.b16 %v485
  %v560 = vunpack.c.l.b16 %v486
  %v561 = vunpack.c.h.b16 %v486
  %v562 = vunpack.c.l.b16 %v487
  %v563 = vunpack.c.h.b16 %v487
  %v564 = vunpack.c.l.b16 %v488
  %v565 = vunpack.c.h.b16 %v488
  %v566 = vunpack.c.l.b16 %v489
  %v567 = vunpack.c.h.b16 %v489
  %v568 = vunpack.c.l.b16 %v490
  %v569 = vunpack.c.h.b16 %v490
  %v570 = vunpack.c.l.b16 %v491
  %v571 = vunpack.c.h.b16 %v491
  %v572 = vunpack.c.l.b16 %v492
  %v573 = vunpack.c.h.b16 %v492
  %v574 = vunpack.c.l.b16 %v493
  %v575 = vunpack.c.h.b16 %v493
  %v576 = vunpack.c.l.b16 %v494
  %v577 = vunpack.c.h.b16 %v494
  %v578 = vunpack.c.l.b16 %v495
  %v579 = vunpack.c.h.b16 %v495
  %v580 = vunpack.c.l.b16 %v496
  %v581 = vunpack.c.h.b16 %v496
  %v582 = vunpack.c.l.b16 %v497
  %v583 = vunpack.c.h.b16 %v497
  %v584 = vunpack.c.l.b16 %v498
  %v585 = vunpack.c.h.b16 %v498
  %v586 = vunpack.c.l.b16 %v499
  %v587 = vunpack.c.h.b16 %v499
  %v588 = vunpack.c.l.b16 %v500
  %v589 = vunpack.c.h.b16 %v500
  %v590 = vunpack.c.l.b16 %v501
  %v591 = vunpack.c.h.b16 %v501
  %v592 = vunpack.c.l.b16 %v502
  %v593 = vunpack.c.h.b16 %v502
  %v594 = vunpack.c.l.b16 %v503
  %v595 = vunpack.c.h.b16 %v503
  %v596 = vunpack.c.l.b16 %v504
  %v597 = vunpack.c.h.b16 %v504
  %v598 = vunpack.c.l.b16 %v505
  %v599 = vunpack.c.h.b16 %v505
  %v600 = vunpack.c.l.b16 %v506
  %v601 = vunpack.c.h.b16 %v506
  %v602 = vunpack.c.l.b16 %v507
  %v603 = vunpack.c.h.b16 %v507
  %v604 = vpack.c.b16 %v540, %v540
  %v605 = vpack.c.b16 %v541, %v541
  %v606 = vpack.c.b16 %v542, %v542
  %v607 = vpack.c.b16 %v543, %v543
  %v608 = vpack.c.b16 %v544, %v544
  %v609 = vpack.c.b16 %v545, %v545
  %v610 = vpack.c.b16 %v546, %v546
  %v611 = vpack.c.b16 %v547, %v547
  %v612 = vpack.c.b16 %v548, %v548
  %v613 = vpack.c.b16 %v549, %v549
  %v614 = vpack.c.b16 %v550, %v550
  %v615 = vpack.c.b16 %v551, %v551
  %v616 = vpack.c.b16 %v552, %v552
  %v617 = vpack.c.b16 %v553, %v553
  %v618 = vpack.c.b16 %v554, %v554
  %v619 = vpack.c.b16 %v555, %v555
  %v620 = vpack.c.b16 %v556, %v556
  %v621 = vpack.c.b16 %v557, %v557
  %v622 = vpack.c.b16 %v558, %v558
  %v623 = vpack.c.b16 %v559, %v559
  %v624 = vpack.c.b16 %v560, %v560
  %v625 = vpack.c.b16 %v561, %v561
  %v626 = vpack.c.b16 %v562, %v562
  %v627 = vpack.c.b16 %v563, %v563
  %v628 = vpack.c.b16 %v564, %v564
  %v629 = vpack.c.b16 %v565, %v565
  %v630 = vpack.c.b16 %v566, %v566
  %v631 = vpack.c.b16 %v567, %v567
  %v632 = vpack.c.b16 %v568, %v568
  %v633 = vpack.c.b16 %v569, %v569
  %v634 = vpack.c.b16 %v570, %v570
  %v635 = vpack.c.b16 %v571, %v571
  %v636 = vpack.c.b16 %v572, %v572
  %v637 = vpack.c.b16 %v573, %v573
  %v638 = vpack.c.b16 %v574, %v574
  %v639 = vpack.c.b16 %v575, %v575
  %v640 = vpack.c.b16 %v576, %v576
  %v641 = vpack.c.b16 %v577, %v577
  %v642 = vpack.c.b16 %v578, %v578
  %v643 = vpack.c.b16 %v579, %v579
  %v644 = vpack.c.b16 %v580, %v580
  %v645 = vpack.c.b16 %v581, %v581
  %v646 = vpack.c.b16 %v582, %v582
  %v647 = vpack.c.b16 %v583, %v583
  %v648 = vpack.c.b16 %v584, %v584
  %v649 = vpack.c.b16 %v585, %v585
  %v650 = vpack.c.b16 %v586, %v586
  %v651 = vpack.c.b16 %v587, %v587
  %v652 = vpack.c.b16 %v588, %v588
  %v653 = vpack.c.b16 %v589, %v589
  %v654 = vpack.c.b16 %v590, %v590
  %v655 = vpack.c.b16 %v591, %v591
  %v656 = vpack.c.b16 %v592, %v592
  %v657 = vpack.c.b16 %v593, %v593
  %v658 = vpack.c.b16 %v594, %v594
  %v659 = vpack.c.b16 %v595, %v595
  %v660 = vpack.c.b16 %v596, %v596
  %v661 = vpack.c.b16 %v597, %v597
  %v662 = vpack.c.b16 %v598, %v598
  %v663 = vpack.c.b16 %v599, %v599
  %v664 = vpack.c.b16 %v600, %v600
  %v665 = vpack.c.b16 %v601, %v601
  %v666 = vpack.c.b16 %v602, %v602
  %v667 = vpack.c.b16 %v603, %v603
  %vm732 = vcmask 125952
  %733 = vst.msk [vmem:[%s3] sm:$0xf] %vm732, %v604
  %734 = vst.msk [vmem:[%s3 + $0x4] sm:$0xf] %vm732, %v605
  %735 = vst.msk [vmem:[%s3 + $0x8] sm:$0xf] %vm732, %v606
  %736 = vst.msk [vmem:[%s3 + $0xc] sm:$0xf] %vm732, %v607
  %737 = vst.msk [vmem:[%s3 + $0x10] sm:$0xf] %vm732, %v608
  %738 = vst.msk [vmem:[%s3 + $0x14] sm:$0xf] %vm732, %v609
  %739 = vst.msk [vmem:[%s3 + $0x18] sm:$0xf] %vm732, %v610
  %740 = vst.msk [vmem:[%s3 + $0x1c] sm:$0xf] %vm732, %v611
  %741 = vst.msk [vmem:[%s3 + $0x20] sm:$0xf] %vm732, %v612
  %742 = vst.msk [vmem:[%s3 + $0x24] sm:$0xf] %vm732, %v613
  %743 = vst.msk [vmem:[%s3 + $0x28] sm:$0xf] %vm732, %v614
  %744 = vst.msk [vmem:[%s3 + $0x2c] sm:$0xf] %vm732, %v615
  %745 = vst.msk [vmem:[%s3 + $0x30] sm:$0xf] %vm732, %v616
  %746 = vst.msk [vmem:[%s3 + $0x34] sm:$0xf] %vm732, %v617
  %747 = vst.msk [vmem:[%s3 + $0x38] sm:$0xf] %vm732, %v618
  %748 = vst.msk [vmem:[%s3 + $0x3c] sm:$0xf] %vm732, %v619
  %749 = vst.msk [vmem:[%s3 + $0x40] sm:$0xf] %vm732, %v620
  %750 = vst.msk [vmem:[%s3 + $0x44] sm:$0xf] %vm732, %v621
  %751 = vst.msk [vmem:[%s3 + $0x48] sm:$0xf] %vm732, %v622
  %752 = vst.msk [vmem:[%s3 + $0x4c] sm:$0xf] %vm732, %v623
  %753 = vst.msk [vmem:[%s3 + $0x50] sm:$0xf] %vm732, %v624
  %754 = vst.msk [vmem:[%s3 + $0x54] sm:$0xf] %vm732, %v625
  %755 = vst.msk [vmem:[%s3 + $0x58] sm:$0xf] %vm732, %v626
  %756 = vst.msk [vmem:[%s3 + $0x5c] sm:$0xf] %vm732, %v627
  %757 = vst.msk [vmem:[%s3 + $0x60] sm:$0xf] %vm732, %v628
  %758 = vst.msk [vmem:[%s3 + $0x64] sm:$0xf] %vm732, %v629
  %759 = vst.msk [vmem:[%s3 + $0x68] sm:$0xf] %vm732, %v630
  %760 = vst.msk [vmem:[%s3 + $0x6c] sm:$0xf] %vm732, %v631
  %761 = vst.msk [vmem:[%s3 + $0x70] sm:$0xf] %vm732, %v632
  %762 = vst.msk [vmem:[%s3 + $0x74] sm:$0xf] %vm732, %v633
  %763 = vst.msk [vmem:[%s3 + $0x78] sm:$0xf] %vm732, %v634
  %764 = vst.msk [vmem:[%s3 + $0x7c] sm:$0xf] %vm732, %v635
  %765 = vst.msk [vmem:[%s3 + $0x80] sm:$0xf] %vm732, %v636
  %766 = vst.msk [vmem:[%s3 + $0x84] sm:$0xf] %vm732, %v637
  %767 = vst.msk [vmem:[%s3 + $0x88] sm:$0xf] %vm732, %v638
  %768 = vst.msk [vmem:[%s3 + $0x8c] sm:$0xf] %vm732, %v639
  %769 = vst.msk [vmem:[%s3 + $0x90] sm:$0xf] %vm732, %v640
  %770 = vst.msk [vmem:[%s3 + $0x94] sm:$0xf] %vm732, %v641
  %771 = vst.msk [vmem:[%s3 + $0x98] sm:$0xf] %vm732, %v642
  %772 = vst.msk [vmem:[%s3 + $0x9c] sm:$0xf] %vm732, %v643
  %773 = vst.msk [vmem:[%s3 + $0xa0] sm:$0xf] %vm732, %v644
  %774 = vst.msk [vmem:[%s3 + $0xa4] sm:$0xf] %vm732, %v645
  %775 = vst.msk [vmem:[%s3 + $0xa8] sm:$0xf] %vm732, %v646
  %776 = vst.msk [vmem:[%s3 + $0xac] sm:$0xf] %vm732, %v647
  %777 = vst.msk [vmem:[%s3 + $0xb0] sm:$0xf] %vm732, %v648
  %778 = vst.msk [vmem:[%s3 + $0xb4] sm:$0xf] %vm732, %v649
  %779 = vst.msk [vmem:[%s3 + $0xb8] sm:$0xf] %vm732, %v650
  %780 = vst.msk [vmem:[%s3 + $0xbc] sm:$0xf] %vm732, %v651
  %781 = vst.msk [vmem:[%s3 + $0xc0] sm:$0xf] %vm732, %v652
  %782 = vst.msk [vmem:[%s3 + $0xc4] sm:$0xf] %vm732, %v653
  %783 = vst.msk [vmem:[%s3 + $0xc8] sm:$0xf] %vm732, %v654
  %784 = vst.msk [vmem:[%s3 + $0xcc] sm:$0xf] %vm732, %v655
  %785 = vst.msk [vmem:[%s3 + $0xd0] sm:$0xf] %vm732, %v656
  %786 = vst.msk [vmem:[%s3 + $0xd4] sm:$0xf] %vm732, %v657
  %787 = vst.msk [vmem:[%s3 + $0xd8] sm:$0xf] %vm732, %v658
  %788 = vst.msk [vmem:[%s3 + $0xdc] sm:$0xf] %vm732, %v659
  %789 = vst.msk [vmem:[%s3 + $0xe0] sm:$0xf] %vm732, %v660
  %790 = vst.msk [vmem:[%s3 + $0xe4] sm:$0xf] %vm732, %v661
  %791 = vst.msk [vmem:[%s3 + $0xe8] sm:$0xf] %vm732, %v662
  %792 = vst.msk [vmem:[%s3 + $0xec] sm:$0xf] %vm732, %v663
  %793 = vst.msk [vmem:[%s3 + $0xf0] sm:$0xf] %vm732, %v664
  %794 = vst.msk [vmem:[%s3 + $0xf4] sm:$0xf] %vm732, %v665
  %795 = vst.msk [vmem:[%s3 + $0xf8] sm:$0xf] %vm732, %v666
  %796 = vst.msk [vmem:[%s3 + $0xfc] sm:$0xf] %vm732, %v667
  // Predicated region
  $region14: #{discriminator_forward.10} parent=0 // pred_check
    _
  $region15: #{discriminator_forward.10} parent=0 // pred_check_branch
    %798 = sbr.rel (0) target = $region17
  $region16: #{discriminator_forward.10} parent=0 // pred_region
    _
  $region17: #{discriminator_forward.10} parent=0 // pred_fallthru
    _
  // Predicated region
  $region18: #{discriminator_forward.10} parent=0 // pred_check
    _
  $region19: #{discriminator_forward.10} parent=0 // pred_check_branch
    %800 = sbr.rel (0) target = $region21
  $region20: #{discriminator_forward.10} parent=0 // pred_region
    _
  $region21: #{discriminator_forward.10} parent=0 // pred_fallthru
    _

// kernel: discriminator_forward.11
$region0: #{discriminator_forward.11}
  #allocation0 [shape = 'u32[]', space=smem, size = 0x4, offset = 0x4, fixed_abs, tag = 'smem constant byte address 0x4 - core index']
  #allocation1 [shape = 'u32[144,128]{1,0:T(1,128)}', space=vmem, size = 0x12000, scoped, tag = 'internal scratch']
  %s0 = inlined_call_operand.vmem [shape: bf16[128,256], index: 0, kind: input, shape index: {}]
  %s1 = inlined_call_operand.vmem [shape: bf16[256,32], index: 1, kind: input, shape index: {}]
  %s2 = inlined_call_operand.vmem [shape: bf16[128,32], index: 2, kind: output, shape index: {0}]
  %s3 = inlined_call_operand.vmem [shape: f32[1,2,32], index: 3, kind: output, shape index: {1}]
  %4 = xla_tuple %s2, %s3
  %s5 = sld [smem:[#allocation0]]
  $region26: #{discriminator_forward.11} parent=0
    _
  %s7 = ssub.s32 1, %s5
  %s8 = scalar_select 0, %s7, %s5
  // Predicated region
  $region2: #{discriminator_forward.11} parent=0 // pred_check
    _
  $region3: #{discriminator_forward.11} parent=0 // pred_check_branch
    %10 = sbr.rel (0) target = $region5
  $region4: #{discriminator_forward.11} parent=0 // pred_region
    _
  $region5: #{discriminator_forward.11} parent=0 // pred_fallthru
    _
  // Predicated region
  $region6: #{discriminator_forward.11} parent=0 // pred_check
    _
  $region7: #{discriminator_forward.11} parent=0 // pred_check_branch
    %12 = sbr.rel (0) target = $region9
  $region8: #{discriminator_forward.11} parent=0 // pred_region
    _
  $region9: #{discriminator_forward.11} parent=0 // pred_fallthru
    _
  %v14 = vld [vmem:[%s0] sm:$0xff]
  %v15 = vld [vmem:[%s0 + $0x8] sm:$0xff]
  %v16 = vld [vmem:[%s0 + $0x10] sm:$0xff]
  %v17 = vld [vmem:[%s0 + $0x18] sm:$0xff]
  %v18 = vld [vmem:[%s0 + $0x20] sm:$0xff]
  %v19 = vld [vmem:[%s0 + $0x28] sm:$0xff]
  %v20 = vld [vmem:[%s0 + $0x30] sm:$0xff]
  %v21 = vld [vmem:[%s0 + $0x38] sm:$0xff]
  %v22 = vld [vmem:[%s0 + $0x40] sm:$0xff]
  %v23 = vld [vmem:[%s0 + $0x48] sm:$0xff]
  %v24 = vld [vmem:[%s0 + $0x50] sm:$0xff]
  %v25 = vld [vmem:[%s0 + $0x58] sm:$0xff]
  %v26 = vld [vmem:[%s0 + $0x60] sm:$0xff]
  %v27 = vld [vmem:[%s0 + $0x68] sm:$0xff]
  %v28 = vld [vmem:[%s0 + $0x70] sm:$0xff]
  %v29 = vld [vmem:[%s0 + $0x78] sm:$0xff]
  %v30 = vld [vmem:[%s1] sm:$0xf]
  %v31 = vld [vmem:[%s1 + $0x4] sm:$0xf]
  %v32 = vld [vmem:[%s1 + $0x8] sm:$0xf]
  %v33 = vld [vmem:[%s1 + $0xc] sm:$0xf]
  %v34 = vld [vmem:[%s1 + $0x10] sm:$0xf]
  %v35 = vld [vmem:[%s1 + $0x14] sm:$0xf]
  %v36 = vld [vmem:[%s1 + $0x18] sm:$0xf]
  %v37 = vld [vmem:[%s1 + $0x1c] sm:$0xf]
  %v38 = vld [vmem:[%s1 + $0x20] sm:$0xf]
  %v39 = vld [vmem:[%s1 + $0x24] sm:$0xf]
  %v40 = vld [vmem:[%s1 + $0x28] sm:$0xf]
  %v41 = vld [vmem:[%s1 + $0x2c] sm:$0xf]
  %v42 = vld [vmem:[%s1 + $0x30] sm:$0xf]
  %v43 = vld [vmem:[%s1 + $0x34] sm:$0xf]
  %v44 = vld [vmem:[%s1 + $0x38] sm:$0xf]
  %v45 = vld [vmem:[%s1 + $0x3c] sm:$0xf]
  %v46 = vld [vmem:[%s1 + $0x40] sm:$0xf]
  %v47 = vld [vmem:[%s1 + $0x44] sm:$0xf]
  %v48 = vld [vmem:[%s1 + $0x48] sm:$0xf]
  %v49 = vld [vmem:[%s1 + $0x4c] sm:$0xf]
  %v50 = vld [vmem:[%s1 + $0x50] sm:$0xf]
  %v51 = vld [vmem:[%s1 + $0x54] sm:$0xf]
  %v52 = vld [vmem:[%s1 + $0x58] sm:$0xf]
  %v53 = vld [vmem:[%s1 + $0x5c] sm:$0xf]
  %v54 = vld [vmem:[%s1 + $0x60] sm:$0xf]
  %v55 = vld [vmem:[%s1 + $0x64] sm:$0xf]
  %v56 = vld [vmem:[%s1 + $0x68] sm:$0xf]
  %v57 = vld [vmem:[%s1 + $0x6c] sm:$0xf]
  %v58 = vld [vmem:[%s1 + $0x70] sm:$0xf]
  %v59 = vld [vmem:[%s1 + $0x74] sm:$0xf]
  %v60 = vld [vmem:[%s1 + $0x78] sm:$0xf]
  %v61 = vld [vmem:[%s1 + $0x7c] sm:$0xf]
  %v78 = vunpack.c.l.b16 %v14
  %v79 = vunpack.c.h.b16 %v14
  %v80 = vunpack.c.l.b16 %v15
  %v81 = vunpack.c.h.b16 %v15
  %v82 = vunpack.c.l.b16 %v16
  %v83 = vunpack.c.h.b16 %v16
  %v84 = vunpack.c.l.b16 %v17
  %v85 = vunpack.c.h.b16 %v17
  %v86 = vunpack.c.l.b16 %v18
  %v87 = vunpack.c.h.b16 %v18
  %v88 = vunpack.c.l.b16 %v19
  %v89 = vunpack.c.h.b16 %v19
  %v90 = vunpack.c.l.b16 %v20
  %v91 = vunpack.c.h.b16 %v20
  %v92 = vunpack.c.l.b16 %v21
  %v93 = vunpack.c.h.b16 %v21
  %v94 = vunpack.c.l.b16 %v22
  %v95 = vunpack.c.h.b16 %v22
  %v96 = vunpack.c.l.b16 %v23
  %v97 = vunpack.c.h.b16 %v23
  %v98 = vunpack.c.l.b16 %v24
  %v99 = vunpack.c.h.b16 %v24
  %v100 = vunpack.c.l.b16 %v25
  %v101 = vunpack.c.h.b16 %v25
  %v102 = vunpack.c.l.b16 %v26
  %v103 = vunpack.c.h.b16 %v26
  %v104 = vunpack.c.l.b16 %v27
  %v105 = vunpack.c.h.b16 %v27
  %v106 = vunpack.c.l.b16 %v28
  %v107 = vunpack.c.h.b16 %v28
  %v108 = vunpack.c.l.b16 %v29
  %v109 = vunpack.c.h.b16 %v29
  %v110 = vpack.c.b16 %v80, %v78
  %v111 = vpack.c.b16 %v81, %v79
  %v112 = vpack.c.b16 %v84, %v82
  %v113 = vpack.c.b16 %v85, %v83
  %v114 = vpack.c.b16 %v88, %v86
  %v115 = vpack.c.b16 %v89, %v87
  %v116 = vpack.c.b16 %v92, %v90
  %v117 = vpack.c.b16 %v93, %v91
  %v118 = vpack.c.b16 %v96, %v94
  %v119 = vpack.c.b16 %v97, %v95
  %v120 = vpack.c.b16 %v100, %v98
  %v121 = vpack.c.b16 %v101, %v99
  %v122 = vpack.c.b16 %v104, %v102
  %v123 = vpack.c.b16 %v105, %v103
  %v124 = vpack.c.b16 %v108, %v106
  %v125 = vpack.c.b16 %v109, %v107
  %v174 = vunpack.c.l.b16 %v30
  %v175 = vunpack.c.l.b16 %v31
  %v176 = vunpack.c.l.b16 %v32
  %v177 = vunpack.c.l.b16 %v33
  %v178 = vunpack.c.l.b16 %v34
  %v179 = vunpack.c.l.b16 %v35
  %v180 = vunpack.c.l.b16 %v36
  %v181 = vunpack.c.l.b16 %v37
  %v182 = vunpack.c.l.b16 %v38
  %v183 = vunpack.c.l.b16 %v39
  %v184 = vunpack.c.l.b16 %v40
  %v185 = vunpack.c.l.b16 %v41
  %v186 = vunpack.c.l.b16 %v42
  %v187 = vunpack.c.l.b16 %v43
  %v188 = vunpack.c.l.b16 %v44
  %v189 = vunpack.c.l.b16 %v45
  %v190 = vunpack.c.l.b16 %v46
  %v191 = vunpack.c.l.b16 %v47
  %v192 = vunpack.c.l.b16 %v48
  %v193 = vunpack.c.l.b16 %v49
  %v194 = vunpack.c.l.b16 %v50
  %v195 = vunpack.c.l.b16 %v51
  %v196 = vunpack.c.l.b16 %v52
  %v197 = vunpack.c.l.b16 %v53
  %v198 = vunpack.c.l.b16 %v54
  %v199 = vunpack.c.l.b16 %v55
  %v200 = vunpack.c.l.b16 %v56
  %v201 = vunpack.c.l.b16 %v57
  %v202 = vunpack.c.l.b16 %v58
  %v203 = vunpack.c.l.b16 %v59
  %v204 = vunpack.c.l.b16 %v60
  %v205 = vunpack.c.l.b16 %v61
  %v206 = vpack.c.b16 %v175, %v174
  %v207 = vpack.c.b16 %v177, %v176
  %v208 = vpack.c.b16 %v179, %v178
  %v209 = vpack.c.b16 %v181, %v180
  %v210 = vpack.c.b16 %v183, %v182
  %v211 = vpack.c.b16 %v185, %v184
  %v212 = vpack.c.b16 %v187, %v186
  %v213 = vpack.c.b16 %v189, %v188
  %v214 = vpack.c.b16 %v191, %v190
  %v215 = vpack.c.b16 %v193, %v192
  %v216 = vpack.c.b16 %v195, %v194
  %v217 = vpack.c.b16 %v197, %v196
  %v218 = vpack.c.b16 %v199, %v198
  %v219 = vpack.c.b16 %v201, %v200
  %v220 = vpack.c.b16 %v203, %v202
  %v221 = vpack.c.b16 %v205, %v204
  %238 = vmatprep.subr.bf16.mxu0 0
  %239 = vmatpush1.bf16.msra.mxu0 %v206
  %240 = vmatprep.subr.bf16.mxu0 0
  %241 = vmatpush1.bf16.msra.mxu0 %v207
  %242 = vmatprep.subr.bf16.mxu0 0
  %243 = vmatpush1.bf16.msra.mxu0 %v208
  %244 = vmatprep.subr.bf16.mxu0 0
  %245 = vmatpush1.bf16.msra.mxu0 %v209
  %246 = vmatprep.subr.bf16.mxu0 0
  %247 = vmatpush1.bf16.msra.mxu0 %v210
  %248 = vmatprep.subr.bf16.mxu0 0
  %249 = vmatpush1.bf16.msra.mxu0 %v211
  %250 = vmatprep.subr.bf16.mxu0 0
  %251 = vmatpush1.bf16.msra.mxu0 %v212
  %252 = vmatprep.subr.bf16.mxu0 0
  %253 = vmatpush1.bf16.msra.mxu0 %v213
  %254 = vmatprep.subr.bf16.mxu0 0
  %255 = vmatpush1.bf16.msra.mxu0 %v214
  %256 = vmatprep.subr.bf16.mxu0 0
  %257 = vmatpush1.bf16.msra.mxu0 %v215
  %258 = vmatprep.subr.bf16.mxu0 0
  %259 = vmatpush1.bf16.msra.mxu0 %v216
  %260 = vmatprep.subr.bf16.mxu0 0
  %261 = vmatpush1.bf16.msra.mxu0 %v217
  %262 = vmatprep.subr.bf16.mxu0 0
  %263 = vmatpush1.bf16.msra.mxu0 %v218
  %264 = vmatprep.subr.bf16.mxu0 0
  %265 = vmatpush1.bf16.msra.mxu0 %v219
  %266 = vmatprep.subr.bf16.mxu0 0
  %267 = vmatpush1.bf16.msra.mxu0 %v220
  %268 = vmatprep.subr.bf16.mxu0 0
  %269 = vmatpush1.bf16.msra.mxu0 %v221
  %270 = vmatprep.mubr.bf16.mxu0 %v111
  %271 = vmatmul.mubr.bf16.gmra.mrb[0].mxu0 %v110
  %v272 = vpop.f32.mrb[0].mxu0
  %v273 = vadd.f32 0.0, %v272
  %v274 = vpop.f32.mrb[0].mxu0
  %v275 = vpop.f32.mrb[0].mxu0
  %v276 = vadd.f32 0.0, %v275
  %v277 = vpop.f32.mrb[0].mxu0
  %278 = vmatprep.mubr.bf16.mxu0 %v113
  %279 = vmatmul.mubr.bf16.gmra.mrb[0].mxu0 %v112
  %v280 = vpop.f32.mrb[0].mxu0
  %v281 = vadd.f32 0.0, %v280
  %v282 = vpop.f32.mrb[0].mxu0
  %v283 = vpop.f32.mrb[0].mxu0
  %v284 = vadd.f32 0.0, %v283
  %v285 = vpop.f32.mrb[0].mxu0
  %286 = vmatprep.mubr.bf16.mxu0 %v115
  %287 = vmatmul.mubr.bf16.gmra.mrb[0].mxu0 %v114
  %v288 = vpop.f32.mrb[0].mxu0
  %v289 = vadd.f32 0.0, %v288
  %v290 = vpop.f32.mrb[0].mxu0
  %v291 = vpop.f32.mrb[0].mxu0
  %v292 = vadd.f32 0.0, %v291
  %v293 = vpop.f32.mrb[0].mxu0
  %294 = vmatprep.mubr.bf16.mxu0 %v117
  %295 = vmatmul.mubr.bf16.gmra.mrb[0].mxu0 %v116
  %v296 = vpop.f32.mrb[0].mxu0
  %v297 = vadd.f32 0.0, %v296
  %v298 = vpop.f32.mrb[0].mxu0
  %v299 = vpop.f32.mrb[0].mxu0
  %v300 = vadd.f32 0.0, %v299
  %v301 = vpop.f32.mrb[0].mxu0
  %302 = vmatprep.mubr.bf16.mxu0 %v119
  %303 = vmatmul.mubr.bf16.gmra.mrb[0].mxu0 %v118
  %v304 = vpop.f32.mrb[0].mxu0
  %v305 = vadd.f32 0.0, %v304
  %v306 = vpop.f32.mrb[0].mxu0
  %v307 = vpop.f32.mrb[0].mxu0
  %v308 = vadd.f32 0.0, %v307
  %v309 = vpop.f32.mrb[0].mxu0
  %310 = vmatprep.mubr.bf16.mxu0 %v121
  %311 = vmatmul.mubr.bf16.gmra.mrb[0].mxu0 %v120
  %v312 = vpop.f32.mrb[0].mxu0
  %v313 = vadd.f32 0.0, %v312
  %v314 = vpop.f32.mrb[0].mxu0
  %v315 = vpop.f32.mrb[0].mxu0
  %v316 = vadd.f32 0.0, %v315
  %v317 = vpop.f32.mrb[0].mxu0
  %318 = vmatprep.mubr.bf16.mxu0 %v123
  %319 = vmatmul.mubr.bf16.gmra.mrb[0].mxu0 %v122
  %v320 = vpop.f32.mrb[0].mxu0
  %v321 = vadd.f32 0.0, %v320
  %v322 = vpop.f32.mrb[0].mxu0
  %v323 = vpop.f32.mrb[0].mxu0
  %v324 = vadd.f32 0.0, %v323
  %v325 = vpop.f32.mrb[0].mxu0
  %326 = vmatprep.mubr.bf16.mxu0 %v125
  %327 = vmatmul.mubr.bf16.gmra.mrb[0].mxu0 %v124
  %v328 = vpop.f32.mrb[0].mxu0
  %v329 = vadd.f32 0.0, %v328
  %v330 = vpop.f32.mrb[0].mxu0
  %v331 = vpop.f32.mrb[0].mxu0
  %v332 = vadd.f32 0.0, %v331
  %v333 = vpop.f32.mrb[0].mxu0
  %334 = vdwg.mxu0
  %vm335 = vcmask 261120
  %v336 = vsel %vm335, %v273, 0.0
  %v337 = vsel %vm335, %v276, 0.0
  %v338 = vadd.f32 %v336, %v337
  %v339 = vsel %vm335, %v281, 0.0
  %v340 = vadd.f32 %v338, %v339
  %v341 = vsel %vm335, %v284, 0.0
  %v342 = vadd.f32 %v340, %v341
  %v343 = vsel %vm335, %v289, 0.0
  %v344 = vadd.f32 %v342, %v343
  %v345 = vsel %vm335, %v292, 0.0
  %v346 = vadd.f32 %v344, %v345
  %v347 = vsel %vm335, %v297, 0.0
  %v348 = vadd.f32 %v346, %v347
  %v349 = vsel %vm335, %v300, 0.0
  %v350 = vadd.f32 %v348, %v349
  %v351 = vsel %vm335, %v305, 0.0
  %v352 = vadd.f32 %v350, %v351
  %v353 = vsel %vm335, %v308, 0.0
  %v354 = vadd.f32 %v352, %v353
  %v355 = vsel %vm335, %v313, 0.0
  %v356 = vadd.f32 %v354, %v355
  %v357 = vsel %vm335, %v316, 0.0
  %v358 = vadd.f32 %v356, %v357
  %v359 = vsel %vm335, %v321, 0.0
  %v360 = vadd.f32 %v358, %v359
  %v361 = vsel %vm335, %v324, 0.0
  %v362 = vadd.f32 %v360, %v361
  %v363 = vsel %vm335, %v329, 0.0
  %v364 = vadd.f32 %v362, %v363
  %v365 = vsel %vm335, %v332, 0.0
  %v366 = vadd.f32 %v364, %v365
  %v367 = vrot.slane %v366, 4
  %v368 = vadd.f32 %v366, %v367
  %v369 = vrot.slane %v368, 2
  %v370 = vadd.f32 %v368, %v369
  %v371 = vrot.slane %v370, 1
  %v372 = vadd.f32 %v370, %v371
  %v373 = vmul.f32 %v273, %v273
  %v374 = vmul.f32 %v276, %v276
  %v375 = vmul.f32 %v281, %v281
  %v376 = vmul.f32 %v284, %v284
  %v377 = vmul.f32 %v289, %v289
  %v378 = vmul.f32 %v292, %v292
  %v379 = vmul.f32 %v297, %v297
  %v380 = vmul.f32 %v300, %v300
  %v381 = vmul.f32 %v305, %v305
  %v382 = vmul.f32 %v308, %v308
  %v383 = vmul.f32 %v313, %v313
  %v384 = vmul.f32 %v316, %v316
  %v385 = vmul.f32 %v321, %v321
  %v386 = vmul.f32 %v324, %v324
  %v387 = vmul.f32 %v329, %v329
  %v388 = vmul.f32 %v332, %v332
  %v389 = vsel %vm335, %v373, 0.0
  %v390 = vsel %vm335, %v374, 0.0
  %v391 = vadd.f32 %v389, %v390
  %v392 = vsel %vm335, %v375, 0.0
  %v393 = vadd.f32 %v391, %v392
  %v394 = vsel %vm335, %v376, 0.0
  %v395 = vadd.f32 %v393, %v394
  %v396 = vsel %vm335, %v377, 0.0
  %v397 = vadd.f32 %v395, %v396
  %v398 = vsel %vm335, %v378, 0.0
  %v399 = vadd.f32 %v397, %v398
  %v400 = vsel %vm335, %v379, 0.0
  %v401 = vadd.f32 %v399, %v400
  %v402 = vsel %vm335, %v380, 0.0
  %v403 = vadd.f32 %v401, %v402
  %v404 = vsel %vm335, %v381, 0.0
  %v405 = vadd.f32 %v403, %v404
  %v406 = vsel %vm335, %v382, 0.0
  %v407 = vadd.f32 %v405, %v406
  %v408 = vsel %vm335, %v383, 0.0
  %v409 = vadd.f32 %v407, %v408
  %v410 = vsel %vm335, %v384, 0.0
  %v411 = vadd.f32 %v409, %v410
  %v412 = vsel %vm335, %v385, 0.0
  %v413 = vadd.f32 %v411, %v412
  %v414 = vsel %vm335, %v386, 0.0
  %v415 = vadd.f32 %v413, %v414
  %v416 = vsel %vm335, %v387, 0.0
  %v417 = vadd.f32 %v415, %v416
  %v418 = vsel %vm335, %v388, 0.0
  %v419 = vadd.f32 %v417, %v418
  %v420 = vrot.slane %v419, 4
  %v421 = vadd.f32 %v419, %v420
  %v422 = vrot.slane %v421, 2
  %v423 = vadd.f32 %v421, %v422
  %v424 = vrot.slane %v423, 1
  %v425 = vadd.f32 %v423, %v424
  %vm426 = vcmask 1040384
  %v427 = vsel %vm426, %v372, %v425
  %vm428 = vcmask 254976
  %429 = vst.msk [vmem:[%s3] sm:$0x3] %vm428, %v427
  %v430 = vpack.c.bf16 %v276, %v273
  %v431 = vpack.c.bf16 %v284, %v281
  %v432 = vpack.c.bf16 %v292, %v289
  %v433 = vpack.c.bf16 %v300, %v297
  %v434 = vpack.c.bf16 %v308, %v305
  %v435 = vpack.c.bf16 %v316, %v313
  %v436 = vpack.c.bf16 %v324, %v321
  %v437 = vpack.c.bf16 %v332, %v329
  %v446 = vunpack.c.l.b16 %v430
  %v447 = vunpack.c.h.b16 %v430
  %v448 = vunpack.c.l.b16 %v431
  %v449 = vunpack.c.h.b16 %v431
  %v450 = vunpack.c.l.b16 %v432
  %v451 = vunpack.c.h.b16 %v432
  %v452 = vunpack.c.l.b16 %v433
  %v453 = vunpack.c.h.b16 %v433
  %v454 = vunpack.c.l.b16 %v434
  %v455 = vunpack.c.h.b16 %v434
  %v456 = vunpack.c.l.b16 %v435
  %v457 = vunpack.c.h.b16 %v435
  %v458 = vunpack.c.l.b16 %v436
  %v459 = vunpack.c.h.b16 %v436
  %v460 = vunpack.c.l.b16 %v437
  %v461 = vunpack.c.h.b16 %v437
  %v462 = vpack.c.b16 %v446, %v446
  %v463 = vpack.c.b16 %v447, %v447
  %v464 = vpack.c.b16 %v448, %v448
  %v465 = vpack.c.b16 %v449, %v449
  %v466 = vpack.c.b16 %v450, %v450
  %v467 = vpack.c.b16 %v451, %v451
  %v468 = vpack.c.b16 %v452, %v452
  %v469 = vpack.c.b16 %v453, %v453
  %v470 = vpack.c.b16 %v454, %v454
  %v471 = vpack.c.b16 %v455, %v455
  %v472 = vpack.c.b16 %v456, %v456
  %v473 = vpack.c.b16 %v457, %v457
  %v474 = vpack.c.b16 %v458, %v458
  %v475 = vpack.c.b16 %v459, %v459
  %v476 = vpack.c.b16 %v460, %v460
  %v477 = vpack.c.b16 %v461, %v461
  %vm494 = vcmask 257024
  %495 = vst.msk [vmem:[%s2] sm:$0xf] %vm494, %v462
  %496 = vst.msk [vmem:[%s2 + $0x4] sm:$0xf] %vm494, %v463
  %497 = vst.msk [vmem:[%s2 + $0x8] sm:$0xf] %vm494, %v464
  %498 = vst.msk [vmem:[%s2 + $0xc] sm:$0xf] %vm494, %v465
  %499 = vst.msk [vmem:[%s2 + $0x10] sm:$0xf] %vm494, %v466
  %500 = vst.msk [vmem:[%s2 + $0x14] sm:$0xf] %vm494, %v467
  %501 = vst.msk [vmem:[%s2 + $0x18] sm:$0xf] %vm494, %v468
  %502 = vst.msk [vmem:[%s2 + $0x1c] sm:$0xf] %vm494, %v469
  %503 = vst.msk [vmem:[%s2 + $0x20] sm:$0xf] %vm494, %v470
  %504 = vst.msk [vmem:[%s2 + $0x24] sm:$0xf] %vm494, %v471
  %505 = vst.msk [vmem:[%s2 + $0x28] sm:$0xf] %vm494, %v472
  %506 = vst.msk [vmem:[%s2 + $0x2c] sm:$0xf] %vm494, %v473
  %507 = vst.msk [vmem:[%s2 + $0x30] sm:$0xf] %vm494, %v474
  %508 = vst.msk [vmem:[%s2 + $0x34] sm:$0xf] %vm494, %v475
  %509 = vst.msk [vmem:[%s2 + $0x38] sm:$0xf] %vm494, %v476
  %510 = vst.msk [vmem:[%s2 + $0x3c] sm:$0xf] %vm494, %v477
  // Predicated region
  $region10: #{discriminator_forward.11} parent=0 // pred_check
    _
  $region11: #{discriminator_forward.11} parent=0 // pred_check_branch
    %512 = sbr.rel (0) target = $region13
  $region12: #{discriminator_forward.11} parent=0 // pred_region
    _
  $region13: #{discriminator_forward.11} parent=0 // pred_fallthru
    _
  // Predicated region
  $region14: #{discriminator_forward.11} parent=0 // pred_check
    _
  $region15: #{discriminator_forward.11} parent=0 // pred_check_branch
    %514 = sbr.rel (0) target = $region17
  $region16: #{discriminator_forward.11} parent=0 // pred_region
    _
  $region17: #{discriminator_forward.11} parent=0 // pred_fallthru
    _
  // Predicated region
  $region18: #{discriminator_forward.11} parent=0 // pred_check
    _
  $region19: #{discriminator_forward.11} parent=0 // pred_check_branch
    %516 = sbr.rel (0) target = $region21
  $region20: #{discriminator_forward.11} parent=0 // pred_region
    _
  $region21: #{discriminator_forward.11} parent=0 // pred_fallthru
    _
  // Predicated region
  $region22: #{discriminator_forward.11} parent=0 // pred_check
    _
  $region23: #{discriminator_forward.11} parent=0 // pred_check_branch
    %518 = sbr.rel (0) target = $region25
  $region24: #{discriminator_forward.11} parent=0 // pred_region
    _
  $region25: #{discriminator_forward.11} parent=0 // pred_fallthru
    _

// kernel: discriminator_forward.12
$region0: #{discriminator_forward.12}
  #allocation0 [shape = 'u32[]', space=smem, size = 0x4, offset = 0x4, fixed_abs, tag = 'smem constant byte address 0x4 - core index']
  #allocation1 [shape = 'u32[144,128]{1,0:T(1,128)}', space=vmem, size = 0x12000, scoped, tag = 'internal scratch']
  %s0 = inlined_call_operand.vmem [shape: bf16[128,32], index: 0, kind: input, shape index: {}]
  %s1 = inlined_call_operand.vmem [shape: f32[1,32], index: 1, kind: input, shape index: {}]
  %s2 = inlined_call_operand.vmem [shape: f32[1,32], index: 2, kind: input, shape index: {}]
  %s3 = inlined_call_operand.vmem [shape: bf16[128,32], index: 3, kind: output, shape index: {}]
  %s4 = sld [smem:[#allocation0]]
  $region22: #{discriminator_forward.12} parent=0
    _
  %s6 = ssub.s32 1, %s4
  %s7 = scalar_select 0, %s6, %s4
  // Predicated region
  $region2: #{discriminator_forward.12} parent=0 // pred_check
    _
  $region3: #{discriminator_forward.12} parent=0 // pred_check_branch
    %9 = sbr.rel (0) target = $region5
  $region4: #{discriminator_forward.12} parent=0 // pred_region
    _
  $region5: #{discriminator_forward.12} parent=0 // pred_fallthru
    _
  // Predicated region
  $region6: #{discriminator_forward.12} parent=0 // pred_check
    _
  $region7: #{discriminator_forward.12} parent=0 // pred_check_branch
    %11 = sbr.rel (0) target = $region9
  $region8: #{discriminator_forward.12} parent=0 // pred_region
    _
  $region9: #{discriminator_forward.12} parent=0 // pred_fallthru
    _
  // Predicated region
  $region10: #{discriminator_forward.12} parent=0 // pred_check
    _
  $region11: #{discriminator_forward.12} parent=0 // pred_check_branch
    %13 = sbr.rel (0) target = $region13
  $region12: #{discriminator_forward.12} parent=0 // pred_region
    _
  $region13: #{discriminator_forward.12} parent=0 // pred_fallthru
    _
  %v14 = vld [vmem:[%s0] sm:$0xf]
  %v15 = vld [vmem:[%s0 + $0x4] sm:$0xf]
  %v16 = vld [vmem:[%s0 + $0x8] sm:$0xf]
  %v17 = vld [vmem:[%s0 + $0xc] sm:$0xf]
  %v18 = vld [vmem:[%s0 + $0x10] sm:$0xf]
  %v19 = vld [vmem:[%s0 + $0x14] sm:$0xf]
  %v20 = vld [vmem:[%s0 + $0x18] sm:$0xf]
  %v21 = vld [vmem:[%s0 + $0x1c] sm:$0xf]
  %v22 = vld [vmem:[%s0 + $0x20] sm:$0xf]
  %v23 = vld [vmem:[%s0 + $0x24] sm:$0xf]
  %v24 = vld [vmem:[%s0 + $0x28] sm:$0xf]
  %v25 = vld [vmem:[%s0 + $0x2c] sm:$0xf]
  %v26 = vld [vmem:[%s0 + $0x30] sm:$0xf]
  %v27 = vld [vmem:[%s0 + $0x34] sm:$0xf]
  %v28 = vld [vmem:[%s0 + $0x38] sm:$0xf]
  %v29 = vld [vmem:[%s0 + $0x3c] sm:$0xf]
  %v30 = vunpack.c.l.bf16 %v14
  %v31 = vunpack.c.l.bf16 %v15
  %v32 = vunpack.c.l.bf16 %v16
  %v33 = vunpack.c.l.bf16 %v17
  %v34 = vunpack.c.l.bf16 %v18
  %v35 = vunpack.c.l.bf16 %v19
  %v36 = vunpack.c.l.bf16 %v20
  %v37 = vunpack.c.l.bf16 %v21
  %v38 = vunpack.c.l.bf16 %v22
  %v39 = vunpack.c.l.bf16 %v23
  %v40 = vunpack.c.l.bf16 %v24
  %v41 = vunpack.c.l.bf16 %v25
  %v42 = vunpack.c.l.bf16 %v26
  %v43 = vunpack.c.l.bf16 %v27
  %v44 = vunpack.c.l.bf16 %v28
  %v45 = vunpack.c.l.bf16 %v29
  %v46 = vld [vmem:[%s1] sm:$0x1]
  %v48 = vlaneseq
  %v49 = vshrl.u32 %v48, 7
  %v50 = vsub.s32 0, %v49
  %v51 = vrot.slane %v46, %v50
  %v53 = vmul.f32 %v30, %v51
  %v54 = vmul.f32 %v31, %v51
  %v55 = vmul.f32 %v32, %v51
  %v56 = vmul.f32 %v33, %v51
  %v57 = vmul.f32 %v34, %v51
  %v58 = vmul.f32 %v35, %v51
  %v59 = vmul.f32 %v36, %v51
  %v60 = vmul.f32 %v37, %v51
  %v61 = vmul.f32 %v38, %v51
  %v62 = vmul.f32 %v39, %v51
  %v63 = vmul.f32 %v40, %v51
  %v64 = vmul.f32 %v41, %v51
  %v65 = vmul.f32 %v42, %v51
  %v66 = vmul.f32 %v43, %v51
  %v67 = vmul.f32 %v44, %v51
  %v68 = vmul.f32 %v45, %v51
  %v69 = vld [vmem:[%s2] sm:$0x1]
  %v71 = vlaneseq
  %v72 = vshrl.u32 %v71, 7
  %v73 = vsub.s32 0, %v72
  %v74 = vrot.slane %v69, %v73
  %v76 = vadd.f32 %v53, %v74
  %v77 = vadd.f32 %v54, %v74
  %v78 = vadd.f32 %v55, %v74
  %v79 = vadd.f32 %v56, %v74
  %v80 = vadd.f32 %v57, %v74
  %v81 = vadd.f32 %v58, %v74
  %v82 = vadd.f32 %v59, %v74
  %v83 = vadd.f32 %v60, %v74
  %v84 = vadd.f32 %v61, %v74
  %v85 = vadd.f32 %v62, %v74
  %v86 = vadd.f32 %v63, %v74
  %v87 = vadd.f32 %v64, %v74
  %v88 = vadd.f32 %v65, %v74
  %v89 = vadd.f32 %v66, %v74
  %v90 = vadd.f32 %v67, %v74
  %v91 = vadd.f32 %v68, %v74
  %vm92 = vcmp.ge.f32.partialorder %v76, 0.0
  %vm93 = vcmp.ge.f32.partialorder %v77, 0.0
  %vm94 = vcmp.ge.f32.partialorder %v78, 0.0
  %vm95 = vcmp.ge.f32.partialorder %v79, 0.0
  %vm96 = vcmp.ge.f32.partialorder %v80, 0.0
  %vm97 = vcmp.ge.f32.partialorder %v81, 0.0
  %vm98 = vcmp.ge.f32.partialorder %v82, 0.0
  %vm99 = vcmp.ge.f32.partialorder %v83, 0.0
  %vm100 = vcmp.ge.f32.partialorder %v84, 0.0
  %vm101 = vcmp.ge.f32.partialorder %v85, 0.0
  %vm102 = vcmp.ge.f32.partialorder %v86, 0.0
  %vm103 = vcmp.ge.f32.partialorder %v87, 0.0
  %vm104 = vcmp.ge.f32.partialorder %v88, 0.0
  %vm105 = vcmp.ge.f32.partialorder %v89, 0.0
  %vm106 = vcmp.ge.f32.partialorder %v90, 0.0
  %vm107 = vcmp.ge.f32.partialorder %v91, 0.0
  %v108 = vmul.f32 %v76, 0.2
  %v109 = vmul.f32 %v77, 0.2
  %v110 = vmul.f32 %v78, 0.2
  %v111 = vmul.f32 %v79, 0.2
  %v112 = vmul.f32 %v80, 0.2
  %v113 = vmul.f32 %v81, 0.2
  %v114 = vmul.f32 %v82, 0.2
  %v115 = vmul.f32 %v83, 0.2
  %v116 = vmul.f32 %v84, 0.2
  %v117 = vmul.f32 %v85, 0.2
  %v118 = vmul.f32 %v86, 0.2
  %v119 = vmul.f32 %v87, 0.2
  %v120 = vmul.f32 %v88, 0.2
  %v121 = vmul.f32 %v89, 0.2
  %v122 = vmul.f32 %v90, 0.2
  %v123 = vmul.f32 %v91, 0.2
  %v124 = vsel %vm92, %v76, %v108
  %v125 = vsel %vm93, %v77, %v109
  %v126 = vsel %vm94, %v78, %v110
  %v127 = vsel %vm95, %v79, %v111
  %v128 = vsel %vm96, %v80, %v112
  %v129 = vsel %vm97, %v81, %v113
  %v130 = vsel %vm98, %v82, %v114
  %v131 = vsel %vm99, %v83, %v115
  %v132 = vsel %vm100, %v84, %v116
  %v133 = vsel %vm101, %v85, %v117
  %v134 = vsel %vm102, %v86, %v118
  %v135 = vsel %vm103, %v87, %v119
  %v136 = vsel %vm104, %v88, %v120
  %v137 = vsel %vm105, %v89, %v121
  %v138 = vsel %vm106, %v90, %v122
  %v139 = vsel %vm107, %v91, %v123
  %v140 = vpack.c.bf16 %v125, %v124
  %v141 = vpack.c.bf16 %v127, %v126
  %v142 = vpack.c.bf16 %v129, %v128
  %v143 = vpack.c.bf16 %v131, %v130
  %v144 = vpack.c.bf16 %v133, %v132
  %v145 = vpack.c.bf16 %v135, %v134
  %v146 = vpack.c.bf16 %v137, %v136
  %v147 = vpack.c.bf16 %v139, %v138
  %v156 = vunpack.c.l.b16 %v140
  %v157 = vunpack.c.h.b16 %v140
  %v158 = vunpack.c.l.b16 %v141
  %v159 = vunpack.c.h.b16 %v141
  %v160 = vunpack.c.l.b16 %v142
  %v161 = vunpack.c.h.b16 %v142
  %v162 = vunpack.c.l.b16 %v143
  %v163 = vunpack.c.h.b16 %v143
  %v164 = vunpack.c.l.b16 %v144
  %v165 = vunpack.c.h.b16 %v144
  %v166 = vunpack.c.l.b16 %v145
  %v167 = vunpack.c.h.b16 %v145
  %v168 = vunpack.c.l.b16 %v146
  %v169 = vunpack.c.h.b16 %v146
  %v170 = vunpack.c.l.b16 %v147
  %v171 = vunpack.c.h.b16 %v147
  %v172 = vpack.c.b16 %v156, %v156
  %v173 = vpack.c.b16 %v157, %v157
  %v174 = vpack.c.b16 %v158, %v158
  %v175 = vpack.c.b16 %v159, %v159
  %v176 = vpack.c.b16 %v160, %v160
  %v177 = vpack.c.b16 %v161, %v161
  %v178 = vpack.c.b16 %v162, %v162
  %v179 = vpack.c.b16 %v163, %v163
  %v180 = vpack.c.b16 %v164, %v164
  %v181 = vpack.c.b16 %v165, %v165
  %v182 = vpack.c.b16 %v166, %v166
  %v183 = vpack.c.b16 %v167, %v167
  %v184 = vpack.c.b16 %v168, %v168
  %v185 = vpack.c.b16 %v169, %v169
  %v186 = vpack.c.b16 %v170, %v170
  %v187 = vpack.c.b16 %v171, %v171
  %vm204 = vcmask 257024
  %205 = vst.msk [vmem:[%s3] sm:$0xf] %vm204, %v172
  %206 = vst.msk [vmem:[%s3 + $0x4] sm:$0xf] %vm204, %v173
  %207 = vst.msk [vmem:[%s3 + $0x8] sm:$0xf] %vm204, %v174
  %208 = vst.msk [vmem:[%s3 + $0xc] sm:$0xf] %vm204, %v175
  %209 = vst.msk [vmem:[%s3 + $0x10] sm:$0xf] %vm204, %v176
  %210 = vst.msk [vmem:[%s3 + $0x14] sm:$0xf] %vm204, %v177
  %211 = vst.msk [vmem:[%s3 + $0x18] sm:$0xf] %vm204, %v178
  %212 = vst.msk [vmem:[%s3 + $0x1c] sm:$0xf] %vm204, %v179
  %213 = vst.msk [vmem:[%s3 + $0x20] sm:$0xf] %vm204, %v180
  %214 = vst.msk [vmem:[%s3 + $0x24] sm:$0xf] %vm204, %v181
  %215 = vst.msk [vmem:[%s3 + $0x28] sm:$0xf] %vm204, %v182
  %216 = vst.msk [vmem:[%s3 + $0x2c] sm:$0xf] %vm204, %v183
  %217 = vst.msk [vmem:[%s3 + $0x30] sm:$0xf] %vm204, %v184
  %218 = vst.msk [vmem:[%s3 + $0x34] sm:$0xf] %vm204, %v185
  %219 = vst.msk [vmem:[%s3 + $0x38] sm:$0xf] %vm204, %v186
  %220 = vst.msk [vmem:[%s3 + $0x3c] sm:$0xf] %vm204, %v187
  // Predicated region
  $region14: #{discriminator_forward.12} parent=0 // pred_check
    _
  $region15: #{discriminator_forward.12} parent=0 // pred_check_branch
    %222 = sbr.rel (0) target = $region17
  $region16: #{discriminator_forward.12} parent=0 // pred_region
    _
  $region17: #{discriminator_forward.12} parent=0 // pred_fallthru
    _
  // Predicated region
  $region18: #{discriminator_forward.12} parent=0 // pred_check
    _
  $region19: #{discriminator_forward.12} parent=0 // pred_check_branch
    %224 = sbr.rel (0) target = $region21
  $region20: #{discriminator_forward.12} parent=0 // pred_region
    _
  $region21: #{discriminator_forward.12} parent=0 // pred_fallthru
    _

// kernel: discriminator_forward.13
$region0: #{discriminator_forward.13}
  #allocation0 [shape = 'u32[]', space=smem, size = 0x4, offset = 0x4, fixed_abs, tag = 'smem constant byte address 0x4 - core index']
  #allocation1 [shape = 'u32[144,128]{1,0:T(1,128)}', space=vmem, size = 0x12000, scoped, tag = 'internal scratch']
  %s0 = inlined_call_operand.vmem [shape: bf16[32,512], index: 0, kind: input, shape index: {}]
  %s1 = inlined_call_operand.vmem [shape: bf16[512,64], index: 1, kind: input, shape index: {}]
  %s2 = inlined_call_operand.vmem [shape: bf16[32,64], index: 2, kind: output, shape index: {0}]
  %s3 = inlined_call_operand.vmem [shape: f32[1,2,64], index: 3, kind: output, shape index: {1}]
  %4 = xla_tuple %s2, %s3
  %s5 = sld [smem:[#allocation0]]
  $region26: #{discriminator_forward.13} parent=0
    _
  %s7 = ssub.s32 1, %s5
  %s8 = scalar_select 0, %s7, %s5
  // Predicated region
  $region2: #{discriminator_forward.13} parent=0 // pred_check
    _
  $region3: #{discriminator_forward.13} parent=0 // pred_check_branch
    %10 = sbr.rel (0) target = $region5
  $region4: #{discriminator_forward.13} parent=0 // pred_region
    _
  $region5: #{discriminator_forward.13} parent=0 // pred_fallthru
    _
  // Predicated region
  $region6: #{discriminator_forward.13} parent=0 // pred_check
    _
  $region7: #{discriminator_forward.13} parent=0 // pred_check_branch
    %12 = sbr.rel (0) target = $region9
  $region8: #{discriminator_forward.13} parent=0 // pred_region
    _
  $region9: #{discriminator_forward.13} parent=0 // pred_fallthru
    _
  %v14 = vld [vmem:[%s0] sm:$0xff]
  %v15 = vld [vmem:[%s0 + $0x8] sm:$0xff]
  %v16 = vld [vmem:[%s0 + $0x10] sm:$0xff]
  %v17 = vld [vmem:[%s0 + $0x18] sm:$0xff]
  %v18 = vld [vmem:[%s0 + $0x20] sm:$0xff]
  %v19 = vld [vmem:[%s0 + $0x28] sm:$0xff]
  %v20 = vld [vmem:[%s0 + $0x30] sm:$0xff]
  %v21 = vld [vmem:[%s0 + $0x38] sm:$0xff]
  %v22 = vld [vmem:[%s1] sm:$0xf]
  %v23 = vld [vmem:[%s1 + $0x4] sm:$0xf]
  %v24 = vld [vmem:[%s1 + $0x8] sm:$0xf]
  %v25 = vld [vmem:[%s1 + $0xc] sm:$0xf]
  %v26 = vld [vmem:[%s1 + $0x10] sm:$0xf]
  %v27 = vld [vmem:[%s1 + $0x14] sm:$0xf]
  %v28 = vld [vmem:[%s1 + $0x18] sm:$0xf]
  %v29 = vld [vmem:[%s1 + $0x1c] sm:$0xf]
  %v30 = vld [vmem:[%s1 + $0x20] sm:$0xf]
  %v31 = vld [vmem:[%s1 + $0x24] sm:$0xf]
  %v32 = vld [vmem:[%s1 + $0x28] sm:$0xf]
  %v33 = vld [vmem:[%s1 + $0x2c] sm:$0xf]
  %v34 = vld [vmem:[%s1 + $0x30] sm:$0xf]
  %v35 = vld [vmem:[%s1 + $0x34] sm:$0xf]
  %v36 = vld [vmem:[%s1 + $0x38] sm:$0xf]
  %v37 = vld [vmem:[%s1 + $0x3c] sm:$0xf]
  %v38 = vld [vmem:[%s1 + $0x40] sm:$0xf]
  %v39 = vld [vmem:[%s1 + $0x44] sm:$0xf]
  %v40 = vld [vmem:[%s1 + $0x48] sm:$0xf]
  %v41 = vld [vmem:[%s1 + $0x4c] sm:$0xf]
  %v42 = vld [vmem:[%s1 + $0x50] sm:$0xf]
  %v43 = vld [vmem:[%s1 + $0x54] sm:$0xf]
  %v44 = vld [vmem:[%s1 + $0x58] sm:$0xf]
  %v45 = vld [vmem:[%s1 + $0x5c] sm:$0xf]
  %v46 = vld [vmem:[%s1 + $0x60] sm:$0xf]
  %v47 = vld [vmem:[%s1 + $0x64] sm:$0xf]
  %v48 = vld [vmem:[%s1 + $0x68] sm:$0xf]
  %v49 = vld [vmem:[%s1 + $0x6c] sm:$0xf]
  %v50 = vld [vmem:[%s1 + $0x70] sm:$0xf]
  %v51 = vld [vmem:[%s1 + $0x74] sm:$0xf]
  %v52 = vld [vmem:[%s1 + $0x78] sm:$0xf]
  %v53 = vld [vmem:[%s1 + $0x7c] sm:$0xf]
  %v54 = vld [vmem:[%s1 + $0x80] sm:$0xf]
  %v55 = vld [vmem:[%s1 + $0x84] sm:$0xf]
  %v56 = vld [vmem:[%s1 + $0x88] sm:$0xf]
  %v57 = vld [vmem:[%s1 + $0x8c] sm:$0xf]
  %v58 = vld [vmem:[%s1 + $0x90] sm:$0xf]
  %v59 = vld [vmem:[%s1 + $0x94] sm:$0xf]
  %v60 = vld [vmem:[%s1 + $0x98] sm:$0xf]
  %v61 = vld [vmem:[%s1 + $0x9c] sm:$0xf]
  %v62 = vld [vmem:[%s1 + $0xa0] sm:$0xf]
  %v63 = vld [vmem:[%s1 + $0xa4] sm:$0xf]
  %v64 = vld [vmem:[%s1 + $0xa8] sm:$0xf]
  %v65 = vld [vmem:[%s1 + $0xac] sm:$0xf]
  %v66 = vld [vmem:[%s1 + $0xb0] sm:$0xf]
  %v67 = vld [vmem:[%s1 + $0xb4] sm:$0xf]
  %v68 = vld [vmem:[%s1 + $0xb8] sm:$0xf]
  %v69 = vld [vmem:[%s1 + $0xbc] sm:$0xf]
  %v70 = vld [vmem:[%s1 + $0xc0] sm:$0xf]
  %v71 = vld [vmem:[%s1 + $0xc4] sm:$0xf]
  %v72 = vld [vmem:[%s1 + $0xc8] sm:$0xf]
  %v73 = vld [vmem:[%s1 + $0xcc] sm:$0xf]
  %v74 = vld [vmem:[%s1 + $0xd0] sm:$0xf]
  %v75 = vld [vmem:[%s1 + $0xd4] sm:$0xf]
  %v76 = vld [vmem:[%s1 + $0xd8] sm:$0xf]
  %v77 = vld [vmem:[%s1 + $0xdc] sm:$0xf]
  %v78 = vld [vmem:[%s1 + $0xe0] sm:$0xf]
  %v79 = vld [vmem:[%s1 + $0xe4] sm:$0xf]
  %v80 = vld [vmem:[%s1 + $0xe8] sm:$0xf]
  %v81 = vld [vmem:[%s1 + $0xec] sm:$0xf]
  %v82 = vld [vmem:[%s1 + $0xf0] sm:$0xf]
  %v83 = vld [vmem:[%s1 + $0xf4] sm:$0xf]
  %v84 = vld [vmem:[%s1 + $0xf8] sm:$0xf]
  %v85 = vld [vmem:[%s1 + $0xfc] sm:$0xf]
  %v94 = vunpack.c.l.b16 %v14
  %v95 = vunpack.c.h.b16 %v14
  %v96 = vunpack.c.l.b16 %v15
  %v97 = vunpack.c.h.b16 %v15
  %v98 = vunpack.c.l.b16 %v16
  %v99 = vunpack.c.h.b16 %v16
  %v100 = vunpack.c.l.b16 %v17
  %v101 = vunpack.c.h.b16 %v17
  %v102 = vunpack.c.l.b16 %v18
  %v103 = vunpack.c.h.b16 %v18
  %v104 = vunpack.c.l.b16 %v19
  %v105 = vunpack.c.h.b16 %v19
  %v106 = vunpack.c.l.b16 %v20
  %v107 = vunpack.c.h.b16 %v20
  %v108 = vunpack.c.l.b16 %v21
  %v109 = vunpack.c.h.b16 %v21
  %v110 = vpack.c.b16 %v98, %v94
  %v111 = vpack.c.b16 %v99, %v95
  %v112 = vpack.c.b16 %v100, %v96
  %v113 = vpack.c.b16 %v101, %v97
  %v114 = vpack.c.b16 %v106, %v102
  %v115 = vpack.c.b16 %v107, %v103
  %v116 = vpack.c.b16 %v108, %v104
  %v117 = vpack.c.b16 %v109, %v105
  %v190 = vunpack.c.l.b16 %v22
  %v191 = vunpack.c.l.b16 %v23
  %v192 = vunpack.c.l.b16 %v24
  %v193 = vunpack.c.l.b16 %v25
  %v194 = vunpack.c.l.b16 %v26
  %v195 = vunpack.c.l.b16 %v27
  %v196 = vunpack.c.l.b16 %v28
  %v197 = vunpack.c.l.b16 %v29
  %v198 = vunpack.c.l.b16 %v30
  %v199 = vunpack.c.l.b16 %v31
  %v200 = vunpack.c.l.b16 %v32
  %v201 = vunpack.c.l.b16 %v33
  %v202 = vunpack.c.l.b16 %v34
  %v203 = vunpack.c.l.b16 %v35
  %v204 = vunpack.c.l.b16 %v36
  %v205 = vunpack.c.l.b16 %v37
  %v206 = vunpack.c.l.b16 %v38
  %v207 = vunpack.c.l.b16 %v39
  %v208 = vunpack.c.l.b16 %v40
  %v209 = vunpack.c.l.b16 %v41
  %v210 = vunpack.c.l.b16 %v42
  %v211 = vunpack.c.l.b16 %v43
  %v212 = vunpack.c.l.b16 %v44
  %v213 = vunpack.c.l.b16 %v45
  %v214 = vunpack.c.l.b16 %v46
  %v215 = vunpack.c.l.b16 %v47
  %v216 = vunpack.c.l.b16 %v48
  %v217 = vunpack.c.l.b16 %v49
  %v218 = vunpack.c.l.b16 %v50
  %v219 = vunpack.c.l.b16 %v51
  %v220 = vunpack.c.l.b16 %v52
  %v221 = vunpack.c.l.b16 %v53
  %v222 = vunpack.c.l.b16 %v54
  %v223 = vunpack.c.l.b16 %v55
  %v224 = vunpack.c.l.b16 %v56
  %v225 = vunpack.c.l.b16 %v57
  %v226 = vunpack.c.l.b16 %v58
  %v227 = vunpack.c.l.b16 %v59
  %v228 = vunpack.c.l.b16 %v60
  %v229 = vunpack.c.l.b16 %v61
  %v230 = vunpack.c.l.b16 %v62
  %v231 = vunpack.c.l.b16 %v63
  %v232 = vunpack.c.l.b16 %v64
  %v233 = vunpack.c.l.b16 %v65
  %v234 = vunpack.c.l.b16 %v66
  %v235 = vunpack.c.l.b16 %v67
  %v236 = vunpack.c.l.b16 %v68
  %v237 = vunpack.c.l.b16 %v69
  %v238 = vunpack.c.l.b16 %v70
  %v239 = vunpack.c.l.b16 %v71
  %v240 = vunpack.c.l.b16 %v72
  %v241 = vunpack.c.l.b16 %v73
  %v242 = vunpack.c.l.b16 %v74
  %v243 = vunpack.c.l.b16 %v75
  %v244 = vunpack.c.l.b16 %v76
  %v245 = vunpack.c.l.b16 %v77
  %v246 = vunpack.c.l.b16 %v78
  %v247 = vunpack.c.l.b16 %v79
  %v248 = vunpack.c.l.b16 %v80
  %v249 = vunpack.c.l.b16 %v81
  %v250 = vunpack.c.l.b16 %v82
  %v251 = vunpack.c.l.b16 %v83
  %v252 = vunpack.c.l.b16 %v84
  %v253 = vunpack.c.l.b16 %v85
  %v254 = vpack.c.b16 %v191, %v190
  %v255 = vpack.c.b16 %v193, %v192
  %v256 = vpack.c.b16 %v195, %v194
  %v257 = vpack.c.b16 %v197, %v196
  %v258 = vpack.c.b16 %v199, %v198
  %v259 = vpack.c.b16 %v201, %v200
  %v260 = vpack.c.b16 %v203, %v202
  %v261 = vpack.c.b16 %v205, %v204
  %v262 = vpack.c.b16 %v207, %v206
  %v263 = vpack.c.b16 %v209, %v208
  %v264 = vpack.c.b16 %v211, %v210
  %v265 = vpack.c.b16 %v213, %v212
  %v266 = vpack.c.b16 %v215, %v214
  %v267 = vpack.c.b16 %v217, %v216
  %v268 = vpack.c.b16 %v219, %v218
  %v269 = vpack.c.b16 %v221, %v220
  %v270 = vpack.c.b16 %v223, %v222
  %v271 = vpack.c.b16 %v225, %v224
  %v272 = vpack.c.b16 %v227, %v226
  %v273 = vpack.c.b16 %v229, %v228
  %v274 = vpack.c.b16 %v231, %v230
  %v275 = vpack.c.b16 %v233, %v232
  %v276 = vpack.c.b16 %v235, %v234
  %v277 = vpack.c.b16 %v237, %v236
  %v278 = vpack.c.b16 %v239, %v238
  %v279 = vpack.c.b16 %v241, %v240
  %v280 = vpack.c.b16 %v243, %v242
  %v281 = vpack.c.b16 %v245, %v244
  %v282 = vpack.c.b16 %v247, %v246
  %v283 = vpack.c.b16 %v249, %v248
  %v284 = vpack.c.b16 %v251, %v250
  %v285 = vpack.c.b16 %v253, %v252
  %318 = vmatprep.subr.bf16.mxu0 0
  %319 = vmatpush1.bf16.msra.mxu0 %v254
  %320 = vmatprep.subr.bf16.mxu0 0
  %321 = vmatpush1.bf16.msra.mxu0 %v255
  %322 = vmatprep.subr.bf16.mxu0 0
  %323 = vmatpush1.bf16.msra.mxu0 %v256
  %324 = vmatprep.subr.bf16.mxu0 0
  %325 = vmatpush1.bf16.msra.mxu0 %v257
  %326 = vmatprep.subr.bf16.mxu0 0
  %327 = vmatpush1.bf16.msra.mxu0 %v258
  %328 = vmatprep.subr.bf16.mxu0 0
  %329 = vmatpush1.bf16.msra.mxu0 %v259
  %330 = vmatprep.subr.bf16.mxu0 0
  %331 = vmatpush1.bf16.msra.mxu0 %v260
  %332 = vmatprep.subr.bf16.mxu0 0
  %333 = vmatpush1.bf16.msra.mxu0 %v261
  %334 = vmatprep.subr.bf16.mxu0 0
  %335 = vmatpush1.bf16.msra.mxu0 %v262
  %336 = vmatprep.subr.bf16.mxu0 0
  %337 = vmatpush1.bf16.msra.mxu0 %v263
  %338 = vmatprep.subr.bf16.mxu0 0
  %339 = vmatpush1.bf16.msra.mxu0 %v264
  %340 = vmatprep.subr.bf16.mxu0 0
  %341 = vmatpush1.bf16.msra.mxu0 %v265
  %342 = vmatprep.subr.bf16.mxu0 0
  %343 = vmatpush1.bf16.msra.mxu0 %v266
  %344 = vmatprep.subr.bf16.mxu0 0
  %345 = vmatpush1.bf16.msra.mxu0 %v267
  %346 = vmatprep.subr.bf16.mxu0 0
  %347 = vmatpush1.bf16.msra.mxu0 %v268
  %348 = vmatprep.subr.bf16.mxu0 0
  %349 = vmatpush1.bf16.msra.mxu0 %v269
  %350 = vmatprep.mubr.bf16.mxu0 %v111
  %351 = vmatmul.mubr.bf16.gmra.mrb[0].mxu0 %v110
  %v352 = vpop.f32.mrb[0].mxu0
  %v353 = vadd.f32 0.0, %v352
  %v354 = vpop.f32.mrb[0].mxu0
  %v355 = vpop.f32.mrb[0].mxu0
  %v356 = vadd.f32 0.0, %v355
  %v357 = vpop.f32.mrb[0].mxu0
  %358 = vmatprep.mubr.bf16.mxu0 %v115
  %359 = vmatmul.mubr.bf16.gmra.mrb[0].mxu0 %v114
  %v360 = vpop.f32.mrb[0].mxu0
  %v361 = vadd.f32 0.0, %v360
  %v362 = vpop.f32.mrb[0].mxu0
  %v363 = vpop.f32.mrb[0].mxu0
  %v364 = vadd.f32 0.0, %v363
  %v365 = vpop.f32.mrb[0].mxu0
  %366 = vdwg.mxu0
  %367 = vmatprep.subr.bf16.mxu0 0
  %368 = vmatpush1.bf16.msra.mxu0 %v270
  %369 = vmatprep.subr.bf16.mxu0 0
  %370 = vmatpush1.bf16.msra.mxu0 %v271
  %371 = vmatprep.subr.bf16.mxu0 0
  %372 = vmatpush1.bf16.msra.mxu0 %v272
  %373 = vmatprep.subr.bf16.mxu0 0
  %374 = vmatpush1.bf16.msra.mxu0 %v273
  %375 = vmatprep.subr.bf16.mxu0 0
  %376 = vmatpush1.bf16.msra.mxu0 %v274
  %377 = vmatprep.subr.bf16.mxu0 0
  %378 = vmatpush1.bf16.msra.mxu0 %v275
  %379 = vmatprep.subr.bf16.mxu0 0
  %380 = vmatpush1.bf16.msra.mxu0 %v276
  %381 = vmatprep.subr.bf16.mxu0 0
  %382 = vmatpush1.bf16.msra.mxu0 %v277
  %383 = vmatprep.subr.bf16.mxu0 0
  %384 = vmatpush1.bf16.msra.mxu0 %v278
  %385 = vmatprep.subr.bf16.mxu0 0
  %386 = vmatpush1.bf16.msra.mxu0 %v279
  %387 = vmatprep.subr.bf16.mxu0 0
  %388 = vmatpush1.bf16.msra.mxu0 %v280
  %389 = vmatprep.subr.bf16.mxu0 0
  %390 = vmatpush1.bf16.msra.mxu0 %v281
  %391 = vmatprep.subr.bf16.mxu0 0
  %392 = vmatpush1.bf16.msra.mxu0 %v282
  %393 = vmatprep.subr.bf16.mxu0 0
  %394 = vmatpush1.bf16.msra.mxu0 %v283
  %395 = vmatprep.subr.bf16.mxu0 0
  %396 = vmatpush1.bf16.msra.mxu0 %v284
  %397 = vmatprep.subr.bf16.mxu0 0
  %398 = vmatpush1.bf16.msra.mxu0 %v285
  %399 = vmatprep.mubr.bf16.mxu0 %v113
  %400 = vmatmul.mubr.bf16.gmra.mrb[0].mxu0 %v112
  %v401 = vpop.f32.mrb[0].mxu0
  %v402 = vadd.f32 %v353, %v401
  %v403 = vpop.f32.mrb[0].mxu0
  %v404 = vpop.f32.mrb[0].mxu0
  %v405 = vadd.f32 %v356, %v404
  %v406 = vpop.f32.mrb[0].mxu0
  %407 = vmatprep.mubr.bf16.mxu0 %v117
  %408 = vmatmul.mubr.bf16.gmra.mrb[0].mxu0 %v116
  %v409 = vpop.f32.mrb[0].mxu0
  %v410 = vadd.f32 %v361, %v409
  %v411 = vpop.f32.mrb[0].mxu0
  %v412 = vpop.f32.mrb[0].mxu0
  %v413 = vadd.f32 %v364, %v412
  %v414 = vpop.f32.mrb[0].mxu0
  %415 = vdwg.mxu0
  %vm416 = vcmask 523264
  %v417 = vsel %vm416, %v402, 0.0
  %v418 = vsel %vm416, %v405, 0.0
  %v419 = vadd.f32 %v417, %v418
  %v420 = vsel %vm416, %v410, 0.0
  %v421 = vadd.f32 %v419, %v420
  %v422 = vsel %vm416, %v413, 0.0
  %v423 = vadd.f32 %v421, %v422
  %v424 = vrot.slane %v423, 4
  %v425 = vadd.f32 %v423, %v424
  %v426 = vrot.slane %v425, 2
  %v427 = vadd.f32 %v425, %v426
  %v428 = vrot.slane %v427, 1
  %v429 = vadd.f32 %v427, %v428
  %v430 = vmul.f32 %v402, %v402
  %v431 = vmul.f32 %v405, %v405
  %v432 = vmul.f32 %v410, %v410
  %v433 = vmul.f32 %v413, %v413
  %v434 = vsel %vm416, %v430, 0.0
  %v435 = vsel %vm416, %v431, 0.0
  %v436 = vadd.f32 %v434, %v435
  %v437 = vsel %vm416, %v432, 0.0
  %v438 = vadd.f32 %v436, %v437
  %v439 = vsel %vm416, %v433, 0.0
  %v440 = vadd.f32 %v438, %v439
  %v441 = vrot.slane %v440, 4
  %v442 = vadd.f32 %v440, %v441
  %v443 = vrot.slane %v442, 2
  %v444 = vadd.f32 %v442, %v443
  %v445 = vrot.slane %v444, 1
  %v446 = vadd.f32 %v444, %v445
  %vm447 = vcmask 1040384
  %v448 = vsel %vm447, %v429, %v446
  %vm449 = vcmask 517120
  %450 = vst.msk [vmem:[%s3] sm:$0x3] %vm449, %v448
  %v451 = vpack.c.bf16 %v405, %v402
  %v452 = vpack.c.bf16 %v413, %v410
  %v455 = vunpack.c.l.b16 %v451
  %v456 = vunpack.c.h.b16 %v451
  %v457 = vunpack.c.l.b16 %v452
  %v458 = vunpack.c.h.b16 %v452
  %v459 = vpack.c.b16 %v455, %v455
  %v460 = vpack.c.b16 %v456, %v456
  %v461 = vpack.c.b16 %v457, %v457
  %v462 = vpack.c.b16 %v458, %v458
  %vm467 = vcmask 519168
  %468 = vst.msk [vmem:[%s2] sm:$0xf] %vm467, %v459
  %469 = vst.msk [vmem:[%s2 + $0x4] sm:$0xf] %vm467, %v460
  %470 = vst.msk [vmem:[%s2 + $0x8] sm:$0xf] %vm467, %v461
  %471 = vst.msk [vmem:[%s2 + $0xc] sm:$0xf] %vm467, %v462
  // Predicated region
  $region10: #{discriminator_forward.13} parent=0 // pred_check
    _
  $region11: #{discriminator_forward.13} parent=0 // pred_check_branch
    %473 = sbr.rel (0) target = $region13
  $region12: #{discriminator_forward.13} parent=0 // pred_region
    _
  $region13: #{discriminator_forward.13} parent=0 // pred_fallthru
    _
  // Predicated region
  $region14: #{discriminator_forward.13} parent=0 // pred_check
    _
  $region15: #{discriminator_forward.13} parent=0 // pred_check_branch
    %475 = sbr.rel (0) target = $region17
  $region16: #{discriminator_forward.13} parent=0 // pred_region
    _
  $region17: #{discriminator_forward.13} parent=0 // pred_fallthru
    _
  // Predicated region
  $region18: #{discriminator_forward.13} parent=0 // pred_check
    _
  $region19: #{discriminator_forward.13} parent=0 // pred_check_branch
    %477 = sbr.rel (0) target = $region21
  $region20: #{discriminator_forward.13} parent=0 // pred_region
    _
  $region21: #{discriminator_forward.13} parent=0 // pred_fallthru
    _
  // Predicated region
  $region22: #{discriminator_forward.13} parent=0 // pred_check
    _
  $region23: #{discriminator_forward.13} parent=0 // pred_check_branch
    %479 = sbr.rel (0) target = $region25
  $region24: #{discriminator_forward.13} parent=0 // pred_region
    _
  $region25: #{discriminator_forward.13} parent=0 // pred_fallthru
    _

// kernel: discriminator_forward.14
$region0: #{discriminator_forward.14}
  #allocation0 [shape = 'u32[]', space=smem, size = 0x4, offset = 0x4, fixed_abs, tag = 'smem constant byte address 0x4 - core index']
  #allocation1 [shape = 'u32[144,128]{1,0:T(1,128)}', space=vmem, size = 0x12000, scoped, tag = 'internal scratch']
  %s0 = inlined_call_operand.vmem [shape: bf16[32,64], index: 0, kind: input, shape index: {}]
  %s1 = inlined_call_operand.vmem [shape: f32[1,64], index: 1, kind: input, shape index: {}]
  %s2 = inlined_call_operand.vmem [shape: f32[1,64], index: 2, kind: input, shape index: {}]
  %s3 = inlined_call_operand.vmem [shape: bf16[32,64], index: 3, kind: output, shape index: {}]
  %s4 = sld [smem:[#allocation0]]
  $region22: #{discriminator_forward.14} parent=0
    _
  %s6 = ssub.s32 1, %s4
  %s7 = scalar_select 0, %s6, %s4
  // Predicated region
  $region2: #{discriminator_forward.14} parent=0 // pred_check
    _
  $region3: #{discriminator_forward.14} parent=0 // pred_check_branch
    %9 = sbr.rel (0) target = $region5
  $region4: #{discriminator_forward.14} parent=0 // pred_region
    _
  $region5: #{discriminator_forward.14} parent=0 // pred_fallthru
    _
  // Predicated region
  $region6: #{discriminator_forward.14} parent=0 // pred_check
    _
  $region7: #{discriminator_forward.14} parent=0 // pred_check_branch
    %11 = sbr.rel (0) target = $region9
  $region8: #{discriminator_forward.14} parent=0 // pred_region
    _
  $region9: #{discriminator_forward.14} parent=0 // pred_fallthru
    _
  // Predicated region
  $region10: #{discriminator_forward.14} parent=0 // pred_check
    _
  $region11: #{discriminator_forward.14} parent=0 // pred_check_branch
    %13 = sbr.rel (0) target = $region13
  $region12: #{discriminator_forward.14} parent=0 // pred_region
    _
  $region13: #{discriminator_forward.14} parent=0 // pred_fallthru
    _
  %v14 = vld [vmem:[%s0] sm:$0xf]
  %v15 = vld [vmem:[%s0 + $0x4] sm:$0xf]
  %v16 = vld [vmem:[%s0 + $0x8] sm:$0xf]
  %v17 = vld [vmem:[%s0 + $0xc] sm:$0xf]
  %v18 = vunpack.c.l.bf16 %v14
  %v19 = vunpack.c.l.bf16 %v15
  %v20 = vunpack.c.l.bf16 %v16
  %v21 = vunpack.c.l.bf16 %v17
  %v22 = vld [vmem:[%s1] sm:$0x1]
  %v24 = vlaneseq
  %v25 = vshrl.u32 %v24, 7
  %v26 = vsub.s32 0, %v25
  %v27 = vrot.slane %v22, %v26
  %v29 = vmul.f32 %v18, %v27
  %v30 = vmul.f32 %v19, %v27
  %v31 = vmul.f32 %v20, %v27
  %v32 = vmul.f32 %v21, %v27
  %v33 = vld [vmem:[%s2] sm:$0x1]
  %v35 = vlaneseq
  %v36 = vshrl.u32 %v35, 7
  %v37 = vsub.s32 0, %v36
  %v38 = vrot.slane %v33, %v37
  %v40 = vadd.f32 %v29, %v38
  %v41 = vadd.f32 %v30, %v38
  %v42 = vadd.f32 %v31, %v38
  %v43 = vadd.f32 %v32, %v38
  %vm44 = vcmp.ge.f32.partialorder %v40, 0.0
  %vm45 = vcmp.ge.f32.partialorder %v41, 0.0
  %vm46 = vcmp.ge.f32.partialorder %v42, 0.0
  %vm47 = vcmp.ge.f32.partialorder %v43, 0.0
  %v48 = vmul.f32 %v40, 0.2
  %v49 = vmul.f32 %v41, 0.2
  %v50 = vmul.f32 %v42, 0.2
  %v51 = vmul.f32 %v43, 0.2
  %v52 = vsel %vm44, %v40, %v48
  %v53 = vsel %vm45, %v41, %v49
  %v54 = vsel %vm46, %v42, %v50
  %v55 = vsel %vm47, %v43, %v51
  %v56 = vpack.c.bf16 %v53, %v52
  %v57 = vpack.c.bf16 %v55, %v54
  %v60 = vunpack.c.l.b16 %v56
  %v61 = vunpack.c.h.b16 %v56
  %v62 = vunpack.c.l.b16 %v57
  %v63 = vunpack.c.h.b16 %v57
  %v64 = vpack.c.b16 %v60, %v60
  %v65 = vpack.c.b16 %v61, %v61
  %v66 = vpack.c.b16 %v62, %v62
  %v67 = vpack.c.b16 %v63, %v63
  %vm72 = vcmask 519168
  %73 = vst.msk [vmem:[%s3] sm:$0xf] %vm72, %v64
  %74 = vst.msk [vmem:[%s3 + $0x4] sm:$0xf] %vm72, %v65
  %75 = vst.msk [vmem:[%s3 + $0x8] sm:$0xf] %vm72, %v66
  %76 = vst.msk [vmem:[%s3 + $0xc] sm:$0xf] %vm72, %v67
  // Predicated region
  $region14: #{discriminator_forward.14} parent=0 // pred_check
    _
  $region15: #{discriminator_forward.14} parent=0 // pred_check_branch
    %78 = sbr.rel (0) target = $region17
  $region16: #{discriminator_forward.14} parent=0 // pred_region
    _
  $region17: #{discriminator_forward.14} parent=0 // pred_fallthru
    _
  // Predicated region
  $region18: #{discriminator_forward.14} parent=0 // pred_check
    _
  $region19: #{discriminator_forward.14} parent=0 // pred_check_branch
    %80 = sbr.rel (0) target = $region21
  $region20: #{discriminator_forward.14} parent=0 // pred_region
    _
  $region21: #{discriminator_forward.14} parent=0 // pred_fallthru
    _

// kernel: discriminator_forward.15
$region0: #{discriminator_forward.15}
  #allocation0 [shape = 'u32[]', space=smem, size = 0x4, offset = 0x4, fixed_abs, tag = 'smem constant byte address 0x4 - core index']
  #allocation1 [shape = 'u32[144,128]{1,0:T(1,128)}', space=vmem, size = 0x12000, scoped, tag = 'internal scratch']
  %s0 = inlined_call_operand.vmem [shape: bf16[2,1024], index: 0, kind: input, shape index: {}]
  %s1 = inlined_call_operand.vmem [shape: bf16[1,1024], index: 1, kind: input, shape index: {}]
  %s2 = inlined_call_operand.vmem [shape: f32[2,1], index: 2, kind: output, shape index: {}]
  %s3 = sld [smem:[#allocation0]]
  $region18: #{discriminator_forward.15} parent=0
    _
  %s5 = ssub.s32 1, %s3
  %s6 = scalar_select 0, %s5, %s3
  // Predicated region
  $region2: #{discriminator_forward.15} parent=0 // pred_check
    _
  $region3: #{discriminator_forward.15} parent=0 // pred_check_branch
    %8 = sbr.rel (0) target = $region5
  $region4: #{discriminator_forward.15} parent=0 // pred_region
    _
  $region5: #{discriminator_forward.15} parent=0 // pred_fallthru
    _
  // Predicated region
  $region6: #{discriminator_forward.15} parent=0 // pred_check
    _
  $region7: #{discriminator_forward.15} parent=0 // pred_check_branch
    %10 = sbr.rel (0) target = $region9
  $region8: #{discriminator_forward.15} parent=0 // pred_region
    _
  $region9: #{discriminator_forward.15} parent=0 // pred_fallthru
    _
  %v11 = vld [vmem:[%s0] sm:$0xff]
  %v12 = vunpack.c.l.bf16 %v11
  %v13 = vunpack.c.h.bf16 %v11
  %v14 = vld [vmem:[%s1] sm:$0xff]
  %v15 = vunpack.c.l.bf16 %v14
  %v16 = vunpack.c.h.bf16 %v14
  %v19 = vlaneseq
  %v20 = vshrl.u32 %v19, 7
  %v21 = vsub.s32 0, %v20
  %v22 = vrot.slane %v15, %v21
  %v23 = vlaneseq
  %v24 = vshrl.u32 %v23, 7
  %v25 = vsub.s32 2, %v24
  %v26 = vrot.slane %v15, %v25
  %v27 = vlaneseq
  %v28 = vshrl.u32 %v27, 7
  %v29 = vsub.s32 4, %v28
  %v30 = vrot.slane %v15, %v29
  %v31 = vlaneseq
  %v32 = vshrl.u32 %v31, 7
  %v33 = vsub.s32 6, %v32
  %v34 = vrot.slane %v15, %v33
  %v35 = vlaneseq
  %v36 = vshrl.u32 %v35, 7
  %v37 = vsub.s32 0, %v36
  %v38 = vrot.slane %v16, %v37
  %v39 = vlaneseq
  %v40 = vshrl.u32 %v39, 7
  %v41 = vsub.s32 2, %v40
  %v42 = vrot.slane %v16, %v41
  %v43 = vlaneseq
  %v44 = vshrl.u32 %v43, 7
  %v45 = vsub.s32 4, %v44
  %v46 = vrot.slane %v16, %v45
  %v47 = vlaneseq
  %v48 = vshrl.u32 %v47, 7
  %v49 = vsub.s32 6, %v48
  %v50 = vrot.slane %v16, %v49
  %v59 = vlaneseq
  %v60 = vshrl.u32 %v59, 7
  %v61 = vsub.s32 0, %v60
  %v62 = vrot.slane %v22, %v61
  %v63 = vlaneseq
  %v64 = vshrl.u32 %v63, 7
  %v65 = vsub.s32 0, %v64
  %v66 = vrot.slane %v26, %v65
  %v67 = vlaneseq
  %v68 = vshrl.u32 %v67, 7
  %v69 = vsub.s32 0, %v68
  %v70 = vrot.slane %v30, %v69
  %v71 = vlaneseq
  %v72 = vshrl.u32 %v71, 7
  %v73 = vsub.s32 0, %v72
  %v74 = vrot.slane %v34, %v73
  %v75 = vlaneseq
  %v76 = vshrl.u32 %v75, 7
  %v77 = vsub.s32 0, %v76
  %v78 = vrot.slane %v38, %v77
  %v79 = vlaneseq
  %v80 = vshrl.u32 %v79, 7
  %v81 = vsub.s32 0, %v80
  %v82 = vrot.slane %v42, %v81
  %v83 = vlaneseq
  %v84 = vshrl.u32 %v83, 7
  %v85 = vsub.s32 0, %v84
  %v86 = vrot.slane %v46, %v85
  %v87 = vlaneseq
  %v88 = vshrl.u32 %v87, 7
  %v89 = vsub.s32 0, %v88
  %v90 = vrot.slane %v50, %v89
  %v99 = vcombine.low %v62, %v66
  %v100 = vcombine.low %v70, %v74
  %v102 = vunpack.c.l.s4 1983009808
  %v103 = vunpack.c.0.s8 %v102
  %v104 = vlaneseq
  %v105 = vshrl.u32 %v104, 7
  %v106 = vsub.s32 %v103, %v105
  %v107 = vrot.slane %v99, %v106
  %v109 = vunpack.c.l.s4 1983009808
  %v110 = vunpack.c.0.s8 %v109
  %v111 = vlaneseq
  %v112 = vshrl.u32 %v111, 7
  %v113 = vsub.s32 %v110, %v112
  %v114 = vrot.slane %v100, %v113
  %v115 = vcombine.low %v107, %v114
  %v116 = vcombine.low %v78, %v82
  %v117 = vcombine.low %v86, %v90
  %v119 = vunpack.c.l.s4 1983009808
  %v120 = vunpack.c.0.s8 %v119
  %v121 = vlaneseq
  %v122 = vshrl.u32 %v121, 7
  %v123 = vsub.s32 %v120, %v122
  %v124 = vrot.slane %v116, %v123
  %v126 = vunpack.c.l.s4 1983009808
  %v127 = vunpack.c.0.s8 %v126
  %v128 = vlaneseq
  %v129 = vshrl.u32 %v128, 7
  %v130 = vsub.s32 %v127, %v129
  %v131 = vrot.slane %v117, %v130
  %v132 = vcombine.low %v124, %v131
  %v135 = vmul.f32 %v12, %v115
  %v136 = vmul.f32 %v13, %v132
  %v139 = vcombine.high %v135, %v135
  %v141 = vunpack.c.l.s4 1983009808
  %v142 = vunpack.c.0.s8 %v141
  %v143 = vlaneseq
  %v144 = vshrl.u32 %v143, 7
  %v145 = vsub.s32 %v142, %v144
  %v146 = vrot.slane %v135, %v145
  %v148 = vunpack.c.l.s4 1983009808
  %v149 = vunpack.c.0.s8 %v148
  %v150 = vlaneseq
  %v151 = vshrl.u32 %v150, 7
  %v152 = vsub.s32 %v149, %v151
  %v153 = vrot.slane %v139, %v152
  %v154 = vcombine.high %v146, %v146
  %v155 = vcombine.high %v153, %v153
  %v156 = vcombine.high %v136, %v136
  %v158 = vunpack.c.l.s4 1983009808
  %v159 = vunpack.c.0.s8 %v158
  %v160 = vlaneseq
  %v161 = vshrl.u32 %v160, 7
  %v162 = vsub.s32 %v159, %v161
  %v163 = vrot.slane %v136, %v162
  %v165 = vunpack.c.l.s4 1983009808
  %v166 = vunpack.c.0.s8 %v165
  %v167 = vlaneseq
  %v168 = vshrl.u32 %v167, 7
  %v169 = vsub.s32 %v166, %v168
  %v170 = vrot.slane %v156, %v169
  %v171 = vcombine.high %v163, %v163
  %v172 = vcombine.high %v170, %v170
  %vm181 = vcmask 1041408
  %v182 = vsel %vm181, %v146, 0.0
  %v183 = vsel %vm181, %v154, 0.0
  %v184 = vadd.f32 %v182, %v183
  %v185 = vsel %vm181, %v153, 0.0
  %v186 = vadd.f32 %v184, %v185
  %v187 = vsel %vm181, %v155, 0.0
  %v188 = vadd.f32 %v186, %v187
  %v189 = vsel %vm181, %v163, 0.0
  %v190 = vadd.f32 %v188, %v189
  %v191 = vsel %vm181, %v171, 0.0
  %v192 = vadd.f32 %v190, %v191
  %v193 = vsel %vm181, %v170, 0.0
  %v194 = vadd.f32 %v192, %v193
  %v195 = vsel %vm181, %v172, 0.0
  %v196 = vadd.f32 %v194, %v195
  %197 = vadd.xlane.f32.xlu0 %v196
  %v198 = vpop.xlane.xlu0 %197
  %v199 = vxor.u32 %v198, 2147483648
  %v200 = vmul.f32 %v199, 1.442695
  %v201 = vpow.pop %v200
  %v202 = vadd.f32 %v201, 1.0
  %v203 = vrcp.pop %v202
  %v204 = vmul.f32 1.0, %v203
  %vm205 = vcmask 1024
  %206 = vst.msk [vmem:[%s2] sm:$0x3] %vm205, %v204
  // Predicated region
  $region10: #{discriminator_forward.15} parent=0 // pred_check
    _
  $region11: #{discriminator_forward.15} parent=0 // pred_check_branch
    %208 = sbr.rel (0) target = $region13
  $region12: #{discriminator_forward.15} parent=0 // pred_region
    _
  $region13: #{discriminator_forward.15} parent=0 // pred_fallthru
    _
  // Predicated region
  $region14: #{discriminator_forward.15} parent=0 // pred_check
    _
  $region15: #{discriminator_forward.15} parent=0 // pred_check_branch
    %210 = sbr.rel (0) target = $region17
  $region16: #{discriminator_forward.15} parent=0 // pred_region
    _
  $region17: #{discriminator_forward.15} parent=0 // pred_fallthru
    _

</llo_original>
